<compile_context>
chip_gen: v7x
topology: tpu7x:2x2x1
jax: 0.10.0
libtpu: 0.0.40
codegen_flags: <defaults>
</compile_context>

<pallas_src>
import numpy as np
import jax
import jax.numpy as jnp
from jax.experimental import pallas as pl
from jax.experimental.pallas import tpu as pltpu

H, W = 12, 8
C = 25                  # conv channels
FC_H = 64               # fc hidden width
NUM_ACTIONS = 6
HEAD_PAD = 8            # common padded width of actor(6)/critic(1) heads
ROW_PAD = 16            # zero rows above/below the activation in the shift scratch


# ---------------------------------------------------------------------------
# Kernel 1: conv1 -> conv2 -> conv3 (tanh after each), one branch per grid step
# ---------------------------------------------------------------------------
def _conv_stage_kernel(mask_ref, p1_ref, w1_ref, b1_ref, w2_ref, b2_ref,
                       w3_ref, b3_ref, out_ref, apad_ref):
    M = p1_ref.shape[0]                       # B * H * W

    # Deterministic contents for the shifted reads (borders stay zero).
    apad_ref[...] = jnp.zeros(apad_ref.shape, apad_ref.dtype)

    # conv1: a single MXU matmul on pre-built 5x5 patches (Cin == 1).
    a = jnp.tanh(
        jnp.dot(p1_ref[...], w1_ref[0], preferred_element_type=jnp.float32)
        + b1_ref[0])

    def conv3x3(a_in, w_ref, b_ref):
        # Activation rows are ordered (b, y, x); the 3x3 tap (dy, dx) is a row
        # shift by (dy-1)*W + (dx-1). Taps falling outside the image (or into
        # the neighbouring row / batch) are masked to zero before the matmul.
        apad_ref[ROW_PAD:ROW_PAD + M, :] = a_in
        acc = jnp.zeros((M, C), jnp.float32)
        for dy in range(3):
            for dx in range(3):
                k = dy * 3 + dx
                shift = (dy - 1) * W + (dx - 1)
                tap = apad_ref[ROW_PAD + shift:ROW_PAD + shift + M, :]
                tap = tap * mask_ref[k]                       # (M, 1) broadcast
                acc = acc + jnp.dot(tap, w_ref[0, k],
                                    preferred_element_type=jnp.float32)
        return jnp.tanh(acc + b_ref[0])

    a = conv3x3(a, w2_ref, b2_ref)
    a = conv3x3(a, w3_ref, b3_ref)
    out_ref[0] = a.astype(out_ref.dtype)


def _conv_stage(patches1, masks, pp):
    M = patches1.shape[0]
    return pl.pallas_call(
        _conv_stage_kernel,
        out_shape=jax.ShapeDtypeStruct((2, M, C), jnp.float32),
        grid=(2,),
        in_specs=[
            pl.BlockSpec((9, M, 1), lambda g: (0, 0, 0)),        # border masks (shared)
            pl.BlockSpec((M, C), lambda g: (0, 0)),              # conv1 patches (shared)
            pl.BlockSpec((1, C, C), lambda g: (g, 0, 0)),        # conv1 weight
            pl.BlockSpec((1, 1, C), lambda g: (g, 0, 0)),        # conv1 bias
            pl.BlockSpec((1, 9, C, C), lambda g: (g, 0, 0, 0)),  # conv2 weight
            pl.BlockSpec((1, 1, C), lambda g: (g, 0, 0)),        # conv2 bias
            pl.BlockSpec((1, 9, C, C), lambda g: (g, 0, 0, 0)),  # conv3 weight
            pl.BlockSpec((1, 1, C), lambda g: (g, 0, 0)),        # conv3 bias
        ],
        out_specs=pl.BlockSpec((1, M, C), lambda g: (g, 0, 0)),
        scratch_shapes=[pltpu.VMEM((M + 2 * ROW_PAD, C), jnp.float32)],
        compiler_params=pltpu.CompilerParams(
            dimension_semantics=("parallel",)),
    )(masks, patches1, pp["w1"], pp["b1"], pp["w2"], pp["b2"], pp["w3"], pp["b3"])


# ---------------------------------------------------------------------------
# Kernel 2: fc1 -> fc2 -> head, one branch per grid step
# ---------------------------------------------------------------------------
def _fc_stage_kernel(a_ref, w1_ref, b1_ref, w2_ref, b2_ref, w3_ref, b3_ref,
                     o_ref):
    h = jnp.tanh(jnp.dot(a_ref[0], w1_ref[0],
                         preferred_element_type=jnp.float32) + b1_ref[0])
    h = jnp.tanh(jnp.dot(h, w2_ref[0],
                         preferred_element_type=jnp.float32) + b2_ref[0])
    o = jnp.dot(h, w3_ref[0], preferred_element_type=jnp.float32) + b3_ref[0]
    o_ref[0] = o.astype(o_ref.dtype)


def _fc_stage(a3f, pp):
    B, K = a3f.shape[1], a3f.shape[2]
    return pl.pallas_call(
        _fc_stage_kernel,
        out_shape=jax.ShapeDtypeStruct((2, B, HEAD_PAD), jnp.float32),
        grid=(2,),
        in_specs=[
            pl.BlockSpec((1, B, K), lambda g: (g, 0, 0)),          # flat conv features
            pl.BlockSpec((1, K, FC_H), lambda g: (g, 0, 0)),       # fc1 weight
            pl.BlockSpec((1, 1, FC_H), lambda g: (g, 0, 0)),       # fc1 bias
            pl.BlockSpec((1, FC_H, FC_H), lambda g: (g, 0, 0)),    # fc2 weight
            pl.BlockSpec((1, 1, FC_H), lambda g: (g, 0, 0)),       # fc2 bias
            pl.BlockSpec((1, FC_H, HEAD_PAD), lambda g: (g, 0, 0)),# head weight (padded)
            pl.BlockSpec((1, 1, HEAD_PAD), lambda g: (g, 0, 0)),   # head bias (padded)
        ],
        out_specs=pl.BlockSpec((1, B, HEAD_PAD), lambda g: (g, 0, 0)),
        compiler_params=pltpu.CompilerParams(
            dimension_semantics=("parallel",)),
    )(a3f, pp["fc1w"], pp["fc1b"], pp["fc2w"], pp["fc2b"], pp["ow"], pp["ob"])


# ---------------------------------------------------------------------------
# XLA-side glue (tiny, fuses into a couple of ops)
# ---------------------------------------------------------------------------
def _conv1_patches(x):
    """5x5 'same' im2col of the (B, 96) input; columns ordered (dy, dx)."""
    B = x.shape[0]
    xi = x.reshape(B, H, W)
    xp = jnp.pad(xi, ((0, 0), (2, 2), (2, 2)))
    cols = [xp[:, dy:dy + H, dx:dx + W] for dy in range(5) for dx in range(5)]
    return jnp.stack(cols, axis=-1).reshape(B * H * W, 25)


def _border_masks(B):
    """(9, B*H*W, 1) f32; 1 where the 3x3 tap (dy, dx) lands inside the image."""
    r = np.arange(B * H * W)
    y = (r // W) % H
    x = r % W
    ms = []
    for dy in range(3):
        for dx in range(3):
            ys, xs = y + dy - 1, x + dx - 1
            ms.append((ys >= 0) & (ys < H) & (xs >= 0) & (xs < W))
    return jnp.asarray(np.stack(ms, 0)[..., None].astype(np.float32))


# ---------------------------------------------------------------------------
# Parameters: PyTorch-style init + one-time re-layout for the fused kernels
# ---------------------------------------------------------------------------
def init_params(key, num_actions):
    keys = jax.random.split(key, 24)
    it = iter(keys)

    def nrm(shape, scale=0.05):
        return (scale * jax.random.normal(next(it), shape)).astype(jnp.float32)

    def branch(out_dim):
        return {
            "conv1_w": nrm((25, 1, 5, 5)),   "conv1_b": nrm((25,)),
            "conv2_w": nrm((25, 25, 3, 3)),  "conv2_b": nrm((25,)),
            "conv3_w": nrm((25, 25, 3, 3)),  "conv3_b": nrm((25,)),
            # Linear weights stored pre-transposed as (in, out); fc1 rows are in
            # PyTorch NCHW-flatten order (c*H*W + y*W + x).
            "fc1_w": nrm((H * W * 25, 64)),  "fc1_b": nrm((64,)),
            "fc2_w": nrm((64, 64)),          "fc2_b": nrm((64,)),
            "out_w": nrm((64, out_dim)),     "out_b": nrm((out_dim,)),
        }

    return {"actor": branch(num_actions), "critic": branch(1)}


def prepare_params(params):
    """One-time re-layout: conv -> (tap, Cin, Cout), fc1 rows -> NHWC order,
    heads zero-padded to HEAD_PAD, actor/critic stacked on a leading axis."""
    def conv_mat(w):   # (Cout, Cin, kh, kw) -> (kh*kw*Cin, Cout), rows (dy, dx, ci)
        co, ci, kh, kw = w.shape
        return jnp.transpose(w, (2, 3, 1, 0)).reshape(kh * kw * ci, co)

    def fc1_nhwc(w):   # rows c*H*W + y*W + x  ->  rows (y*W + x)*C + c
        return (w.reshape(C, H, W, FC_H)
                 .transpose(1, 2, 0, 3)
                 .reshape(H * W * C, FC_H))

    def head_w(p):
        w = p["out_w"]
        return jnp.pad(w, ((0, 0), (0, HEAD_PAD - w.shape[1])))

    def head_b(p):
        b = p["out_b"]
        return jnp.pad(b, (0, HEAD_PAD - b.shape[0])).reshape(1, HEAD_PAD)

    def stack(fn):
        return jnp.stack([fn(params["actor"]), fn(params["critic"])], axis=0)

    return {
        "w1": stack(lambda p: conv_mat(p["conv1_w"])),                    # (2, 25, 25)
        "b1": stack(lambda p: p["conv1_b"].reshape(1, C)),                # (2, 1, 25)
        "w2": stack(lambda p: conv_mat(p["conv2_w"]).reshape(9, C, C)),   # (2, 9, 25, 25)
        "b2": stack(lambda p: p["conv2_b"].reshape(1, C)),
        "w3": stack(lambda p: conv_mat(p["conv3_w"]).reshape(9, C, C)),
        "b3": stack(lambda p: p["conv3_b"].reshape(1, C)),
        "fc1w": stack(lambda p: fc1_nhwc(p["fc1_w"])),                    # (2, 2400, 64)
        "fc1b": stack(lambda p: p["fc1_b"].reshape(1, FC_H)),
        "fc2w": stack(lambda p: p["fc2_w"]),                              # (2, 64, 64)
        "fc2b": stack(lambda p: p["fc2_b"].reshape(1, FC_H)),
        "ow": stack(head_w),                                              # (2, 64, 8)
        "ob": stack(head_b),                                              # (2, 1, 8)
    }


# ---------------------------------------------------------------------------
# Forward pass (matches ActorCritic.forward)
# ---------------------------------------------------------------------------
@jax.jit
def actor_critic_forward(prepped, x):
    B = x.shape[0]
    patches1 = _conv1_patches(x)                # (B*96, 25)  tiny XLA prelude
    masks = _border_masks(B)                    # compile-time constant
    a3 = _conv_stage(patches1, masks, prepped)  # (2, B*96, 25)
    a3f = a3.reshape(2, B, H * W * C)           # NHWC flatten; matches fc1w perm
    out = _fc_stage(a3f, prepped)               # (2, B, HEAD_PAD)
    return out[0, :, :NUM_ACTIONS], out[1, :, :1]


# ---------------------------------------------------------------------------
# Pure-JAX reference (same semantics as the PyTorch module) for a self-check
# ---------------------------------------------------------------------------
def reference_forward(params, x):
    def conv(a, w, b):
        y = jax.lax.conv_general_dilated(
            a, w, window_strides=(1, 1), padding="SAME",
            dimension_numbers=("NCHW", "OIHW", "NCHW"))
        return jnp.tanh(y + b[None, :, None, None])

    def branch(p):
        B = x.shape[0]
        a = x.reshape(B, 1, H, W)
        a = conv(a, p["conv1_w"], p["conv1_b"])
        a = conv(a, p["conv2_w"], p["conv2_b"])
        a = conv(a, p["conv3_w"], p["conv3_b"])
        a = a.reshape(B, -1)                         # NCHW flatten
        a = jnp.tanh(a @ p["fc1_w"] + p["fc1_b"])
        a = jnp.tanh(a @ p["fc2_w"] + p["fc2_b"])
        return a @ p["out_w"] + p["out_b"]

    return branch(params["actor"]), branch(params["critic"])


if __name__ == "__main__":
    key = jax.random.PRNGKey(0)
    k_param, k_x = jax.random.split(key)
    params = init_params(k_param, NUM_ACTIONS)
    prepped = prepare_params(params)

    B = 2
    x = jax.random.normal(k_x, (B, H * W), dtype=jnp.float32)   # (2, 96)

    logits, value = actor_critic_forward(prepped, x)
    jax.block_until_ready((logits, value))

    assert logits.shape == (B, NUM_ACTIONS), logits.shape
    assert value.shape == (B, 1), value.shape

    ref_logits, ref_value = reference_forward(params, x)
    err = max(float(jnp.max(jnp.abs(logits - ref_logits))),
              float(jnp.max(jnp.abs(value - ref_value))))
    assert err < 2e-2, f"mismatch vs pure-JAX reference: {err}"
    print("KERNEL_OK")
</pallas_src>

<mosaic_0001>
module attributes {stable_mosaic.version = 11 : i64} {
  func.func @_conv_stage_kernel(%arg0: i32, %arg1: memref<9x192x1xf32, #tpu.memory_space<vmem>>, %arg2: memref<192x25xf32, #tpu.memory_space<vmem>>, %arg3: memref<1x25x25xf32, #tpu.memory_space<vmem>>, %arg4: memref<1x1x25xf32, #tpu.memory_space<vmem>>, %arg5: memref<1x9x25x25xf32, #tpu.memory_space<vmem>>, %arg6: memref<1x1x25xf32, #tpu.memory_space<vmem>>, %arg7: memref<1x9x25x25xf32, #tpu.memory_space<vmem>>, %arg8: memref<1x1x25xf32, #tpu.memory_space<vmem>>, %arg9: memref<1x192x25xf32, #tpu.memory_space<vmem>>, %arg10: memref<224x25xf32, #tpu.memory_space<vmem>>) attributes {dimension_semantics = [#tpu.dimension_semantics<parallel>], iteration_bounds = array<i64: 2>, scalar_prefetch = 0 : i64, scratch_operands = 1 : i64, tpu.core_type = #tpu.core_type<tc>, window_params = [{pipeline_mode = #tpu.pipeline_mode<synchronous>, transform_indices = @transform_0, window_bounds = array<i64: 9, 192, 1>}, {pipeline_mode = #tpu.pipeline_mode<synchronous>, transform_indices = @transform_1, window_bounds = array<i64: 192, 25>}, {transform_indices = @transform_2, window_bounds = array<i64: 1, 25, 25>}, {transform_indices = @transform_3, window_bounds = array<i64: 1, 1, 25>}, {transform_indices = @transform_4, window_bounds = array<i64: 1, 9, 25, 25>}, {transform_indices = @transform_5, window_bounds = array<i64: 1, 1, 25>}, {transform_indices = @transform_6, window_bounds = array<i64: 1, 9, 25, 25>}, {transform_indices = @transform_7, window_bounds = array<i64: 1, 1, 25>}, {transform_indices = @transform_8, window_bounds = array<i64: 1, 192, 25>}]} {
    %cst = arith.constant 0.000000e+00 : f32
    %0 = vector.broadcast %cst : f32 to vector<224x25xf32>
    %c0 = arith.constant 0 : index
    %c0_0 = arith.constant 0 : index
    %1 = vector.load %arg10[%c0, %c0_0] : memref<224x25xf32, #tpu.memory_space<vmem>>, vector<224x25xf32>
    tpu.vector_store %arg10[%c0, %c0_0], %0 {strides = array<i32>} : memref<224x25xf32, #tpu.memory_space<vmem>>, vector<224x25xf32>,
    %c0_1 = arith.constant 0 : index
    %c0_2 = arith.constant 0 : index
    %2 = vector.load %arg2[%c0_1, %c0_2] : memref<192x25xf32, #tpu.memory_space<vmem>>, vector<192x25xf32>
    %c0_3 = arith.constant 0 : index
    %c0_4 = arith.constant 0 : index
    %c0_5 = arith.constant 0 : index
    %3 = vector.load %arg3[%c0_3, %c0_4, %c0_5] : memref<1x25x25xf32, #tpu.memory_space<vmem>>, vector<1x25x25xf32>
    %4 = vector.shape_cast %3 : vector<1x25x25xf32> to vector<25x25xf32>
    %cst_6 = arith.constant dense<0.000000e+00> : vector<192x25xf32>
    %5 = tpu.matmul %2, %4, %cst_6 {dimension_numbers = #tpu.dot_dimension_numbers<[1], [0], [0], [1], [0, 0, 1, 1], [], []>} : vector<192x25xf32>, vector<25x25xf32>, vector<192x25xf32> -> vector<192x25xf32>
    %c0_7 = arith.constant 0 : index
    %c0_8 = arith.constant 0 : index
    %c0_9 = arith.constant 0 : index
    %6 = vector.load %arg4[%c0_7, %c0_8, %c0_9] : memref<1x1x25xf32, #tpu.memory_space<vmem>>, vector<1x1x25xf32>
    %7 = vector.shape_cast %6 : vector<1x1x25xf32> to vector<1x25xf32>
    %8 = vector.broadcast %7 : vector<1x25xf32> to vector<192x25xf32>
    %9 = arith.addf %5, %8 : vector<192x25xf32>
    %10 = math.tanh %9 : vector<192x25xf32>
    %c16 = arith.constant 16 : index
    %c0_10 = arith.constant 0 : index
    %11 = vector.load %arg10[%c16, %c0_10] : memref<224x25xf32, #tpu.memory_space<vmem>>, vector<192x25xf32>
    tpu.vector_store %arg10[%c16, %c0_10], %10 {strides = array<i32>} : memref<224x25xf32, #tpu.memory_space<vmem>>, vector<192x25xf32>,
    %cst_11 = arith.constant 0.000000e+00 : f32
    %12 = vector.broadcast %cst_11 : f32 to vector<192x25xf32>
    %c7 = arith.constant 7 : index
    %c0_12 = arith.constant 0 : index
    %13 = vector.load %arg10[%c7, %c0_12] : memref<224x25xf32, #tpu.memory_space<vmem>>, vector<192x25xf32>
    %c0_13 = arith.constant 0 : index
    %c0_14 = arith.constant 0 : index
    %c0_15 = arith.constant 0 : index
    %14 = vector.load %arg1[%c0_13, %c0_14, %c0_15] : memref<9x192x1xf32, #tpu.memory_space<vmem>>, vector<1x192x1xf32>
    %15 = vector.shape_cast %14 : vector<1x192x1xf32> to vector<192x1xf32>
    %16 = vector.broadcast %15 : vector<192x1xf32> to vector<192x25xf32>
    %17 = arith.mulf %13, %16 : vector<192x25xf32>
    %c0_16 = arith.constant 0 : index
    %c0_17 = arith.constant 0 : index
    %c0_18 = arith.constant 0 : index
    %c0_19 = arith.constant 0 : index
    %18 = vector.load %arg5[%c0_16, %c0_17, %c0_18, %c0_19] : memref<1x9x25x25xf32, #tpu.memory_space<vmem>>, vector<1x1x25x25xf32>
    %19 = vector.shape_cast %18 : vector<1x1x25x25xf32> to vector<25x25xf32>
    %cst_20 = arith.constant dense<0.000000e+00> : vector<192x25xf32>
    %20 = tpu.matmul %17, %19, %cst_20 {dimension_numbers = #tpu.dot_dimension_numbers<[1], [0], [0], [1], [0, 0, 1, 1], [], []>} : vector<192x25xf32>, vector<25x25xf32>, vector<192x25xf32> -> vector<192x25xf32>
    %21 = arith.addf %12, %20 : vector<192x25xf32>
    %c8 = arith.constant 8 : index
    %c0_21 = arith.constant 0 : index
    %22 = vector.load %arg10[%c8, %c0_21] : memref<224x25xf32, #tpu.memory_space<vmem>>, vector<192x25xf32>
    %c1 = arith.constant 1 : index
    %c0_22 = arith.constant 0 : index
    %c0_23 = arith.constant 0 : index
    %23 = vector.load %arg1[%c1, %c0_22, %c0_23] : memref<9x192x1xf32, #tpu.memory_space<vmem>>, vector<1x192x1xf32>
    %24 = vector.shape_cast %23 : vector<1x192x1xf32> to vector<192x1xf32>
    %25 = vector.broadcast %24 : vector<192x1xf32> to vector<192x25xf32>
    %26 = arith.mulf %22, %25 : vector<192x25xf32>
    %c0_24 = arith.constant 0 : index
    %c1_25 = arith.constant 1 : index
    %c0_26 = arith.constant 0 : index
    %c0_27 = arith.constant 0 : index
    %27 = vector.load %arg5[%c0_24, %c1_25, %c0_26, %c0_27] : memref<1x9x25x25xf32, #tpu.memory_space<vmem>>, vector<1x1x25x25xf32>
    %28 = vector.shape_cast %27 : vector<1x1x25x25xf32> to vector<25x25xf32>
    %cst_28 = arith.constant dense<0.000000e+00> : vector<192x25xf32>
    %29 = tpu.matmul %26, %28, %cst_28 {dimension_numbers = #tpu.dot_dimension_numbers<[1], [0], [0], [1], [0, 0, 1, 1], [], []>} : vector<192x25xf32>, vector<25x25xf32>, vector<192x25xf32> -> vector<192x25xf32>
    %30 = arith.addf %21, %29 : vector<192x25xf32>
    %c9 = arith.constant 9 : index
    %c0_29 = arith.constant 0 : index
    %31 = vector.load %arg10[%c9, %c0_29] : memref<224x25xf32, #tpu.memory_space<vmem>>, vector<192x25xf32>
    %c2 = arith.constant 2 : index
    %c0_30 = arith.constant 0 : index
    %c0_31 = arith.constant 0 : index
    %32 = vector.load %arg1[%c2, %c0_30, %c0_31] : memref<9x192x1xf32, #tpu.memory_space<vmem>>, vector<1x192x1xf32>
    %33 = vector.shape_cast %32 : vector<1x192x1xf32> to vector<192x1xf32>
    %34 = vector.broadcast %33 : vector<192x1xf32> to vector<192x25xf32>
    %35 = arith.mulf %31, %34 : vector<192x25xf32>
    %c0_32 = arith.constant 0 : index
    %c2_33 = arith.constant 2 : index
    %c0_34 = arith.constant 0 : index
    %c0_35 = arith.constant 0 : index
    %36 = vector.load %arg5[%c0_32, %c2_33, %c0_34, %c0_35] : memref<1x9x25x25xf32, #tpu.memory_space<vmem>>, vector<1x1x25x25xf32>
    %37 = vector.shape_cast %36 : vector<1x1x25x25xf32> to vector<25x25xf32>
    %cst_36 = arith.constant dense<0.000000e+00> : vector<192x25xf32>
    %38 = tpu.matmul %35, %37, %cst_36 {dimension_numbers = #tpu.dot_dimension_numbers<[1], [0], [0], [1], [0, 0, 1, 1], [], []>} : vector<192x25xf32>, vector<25x25xf32>, vector<192x25xf32> -> vector<192x25xf32>
    %39 = arith.addf %30, %38 : vector<192x25xf32>
    %c15 = arith.constant 15 : index
    %c0_37 = arith.constant 0 : index
    %40 = vector.load %arg10[%c15, %c0_37] : memref<224x25xf32, #tpu.memory_space<vmem>>, vector<192x25xf32>
    %c3 = arith.constant 3 : index
    %c0_38 = arith.constant 0 : index
    %c0_39 = arith.constant 0 : index
    %41 = vector.load %arg1[%c3, %c0_38, %c0_39] : memref<9x192x1xf32, #tpu.memory_space<vmem>>, vector<1x192x1xf32>
    %42 = vector.shape_cast %41 : vector<1x192x1xf32> to vector<192x1xf32>
    %43 = vector.broadcast %42 : vector<192x1xf32> to vector<192x25xf32>
    %44 = arith.mulf %40, %43 : vector<192x25xf32>
    %c0_40 = arith.constant 0 : index
    %c3_41 = arith.constant 3 : index
    %c0_42 = arith.constant 0 : index
    %c0_43 = arith.constant 0 : index
    %45 = vector.load %arg5[%c0_40, %c3_41, %c0_42, %c0_43] : memref<1x9x25x25xf32, #tpu.memory_space<vmem>>, vector<1x1x25x25xf32>
    %46 = vector.shape_cast %45 : vector<1x1x25x25xf32> to vector<25x25xf32>
    %cst_44 = arith.constant dense<0.000000e+00> : vector<192x25xf32>
    %47 = tpu.matmul %44, %46, %cst_44 {dimension_numbers = #tpu.dot_dimension_numbers<[1], [0], [0], [1], [0, 0, 1, 1], [], []>} : vector<192x25xf32>, vector<25x25xf32>, vector<192x25xf32> -> vector<192x25xf32>
    %48 = arith.addf %39, %47 : vector<192x25xf32>
    %c16_45 = arith.constant 16 : index
    %c0_46 = arith.constant 0 : index
    %49 = vector.load %arg10[%c16_45, %c0_46] : memref<224x25xf32, #tpu.memory_space<vmem>>, vector<192x25xf32>
    %c4 = arith.constant 4 : index
    %c0_47 = arith.constant 0 : index
    %c0_48 = arith.constant 0 : index
    %50 = vector.load %arg1[%c4, %c0_47, %c0_48] : memref<9x192x1xf32, #tpu.memory_space<vmem>>, vector<1x192x1xf32>
    %51 = vector.shape_cast %50 : vector<1x192x1xf32> to vector<192x1xf32>
    %52 = vector.broadcast %51 : vector<192x1xf32> to vector<192x25xf32>
    %53 = arith.mulf %49, %52 : vector<192x25xf32>
    %c0_49 = arith.constant 0 : index
    %c4_50 = arith.constant 4 : index
    %c0_51 = arith.constant 0 : index
    %c0_52 = arith.constant 0 : index
    %54 = vector.load %arg5[%c0_49, %c4_50, %c0_51, %c0_52] : memref<1x9x25x25xf32, #tpu.memory_space<vmem>>, vector<1x1x25x25xf32>
    %55 = vector.shape_cast %54 : vector<1x1x25x25xf32> to vector<25x25xf32>
    %cst_53 = arith.constant dense<0.000000e+00> : vector<192x25xf32>
    %56 = tpu.matmul %53, %55, %cst_53 {dimension_numbers = #tpu.dot_dimension_numbers<[1], [0], [0], [1], [0, 0, 1, 1], [], []>} : vector<192x25xf32>, vector<25x25xf32>, vector<192x25xf32> -> vector<192x25xf32>
    %57 = arith.addf %48, %56 : vector<192x25xf32>
    %c17 = arith.constant 17 : index
    %c0_54 = arith.constant 0 : index
    %58 = vector.load %arg10[%c17, %c0_54] : memref<224x25xf32, #tpu.memory_space<vmem>>, vector<192x25xf32>
    %c5 = arith.constant 5 : index
    %c0_55 = arith.constant 0 : index
    %c0_56 = arith.constant 0 : index
    %59 = vector.load %arg1[%c5, %c0_55, %c0_56] : memref<9x192x1xf32, #tpu.memory_space<vmem>>, vector<1x192x1xf32>
    %60 = vector.shape_cast %59 : vector<1x192x1xf32> to vector<192x1xf32>
    %61 = vector.broadcast %60 : vector<192x1xf32> to vector<192x25xf32>
    %62 = arith.mulf %58, %61 : vector<192x25xf32>
    %c0_57 = arith.constant 0 : index
    %c5_58 = arith.constant 5 : index
    %c0_59 = arith.constant 0 : index
    %c0_60 = arith.constant 0 : index
    %63 = vector.load %arg5[%c0_57, %c5_58, %c0_59, %c0_60] : memref<1x9x25x25xf32, #tpu.memory_space<vmem>>, vector<1x1x25x25xf32>
    %64 = vector.shape_cast %63 : vector<1x1x25x25xf32> to vector<25x25xf32>
    %cst_61 = arith.constant dense<0.000000e+00> : vector<192x25xf32>
    %65 = tpu.matmul %62, %64, %cst_61 {dimension_numbers = #tpu.dot_dimension_numbers<[1], [0], [0], [1], [0, 0, 1, 1], [], []>} : vector<192x25xf32>, vector<25x25xf32>, vector<192x25xf32> -> vector<192x25xf32>
    %66 = arith.addf %57, %65 : vector<192x25xf32>
    %c23 = arith.constant 23 : index
    %c0_62 = arith.constant 0 : index
    %67 = vector.load %arg10[%c23, %c0_62] : memref<224x25xf32, #tpu.memory_space<vmem>>, vector<192x25xf32>
    %c6 = arith.constant 6 : index
    %c0_63 = arith.constant 0 : index
    %c0_64 = arith.constant 0 : index
    %68 = vector.load %arg1[%c6, %c0_63, %c0_64] : memref<9x192x1xf32, #tpu.memory_space<vmem>>, vector<1x192x1xf32>
    %69 = vector.shape_cast %68 : vector<1x192x1xf32> to vector<192x1xf32>
    %70 = vector.broadcast %69 : vector<192x1xf32> to vector<192x25xf32>
    %71 = arith.mulf %67, %70 : vector<192x25xf32>
    %c0_65 = arith.constant 0 : index
    %c6_66 = arith.constant 6 : index
    %c0_67 = arith.constant 0 : index
    %c0_68 = arith.constant 0 : index
    %72 = vector.load %arg5[%c0_65, %c6_66, %c0_67, %c0_68] : memref<1x9x25x25xf32, #tpu.memory_space<vmem>>, vector<1x1x25x25xf32>
    %73 = vector.shape_cast %72 : vector<1x1x25x25xf32> to vector<25x25xf32>
    %cst_69 = arith.constant dense<0.000000e+00> : vector<192x25xf32>
    %74 = tpu.matmul %71, %73, %cst_69 {dimension_numbers = #tpu.dot_dimension_numbers<[1], [0], [0], [1], [0, 0, 1, 1], [], []>} : vector<192x25xf32>, vector<25x25xf32>, vector<192x25xf32> -> vector<192x25xf32>
    %75 = arith.addf %66, %74 : vector<192x25xf32>
    %c24 = arith.constant 24 : index
    %c0_70 = arith.constant 0 : index
    %76 = vector.load %arg10[%c24, %c0_70] : memref<224x25xf32, #tpu.memory_space<vmem>>, vector<192x25xf32>
    %c7_71 = arith.constant 7 : index
    %c0_72 = arith.constant 0 : index
    %c0_73 = arith.constant 0 : index
    %77 = vector.load %arg1[%c7_71, %c0_72, %c0_73] : memref<9x192x1xf32, #tpu.memory_space<vmem>>, vector<1x192x1xf32>
    %78 = vector.shape_cast %77 : vector<1x192x1xf32> to vector<192x1xf32>
    %79 = vector.broadcast %78 : vector<192x1xf32> to vector<192x25xf32>
    %80 = arith.mulf %76, %79 : vector<192x25xf32>
    %c0_74 = arith.constant 0 : index
    %c7_75 = arith.constant 7 : index
    %c0_76 = arith.constant 0 : index
    %c0_77 = arith.constant 0 : index
    %81 = vector.load %arg5[%c0_74, %c7_75, %c0_76, %c0_77] : memref<1x9x25x25xf32, #tpu.memory_space<vmem>>, vector<1x1x25x25xf32>
    %82 = vector.shape_cast %81 : vector<1x1x25x25xf32> to vector<25x25xf32>
    %cst_78 = arith.constant dense<0.000000e+00> : vector<192x25xf32>
    %83 = tpu.matmul %80, %82, %cst_78 {dimension_numbers = #tpu.dot_dimension_numbers<[1], [0], [0], [1], [0, 0, 1, 1], [], []>} : vector<192x25xf32>, vector<25x25xf32>, vector<192x25xf32> -> vector<192x25xf32>
    %84 = arith.addf %75, %83 : vector<192x25xf32>
    %c25 = arith.constant 25 : index
    %c0_79 = arith.constant 0 : index
    %85 = vector.load %arg10[%c25, %c0_79] : memref<224x25xf32, #tpu.memory_space<vmem>>, vector<192x25xf32>
    %c8_80 = arith.constant 8 : index
    %c0_81 = arith.constant 0 : index
    %c0_82 = arith.constant 0 : index
    %86 = vector.load %arg1[%c8_80, %c0_81, %c0_82] : memref<9x192x1xf32, #tpu.memory_space<vmem>>, vector<1x192x1xf32>
    %87 = vector.shape_cast %86 : vector<1x192x1xf32> to vector<192x1xf32>
    %88 = vector.broadcast %87 : vector<192x1xf32> to vector<192x25xf32>
    %89 = arith.mulf %85, %88 : vector<192x25xf32>
    %c0_83 = arith.constant 0 : index
    %c8_84 = arith.constant 8 : index
    %c0_85 = arith.constant 0 : index
    %c0_86 = arith.constant 0 : index
    %90 = vector.load %arg5[%c0_83, %c8_84, %c0_85, %c0_86] : memref<1x9x25x25xf32, #tpu.memory_space<vmem>>, vector<1x1x25x25xf32>
    %91 = vector.shape_cast %90 : vector<1x1x25x25xf32> to vector<25x25xf32>
    %cst_87 = arith.constant dense<0.000000e+00> : vector<192x25xf32>
    %92 = tpu.matmul %89, %91, %cst_87 {dimension_numbers = #tpu.dot_dimension_numbers<[1], [0], [0], [1], [0, 0, 1, 1], [], []>} : vector<192x25xf32>, vector<25x25xf32>, vector<192x25xf32> -> vector<192x25xf32>
    %93 = arith.addf %84, %92 : vector<192x25xf32>
    %c0_88 = arith.constant 0 : index
    %c0_89 = arith.constant 0 : index
    %c0_90 = arith.constant 0 : index
    %94 = vector.load %arg6[%c0_88, %c0_89, %c0_90] : memref<1x1x25xf32, #tpu.memory_space<vmem>>, vector<1x1x25xf32>
    %95 = vector.shape_cast %94 : vector<1x1x25xf32> to vector<1x25xf32>
    %96 = vector.broadcast %95 : vector<1x25xf32> to vector<192x25xf32>
    %97 = arith.addf %93, %96 : vector<192x25xf32>
    %98 = math.tanh %97 : vector<192x25xf32>
    %c16_91 = arith.constant 16 : index
    %c0_92 = arith.constant 0 : index
    %99 = vector.load %arg10[%c16_91, %c0_92] : memref<224x25xf32, #tpu.memory_space<vmem>>, vector<192x25xf32>
    tpu.vector_store %arg10[%c16_91, %c0_92], %98 {strides = array<i32>} : memref<224x25xf32, #tpu.memory_space<vmem>>, vector<192x25xf32>,
    %cst_93 = arith.constant 0.000000e+00 : f32
    %100 = vector.broadcast %cst_93 : f32 to vector<192x25xf32>
    %c7_94 = arith.constant 7 : index
    %c0_95 = arith.constant 0 : index
    %101 = vector.load %arg10[%c7_94, %c0_95] : memref<224x25xf32, #tpu.memory_space<vmem>>, vector<192x25xf32>
    %c0_96 = arith.constant 0 : index
    %c0_97 = arith.constant 0 : index
    %c0_98 = arith.constant 0 : index
    %102 = vector.load %arg1[%c0_96, %c0_97, %c0_98] : memref<9x192x1xf32, #tpu.memory_space<vmem>>, vector<1x192x1xf32>
    %103 = vector.shape_cast %102 : vector<1x192x1xf32> to vector<192x1xf32>
    %104 = vector.broadcast %103 : vector<192x1xf32> to vector<192x25xf32>
    %105 = arith.mulf %101, %104 : vector<192x25xf32>
    %c0_99 = arith.constant 0 : index
    %c0_100 = arith.constant 0 : index
    %c0_101 = arith.constant 0 : index
    %c0_102 = arith.constant 0 : index
    %106 = vector.load %arg7[%c0_99, %c0_100, %c0_101, %c0_102] : memref<1x9x25x25xf32, #tpu.memory_space<vmem>>, vector<1x1x25x25xf32>
    %107 = vector.shape_cast %106 : vector<1x1x25x25xf32> to vector<25x25xf32>
    %cst_103 = arith.constant dense<0.000000e+00> : vector<192x25xf32>
    %108 = tpu.matmul %105, %107, %cst_103 {dimension_numbers = #tpu.dot_dimension_numbers<[1], [0], [0], [1], [0, 0, 1, 1], [], []>} : vector<192x25xf32>, vector<25x25xf32>, vector<192x25xf32> -> vector<192x25xf32>
    %109 = arith.addf %100, %108 : vector<192x25xf32>
    %c8_104 = arith.constant 8 : index
    %c0_105 = arith.constant 0 : index
    %110 = vector.load %arg10[%c8_104, %c0_105] : memref<224x25xf32, #tpu.memory_space<vmem>>, vector<192x25xf32>
    %c1_106 = arith.constant 1 : index
    %c0_107 = arith.constant 0 : index
    %c0_108 = arith.constant 0 : index
    %111 = vector.load %arg1[%c1_106, %c0_107, %c0_108] : memref<9x192x1xf32, #tpu.memory_space<vmem>>, vector<1x192x1xf32>
    %112 = vector.shape_cast %111 : vector<1x192x1xf32> to vector<192x1xf32>
    %113 = vector.broadcast %112 : vector<192x1xf32> to vector<192x25xf32>
    %114 = arith.mulf %110, %113 : vector<192x25xf32>
    %c0_109 = arith.constant 0 : index
    %c1_110 = arith.constant 1 : index
    %c0_111 = arith.constant 0 : index
    %c0_112 = arith.constant 0 : index
    %115 = vector.load %arg7[%c0_109, %c1_110, %c0_111, %c0_112] : memref<1x9x25x25xf32, #tpu.memory_space<vmem>>, vector<1x1x25x25xf32>
    %116 = vector.shape_cast %115 : vector<1x1x25x25xf32> to vector<25x25xf32>
    %cst_113 = arith.constant dense<0.000000e+00> : vector<192x25xf32>
    %117 = tpu.matmul %114, %116, %cst_113 {dimension_numbers = #tpu.dot_dimension_numbers<[1], [0], [0], [1], [0, 0, 1, 1], [], []>} : vector<192x25xf32>, vector<25x25xf32>, vector<192x25xf32> -> vector<192x25xf32>
    %118 = arith.addf %109, %117 : vector<192x25xf32>
    %c9_114 = arith.constant 9 : index
    %c0_115 = arith.constant 0 : index
    %119 = vector.load %arg10[%c9_114, %c0_115] : memref<224x25xf32, #tpu.memory_space<vmem>>, vector<192x25xf32>
    %c2_116 = arith.constant 2 : index
    %c0_117 = arith.constant 0 : index
    %c0_118 = arith.constant 0 : index
    %120 = vector.load %arg1[%c2_116, %c0_117, %c0_118] : memref<9x192x1xf32, #tpu.memory_space<vmem>>, vector<1x192x1xf32>
    %121 = vector.shape_cast %120 : vector<1x192x1xf32> to vector<192x1xf32>
    %122 = vector.broadcast %121 : vector<192x1xf32> to vector<192x25xf32>
    %123 = arith.mulf %119, %122 : vector<192x25xf32>
    %c0_119 = arith.constant 0 : index
    %c2_120 = arith.constant 2 : index
    %c0_121 = arith.constant 0 : index
    %c0_122 = arith.constant 0 : index
    %124 = vector.load %arg7[%c0_119, %c2_120, %c0_121, %c0_122] : memref<1x9x25x25xf32, #tpu.memory_space<vmem>>, vector<1x1x25x25xf32>
    %125 = vector.shape_cast %124 : vector<1x1x25x25xf32> to vector<25x25xf32>
    %cst_123 = arith.constant dense<0.000000e+00> : vector<192x25xf32>
    %126 = tpu.matmul %123, %125, %cst_123 {dimension_numbers = #tpu.dot_dimension_numbers<[1], [0], [0], [1], [0, 0, 1, 1], [], []>} : vector<192x25xf32>, vector<25x25xf32>, vector<192x25xf32> -> vector<192x25xf32>
    %127 = arith.addf %118, %126 : vector<192x25xf32>
    %c15_124 = arith.constant 15 : index
    %c0_125 = arith.constant 0 : index
    %128 = vector.load %arg10[%c15_124, %c0_125] : memref<224x25xf32, #tpu.memory_space<vmem>>, vector<192x25xf32>
    %c3_126 = arith.constant 3 : index
    %c0_127 = arith.constant 0 : index
    %c0_128 = arith.constant 0 : index
    %129 = vector.load %arg1[%c3_126, %c0_127, %c0_128] : memref<9x192x1xf32, #tpu.memory_space<vmem>>, vector<1x192x1xf32>
    %130 = vector.shape_cast %129 : vector<1x192x1xf32> to vector<192x1xf32>
    %131 = vector.broadcast %130 : vector<192x1xf32> to vector<192x25xf32>
    %132 = arith.mulf %128, %131 : vector<192x25xf32>
    %c0_129 = arith.constant 0 : index
    %c3_130 = arith.constant 3 : index
    %c0_131 = arith.constant 0 : index
    %c0_132 = arith.constant 0 : index
    %133 = vector.load %arg7[%c0_129, %c3_130, %c0_131, %c0_132] : memref<1x9x25x25xf32, #tpu.memory_space<vmem>>, vector<1x1x25x25xf32>
    %134 = vector.shape_cast %133 : vector<1x1x25x25xf32> to vector<25x25xf32>
    %cst_133 = arith.constant dense<0.000000e+00> : vector<192x25xf32>
    %135 = tpu.matmul %132, %134, %cst_133 {dimension_numbers = #tpu.dot_dimension_numbers<[1], [0], [0], [1], [0, 0, 1, 1], [], []>} : vector<192x25xf32>, vector<25x25xf32>, vector<192x25xf32> -> vector<192x25xf32>
    %136 = arith.addf %127, %135 : vector<192x25xf32>
    %c16_134 = arith.constant 16 : index
    %c0_135 = arith.constant 0 : index
    %137 = vector.load %arg10[%c16_134, %c0_135] : memref<224x25xf32, #tpu.memory_space<vmem>>, vector<192x25xf32>
    %c4_136 = arith.constant 4 : index
    %c0_137 = arith.constant 0 : index
    %c0_138 = arith.constant 0 : index
    %138 = vector.load %arg1[%c4_136, %c0_137, %c0_138] : memref<9x192x1xf32, #tpu.memory_space<vmem>>, vector<1x192x1xf32>
    %139 = vector.shape_cast %138 : vector<1x192x1xf32> to vector<192x1xf32>
    %140 = vector.broadcast %139 : vector<192x1xf32> to vector<192x25xf32>
    %141 = arith.mulf %137, %140 : vector<192x25xf32>
    %c0_139 = arith.constant 0 : index
    %c4_140 = arith.constant 4 : index
    %c0_141 = arith.constant 0 : index
    %c0_142 = arith.constant 0 : index
    %142 = vector.load %arg7[%c0_139, %c4_140, %c0_141, %c0_142] : memref<1x9x25x25xf32, #tpu.memory_space<vmem>>, vector<1x1x25x25xf32>
    %143 = vector.shape_cast %142 : vector<1x1x25x25xf32> to vector<25x25xf32>
    %cst_143 = arith.constant dense<0.000000e+00> : vector<192x25xf32>
    %144 = tpu.matmul %141, %143, %cst_143 {dimension_numbers = #tpu.dot_dimension_numbers<[1], [0], [0], [1], [0, 0, 1, 1], [], []>} : vector<192x25xf32>, vector<25x25xf32>, vector<192x25xf32> -> vector<192x25xf32>
    %145 = arith.addf %136, %144 : vector<192x25xf32>
    %c17_144 = arith.constant 17 : index
    %c0_145 = arith.constant 0 : index
    %146 = vector.load %arg10[%c17_144, %c0_145] : memref<224x25xf32, #tpu.memory_space<vmem>>, vector<192x25xf32>
    %c5_146 = arith.constant 5 : index
    %c0_147 = arith.constant 0 : index
    %c0_148 = arith.constant 0 : index
    %147 = vector.load %arg1[%c5_146, %c0_147, %c0_148] : memref<9x192x1xf32, #tpu.memory_space<vmem>>, vector<1x192x1xf32>
    %148 = vector.shape_cast %147 : vector<1x192x1xf32> to vector<192x1xf32>
    %149 = vector.broadcast %148 : vector<192x1xf32> to vector<192x25xf32>
    %150 = arith.mulf %146, %149 : vector<192x25xf32>
    %c0_149 = arith.constant 0 : index
    %c5_150 = arith.constant 5 : index
    %c0_151 = arith.constant 0 : index
    %c0_152 = arith.constant 0 : index
    %151 = vector.load %arg7[%c0_149, %c5_150, %c0_151, %c0_152] : memref<1x9x25x25xf32, #tpu.memory_space<vmem>>, vector<1x1x25x25xf32>
    %152 = vector.shape_cast %151 : vector<1x1x25x25xf32> to vector<25x25xf32>
    %cst_153 = arith.constant dense<0.000000e+00> : vector<192x25xf32>
    %153 = tpu.matmul %150, %152, %cst_153 {dimension_numbers = #tpu.dot_dimension_numbers<[1], [0], [0], [1], [0, 0, 1, 1], [], []>} : vector<192x25xf32>, vector<25x25xf32>, vector<192x25xf32> -> vector<192x25xf32>
    %154 = arith.addf %145, %153 : vector<192x25xf32>
    %c23_154 = arith.constant 23 : index
    %c0_155 = arith.constant 0 : index
    %155 = vector.load %arg10[%c23_154, %c0_155] : memref<224x25xf32, #tpu.memory_space<vmem>>, vector<192x25xf32>
    %c6_156 = arith.constant 6 : index
    %c0_157 = arith.constant 0 : index
    %c0_158 = arith.constant 0 : index
    %156 = vector.load %arg1[%c6_156, %c0_157, %c0_158] : memref<9x192x1xf32, #tpu.memory_space<vmem>>, vector<1x192x1xf32>
    %157 = vector.shape_cast %156 : vector<1x192x1xf32> to vector<192x1xf32>
    %158 = vector.broadcast %157 : vector<192x1xf32> to vector<192x25xf32>
    %159 = arith.mulf %155, %158 : vector<192x25xf32>
    %c0_159 = arith.constant 0 : index
    %c6_160 = arith.constant 6 : index
    %c0_161 = arith.constant 0 : index
    %c0_162 = arith.constant 0 : index
    %160 = vector.load %arg7[%c0_159, %c6_160, %c0_161, %c0_162] : memref<1x9x25x25xf32, #tpu.memory_space<vmem>>, vector<1x1x25x25xf32>
    %161 = vector.shape_cast %160 : vector<1x1x25x25xf32> to vector<25x25xf32>
    %cst_163 = arith.constant dense<0.000000e+00> : vector<192x25xf32>
    %162 = tpu.matmul %159, %161, %cst_163 {dimension_numbers = #tpu.dot_dimension_numbers<[1], [0], [0], [1], [0, 0, 1, 1], [], []>} : vector<192x25xf32>, vector<25x25xf32>, vector<192x25xf32> -> vector<192x25xf32>
    %163 = arith.addf %154, %162 : vector<192x25xf32>
    %c24_164 = arith.constant 24 : index
    %c0_165 = arith.constant 0 : index
    %164 = vector.load %arg10[%c24_164, %c0_165] : memref<224x25xf32, #tpu.memory_space<vmem>>, vector<192x25xf32>
    %c7_166 = arith.constant 7 : index
    %c0_167 = arith.constant 0 : index
    %c0_168 = arith.constant 0 : index
    %165 = vector.load %arg1[%c7_166, %c0_167, %c0_168] : memref<9x192x1xf32, #tpu.memory_space<vmem>>, vector<1x192x1xf32>
    %166 = vector.shape_cast %165 : vector<1x192x1xf32> to vector<192x1xf32>
    %167 = vector.broadcast %166 : vector<192x1xf32> to vector<192x25xf32>
    %168 = arith.mulf %164, %167 : vector<192x25xf32>
    %c0_169 = arith.constant 0 : index
    %c7_170 = arith.constant 7 : index
    %c0_171 = arith.constant 0 : index
    %c0_172 = arith.constant 0 : index
    %169 = vector.load %arg7[%c0_169, %c7_170, %c0_171, %c0_172] : memref<1x9x25x25xf32, #tpu.memory_space<vmem>>, vector<1x1x25x25xf32>
    %170 = vector.shape_cast %169 : vector<1x1x25x25xf32> to vector<25x25xf32>
    %cst_173 = arith.constant dense<0.000000e+00> : vector<192x25xf32>
    %171 = tpu.matmul %168, %170, %cst_173 {dimension_numbers = #tpu.dot_dimension_numbers<[1], [0], [0], [1], [0, 0, 1, 1], [], []>} : vector<192x25xf32>, vector<25x25xf32>, vector<192x25xf32> -> vector<192x25xf32>
    %172 = arith.addf %163, %171 : vector<192x25xf32>
    %c25_174 = arith.constant 25 : index
    %c0_175 = arith.constant 0 : index
    %173 = vector.load %arg10[%c25_174, %c0_175] : memref<224x25xf32, #tpu.memory_space<vmem>>, vector<192x25xf32>
    %c8_176 = arith.constant 8 : index
    %c0_177 = arith.constant 0 : index
    %c0_178 = arith.constant 0 : index
    %174 = vector.load %arg1[%c8_176, %c0_177, %c0_178] : memref<9x192x1xf32, #tpu.memory_space<vmem>>, vector<1x192x1xf32>
    %175 = vector.shape_cast %174 : vector<1x192x1xf32> to vector<192x1xf32>
    %176 = vector.broadcast %175 : vector<192x1xf32> to vector<192x25xf32>
    %177 = arith.mulf %173, %176 : vector<192x25xf32>
    %c0_179 = arith.constant 0 : index
    %c8_180 = arith.constant 8 : index
    %c0_181 = arith.constant 0 : index
    %c0_182 = arith.constant 0 : index
    %178 = vector.load %arg7[%c0_179, %c8_180, %c0_181, %c0_182] : memref<1x9x25x25xf32, #tpu.memory_space<vmem>>, vector<1x1x25x25xf32>
    %179 = vector.shape_cast %178 : vector<1x1x25x25xf32> to vector<25x25xf32>
    %cst_183 = arith.constant dense<0.000000e+00> : vector<192x25xf32>
    %180 = tpu.matmul %177, %179, %cst_183 {dimension_numbers = #tpu.dot_dimension_numbers<[1], [0], [0], [1], [0, 0, 1, 1], [], []>} : vector<192x25xf32>, vector<25x25xf32>, vector<192x25xf32> -> vector<192x25xf32>
    %181 = arith.addf %172, %180 : vector<192x25xf32>
    %c0_184 = arith.constant 0 : index
    %c0_185 = arith.constant 0 : index
    %c0_186 = arith.constant 0 : index
    %182 = vector.load %arg8[%c0_184, %c0_185, %c0_186] : memref<1x1x25xf32, #tpu.memory_space<vmem>>, vector<1x1x25xf32>
    %183 = vector.shape_cast %182 : vector<1x1x25xf32> to vector<1x25xf32>
    %184 = vector.broadcast %183 : vector<1x25xf32> to vector<192x25xf32>
    %185 = arith.addf %181, %184 : vector<192x25xf32>
    %186 = math.tanh %185 : vector<192x25xf32>
    %c0_187 = arith.constant 0 : index
    %c0_188 = arith.constant 0 : index
    %c0_189 = arith.constant 0 : index
    %187 = vector.load %arg9[%c0_187, %c0_188, %c0_189] : memref<1x192x25xf32, #tpu.memory_space<vmem>>, vector<1x192x25xf32>
    %188 = vector.shape_cast %187 : vector<1x192x25xf32> to vector<192x25xf32>
    %189 = vector.shape_cast %186 : vector<192x25xf32> to vector<1x192x25xf32>
    tpu.vector_store %arg9[%c0_187, %c0_188, %c0_189], %189 {strides = array<i32>} : memref<1x192x25xf32, #tpu.memory_space<vmem>>, vector<1x192x25xf32>,
    return
  }
  func.func @transform_0(%arg0: i32) -> (i32, i32, i32) {
    %c0_i32 = arith.constant 0 : i32
    %c0_i32_0 = arith.constant 0 : i32
    %c0_i32_1 = arith.constant 0 : i32
    %c0_i32_2 = arith.constant 0 : i32
    return %c0_i32, %c0_i32_0, %c0_i32_1 : i32, i32, i32
  }
  func.func @transform_1(%arg0: i32) -> (i32, i32) {
    %c0_i32 = arith.constant 0 : i32
    %c0_i32_0 = arith.constant 0 : i32
    %c0_i32_1 = arith.constant 0 : i32
    return %c0_i32, %c0_i32_0 : i32, i32
  }
  func.func @transform_2(%arg0: i32) -> (i32, i32, i32) {
    %c0_i32 = arith.constant 0 : i32
    %c0_i32_0 = arith.constant 0 : i32
    %c0_i32_1 = arith.constant 0 : i32
    return %arg0, %c0_i32, %c0_i32_0 : i32, i32, i32
  }
  func.func @transform_3(%arg0: i32) -> (i32, i32, i32) {
    %c0_i32 = arith.constant 0 : i32
    %c0_i32_0 = arith.constant 0 : i32
    %c0_i32_1 = arith.constant 0 : i32
    return %arg0, %c0_i32, %c0_i32_0 : i32, i32, i32
  }
  func.func @transform_4(%arg0: i32) -> (i32, i32, i32, i32) {
    %c0_i32 = arith.constant 0 : i32
    %c0_i32_0 = arith.constant 0 : i32
    %c0_i32_1 = arith.constant 0 : i32
    %c0_i32_2 = arith.constant 0 : i32
    return %arg0, %c0_i32, %c0_i32_0, %c0_i32_1 : i32, i32, i32, i32
  }
  func.func @transform_5(%arg0: i32) -> (i32, i32, i32) {
    %c0_i32 = arith.constant 0 : i32
    %c0_i32_0 = arith.constant 0 : i32
    %c0_i32_1 = arith.constant 0 : i32
    return %arg0, %c0_i32, %c0_i32_0 : i32, i32, i32
  }
  func.func @transform_6(%arg0: i32) -> (i32, i32, i32, i32) {
    %c0_i32 = arith.constant 0 : i32
    %c0_i32_0 = arith.constant 0 : i32
    %c0_i32_1 = arith.constant 0 : i32
    %c0_i32_2 = arith.constant 0 : i32
    return %arg0, %c0_i32, %c0_i32_0, %c0_i32_1 : i32, i32, i32, i32
  }
  func.func @transform_7(%arg0: i32) -> (i32, i32, i32) {
    %c0_i32 = arith.constant 0 : i32
    %c0_i32_0 = arith.constant 0 : i32
    %c0_i32_1 = arith.constant 0 : i32
    return %arg0, %c0_i32, %c0_i32_0 : i32, i32, i32
  }
  func.func @transform_8(%arg0: i32) -> (i32, i32, i32) {
    %c0_i32 = arith.constant 0 : i32
    %c0_i32_0 = arith.constant 0 : i32
    %c0_i32_1 = arith.constant 0 : i32
    return %arg0, %c0_i32, %c0_i32_0 : i32, i32, i32
  }
}

module attributes {stable_mosaic.version = 11 : i64} {
  func.func @_fc_stage_kernel(%arg0: i32, %arg1: memref<1x2x2400xf32, #tpu.memory_space<vmem>>, %arg2: memref<1x2400x64xf32, #tpu.memory_space<vmem>>, %arg3: memref<1x1x64xf32, #tpu.memory_space<vmem>>, %arg4: memref<1x64x64xf32, #tpu.memory_space<vmem>>, %arg5: memref<1x1x64xf32, #tpu.memory_space<vmem>>, %arg6: memref<1x64x8xf32, #tpu.memory_space<vmem>>, %arg7: memref<1x1x8xf32, #tpu.memory_space<vmem>>, %arg8: memref<1x2x8xf32, #tpu.memory_space<vmem>>) attributes {dimension_semantics = [#tpu.dimension_semantics<parallel>], iteration_bounds = array<i64: 2>, scalar_prefetch = 0 : i64, scratch_operands = 0 : i64, tpu.core_type = #tpu.core_type<tc>, window_params = [{transform_indices = @transform_0, window_bounds = array<i64: 1, 2, 2400>}, {transform_indices = @transform_1, window_bounds = array<i64: 1, 2400, 64>}, {transform_indices = @transform_2, window_bounds = array<i64: 1, 1, 64>}, {transform_indices = @transform_3, window_bounds = array<i64: 1, 64, 64>}, {transform_indices = @transform_4, window_bounds = array<i64: 1, 1, 64>}, {transform_indices = @transform_5, window_bounds = array<i64: 1, 64, 8>}, {transform_indices = @transform_6, window_bounds = array<i64: 1, 1, 8>}, {transform_indices = @transform_7, window_bounds = array<i64: 1, 2, 8>}]} {
    %c0 = arith.constant 0 : index
    %c0_0 = arith.constant 0 : index
    %c0_1 = arith.constant 0 : index
    %0 = vector.load %arg1[%c0, %c0_0, %c0_1] : memref<1x2x2400xf32, #tpu.memory_space<vmem>>, vector<1x2x2400xf32>
    %1 = vector.shape_cast %0 : vector<1x2x2400xf32> to vector<2x2400xf32>
    %c0_2 = arith.constant 0 : index
    %c0_3 = arith.constant 0 : index
    %c0_4 = arith.constant 0 : index
    %2 = vector.load %arg2[%c0_2, %c0_3, %c0_4] : memref<1x2400x64xf32, #tpu.memory_space<vmem>>, vector<1x2400x64xf32>
    %3 = vector.shape_cast %2 : vector<1x2400x64xf32> to vector<2400x64xf32>
    %cst = arith.constant dense<0.000000e+00> : vector<2x64xf32>
    %4 = tpu.matmul %1, %3, %cst {dimension_numbers = #tpu.dot_dimension_numbers<[1], [0], [0], [1], [0, 0, 1, 1], [], []>} : vector<2x2400xf32>, vector<2400x64xf32>, vector<2x64xf32> -> vector<2x64xf32>
    %c0_5 = arith.constant 0 : index
    %c0_6 = arith.constant 0 : index
    %c0_7 = arith.constant 0 : index
    %5 = vector.load %arg3[%c0_5, %c0_6, %c0_7] : memref<1x1x64xf32, #tpu.memory_space<vmem>>, vector<1x1x64xf32>
    %6 = vector.shape_cast %5 : vector<1x1x64xf32> to vector<1x64xf32>
    %7 = vector.broadcast %6 : vector<1x64xf32> to vector<2x64xf32>
    %8 = arith.addf %4, %7 : vector<2x64xf32>
    %9 = math.tanh %8 : vector<2x64xf32>
    %c0_8 = arith.constant 0 : index
    %c0_9 = arith.constant 0 : index
    %c0_10 = arith.constant 0 : index
    %10 = vector.load %arg4[%c0_8, %c0_9, %c0_10] : memref<1x64x64xf32, #tpu.memory_space<vmem>>, vector<1x64x64xf32>
    %11 = vector.shape_cast %10 : vector<1x64x64xf32> to vector<64x64xf32>
    %cst_11 = arith.constant dense<0.000000e+00> : vector<2x64xf32>
    %12 = tpu.matmul %9, %11, %cst_11 {dimension_numbers = #tpu.dot_dimension_numbers<[1], [0], [0], [1], [0, 0, 1, 1], [], []>} : vector<2x64xf32>, vector<64x64xf32>, vector<2x64xf32> -> vector<2x64xf32>
    %c0_12 = arith.constant 0 : index
    %c0_13 = arith.constant 0 : index
    %c0_14 = arith.constant 0 : index
    %13 = vector.load %arg5[%c0_12, %c0_13, %c0_14] : memref<1x1x64xf32, #tpu.memory_space<vmem>>, vector<1x1x64xf32>
    %14 = vector.shape_cast %13 : vector<1x1x64xf32> to vector<1x64xf32>
    %15 = vector.broadcast %14 : vector<1x64xf32> to vector<2x64xf32>
    %16 = arith.addf %12, %15 : vector<2x64xf32>
    %17 = math.tanh %16 : vector<2x64xf32>
    %c0_15 = arith.constant 0 : index
    %c0_16 = arith.constant 0 : index
    %c0_17 = arith.constant 0 : index
    %18 = vector.load %arg6[%c0_15, %c0_16, %c0_17] : memref<1x64x8xf32, #tpu.memory_space<vmem>>, vector<1x64x8xf32>
    %19 = vector.shape_cast %18 : vector<1x64x8xf32> to vector<64x8xf32>
    %cst_18 = arith.constant dense<0.000000e+00> : vector<2x8xf32>
    %20 = tpu.matmul %17, %19, %cst_18 {dimension_numbers = #tpu.dot_dimension_numbers<[1], [0], [0], [1], [0, 0, 1, 1], [], []>} : vector<2x64xf32>, vector<64x8xf32>, vector<2x8xf32> -> vector<2x8xf32>
    %c0_19 = arith.constant 0 : index
    %c0_20 = arith.constant 0 : index
    %c0_21 = arith.constant 0 : index
    %21 = vector.load %arg7[%c0_19, %c0_20, %c0_21] : memref<1x1x8xf32, #tpu.memory_space<vmem>>, vector<1x1x8xf32>
    %22 = vector.shape_cast %21 : vector<1x1x8xf32> to vector<1x8xf32>
    %23 = vector.broadcast %22 : vector<1x8xf32> to vector<2x8xf32>
    %24 = arith.addf %20, %23 : vector<2x8xf32>
    %c0_22 = arith.constant 0 : index
    %c0_23 = arith.constant 0 : index
    %c0_24 = arith.constant 0 : index
    %25 = vector.load %arg8[%c0_22, %c0_23, %c0_24] : memref<1x2x8xf32, #tpu.memory_space<vmem>>, vector<1x2x8xf32>
    %26 = vector.shape_cast %25 : vector<1x2x8xf32> to vector<2x8xf32>
    %27 = vector.shape_cast %24 : vector<2x8xf32> to vector<1x2x8xf32>
    tpu.vector_store %arg8[%c0_22, %c0_23, %c0_24], %27 {strides = array<i32>} : memref<1x2x8xf32, #tpu.memory_space<vmem>>, vector<1x2x8xf32>,
    return
  }
  func.func @transform_0(%arg0: i32) -> (i32, i32, i32) {
    %c0_i32 = arith.constant 0 : i32
    %c0_i32_0 = arith.constant 0 : i32
    %c0_i32_1 = arith.constant 0 : i32
    return %arg0, %c0_i32, %c0_i32_0 : i32, i32, i32
  }
  func.func @transform_1(%arg0: i32) -> (i32, i32, i32) {
    %c0_i32 = arith.constant 0 : i32
    %c0_i32_0 = arith.constant 0 : i32
    %c0_i32_1 = arith.constant 0 : i32
    return %arg0, %c0_i32, %c0_i32_0 : i32, i32, i32
  }
  func.func @transform_2(%arg0: i32) -> (i32, i32, i32) {
    %c0_i32 = arith.constant 0 : i32
    %c0_i32_0 = arith.constant 0 : i32
    %c0_i32_1 = arith.constant 0 : i32
    return %arg0, %c0_i32, %c0_i32_0 : i32, i32, i32
  }
  func.func @transform_3(%arg0: i32) -> (i32, i32, i32) {
    %c0_i32 = arith.constant 0 : i32
    %c0_i32_0 = arith.constant 0 : i32
    %c0_i32_1 = arith.constant 0 : i32
    return %arg0, %c0_i32, %c0_i32_0 : i32, i32, i32
  }
  func.func @transform_4(%arg0: i32) -> (i32, i32, i32) {
    %c0_i32 = arith.constant 0 : i32
    %c0_i32_0 = arith.constant 0 : i32
    %c0_i32_1 = arith.constant 0 : i32
    return %arg0, %c0_i32, %c0_i32_0 : i32, i32, i32
  }
  func.func @transform_5(%arg0: i32) -> (i32, i32, i32) {
    %c0_i32 = arith.constant 0 : i32
    %c0_i32_0 = arith.constant 0 : i32
    %c0_i32_1 = arith.constant 0 : i32
    return %arg0, %c0_i32, %c0_i32_0 : i32, i32, i32
  }
  func.func @transform_6(%arg0: i32) -> (i32, i32, i32) {
    %c0_i32 = arith.constant 0 : i32
    %c0_i32_0 = arith.constant 0 : i32
    %c0_i32_1 = arith.constant 0 : i32
    return %arg0, %c0_i32, %c0_i32_0 : i32, i32, i32
  }
  func.func @transform_7(%arg0: i32) -> (i32, i32, i32) {
    %c0_i32 = arith.constant 0 : i32
    %c0_i32_0 = arith.constant 0 : i32
    %c0_i32_1 = arith.constant 0 : i32
    return %arg0, %c0_i32, %c0_i32_0 : i32, i32, i32
  }
}

</mosaic_0001>

<llo_original>
// kernel: actor_critic_forward.3
$region0: #{actor_critic_forward.3}
  #allocation0 [shape = 'u32[]', space=smem, size = 0x4, offset = 0x4, fixed_abs, tag = 'smem constant byte address 0x4 - core index']
  #allocation1 [shape = 'u32[144,128]{1,0:T(1,128)}', space=vmem, size = 0x12000, scoped, tag = 'internal scratch']
  %s0 = inlined_call_operand.vmem [shape: f32[2,2,2400], index: 0, kind: input, shape index: {}]
  %s1 = inlined_call_operand.vmem [shape: f32[2,2400,64], index: 1, kind: input, shape index: {}]
  %s2 = inlined_call_operand.vmem [shape: f32[2,1,64], index: 2, kind: input, shape index: {}]
  %s3 = inlined_call_operand.vmem [shape: f32[2,64,64], index: 3, kind: input, shape index: {}]
  %s4 = inlined_call_operand.vmem [shape: f32[2,1,64], index: 4, kind: input, shape index: {}]
  %s5 = inlined_call_operand.vmem [shape: f32[2,64,8], index: 5, kind: input, shape index: {}]
  %s6 = inlined_call_operand.vmem [shape: f32[2,1,8], index: 6, kind: input, shape index: {}]
  %s7 = inlined_call_operand.vmem [shape: f32[2,2,8], index: 7, kind: output, shape index: {}]
  %s8 = sld [smem:[#allocation0]]
  $region61: #{actor_critic_forward.3} parent=0
    _
  %s10 = ssub.s32 1, %s8
  %s11 = scalar_select 0, %s10, %s8
  loop: start=0, step=1, limit=4
  $region2: #{actor_critic_forward.3} parent=0 // loop_pre_header
    _
  $region3: #{actor_critic_forward.3} parent=0 // loop_header
    %s13 = sphi 0, %s17
    %p14 = scmp.ge.s32.totalorder %s13, 4
    %s23 = sphi 0, %s25
    %s26 = sphi 0, %s23
    %s27 = sphi 0, %s26
    %s43 = sphi 0, %s27
    %s49 = sphi 0, %s51
    %s52 = sphi 0, %s49
    %s53 = sphi 0, %s52
    %s69 = sphi 0, %s53
    %s75 = sphi 0, %s77
    %s78 = sphi 0, %s75
    %s79 = sphi 0, %s78
    %s95 = sphi 0, %s79
    %s101 = sphi 0, %s103
    %s104 = sphi 0, %s101
    %s105 = sphi 0, %s104
    %s121 = sphi 0, %s105
    %s127 = sphi 0, %s129
    %s130 = sphi 0, %s127
    %s131 = sphi 0, %s130
    %s147 = sphi 0, %s131
    %s153 = sphi 0, %s155
    %s156 = sphi 0, %s153
    %s157 = sphi 0, %s156
    %s173 = sphi 0, %s157
    %s179 = sphi 0, %s181
    %s182 = sphi 0, %s179
    %s183 = sphi 0, %s182
    %s199 = sphi 0, %s183
    %s205 = sphi 0, %s207
    %s208 = sphi 0, %s205
    %s209 = sphi 0, %s208
    %s225 = sphi 0, %s209
  $region4: #{actor_critic_forward.3} parent=0 // loop_header_branch
    %16 = sbr.rel (%p14) target = $region8
  $region5: #{actor_critic_forward.3} parent=0 // loop_body
    %s18 = ssub.s32 %s13, 1
    %s19 = ssub.s32 %s13, 2
    %s20 = sadd.s32 %s13, 1
    %s21 = ssub.s32 %s13, %s20
    %p22 = scmp.eq.s32.totalorder %s21, 0
    %s24 = sadd.s32 %s23, 1
    %s25 = scalar_select %p22, %s23, %s24
    %p28 = pneg %p22
    %p29 = scmp.eq.s32.totalorder %s13, 1
    %p30 = por %p28, %p29
    %p31 = scmp.ne.s32.totalorder %s23, %s26
    %p32 = scmp.eq.s32.totalorder %s13, 0
    %p33 = por %p31, %p32
    %p34 = scmp.ne.s32.totalorder %s23, %s26
    %p35 = scmp.eq.s32.totalorder %s18, 1
    %p36 = por %p34, %p35
    %p37 = scmp.ne.s32.totalorder %s26, %s27
    %p38 = scmp.eq.s32.totalorder %s18, 0
    %p39 = por %p37, %p38
    %p40 = scmp.ne.s32.totalorder %s26, %s27
    %p41 = scmp.eq.s32.totalorder %s19, 1
    %p42 = por %p40, %p41
    %p44 = scmp.ne.s32.totalorder %s27, %s43
    %p45 = scmp.eq.s32.totalorder %s19, 0
    %p46 = por %p44, %p45
    %s47 = ssub.s32 %s13, %s20
    %p48 = scmp.eq.s32.totalorder %s47, 0
    %s50 = sadd.s32 %s49, 1
    %s51 = scalar_select %p48, %s49, %s50
    %p54 = pneg %p48
    %p55 = scmp.eq.s32.totalorder %s13, 1
    %p56 = por %p54, %p55
    %p57 = scmp.ne.s32.totalorder %s49, %s52
    %p58 = scmp.eq.s32.totalorder %s13, 0
    %p59 = por %p57, %p58
    %p60 = scmp.ne.s32.totalorder %s49, %s52
    %p61 = scmp.eq.s32.totalorder %s18, 1
    %p62 = por %p60, %p61
    %p63 = scmp.ne.s32.totalorder %s52, %s53
    %p64 = scmp.eq.s32.totalorder %s18, 0
    %p65 = por %p63, %p64
    %p66 = scmp.ne.s32.totalorder %s52, %s53
    %p67 = scmp.eq.s32.totalorder %s19, 1
    %p68 = por %p66, %p67
    %p70 = scmp.ne.s32.totalorder %s53, %s69
    %p71 = scmp.eq.s32.totalorder %s19, 0
    %p72 = por %p70, %p71
    %s73 = ssub.s32 %s13, %s20
    %p74 = scmp.eq.s32.totalorder %s73, 0
    %s76 = sadd.s32 %s75, 1
    %s77 = scalar_select %p74, %s75, %s76
    %p80 = pneg %p74
    %p81 = scmp.eq.s32.totalorder %s13, 1
    %p82 = por %p80, %p81
    %p83 = scmp.ne.s32.totalorder %s75, %s78
    %p84 = scmp.eq.s32.totalorder %s13, 0
    %p85 = por %p83, %p84
    %p86 = scmp.ne.s32.totalorder %s75, %s78
    %p87 = scmp.eq.s32.totalorder %s18, 1
    %p88 = por %p86, %p87
    %p89 = scmp.ne.s32.totalorder %s78, %s79
    %p90 = scmp.eq.s32.totalorder %s18, 0
    %p91 = por %p89, %p90
    %p92 = scmp.ne.s32.totalorder %s78, %s79
    %p93 = scmp.eq.s32.totalorder %s19, 1
    %p94 = por %p92, %p93
    %p96 = scmp.ne.s32.totalorder %s79, %s95
    %p97 = scmp.eq.s32.totalorder %s19, 0
    %p98 = por %p96, %p97
    %s99 = ssub.s32 %s13, %s20
    %p100 = scmp.eq.s32.totalorder %s99, 0
    %s102 = sadd.s32 %s101, 1
    %s103 = scalar_select %p100, %s101, %s102
    %p106 = pneg %p100
    %p107 = scmp.eq.s32.totalorder %s13, 1
    %p108 = por %p106, %p107
    %p109 = scmp.ne.s32.totalorder %s101, %s104
    %p110 = scmp.eq.s32.totalorder %s13, 0
    %p111 = por %p109, %p110
    %p112 = scmp.ne.s32.totalorder %s101, %s104
    %p113 = scmp.eq.s32.totalorder %s18, 1
    %p114 = por %p112, %p113
    %p115 = scmp.ne.s32.totalorder %s104, %s105
    %p116 = scmp.eq.s32.totalorder %s18, 0
    %p117 = por %p115, %p116
    %p118 = scmp.ne.s32.totalorder %s104, %s105
    %p119 = scmp.eq.s32.totalorder %s19, 1
    %p120 = por %p118, %p119
    %p122 = scmp.ne.s32.totalorder %s105, %s121
    %p123 = scmp.eq.s32.totalorder %s19, 0
    %p124 = por %p122, %p123
    %s125 = ssub.s32 %s13, %s20
    %p126 = scmp.eq.s32.totalorder %s125, 0
    %s128 = sadd.s32 %s127, 1
    %s129 = scalar_select %p126, %s127, %s128
    %p132 = pneg %p126
    %p133 = scmp.eq.s32.totalorder %s13, 1
    %p134 = por %p132, %p133
    %p135 = scmp.ne.s32.totalorder %s127, %s130
    %p136 = scmp.eq.s32.totalorder %s13, 0
    %p137 = por %p135, %p136
    %p138 = scmp.ne.s32.totalorder %s127, %s130
    %p139 = scmp.eq.s32.totalorder %s18, 1
    %p140 = por %p138, %p139
    %p141 = scmp.ne.s32.totalorder %s130, %s131
    %p142 = scmp.eq.s32.totalorder %s18, 0
    %p143 = por %p141, %p142
    %p144 = scmp.ne.s32.totalorder %s130, %s131
    %p145 = scmp.eq.s32.totalorder %s19, 1
    %p146 = por %p144, %p145
    %p148 = scmp.ne.s32.totalorder %s131, %s147
    %p149 = scmp.eq.s32.totalorder %s19, 0
    %p150 = por %p148, %p149
    %s151 = ssub.s32 %s13, %s20
    %p152 = scmp.eq.s32.totalorder %s151, 0
    %s154 = sadd.s32 %s153, 1
    %s155 = scalar_select %p152, %s153, %s154
    %p158 = pneg %p152
    %p159 = scmp.eq.s32.totalorder %s13, 1
    %p160 = por %p158, %p159
    %p161 = scmp.ne.s32.totalorder %s153, %s156
    %p162 = scmp.eq.s32.totalorder %s13, 0
    %p163 = por %p161, %p162
    %p164 = scmp.ne.s32.totalorder %s153, %s156
    %p165 = scmp.eq.s32.totalorder %s18, 1
    %p166 = por %p164, %p165
    %p167 = scmp.ne.s32.totalorder %s156, %s157
    %p168 = scmp.eq.s32.totalorder %s18, 0
    %p169 = por %p167, %p168
    %p170 = scmp.ne.s32.totalorder %s156, %s157
    %p171 = scmp.eq.s32.totalorder %s19, 1
    %p172 = por %p170, %p171
    %p174 = scmp.ne.s32.totalorder %s157, %s173
    %p175 = scmp.eq.s32.totalorder %s19, 0
    %p176 = por %p174, %p175
    %s177 = ssub.s32 %s13, %s20
    %p178 = scmp.eq.s32.totalorder %s177, 0
    %s180 = sadd.s32 %s179, 1
    %s181 = scalar_select %p178, %s179, %s180
    %p184 = pneg %p178
    %p185 = scmp.eq.s32.totalorder %s13, 1
    %p186 = por %p184, %p185
    %p187 = scmp.ne.s32.totalorder %s179, %s182
    %p188 = scmp.eq.s32.totalorder %s13, 0
    %p189 = por %p187, %p188
    %p190 = scmp.ne.s32.totalorder %s179, %s182
    %p191 = scmp.eq.s32.totalorder %s18, 1
    %p192 = por %p190, %p191
    %p193 = scmp.ne.s32.totalorder %s182, %s183
    %p194 = scmp.eq.s32.totalorder %s18, 0
    %p195 = por %p193, %p194
    %p196 = scmp.ne.s32.totalorder %s182, %s183
    %p197 = scmp.eq.s32.totalorder %s19, 1
    %p198 = por %p196, %p197
    %p200 = scmp.ne.s32.totalorder %s183, %s199
    %p201 = scmp.eq.s32.totalorder %s19, 0
    %p202 = por %p200, %p201
    %s203 = ssub.s32 %s13, %s20
    %p204 = scmp.eq.s32.totalorder %s203, 0
    %s206 = sadd.s32 %s205, 1
    %s207 = scalar_select %p204, %s205, %s206
    %p210 = pneg %p204
    %p211 = scmp.eq.s32.totalorder %s13, 1
    %p212 = por %p210, %p211
    %p213 = scmp.ne.s32.totalorder %s205, %s208
    %p214 = scmp.eq.s32.totalorder %s13, 0
    %p215 = por %p213, %p214
    %p216 = scmp.ne.s32.totalorder %s205, %s208
    %p217 = scmp.eq.s32.totalorder %s18, 1
    %p218 = por %p216, %p217
    %p219 = scmp.ne.s32.totalorder %s208, %s209
    %p220 = scmp.eq.s32.totalorder %s18, 0
    %p221 = por %p219, %p220
    %p222 = scmp.ne.s32.totalorder %s208, %s209
    %p223 = scmp.eq.s32.totalorder %s19, 1
    %p224 = por %p222, %p223
    %p226 = scmp.ne.s32.totalorder %s209, %s225
    %p227 = scmp.eq.s32.totalorder %s19, 0
    %p228 = por %p226, %p227
    %p229 = scmp.le.s32.totalorder 1, %s13
    %p230 = scmp.lt.s32.totalorder %s13, 3
    %p231 = pnand %p229, %p230
    %p232 = pneg %p231
    // Predicated region
    $region9: #{actor_critic_forward.3} parent=5 // pred_check
      _
    $region10: #{actor_critic_forward.3} parent=5 // pred_check_branch
      %234 = sbr.rel (%p231) target = $region12
    $region11: #{actor_critic_forward.3} parent=5 // pred_region
      %s235 = ssub.s32 %s13, 1
    $region12: #{actor_critic_forward.3} parent=5 // pred_fallthru
      _
    %p236 = scmp.lt.s32.totalorder %s13, 2
    // Predicated region
    $region13: #{actor_critic_forward.3} parent=5 // pred_check
      %p237 = pneg %p236
    $region14: #{actor_critic_forward.3} parent=5 // pred_check_branch
      %239 = sbr.rel (%p237) target = $region16
    $region15: #{actor_critic_forward.3} parent=5 // pred_region
      // Predicated region
      $region17: #{actor_critic_forward.3} parent=15 // pred_check
        %p240 = pneg %p33
      $region18: #{actor_critic_forward.3} parent=15 // pred_check_branch
        %242 = sbr.rel (%p240) target = $region20
      $region19: #{actor_critic_forward.3} parent=15 // pred_region
        %p243 = scmp.lt.s32.totalorder %s13, 1
        %s244 = scalar_select %p243, %s13, 1
        %s245 = smul.addr %s244, 19
        %s246 = smul.addr %s245, 2
        %s247 = scalar_lea.vmem %s0, %s246
      $region20: #{actor_critic_forward.3} parent=15 // pred_fallthru
        _
      // Predicated region
      $region21: #{actor_critic_forward.3} parent=15 // pred_check
        %p248 = pneg %p59
      $region22: #{actor_critic_forward.3} parent=15 // pred_check_branch
        %250 = sbr.rel (%p248) target = $region24
      $region23: #{actor_critic_forward.3} parent=15 // pred_region
        %p251 = scmp.lt.s32.totalorder %s13, 1
        %s252 = scalar_select %p251, %s13, 1
        %s253 = smul.addr %s252, 300
        %s254 = smul.addr %s253, 8
        %s255 = scalar_lea.vmem %s1, %s254
      $region24: #{actor_critic_forward.3} parent=15 // pred_fallthru
        _
      // Predicated region
      $region25: #{actor_critic_forward.3} parent=15 // pred_check
        %p256 = pneg %p85
      $region26: #{actor_critic_forward.3} parent=15 // pred_check_branch
        %258 = sbr.rel (%p256) target = $region28
      $region27: #{actor_critic_forward.3} parent=15 // pred_region
        %p259 = scmp.lt.s32.totalorder %s13, 1
        %s260 = scalar_select %p259, %s13, 1
        %s261 = scalar_lea.vmem %s2, %s260
      $region28: #{actor_critic_forward.3} parent=15 // pred_fallthru
        _
      // Predicated region
      $region29: #{actor_critic_forward.3} parent=15 // pred_check
        %p262 = pneg %p111
      $region30: #{actor_critic_forward.3} parent=15 // pred_check_branch
        %264 = sbr.rel (%p262) target = $region32
      $region31: #{actor_critic_forward.3} parent=15 // pred_region
        %p265 = scmp.lt.s32.totalorder %s13, 1
        %s266 = scalar_select %p265, %s13, 1
        %s267 = smul.addr %s266, 8
        %s268 = smul.addr %s267, 8
        %s269 = scalar_lea.vmem %s3, %s268
      $region32: #{actor_critic_forward.3} parent=15 // pred_fallthru
        _
      // Predicated region
      $region33: #{actor_critic_forward.3} parent=15 // pred_check
        %p270 = pneg %p137
      $region34: #{actor_critic_forward.3} parent=15 // pred_check_branch
        %272 = sbr.rel (%p270) target = $region36
      $region35: #{actor_critic_forward.3} parent=15 // pred_region
        %p273 = scmp.lt.s32.totalorder %s13, 1
        %s274 = scalar_select %p273, %s13, 1
        %s275 = scalar_lea.vmem %s4, %s274
      $region36: #{actor_critic_forward.3} parent=15 // pred_fallthru
        _
      // Predicated region
      $region37: #{actor_critic_forward.3} parent=15 // pred_check
        %p276 = pneg %p163
      $region38: #{actor_critic_forward.3} parent=15 // pred_check_branch
        %278 = sbr.rel (%p276) target = $region40
      $region39: #{actor_critic_forward.3} parent=15 // pred_region
        %p279 = scmp.lt.s32.totalorder %s13, 1
        %s280 = scalar_select %p279, %s13, 1
        %s281 = smul.addr %s280, 8
        %s282 = smul.addr %s281, 8
        %s283 = scalar_lea.vmem %s5, %s282
      $region40: #{actor_critic_forward.3} parent=15 // pred_fallthru
        _
      // Predicated region
      $region41: #{actor_critic_forward.3} parent=15 // pred_check
        %p284 = pneg %p189
      $region42: #{actor_critic_forward.3} parent=15 // pred_check_branch
        %286 = sbr.rel (%p284) target = $region44
      $region43: #{actor_critic_forward.3} parent=15 // pred_region
        %p287 = scmp.lt.s32.totalorder %s13, 1
        %s288 = scalar_select %p287, %s13, 1
        %s289 = scalar_lea.vmem %s6, %s288
      $region44: #{actor_critic_forward.3} parent=15 // pred_fallthru
        _
    $region16: #{actor_critic_forward.3} parent=5 // pred_fallthru
      _
    %p290 = scmp.le.s32.totalorder 1, %s13
    %p291 = scmp.lt.s32.totalorder %s13, 3
    %p292 = pnand %p290, %p291
    %p293 = pneg %p292
    // Predicated region
    $region45: #{actor_critic_forward.3} parent=5 // pred_check
      _
    $region46: #{actor_critic_forward.3} parent=5 // pred_check_branch
      %295 = sbr.rel (%p292) target = $region48
    $region47: #{actor_critic_forward.3} parent=5 // pred_region
      %s296 = ssub.s32 %s13, 1
      %p297 = scmp.lt.s32.totalorder %s18, 1
      %s298 = scalar_select %p297, %s18, 1
      %s299 = smul.addr %s298, 19
      %s300 = smul.addr %s299, 2
      %s301 = scalar_lea.vmem %s0, %s300
      %p302 = pneg %p39
      %p303 = pneg %p36
      %p304 = scmp.lt.s32.totalorder %s18, 1
      %s305 = scalar_select %p304, %s18, 1
      %s306 = smul.addr %s305, 300
      %s307 = smul.addr %s306, 8
      %s308 = scalar_lea.vmem %s1, %s307
      %p309 = pneg %p65
      %p310 = pneg %p62
      %p311 = scmp.lt.s32.totalorder %s18, 1
      %s312 = scalar_select %p311, %s18, 1
      %s313 = scalar_lea.vmem %s2, %s312
      %p314 = pneg %p91
      %p315 = pneg %p88
      %p316 = scmp.lt.s32.totalorder %s18, 1
      %s317 = scalar_select %p316, %s18, 1
      %s318 = smul.addr %s317, 8
      %s319 = smul.addr %s318, 8
      %s320 = scalar_lea.vmem %s3, %s319
      %p321 = pneg %p117
      %p322 = pneg %p114
      %p323 = scmp.lt.s32.totalorder %s18, 1
      %s324 = scalar_select %p323, %s18, 1
      %s325 = scalar_lea.vmem %s4, %s324
      %p326 = pneg %p143
      %p327 = pneg %p140
      %p328 = scmp.lt.s32.totalorder %s18, 1
      %s329 = scalar_select %p328, %s18, 1
      %s330 = smul.addr %s329, 8
      %s331 = smul.addr %s330, 8
      %s332 = scalar_lea.vmem %s5, %s331
      %p333 = pneg %p169
      %p334 = pneg %p166
      %p335 = scmp.lt.s32.totalorder %s18, 1
      %s336 = scalar_select %p335, %s18, 1
      %s337 = scalar_lea.vmem %s6, %s336
      %p338 = pneg %p195
      %p339 = pneg %p192
      %p340 = pneg %p221
      %p341 = pneg %p218
      %p342 = scmp.lt.s32.totalorder %s18, 1
      %s343 = scalar_select %p342, %s18, 1
      %s344 = smul.addr %s343, 2
      %s345 = scalar_lea.vmem %s7, %s344
      %p346 = scmp.lt.s32.totalorder %s18, 1
      %s347 = scalar_select %p346, %s18, 1
      %s348 = smul.addr %s347, 19
      %s349 = smul.addr %s348, 2
      %s350 = scalar_lea.vmem %s0, %s349
      %p351 = scmp.lt.s32.totalorder %s18, 1
      %s352 = scalar_select %p351, %s18, 1
      %s353 = smul.addr %s352, 300
      %s354 = smul.addr %s353, 8
      %s355 = scalar_lea.vmem %s1, %s354
      %p356 = scmp.lt.s32.totalorder %s18, 1
      %s357 = scalar_select %p356, %s18, 1
      %s358 = scalar_lea.vmem %s2, %s357
      %p359 = scmp.lt.s32.totalorder %s18, 1
      %s360 = scalar_select %p359, %s18, 1
      %s361 = smul.addr %s360, 8
      %s362 = smul.addr %s361, 8
      %s363 = scalar_lea.vmem %s3, %s362
      %p364 = scmp.lt.s32.totalorder %s18, 1
      %s365 = scalar_select %p364, %s18, 1
      %s366 = scalar_lea.vmem %s4, %s365
      %p367 = scmp.lt.s32.totalorder %s18, 1
      %s368 = scalar_select %p367, %s18, 1
      %s369 = smul.addr %s368, 8
      %s370 = smul.addr %s369, 8
      %s371 = scalar_lea.vmem %s5, %s370
      %p372 = scmp.lt.s32.totalorder %s18, 1
      %s373 = scalar_select %p372, %s18, 1
      %s374 = scalar_lea.vmem %s6, %s373
      %p375 = scmp.lt.s32.totalorder %s18, 1
      %s376 = scalar_select %p375, %s18, 1
      %s377 = smul.addr %s376, 2
      %s378 = scalar_lea.vmem %s7, %s377
      %v379 = vld [vmem:[%s350] sm:$0xff]
      %v380 = vld [vmem:[%s350 + $0x8] sm:$0xff]
      %v381 = vld [vmem:[%s350 + $0x10] sm:$0xff]
      %v382 = vld [vmem:[%s350 + $0x18] sm:$0xff]
      %v383 = vld [vmem:[%s350 + $0x20] sm:$0x3f]
      %v384 = vld [vmem:[%s355] sm:$0xff]
      %v385 = vld [vmem:[%s355 + $0x8] sm:$0xff]
      %v386 = vld [vmem:[%s355 + $0x10] sm:$0xff]
      %v387 = vld [vmem:[%s355 + $0x18] sm:$0xff]
      %v388 = vld [vmem:[%s355 + $0x20] sm:$0xff]
      %v389 = vld [vmem:[%s355 + $0x28] sm:$0xff]
      %v390 = vld [vmem:[%s355 + $0x30] sm:$0xff]
      %v391 = vld [vmem:[%s355 + $0x38] sm:$0xff]
      %v392 = vld [vmem:[%s355 + $0x40] sm:$0xff]
      %v393 = vld [vmem:[%s355 + $0x48] sm:$0xff]
      %v394 = vld [vmem:[%s355 + $0x50] sm:$0xff]
      %v395 = vld [vmem:[%s355 + $0x58] sm:$0xff]
      %v396 = vld [vmem:[%s355 + $0x60] sm:$0xff]
      %v397 = vld [vmem:[%s355 + $0x68] sm:$0xff]
      %v398 = vld [vmem:[%s355 + $0x70] sm:$0xff]
      %v399 = vld [vmem:[%s355 + $0x78] sm:$0xff]
      %v400 = vld [vmem:[%s355 + $0x80] sm:$0xff]
      %v401 = vld [vmem:[%s355 + $0x88] sm:$0xff]
      %v402 = vld [vmem:[%s355 + $0x90] sm:$0xff]
      %v403 = vld [vmem:[%s355 + $0x98] sm:$0xff]
      %v404 = vld [vmem:[%s355 + $0xa0] sm:$0xff]
      %v405 = vld [vmem:[%s355 + $0xa8] sm:$0xff]
      %v406 = vld [vmem:[%s355 + $0xb0] sm:$0xff]
      %v407 = vld [vmem:[%s355 + $0xb8] sm:$0xff]
      %v408 = vld [vmem:[%s355 + $0xc0] sm:$0xff]
      %v409 = vld [vmem:[%s355 + $0xc8] sm:$0xff]
      %v410 = vld [vmem:[%s355 + $0xd0] sm:$0xff]
      %v411 = vld [vmem:[%s355 + $0xd8] sm:$0xff]
      %v412 = vld [vmem:[%s355 + $0xe0] sm:$0xff]
      %v413 = vld [vmem:[%s355 + $0xe8] sm:$0xff]
      %v414 = vld [vmem:[%s355 + $0xf0] sm:$0xff]
      %v415 = vld [vmem:[%s355 + $0xf8] sm:$0xff]
      %v416 = vld [vmem:[%s355 + $0x100] sm:$0xff]
      %v417 = vld [vmem:[%s355 + $0x108] sm:$0xff]
      %v418 = vld [vmem:[%s355 + $0x110] sm:$0xff]
      %v419 = vld [vmem:[%s355 + $0x118] sm:$0xff]
      %v420 = vld [vmem:[%s355 + $0x120] sm:$0xff]
      %v421 = vld [vmem:[%s355 + $0x128] sm:$0xff]
      %v422 = vld [vmem:[%s355 + $0x130] sm:$0xff]
      %v423 = vld [vmem:[%s355 + $0x138] sm:$0xff]
      %v424 = vld [vmem:[%s355 + $0x140] sm:$0xff]
      %v425 = vld [vmem:[%s355 + $0x148] sm:$0xff]
      %v426 = vld [vmem:[%s355 + $0x150] sm:$0xff]
      %v427 = vld [vmem:[%s355 + $0x158] sm:$0xff]
      %v428 = vld [vmem:[%s355 + $0x160] sm:$0xff]
      %v429 = vld [vmem:[%s355 + $0x168] sm:$0xff]
      %v430 = vld [vmem:[%s355 + $0x170] sm:$0xff]
      %v431 = vld [vmem:[%s355 + $0x178] sm:$0xff]
      %v432 = vld [vmem:[%s355 + $0x180] sm:$0xff]
      %v433 = vld [vmem:[%s355 + $0x188] sm:$0xff]
      %v434 = vld [vmem:[%s355 + $0x190] sm:$0xff]
      %v435 = vld [vmem:[%s355 + $0x198] sm:$0xff]
      %v436 = vld [vmem:[%s355 + $0x1a0] sm:$0xff]
      %v437 = vld [vmem:[%s355 + $0x1a8] sm:$0xff]
      %v438 = vld [vmem:[%s355 + $0x1b0] sm:$0xff]
      %v439 = vld [vmem:[%s355 + $0x1b8] sm:$0xff]
      %v440 = vld [vmem:[%s355 + $0x1c0] sm:$0xff]
      %v441 = vld [vmem:[%s355 + $0x1c8] sm:$0xff]
      %v442 = vld [vmem:[%s355 + $0x1d0] sm:$0xff]
      %v443 = vld [vmem:[%s355 + $0x1d8] sm:$0xff]
      %v444 = vld [vmem:[%s355 + $0x1e0] sm:$0xff]
      %v445 = vld [vmem:[%s355 + $0x1e8] sm:$0xff]
      %v446 = vld [vmem:[%s355 + $0x1f0] sm:$0xff]
      %v447 = vld [vmem:[%s355 + $0x1f8] sm:$0xff]
      %v448 = vld [vmem:[%s355 + $0x200] sm:$0xff]
      %v449 = vld [vmem:[%s355 + $0x208] sm:$0xff]
      %v450 = vld [vmem:[%s355 + $0x210] sm:$0xff]
      %v451 = vld [vmem:[%s355 + $0x218] sm:$0xff]
      %v452 = vld [vmem:[%s355 + $0x220] sm:$0xff]
      %v453 = vld [vmem:[%s355 + $0x228] sm:$0xff]
      %v454 = vld [vmem:[%s355 + $0x230] sm:$0xff]
      %v455 = vld [vmem:[%s355 + $0x238] sm:$0xff]
      %v456 = vld [vmem:[%s355 + $0x240] sm:$0xff]
      %v457 = vld [vmem:[%s355 + $0x248] sm:$0xff]
      %v458 = vld [vmem:[%s355 + $0x250] sm:$0xff]
      %v459 = vld [vmem:[%s355 + $0x258] sm:$0xff]
      %v460 = vld [vmem:[%s355 + $0x260] sm:$0xff]
      %v461 = vld [vmem:[%s355 + $0x268] sm:$0xff]
      %v462 = vld [vmem:[%s355 + $0x270] sm:$0xff]
      %v463 = vld [vmem:[%s355 + $0x278] sm:$0xff]
      %v464 = vld [vmem:[%s355 + $0x280] sm:$0xff]
      %v465 = vld [vmem:[%s355 + $0x288] sm:$0xff]
      %v466 = vld [vmem:[%s355 + $0x290] sm:$0xff]
      %v467 = vld [vmem:[%s355 + $0x298] sm:$0xff]
      %v468 = vld [vmem:[%s355 + $0x2a0] sm:$0xff]
      %v469 = vld [vmem:[%s355 + $0x2a8] sm:$0xff]
      %v470 = vld [vmem:[%s355 + $0x2b0] sm:$0xff]
      %v471 = vld [vmem:[%s355 + $0x2b8] sm:$0xff]
      %v472 = vld [vmem:[%s355 + $0x2c0] sm:$0xff]
      %v473 = vld [vmem:[%s355 + $0x2c8] sm:$0xff]
      %v474 = vld [vmem:[%s355 + $0x2d0] sm:$0xff]
      %v475 = vld [vmem:[%s355 + $0x2d8] sm:$0xff]
      %v476 = vld [vmem:[%s355 + $0x2e0] sm:$0xff]
      %v477 = vld [vmem:[%s355 + $0x2e8] sm:$0xff]
      %v478 = vld [vmem:[%s355 + $0x2f0] sm:$0xff]
      %v479 = vld [vmem:[%s355 + $0x2f8] sm:$0xff]
      %v480 = vld [vmem:[%s355 + $0x300] sm:$0xff]
      %v481 = vld [vmem:[%s355 + $0x308] sm:$0xff]
      %v482 = vld [vmem:[%s355 + $0x310] sm:$0xff]
      %v483 = vld [vmem:[%s355 + $0x318] sm:$0xff]
      %v484 = vld [vmem:[%s355 + $0x320] sm:$0xff]
      %v485 = vld [vmem:[%s355 + $0x328] sm:$0xff]
      %v486 = vld [vmem:[%s355 + $0x330] sm:$0xff]
      %v487 = vld [vmem:[%s355 + $0x338] sm:$0xff]
      %v488 = vld [vmem:[%s355 + $0x340] sm:$0xff]
      %v489 = vld [vmem:[%s355 + $0x348] sm:$0xff]
      %v490 = vld [vmem:[%s355 + $0x350] sm:$0xff]
      %v491 = vld [vmem:[%s355 + $0x358] sm:$0xff]
      %v492 = vld [vmem:[%s355 + $0x360] sm:$0xff]
      %v493 = vld [vmem:[%s355 + $0x368] sm:$0xff]
      %v494 = vld [vmem:[%s355 + $0x370] sm:$0xff]
      %v495 = vld [vmem:[%s355 + $0x378] sm:$0xff]
      %v496 = vld [vmem:[%s355 + $0x380] sm:$0xff]
      %v497 = vld [vmem:[%s355 + $0x388] sm:$0xff]
      %v498 = vld [vmem:[%s355 + $0x390] sm:$0xff]
      %v499 = vld [vmem:[%s355 + $0x398] sm:$0xff]
      %v500 = vld [vmem:[%s355 + $0x3a0] sm:$0xff]
      %v501 = vld [vmem:[%s355 + $0x3a8] sm:$0xff]
      %v502 = vld [vmem:[%s355 + $0x3b0] sm:$0xff]
      %v503 = vld [vmem:[%s355 + $0x3b8] sm:$0xff]
      %v504 = vld [vmem:[%s355 + $0x3c0] sm:$0xff]
      %v505 = vld [vmem:[%s355 + $0x3c8] sm:$0xff]
      %v506 = vld [vmem:[%s355 + $0x3d0] sm:$0xff]
      %v507 = vld [vmem:[%s355 + $0x3d8] sm:$0xff]
      %v508 = vld [vmem:[%s355 + $0x3e0] sm:$0xff]
      %v509 = vld [vmem:[%s355 + $0x3e8] sm:$0xff]
      %v510 = vld [vmem:[%s355 + $0x3f0] sm:$0xff]
      %v511 = vld [vmem:[%s355 + $0x3f8] sm:$0xff]
      %v512 = vld [vmem:[%s355 + $0x400] sm:$0xff]
      %v513 = vld [vmem:[%s355 + $0x408] sm:$0xff]
      %v514 = vld [vmem:[%s355 + $0x410] sm:$0xff]
      %v515 = vld [vmem:[%s355 + $0x418] sm:$0xff]
      %v516 = vld [vmem:[%s355 + $0x420] sm:$0xff]
      %v517 = vld [vmem:[%s355 + $0x428] sm:$0xff]
      %v518 = vld [vmem:[%s355 + $0x430] sm:$0xff]
      %v519 = vld [vmem:[%s355 + $0x438] sm:$0xff]
      %v520 = vld [vmem:[%s355 + $0x440] sm:$0xff]
      %v521 = vld [vmem:[%s355 + $0x448] sm:$0xff]
      %v522 = vld [vmem:[%s355 + $0x450] sm:$0xff]
      %v523 = vld [vmem:[%s355 + $0x458] sm:$0xff]
      %v524 = vld [vmem:[%s355 + $0x460] sm:$0xff]
      %v525 = vld [vmem:[%s355 + $0x468] sm:$0xff]
      %v526 = vld [vmem:[%s355 + $0x470] sm:$0xff]
      %v527 = vld [vmem:[%s355 + $0x478] sm:$0xff]
      %v528 = vld [vmem:[%s355 + $0x480] sm:$0xff]
      %v529 = vld [vmem:[%s355 + $0x488] sm:$0xff]
      %v530 = vld [vmem:[%s355 + $0x490] sm:$0xff]
      %v531 = vld [vmem:[%s355 + $0x498] sm:$0xff]
      %v532 = vld [vmem:[%s355 + $0x4a0] sm:$0xff]
      %v533 = vld [vmem:[%s355 + $0x4a8] sm:$0xff]
      %v534 = vld [vmem:[%s355 + $0x4b0] sm:$0xff]
      %v535 = vld [vmem:[%s355 + $0x4b8] sm:$0xff]
      %v536 = vld [vmem:[%s355 + $0x4c0] sm:$0xff]
      %v537 = vld [vmem:[%s355 + $0x4c8] sm:$0xff]
      %v538 = vld [vmem:[%s355 + $0x4d0] sm:$0xff]
      %v539 = vld [vmem:[%s355 + $0x4d8] sm:$0xff]
      %v540 = vld [vmem:[%s355 + $0x4e0] sm:$0xff]
      %v541 = vld [vmem:[%s355 + $0x4e8] sm:$0xff]
      %v542 = vld [vmem:[%s355 + $0x4f0] sm:$0xff]
      %v543 = vld [vmem:[%s355 + $0x4f8] sm:$0xff]
      %v544 = vld [vmem:[%s355 + $0x500] sm:$0xff]
      %v545 = vld [vmem:[%s355 + $0x508] sm:$0xff]
      %v546 = vld [vmem:[%s355 + $0x510] sm:$0xff]
      %v547 = vld [vmem:[%s355 + $0x518] sm:$0xff]
      %v548 = vld [vmem:[%s355 + $0x520] sm:$0xff]
      %v549 = vld [vmem:[%s355 + $0x528] sm:$0xff]
      %v550 = vld [vmem:[%s355 + $0x530] sm:$0xff]
      %v551 = vld [vmem:[%s355 + $0x538] sm:$0xff]
      %v552 = vld [vmem:[%s355 + $0x540] sm:$0xff]
      %v553 = vld [vmem:[%s355 + $0x548] sm:$0xff]
      %v554 = vld [vmem:[%s355 + $0x550] sm:$0xff]
      %v555 = vld [vmem:[%s355 + $0x558] sm:$0xff]
      %v556 = vld [vmem:[%s355 + $0x560] sm:$0xff]
      %v557 = vld [vmem:[%s355 + $0x568] sm:$0xff]
      %v558 = vld [vmem:[%s355 + $0x570] sm:$0xff]
      %v559 = vld [vmem:[%s355 + $0x578] sm:$0xff]
      %v560 = vld [vmem:[%s355 + $0x580] sm:$0xff]
      %v561 = vld [vmem:[%s355 + $0x588] sm:$0xff]
      %v562 = vld [vmem:[%s355 + $0x590] sm:$0xff]
      %v563 = vld [vmem:[%s355 + $0x598] sm:$0xff]
      %v564 = vld [vmem:[%s355 + $0x5a0] sm:$0xff]
      %v565 = vld [vmem:[%s355 + $0x5a8] sm:$0xff]
      %v566 = vld [vmem:[%s355 + $0x5b0] sm:$0xff]
      %v567 = vld [vmem:[%s355 + $0x5b8] sm:$0xff]
      %v568 = vld [vmem:[%s355 + $0x5c0] sm:$0xff]
      %v569 = vld [vmem:[%s355 + $0x5c8] sm:$0xff]
      %v570 = vld [vmem:[%s355 + $0x5d0] sm:$0xff]
      %v571 = vld [vmem:[%s355 + $0x5d8] sm:$0xff]
      %v572 = vld [vmem:[%s355 + $0x5e0] sm:$0xff]
      %v573 = vld [vmem:[%s355 + $0x5e8] sm:$0xff]
      %v574 = vld [vmem:[%s355 + $0x5f0] sm:$0xff]
      %v575 = vld [vmem:[%s355 + $0x5f8] sm:$0xff]
      %v576 = vld [vmem:[%s355 + $0x600] sm:$0xff]
      %v577 = vld [vmem:[%s355 + $0x608] sm:$0xff]
      %v578 = vld [vmem:[%s355 + $0x610] sm:$0xff]
      %v579 = vld [vmem:[%s355 + $0x618] sm:$0xff]
      %v580 = vld [vmem:[%s355 + $0x620] sm:$0xff]
      %v581 = vld [vmem:[%s355 + $0x628] sm:$0xff]
      %v582 = vld [vmem:[%s355 + $0x630] sm:$0xff]
      %v583 = vld [vmem:[%s355 + $0x638] sm:$0xff]
      %v584 = vld [vmem:[%s355 + $0x640] sm:$0xff]
      %v585 = vld [vmem:[%s355 + $0x648] sm:$0xff]
      %v586 = vld [vmem:[%s355 + $0x650] sm:$0xff]
      %v587 = vld [vmem:[%s355 + $0x658] sm:$0xff]
      %v588 = vld [vmem:[%s355 + $0x660] sm:$0xff]
      %v589 = vld [vmem:[%s355 + $0x668] sm:$0xff]
      %v590 = vld [vmem:[%s355 + $0x670] sm:$0xff]
      %v591 = vld [vmem:[%s355 + $0x678] sm:$0xff]
      %v592 = vld [vmem:[%s355 + $0x680] sm:$0xff]
      %v593 = vld [vmem:[%s355 + $0x688] sm:$0xff]
      %v594 = vld [vmem:[%s355 + $0x690] sm:$0xff]
      %v595 = vld [vmem:[%s355 + $0x698] sm:$0xff]
      %v596 = vld [vmem:[%s355 + $0x6a0] sm:$0xff]
      %v597 = vld [vmem:[%s355 + $0x6a8] sm:$0xff]
      %v598 = vld [vmem:[%s355 + $0x6b0] sm:$0xff]
      %v599 = vld [vmem:[%s355 + $0x6b8] sm:$0xff]
      %v600 = vld [vmem:[%s355 + $0x6c0] sm:$0xff]
      %v601 = vld [vmem:[%s355 + $0x6c8] sm:$0xff]
      %v602 = vld [vmem:[%s355 + $0x6d0] sm:$0xff]
      %v603 = vld [vmem:[%s355 + $0x6d8] sm:$0xff]
      %v604 = vld [vmem:[%s355 + $0x6e0] sm:$0xff]
      %v605 = vld [vmem:[%s355 + $0x6e8] sm:$0xff]
      %v606 = vld [vmem:[%s355 + $0x6f0] sm:$0xff]
      %v607 = vld [vmem:[%s355 + $0x6f8] sm:$0xff]
      %v608 = vld [vmem:[%s355 + $0x700] sm:$0xff]
      %v609 = vld [vmem:[%s355 + $0x708] sm:$0xff]
      %v610 = vld [vmem:[%s355 + $0x710] sm:$0xff]
      %v611 = vld [vmem:[%s355 + $0x718] sm:$0xff]
      %v612 = vld [vmem:[%s355 + $0x720] sm:$0xff]
      %v613 = vld [vmem:[%s355 + $0x728] sm:$0xff]
      %v614 = vld [vmem:[%s355 + $0x730] sm:$0xff]
      %v615 = vld [vmem:[%s355 + $0x738] sm:$0xff]
      %v616 = vld [vmem:[%s355 + $0x740] sm:$0xff]
      %v617 = vld [vmem:[%s355 + $0x748] sm:$0xff]
      %v618 = vld [vmem:[%s355 + $0x750] sm:$0xff]
      %v619 = vld [vmem:[%s355 + $0x758] sm:$0xff]
      %v620 = vld [vmem:[%s355 + $0x760] sm:$0xff]
      %v621 = vld [vmem:[%s355 + $0x768] sm:$0xff]
      %v622 = vld [vmem:[%s355 + $0x770] sm:$0xff]
      %v623 = vld [vmem:[%s355 + $0x778] sm:$0xff]
      %v624 = vld [vmem:[%s355 + $0x780] sm:$0xff]
      %v625 = vld [vmem:[%s355 + $0x788] sm:$0xff]
      %v626 = vld [vmem:[%s355 + $0x790] sm:$0xff]
      %v627 = vld [vmem:[%s355 + $0x798] sm:$0xff]
      %v628 = vld [vmem:[%s355 + $0x7a0] sm:$0xff]
      %v629 = vld [vmem:[%s355 + $0x7a8] sm:$0xff]
      %v630 = vld [vmem:[%s355 + $0x7b0] sm:$0xff]
      %v631 = vld [vmem:[%s355 + $0x7b8] sm:$0xff]
      %v632 = vld [vmem:[%s355 + $0x7c0] sm:$0xff]
      %v633 = vld [vmem:[%s355 + $0x7c8] sm:$0xff]
      %v634 = vld [vmem:[%s355 + $0x7d0] sm:$0xff]
      %v635 = vld [vmem:[%s355 + $0x7d8] sm:$0xff]
      %v636 = vld [vmem:[%s355 + $0x7e0] sm:$0xff]
      %v637 = vld [vmem:[%s355 + $0x7e8] sm:$0xff]
      %v638 = vld [vmem:[%s355 + $0x7f0] sm:$0xff]
      %v639 = vld [vmem:[%s355 + $0x7f8] sm:$0xff]
      %v640 = vld [vmem:[%s355 + $0x800] sm:$0xff]
      %v641 = vld [vmem:[%s355 + $0x808] sm:$0xff]
      %v642 = vld [vmem:[%s355 + $0x810] sm:$0xff]
      %v643 = vld [vmem:[%s355 + $0x818] sm:$0xff]
      %v644 = vld [vmem:[%s355 + $0x820] sm:$0xff]
      %v645 = vld [vmem:[%s355 + $0x828] sm:$0xff]
      %v646 = vld [vmem:[%s355 + $0x830] sm:$0xff]
      %v647 = vld [vmem:[%s355 + $0x838] sm:$0xff]
      %v648 = vld [vmem:[%s355 + $0x840] sm:$0xff]
      %v649 = vld [vmem:[%s355 + $0x848] sm:$0xff]
      %v650 = vld [vmem:[%s355 + $0x850] sm:$0xff]
      %v651 = vld [vmem:[%s355 + $0x858] sm:$0xff]
      %v652 = vld [vmem:[%s355 + $0x860] sm:$0xff]
      %v653 = vld [vmem:[%s355 + $0x868] sm:$0xff]
      %v654 = vld [vmem:[%s355 + $0x870] sm:$0xff]
      %v655 = vld [vmem:[%s355 + $0x878] sm:$0xff]
      %v656 = vld [vmem:[%s355 + $0x880] sm:$0xff]
      %v657 = vld [vmem:[%s355 + $0x888] sm:$0xff]
      %v658 = vld [vmem:[%s355 + $0x890] sm:$0xff]
      %v659 = vld [vmem:[%s355 + $0x898] sm:$0xff]
      %v660 = vld [vmem:[%s355 + $0x8a0] sm:$0xff]
      %v661 = vld [vmem:[%s355 + $0x8a8] sm:$0xff]
      %v662 = vld [vmem:[%s355 + $0x8b0] sm:$0xff]
      %v663 = vld [vmem:[%s355 + $0x8b8] sm:$0xff]
      %v664 = vld [vmem:[%s355 + $0x8c0] sm:$0xff]
      %v665 = vld [vmem:[%s355 + $0x8c8] sm:$0xff]
      %v666 = vld [vmem:[%s355 + $0x8d0] sm:$0xff]
      %v667 = vld [vmem:[%s355 + $0x8d8] sm:$0xff]
      %v668 = vld [vmem:[%s355 + $0x8e0] sm:$0xff]
      %v669 = vld [vmem:[%s355 + $0x8e8] sm:$0xff]
      %v670 = vld [vmem:[%s355 + $0x8f0] sm:$0xff]
      %v671 = vld [vmem:[%s355 + $0x8f8] sm:$0xff]
      %v672 = vld [vmem:[%s355 + $0x900] sm:$0xff]
      %v673 = vld [vmem:[%s355 + $0x908] sm:$0xff]
      %v674 = vld [vmem:[%s355 + $0x910] sm:$0xff]
      %v675 = vld [vmem:[%s355 + $0x918] sm:$0xff]
      %v676 = vld [vmem:[%s355 + $0x920] sm:$0xff]
      %v677 = vld [vmem:[%s355 + $0x928] sm:$0xff]
      %v678 = vld [vmem:[%s355 + $0x930] sm:$0xff]
      %v679 = vld [vmem:[%s355 + $0x938] sm:$0xff]
      %v680 = vld [vmem:[%s355 + $0x940] sm:$0xff]
      %v681 = vld [vmem:[%s355 + $0x948] sm:$0xff]
      %v682 = vld [vmem:[%s355 + $0x950] sm:$0xff]
      %v683 = vld [vmem:[%s355 + $0x958] sm:$0xff]
      %v684 = vld [vmem:[%s358] sm:$0x1]
      %v686 = vlaneseq
      %v687 = vshrl.u32 %v686, 7
      %v688 = vsub.s32 0, %v687
      %v689 = vrot.slane %v684, %v688
      %v696 = vcombine.high %v379, %v379
      %v698 = vunpack.c.l.s4 1983009808
      %v699 = vunpack.c.0.s8 %v698
      %v700 = vlaneseq
      %v701 = vshrl.u32 %v700, 7
      %v702 = vsub.s32 %v699, %v701
      %v703 = vrot.slane %v379, %v702
      %v705 = vunpack.c.l.s4 1983009808
      %v706 = vunpack.c.0.s8 %v705
      %v707 = vlaneseq
      %v708 = vshrl.u32 %v707, 7
      %v709 = vsub.s32 %v706, %v708
      %v710 = vrot.slane %v696, %v709
      %v711 = vcombine.high %v703, %v703
      %v712 = vcombine.high %v710, %v710
      %v713 = vcombine.high %v380, %v380
      %v715 = vunpack.c.l.s4 1983009808
      %v716 = vunpack.c.0.s8 %v715
      %v717 = vlaneseq
      %v718 = vshrl.u32 %v717, 7
      %v719 = vsub.s32 %v716, %v718
      %v720 = vrot.slane %v380, %v719
      %v722 = vunpack.c.l.s4 1983009808
      %v723 = vunpack.c.0.s8 %v722
      %v724 = vlaneseq
      %v725 = vshrl.u32 %v724, 7
      %v726 = vsub.s32 %v723, %v725
      %v727 = vrot.slane %v713, %v726
      %v728 = vcombine.high %v720, %v720
      %v729 = vcombine.high %v727, %v727
      %v730 = vcombine.high %v381, %v381
      %v732 = vunpack.c.l.s4 1983009808
      %v733 = vunpack.c.0.s8 %v732
      %v734 = vlaneseq
      %v735 = vshrl.u32 %v734, 7
      %v736 = vsub.s32 %v733, %v735
      %v737 = vrot.slane %v381, %v736
      %v739 = vunpack.c.l.s4 1983009808
      %v740 = vunpack.c.0.s8 %v739
      %v741 = vlaneseq
      %v742 = vshrl.u32 %v741, 7
      %v743 = vsub.s32 %v740, %v742
      %v744 = vrot.slane %v730, %v743
      %v745 = vcombine.high %v737, %v737
      %v746 = vcombine.high %v744, %v744
      %v747 = vcombine.high %v382, %v382
      %v749 = vunpack.c.l.s4 1983009808
      %v750 = vunpack.c.0.s8 %v749
      %v751 = vlaneseq
      %v752 = vshrl.u32 %v751, 7
      %v753 = vsub.s32 %v750, %v752
      %v754 = vrot.slane %v382, %v753
      %v756 = vunpack.c.l.s4 1983009808
      %v757 = vunpack.c.0.s8 %v756
      %v758 = vlaneseq
      %v759 = vshrl.u32 %v758, 7
      %v760 = vsub.s32 %v757, %v759
      %v761 = vrot.slane %v747, %v760
      %v762 = vcombine.high %v754, %v754
      %v763 = vcombine.high %v761, %v761
      %v764 = vcombine.high %v383, %v383
      %v766 = vunpack.c.l.s4 1983009808
      %v767 = vunpack.c.0.s8 %v766
      %v768 = vlaneseq
      %v769 = vshrl.u32 %v768, 7
      %v770 = vsub.s32 %v767, %v769
      %v771 = vrot.slane %v383, %v770
      %v773 = vunpack.c.l.s4 1983009808
      %v774 = vunpack.c.0.s8 %v773
      %v775 = vlaneseq
      %v776 = vshrl.u32 %v775, 7
      %v777 = vsub.s32 %v774, %v776
      %v778 = vrot.slane %v764, %v777
      %v779 = vcombine.high %v771, %v771
      %vm798 = vcmask 785408
      %v799 = vsel %vm798, %v778, 0
      %801 = vmatprep.subr.mxu0 0.0
      %802 = vmatpush1.msra.mxu0 %v384
      %803 = vmatprep.subr.mxu0 0.0
      %804 = vmatpush1.msra.mxu0 %v385
      %805 = vmatprep.subr.mxu0 0.0
      %806 = vmatpush1.msra.mxu0 %v386
      %807 = vmatprep.subr.mxu0 0.0
      %808 = vmatpush1.msra.mxu0 %v387
      %809 = vmatprep.subr.mxu0 0.0
      %810 = vmatpush1.msra.mxu0 %v388
      %811 = vmatprep.subr.mxu0 0.0
      %812 = vmatpush1.msra.mxu0 %v389
      %813 = vmatprep.subr.mxu0 0.0
      %814 = vmatpush1.msra.mxu0 %v390
      %815 = vmatprep.subr.mxu0 0.0
      %816 = vmatpush1.msra.mxu0 %v391
      %817 = vmatprep.subr.mxu0 0.0
      %818 = vmatpush1.msra.mxu0 %v392
      %819 = vmatprep.subr.mxu0 0.0
      %820 = vmatpush1.msra.mxu0 %v393
      %821 = vmatprep.subr.mxu0 0.0
      %822 = vmatpush1.msra.mxu0 %v394
      %823 = vmatprep.subr.mxu0 0.0
      %824 = vmatpush1.msra.mxu0 %v395
      %825 = vmatprep.subr.mxu0 0.0
      %826 = vmatpush1.msra.mxu0 %v396
      %827 = vmatprep.subr.mxu0 0.0
      %828 = vmatpush1.msra.mxu0 %v397
      %829 = vmatprep.subr.mxu0 0.0
      %830 = vmatpush1.msra.mxu0 %v398
      %831 = vmatprep.subr.mxu0 0.0
      %832 = vmatpush1.msra.mxu0 %v399
      %833 = vmatprep.subr.mxu0 0.0
      %834 = vmatpush1.msra.mxu0 %v400
      %835 = vmatprep.subr.mxu0 0.0
      %836 = vmatpush1.msra.mxu0 %v401
      %837 = vmatprep.subr.mxu0 0.0
      %838 = vmatpush1.msra.mxu0 %v402
      %839 = vmatprep.subr.mxu0 0.0
      %840 = vmatpush1.msra.mxu0 %v403
      %841 = vmatprep.subr.mxu0 0.0
      %842 = vmatpush1.msra.mxu0 %v404
      %843 = vmatprep.subr.mxu0 0.0
      %844 = vmatpush1.msra.mxu0 %v405
      %845 = vmatprep.subr.mxu0 0.0
      %846 = vmatpush1.msra.mxu0 %v406
      %847 = vmatprep.subr.mxu0 0.0
      %848 = vmatpush1.msra.mxu0 %v407
      %849 = vmatprep.subr.mxu0 0.0
      %850 = vmatpush1.msra.mxu0 %v408
      %851 = vmatprep.subr.mxu0 0.0
      %852 = vmatpush1.msra.mxu0 %v409
      %853 = vmatprep.subr.mxu0 0.0
      %854 = vmatpush1.msra.mxu0 %v410
      %855 = vmatprep.subr.mxu0 0.0
      %856 = vmatpush1.msra.mxu0 %v411
      %857 = vmatprep.subr.mxu0 0.0
      %858 = vmatpush1.msra.mxu0 %v412
      %859 = vmatprep.subr.mxu0 0.0
      %860 = vmatpush1.msra.mxu0 %v413
      %861 = vmatprep.subr.mxu0 0.0
      %862 = vmatpush1.msra.mxu0 %v414
      %863 = vmatprep.subr.mxu0 0.0
      %864 = vmatpush1.msra.mxu0 %v415
      %865 = vmatprep.mubr.f32.mxu0 %v711
      %866 = vmatmul.mubr.f32.gmra.mrb[0].mxu0 %v703
      %v867 = vpop.f32.mrb[0].mxu0
      %v868 = vadd.f32 %v689, %v867
      %v869 = vpop.f32.mrb[0].mxu0
      %870 = vdwg.mxu0
      %871 = vmatprep.subr.mxu0 0.0
      %872 = vmatpush1.msra.mxu0 %v416
      %873 = vmatprep.subr.mxu0 0.0
      %874 = vmatpush1.msra.mxu0 %v417
      %875 = vmatprep.subr.mxu0 0.0
      %876 = vmatpush1.msra.mxu0 %v418
      %877 = vmatprep.subr.mxu0 0.0
      %878 = vmatpush1.msra.mxu0 %v419
      %879 = vmatprep.subr.mxu0 0.0
      %880 = vmatpush1.msra.mxu0 %v420
      %881 = vmatprep.subr.mxu0 0.0
      %882 = vmatpush1.msra.mxu0 %v421
      %883 = vmatprep.subr.mxu0 0.0
      %884 = vmatpush1.msra.mxu0 %v422
      %885 = vmatprep.subr.mxu0 0.0
      %886 = vmatpush1.msra.mxu0 %v423
      %887 = vmatprep.subr.mxu0 0.0
      %888 = vmatpush1.msra.mxu0 %v424
      %889 = vmatprep.subr.mxu0 0.0
      %890 = vmatpush1.msra.mxu0 %v425
      %891 = vmatprep.subr.mxu0 0.0
      %892 = vmatpush1.msra.mxu0 %v426
      %893 = vmatprep.subr.mxu0 0.0
      %894 = vmatpush1.msra.mxu0 %v427
      %895 = vmatprep.subr.mxu0 0.0
      %896 = vmatpush1.msra.mxu0 %v428
      %897 = vmatprep.subr.mxu0 0.0
      %898 = vmatpush1.msra.mxu0 %v429
      %899 = vmatprep.subr.mxu0 0.0
      %900 = vmatpush1.msra.mxu0 %v430
      %901 = vmatprep.subr.mxu0 0.0
      %902 = vmatpush1.msra.mxu0 %v431
      %903 = vmatprep.subr.mxu0 0.0
      %904 = vmatpush1.msra.mxu0 %v432
      %905 = vmatprep.subr.mxu0 0.0
      %906 = vmatpush1.msra.mxu0 %v433
      %907 = vmatprep.subr.mxu0 0.0
      %908 = vmatpush1.msra.mxu0 %v434
      %909 = vmatprep.subr.mxu0 0.0
      %910 = vmatpush1.msra.mxu0 %v435
      %911 = vmatprep.subr.mxu0 0.0
      %912 = vmatpush1.msra.mxu0 %v436
      %913 = vmatprep.subr.mxu0 0.0
      %914 = vmatpush1.msra.mxu0 %v437
      %915 = vmatprep.subr.mxu0 0.0
      %916 = vmatpush1.msra.mxu0 %v438
      %917 = vmatprep.subr.mxu0 0.0
      %918 = vmatpush1.msra.mxu0 %v439
      %919 = vmatprep.subr.mxu0 0.0
      %920 = vmatpush1.msra.mxu0 %v440
      %921 = vmatprep.subr.mxu0 0.0
      %922 = vmatpush1.msra.mxu0 %v441
      %923 = vmatprep.subr.mxu0 0.0
      %924 = vmatpush1.msra.mxu0 %v442
      %925 = vmatprep.subr.mxu0 0.0
      %926 = vmatpush1.msra.mxu0 %v443
      %927 = vmatprep.subr.mxu0 0.0
      %928 = vmatpush1.msra.mxu0 %v444
      %929 = vmatprep.subr.mxu0 0.0
      %930 = vmatpush1.msra.mxu0 %v445
      %931 = vmatprep.subr.mxu0 0.0
      %932 = vmatpush1.msra.mxu0 %v446
      %933 = vmatprep.subr.mxu0 0.0
      %934 = vmatpush1.msra.mxu0 %v447
      %935 = vmatprep.mubr.f32.mxu0 %v712
      %936 = vmatmul.mubr.f32.gmra.mrb[0].mxu0 %v710
      %v937 = vpop.f32.mrb[0].mxu0
      %v938 = vadd.f32 %v868, %v937
      %v939 = vpop.f32.mrb[0].mxu0
      %940 = vdwg.mxu0
      %941 = vmatprep.subr.mxu0 0.0
      %942 = vmatpush1.msra.mxu0 %v448
      %943 = vmatprep.subr.mxu0 0.0
      %944 = vmatpush1.msra.mxu0 %v449
      %945 = vmatprep.subr.mxu0 0.0
      %946 = vmatpush1.msra.mxu0 %v450
      %947 = vmatprep.subr.mxu0 0.0
      %948 = vmatpush1.msra.mxu0 %v451
      %949 = vmatprep.subr.mxu0 0.0
      %950 = vmatpush1.msra.mxu0 %v452
      %951 = vmatprep.subr.mxu0 0.0
      %952 = vmatpush1.msra.mxu0 %v453
      %953 = vmatprep.subr.mxu0 0.0
      %954 = vmatpush1.msra.mxu0 %v454
      %955 = vmatprep.subr.mxu0 0.0
      %956 = vmatpush1.msra.mxu0 %v455
      %957 = vmatprep.subr.mxu0 0.0
      %958 = vmatpush1.msra.mxu0 %v456
      %959 = vmatprep.subr.mxu0 0.0
      %960 = vmatpush1.msra.mxu0 %v457
      %961 = vmatprep.subr.mxu0 0.0
      %962 = vmatpush1.msra.mxu0 %v458
      %963 = vmatprep.subr.mxu0 0.0
      %964 = vmatpush1.msra.mxu0 %v459
      %965 = vmatprep.subr.mxu0 0.0
      %966 = vmatpush1.msra.mxu0 %v460
      %967 = vmatprep.subr.mxu0 0.0
      %968 = vmatpush1.msra.mxu0 %v461
      %969 = vmatprep.subr.mxu0 0.0
      %970 = vmatpush1.msra.mxu0 %v462
      %971 = vmatprep.subr.mxu0 0.0
      %972 = vmatpush1.msra.mxu0 %v463
      %973 = vmatprep.subr.mxu0 0.0
      %974 = vmatpush1.msra.mxu0 %v464
      %975 = vmatprep.subr.mxu0 0.0
      %976 = vmatpush1.msra.mxu0 %v465
      %977 = vmatprep.subr.mxu0 0.0
      %978 = vmatpush1.msra.mxu0 %v466
      %979 = vmatprep.subr.mxu0 0.0
      %980 = vmatpush1.msra.mxu0 %v467
      %981 = vmatprep.subr.mxu0 0.0
      %982 = vmatpush1.msra.mxu0 %v468
      %983 = vmatprep.subr.mxu0 0.0
      %984 = vmatpush1.msra.mxu0 %v469
      %985 = vmatprep.subr.mxu0 0.0
      %986 = vmatpush1.msra.mxu0 %v470
      %987 = vmatprep.subr.mxu0 0.0
      %988 = vmatpush1.msra.mxu0 %v471
      %989 = vmatprep.subr.mxu0 0.0
      %990 = vmatpush1.msra.mxu0 %v472
      %991 = vmatprep.subr.mxu0 0.0
      %992 = vmatpush1.msra.mxu0 %v473
      %993 = vmatprep.subr.mxu0 0.0
      %994 = vmatpush1.msra.mxu0 %v474
      %995 = vmatprep.subr.mxu0 0.0
      %996 = vmatpush1.msra.mxu0 %v475
      %997 = vmatprep.subr.mxu0 0.0
      %998 = vmatpush1.msra.mxu0 %v476
      %999 = vmatprep.subr.mxu0 0.0
      %1000 = vmatpush1.msra.mxu0 %v477
      %1001 = vmatprep.subr.mxu0 0.0
      %1002 = vmatpush1.msra.mxu0 %v478
      %1003 = vmatprep.subr.mxu0 0.0
      %1004 = vmatpush1.msra.mxu0 %v479
      %1005 = vmatprep.mubr.f32.mxu0 %v728
      %1006 = vmatmul.mubr.f32.gmra.mrb[0].mxu0 %v720
      %v1007 = vpop.f32.mrb[0].mxu0
      %v1008 = vadd.f32 %v938, %v1007
      %v1009 = vpop.f32.mrb[0].mxu0
      %1010 = vdwg.mxu0
      %1011 = vmatprep.subr.mxu0 0.0
      %1012 = vmatpush1.msra.mxu0 %v480
      %1013 = vmatprep.subr.mxu0 0.0
      %1014 = vmatpush1.msra.mxu0 %v481
      %1015 = vmatprep.subr.mxu0 0.0
      %1016 = vmatpush1.msra.mxu0 %v482
      %1017 = vmatprep.subr.mxu0 0.0
      %1018 = vmatpush1.msra.mxu0 %v483
      %1019 = vmatprep.subr.mxu0 0.0
      %1020 = vmatpush1.msra.mxu0 %v484
      %1021 = vmatprep.subr.mxu0 0.0
      %1022 = vmatpush1.msra.mxu0 %v485
      %1023 = vmatprep.subr.mxu0 0.0
      %1024 = vmatpush1.msra.mxu0 %v486
      %1025 = vmatprep.subr.mxu0 0.0
      %1026 = vmatpush1.msra.mxu0 %v487
      %1027 = vmatprep.subr.mxu0 0.0
      %1028 = vmatpush1.msra.mxu0 %v488
      %1029 = vmatprep.subr.mxu0 0.0
      %1030 = vmatpush1.msra.mxu0 %v489
      %1031 = vmatprep.subr.mxu0 0.0
      %1032 = vmatpush1.msra.mxu0 %v490
      %1033 = vmatprep.subr.mxu0 0.0
      %1034 = vmatpush1.msra.mxu0 %v491
      %1035 = vmatprep.subr.mxu0 0.0
      %1036 = vmatpush1.msra.mxu0 %v492
      %1037 = vmatprep.subr.mxu0 0.0
      %1038 = vmatpush1.msra.mxu0 %v493
      %1039 = vmatprep.subr.mxu0 0.0
      %1040 = vmatpush1.msra.mxu0 %v494
      %1041 = vmatprep.subr.mxu0 0.0
      %1042 = vmatpush1.msra.mxu0 %v495
      %1043 = vmatprep.subr.mxu0 0.0
      %1044 = vmatpush1.msra.mxu0 %v496
      %1045 = vmatprep.subr.mxu0 0.0
      %1046 = vmatpush1.msra.mxu0 %v497
      %1047 = vmatprep.subr.mxu0 0.0
      %1048 = vmatpush1.msra.mxu0 %v498
      %1049 = vmatprep.subr.mxu0 0.0
      %1050 = vmatpush1.msra.mxu0 %v499
      %1051 = vmatprep.subr.mxu0 0.0
      %1052 = vmatpush1.msra.mxu0 %v500
      %1053 = vmatprep.subr.mxu0 0.0
      %1054 = vmatpush1.msra.mxu0 %v501
      %1055 = vmatprep.subr.mxu0 0.0
      %1056 = vmatpush1.msra.mxu0 %v502
      %1057 = vmatprep.subr.mxu0 0.0
      %1058 = vmatpush1.msra.mxu0 %v503
      %1059 = vmatprep.subr.mxu0 0.0
      %1060 = vmatpush1.msra.mxu0 %v504
      %1061 = vmatprep.subr.mxu0 0.0
      %1062 = vmatpush1.msra.mxu0 %v505
      %1063 = vmatprep.subr.mxu0 0.0
      %1064 = vmatpush1.msra.mxu0 %v506
      %1065 = vmatprep.subr.mxu0 0.0
      %1066 = vmatpush1.msra.mxu0 %v507
      %1067 = vmatprep.subr.mxu0 0.0
      %1068 = vmatpush1.msra.mxu0 %v508
      %1069 = vmatprep.subr.mxu0 0.0
      %1070 = vmatpush1.msra.mxu0 %v509
      %1071 = vmatprep.subr.mxu0 0.0
      %1072 = vmatpush1.msra.mxu0 %v510
      %1073 = vmatprep.subr.mxu0 0.0
      %1074 = vmatpush1.msra.mxu0 %v511
      %1075 = vmatprep.mubr.f32.mxu0 %v729
      %1076 = vmatmul.mubr.f32.gmra.mrb[0].mxu0 %v727
      %v1077 = vpop.f32.mrb[0].mxu0
      %v1078 = vadd.f32 %v1008, %v1077
      %v1079 = vpop.f32.mrb[0].mxu0
      %1080 = vdwg.mxu0
      %1081 = vmatprep.subr.mxu0 0.0
      %1082 = vmatpush1.msra.mxu0 %v512
      %1083 = vmatprep.subr.mxu0 0.0
      %1084 = vmatpush1.msra.mxu0 %v513
      %1085 = vmatprep.subr.mxu0 0.0
      %1086 = vmatpush1.msra.mxu0 %v514
      %1087 = vmatprep.subr.mxu0 0.0
      %1088 = vmatpush1.msra.mxu0 %v515
      %1089 = vmatprep.subr.mxu0 0.0
      %1090 = vmatpush1.msra.mxu0 %v516
      %1091 = vmatprep.subr.mxu0 0.0
      %1092 = vmatpush1.msra.mxu0 %v517
      %1093 = vmatprep.subr.mxu0 0.0
      %1094 = vmatpush1.msra.mxu0 %v518
      %1095 = vmatprep.subr.mxu0 0.0
      %1096 = vmatpush1.msra.mxu0 %v519
      %1097 = vmatprep.subr.mxu0 0.0
      %1098 = vmatpush1.msra.mxu0 %v520
      %1099 = vmatprep.subr.mxu0 0.0
      %1100 = vmatpush1.msra.mxu0 %v521
      %1101 = vmatprep.subr.mxu0 0.0
      %1102 = vmatpush1.msra.mxu0 %v522
      %1103 = vmatprep.subr.mxu0 0.0
      %1104 = vmatpush1.msra.mxu0 %v523
      %1105 = vmatprep.subr.mxu0 0.0
      %1106 = vmatpush1.msra.mxu0 %v524
      %1107 = vmatprep.subr.mxu0 0.0
      %1108 = vmatpush1.msra.mxu0 %v525
      %1109 = vmatprep.subr.mxu0 0.0
      %1110 = vmatpush1.msra.mxu0 %v526
      %1111 = vmatprep.subr.mxu0 0.0
      %1112 = vmatpush1.msra.mxu0 %v527
      %1113 = vmatprep.subr.mxu0 0.0
      %1114 = vmatpush1.msra.mxu0 %v528
      %1115 = vmatprep.subr.mxu0 0.0
      %1116 = vmatpush1.msra.mxu0 %v529
      %1117 = vmatprep.subr.mxu0 0.0
      %1118 = vmatpush1.msra.mxu0 %v530
      %1119 = vmatprep.subr.mxu0 0.0
      %1120 = vmatpush1.msra.mxu0 %v531
      %1121 = vmatprep.subr.mxu0 0.0
      %1122 = vmatpush1.msra.mxu0 %v532
      %1123 = vmatprep.subr.mxu0 0.0
      %1124 = vmatpush1.msra.mxu0 %v533
      %1125 = vmatprep.subr.mxu0 0.0
      %1126 = vmatpush1.msra.mxu0 %v534
      %1127 = vmatprep.subr.mxu0 0.0
      %1128 = vmatpush1.msra.mxu0 %v535
      %1129 = vmatprep.subr.mxu0 0.0
      %1130 = vmatpush1.msra.mxu0 %v536
      %1131 = vmatprep.subr.mxu0 0.0
      %1132 = vmatpush1.msra.mxu0 %v537
      %1133 = vmatprep.subr.mxu0 0.0
      %1134 = vmatpush1.msra.mxu0 %v538
      %1135 = vmatprep.subr.mxu0 0.0
      %1136 = vmatpush1.msra.mxu0 %v539
      %1137 = vmatprep.subr.mxu0 0.0
      %1138 = vmatpush1.msra.mxu0 %v540
      %1139 = vmatprep.subr.mxu0 0.0
      %1140 = vmatpush1.msra.mxu0 %v541
      %1141 = vmatprep.subr.mxu0 0.0
      %1142 = vmatpush1.msra.mxu0 %v542
      %1143 = vmatprep.subr.mxu0 0.0
      %1144 = vmatpush1.msra.mxu0 %v543
      %1145 = vmatprep.mubr.f32.mxu0 %v745
      %1146 = vmatmul.mubr.f32.gmra.mrb[0].mxu0 %v737
      %v1147 = vpop.f32.mrb[0].mxu0
      %v1148 = vadd.f32 %v1078, %v1147
      %v1149 = vpop.f32.mrb[0].mxu0
      %1150 = vdwg.mxu0
      %1151 = vmatprep.subr.mxu0 0.0
      %1152 = vmatpush1.msra.mxu0 %v544
      %1153 = vmatprep.subr.mxu0 0.0
      %1154 = vmatpush1.msra.mxu0 %v545
      %1155 = vmatprep.subr.mxu0 0.0
      %1156 = vmatpush1.msra.mxu0 %v546
      %1157 = vmatprep.subr.mxu0 0.0
      %1158 = vmatpush1.msra.mxu0 %v547
      %1159 = vmatprep.subr.mxu0 0.0
      %1160 = vmatpush1.msra.mxu0 %v548
      %1161 = vmatprep.subr.mxu0 0.0
      %1162 = vmatpush1.msra.mxu0 %v549
      %1163 = vmatprep.subr.mxu0 0.0
      %1164 = vmatpush1.msra.mxu0 %v550
      %1165 = vmatprep.subr.mxu0 0.0
      %1166 = vmatpush1.msra.mxu0 %v551
      %1167 = vmatprep.subr.mxu0 0.0
      %1168 = vmatpush1.msra.mxu0 %v552
      %1169 = vmatprep.subr.mxu0 0.0
      %1170 = vmatpush1.msra.mxu0 %v553
      %1171 = vmatprep.subr.mxu0 0.0
      %1172 = vmatpush1.msra.mxu0 %v554
      %1173 = vmatprep.subr.mxu0 0.0
      %1174 = vmatpush1.msra.mxu0 %v555
      %1175 = vmatprep.subr.mxu0 0.0
      %1176 = vmatpush1.msra.mxu0 %v556
      %1177 = vmatprep.subr.mxu0 0.0
      %1178 = vmatpush1.msra.mxu0 %v557
      %1179 = vmatprep.subr.mxu0 0.0
      %1180 = vmatpush1.msra.mxu0 %v558
      %1181 = vmatprep.subr.mxu0 0.0
      %1182 = vmatpush1.msra.mxu0 %v559
      %1183 = vmatprep.subr.mxu0 0.0
      %1184 = vmatpush1.msra.mxu0 %v560
      %1185 = vmatprep.subr.mxu0 0.0
      %1186 = vmatpush1.msra.mxu0 %v561
      %1187 = vmatprep.subr.mxu0 0.0
      %1188 = vmatpush1.msra.mxu0 %v562
      %1189 = vmatprep.subr.mxu0 0.0
      %1190 = vmatpush1.msra.mxu0 %v563
      %1191 = vmatprep.subr.mxu0 0.0
      %1192 = vmatpush1.msra.mxu0 %v564
      %1193 = vmatprep.subr.mxu0 0.0
      %1194 = vmatpush1.msra.mxu0 %v565
      %1195 = vmatprep.subr.mxu0 0.0
      %1196 = vmatpush1.msra.mxu0 %v566
      %1197 = vmatprep.subr.mxu0 0.0
      %1198 = vmatpush1.msra.mxu0 %v567
      %1199 = vmatprep.subr.mxu0 0.0
      %1200 = vmatpush1.msra.mxu0 %v568
      %1201 = vmatprep.subr.mxu0 0.0
      %1202 = vmatpush1.msra.mxu0 %v569
      %1203 = vmatprep.subr.mxu0 0.0
      %1204 = vmatpush1.msra.mxu0 %v570
      %1205 = vmatprep.subr.mxu0 0.0
      %1206 = vmatpush1.msra.mxu0 %v571
      %1207 = vmatprep.subr.mxu0 0.0
      %1208 = vmatpush1.msra.mxu0 %v572
      %1209 = vmatprep.subr.mxu0 0.0
      %1210 = vmatpush1.msra.mxu0 %v573
      %1211 = vmatprep.subr.mxu0 0.0
      %1212 = vmatpush1.msra.mxu0 %v574
      %1213 = vmatprep.subr.mxu0 0.0
      %1214 = vmatpush1.msra.mxu0 %v575
      %1215 = vmatprep.mubr.f32.mxu0 %v746
      %1216 = vmatmul.mubr.f32.gmra.mrb[0].mxu0 %v744
      %v1217 = vpop.f32.mrb[0].mxu0
      %v1218 = vadd.f32 %v1148, %v1217
      %v1219 = vpop.f32.mrb[0].mxu0
      %1220 = vdwg.mxu0
      %1221 = vmatprep.subr.mxu0 0.0
      %1222 = vmatpush1.msra.mxu0 %v576
      %1223 = vmatprep.subr.mxu0 0.0
      %1224 = vmatpush1.msra.mxu0 %v577
      %1225 = vmatprep.subr.mxu0 0.0
      %1226 = vmatpush1.msra.mxu0 %v578
      %1227 = vmatprep.subr.mxu0 0.0
      %1228 = vmatpush1.msra.mxu0 %v579
      %1229 = vmatprep.subr.mxu0 0.0
      %1230 = vmatpush1.msra.mxu0 %v580
      %1231 = vmatprep.subr.mxu0 0.0
      %1232 = vmatpush1.msra.mxu0 %v581
      %1233 = vmatprep.subr.mxu0 0.0
      %1234 = vmatpush1.msra.mxu0 %v582
      %1235 = vmatprep.subr.mxu0 0.0
      %1236 = vmatpush1.msra.mxu0 %v583
      %1237 = vmatprep.subr.mxu0 0.0
      %1238 = vmatpush1.msra.mxu0 %v584
      %1239 = vmatprep.subr.mxu0 0.0
      %1240 = vmatpush1.msra.mxu0 %v585
      %1241 = vmatprep.subr.mxu0 0.0
      %1242 = vmatpush1.msra.mxu0 %v586
      %1243 = vmatprep.subr.mxu0 0.0
      %1244 = vmatpush1.msra.mxu0 %v587
      %1245 = vmatprep.subr.mxu0 0.0
      %1246 = vmatpush1.msra.mxu0 %v588
      %1247 = vmatprep.subr.mxu0 0.0
      %1248 = vmatpush1.msra.mxu0 %v589
      %1249 = vmatprep.subr.mxu0 0.0
      %1250 = vmatpush1.msra.mxu0 %v590
      %1251 = vmatprep.subr.mxu0 0.0
      %1252 = vmatpush1.msra.mxu0 %v591
      %1253 = vmatprep.subr.mxu0 0.0
      %1254 = vmatpush1.msra.mxu0 %v592
      %1255 = vmatprep.subr.mxu0 0.0
      %1256 = vmatpush1.msra.mxu0 %v593
      %1257 = vmatprep.subr.mxu0 0.0
      %1258 = vmatpush1.msra.mxu0 %v594
      %1259 = vmatprep.subr.mxu0 0.0
      %1260 = vmatpush1.msra.mxu0 %v595
      %1261 = vmatprep.subr.mxu0 0.0
      %1262 = vmatpush1.msra.mxu0 %v596
      %1263 = vmatprep.subr.mxu0 0.0
      %1264 = vmatpush1.msra.mxu0 %v597
      %1265 = vmatprep.subr.mxu0 0.0
      %1266 = vmatpush1.msra.mxu0 %v598
      %1267 = vmatprep.subr.mxu0 0.0
      %1268 = vmatpush1.msra.mxu0 %v599
      %1269 = vmatprep.subr.mxu0 0.0
      %1270 = vmatpush1.msra.mxu0 %v600
      %1271 = vmatprep.subr.mxu0 0.0
      %1272 = vmatpush1.msra.mxu0 %v601
      %1273 = vmatprep.subr.mxu0 0.0
      %1274 = vmatpush1.msra.mxu0 %v602
      %1275 = vmatprep.subr.mxu0 0.0
      %1276 = vmatpush1.msra.mxu0 %v603
      %1277 = vmatprep.subr.mxu0 0.0
      %1278 = vmatpush1.msra.mxu0 %v604
      %1279 = vmatprep.subr.mxu0 0.0
      %1280 = vmatpush1.msra.mxu0 %v605
      %1281 = vmatprep.subr.mxu0 0.0
      %1282 = vmatpush1.msra.mxu0 %v606
      %1283 = vmatprep.subr.mxu0 0.0
      %1284 = vmatpush1.msra.mxu0 %v607
      %1285 = vmatprep.mubr.f32.mxu0 %v762
      %1286 = vmatmul.mubr.f32.gmra.mrb[0].mxu0 %v754
      %v1287 = vpop.f32.mrb[0].mxu0
      %v1288 = vadd.f32 %v1218, %v1287
      %v1289 = vpop.f32.mrb[0].mxu0
      %1290 = vdwg.mxu0
      %1291 = vmatprep.subr.mxu0 0.0
      %1292 = vmatpush1.msra.mxu0 %v608
      %1293 = vmatprep.subr.mxu0 0.0
      %1294 = vmatpush1.msra.mxu0 %v609
      %1295 = vmatprep.subr.mxu0 0.0
      %1296 = vmatpush1.msra.mxu0 %v610
      %1297 = vmatprep.subr.mxu0 0.0
      %1298 = vmatpush1.msra.mxu0 %v611
      %1299 = vmatprep.subr.mxu0 0.0
      %1300 = vmatpush1.msra.mxu0 %v612
      %1301 = vmatprep.subr.mxu0 0.0
      %1302 = vmatpush1.msra.mxu0 %v613
      %1303 = vmatprep.subr.mxu0 0.0
      %1304 = vmatpush1.msra.mxu0 %v614
      %1305 = vmatprep.subr.mxu0 0.0
      %1306 = vmatpush1.msra.mxu0 %v615
      %1307 = vmatprep.subr.mxu0 0.0
      %1308 = vmatpush1.msra.mxu0 %v616
      %1309 = vmatprep.subr.mxu0 0.0
      %1310 = vmatpush1.msra.mxu0 %v617
      %1311 = vmatprep.subr.mxu0 0.0
      %1312 = vmatpush1.msra.mxu0 %v618
      %1313 = vmatprep.subr.mxu0 0.0
      %1314 = vmatpush1.msra.mxu0 %v619
      %1315 = vmatprep.subr.mxu0 0.0
      %1316 = vmatpush1.msra.mxu0 %v620
      %1317 = vmatprep.subr.mxu0 0.0
      %1318 = vmatpush1.msra.mxu0 %v621
      %1319 = vmatprep.subr.mxu0 0.0
      %1320 = vmatpush1.msra.mxu0 %v622
      %1321 = vmatprep.subr.mxu0 0.0
      %1322 = vmatpush1.msra.mxu0 %v623
      %1323 = vmatprep.subr.mxu0 0.0
      %1324 = vmatpush1.msra.mxu0 %v624
      %1325 = vmatprep.subr.mxu0 0.0
      %1326 = vmatpush1.msra.mxu0 %v625
      %1327 = vmatprep.subr.mxu0 0.0
      %1328 = vmatpush1.msra.mxu0 %v626
      %1329 = vmatprep.subr.mxu0 0.0
      %1330 = vmatpush1.msra.mxu0 %v627
      %1331 = vmatprep.subr.mxu0 0.0
      %1332 = vmatpush1.msra.mxu0 %v628
      %1333 = vmatprep.subr.mxu0 0.0
      %1334 = vmatpush1.msra.mxu0 %v629
      %1335 = vmatprep.subr.mxu0 0.0
      %1336 = vmatpush1.msra.mxu0 %v630
      %1337 = vmatprep.subr.mxu0 0.0
      %1338 = vmatpush1.msra.mxu0 %v631
      %1339 = vmatprep.subr.mxu0 0.0
      %1340 = vmatpush1.msra.mxu0 %v632
      %1341 = vmatprep.subr.mxu0 0.0
      %1342 = vmatpush1.msra.mxu0 %v633
      %1343 = vmatprep.subr.mxu0 0.0
      %1344 = vmatpush1.msra.mxu0 %v634
      %1345 = vmatprep.subr.mxu0 0.0
      %1346 = vmatpush1.msra.mxu0 %v635
      %1347 = vmatprep.subr.mxu0 0.0
      %1348 = vmatpush1.msra.mxu0 %v636
      %1349 = vmatprep.subr.mxu0 0.0
      %1350 = vmatpush1.msra.mxu0 %v637
      %1351 = vmatprep.subr.mxu0 0.0
      %1352 = vmatpush1.msra.mxu0 %v638
      %1353 = vmatprep.subr.mxu0 0.0
      %1354 = vmatpush1.msra.mxu0 %v639
      %1355 = vmatprep.mubr.f32.mxu0 %v763
      %1356 = vmatmul.mubr.f32.gmra.mrb[0].mxu0 %v761
      %v1357 = vpop.f32.mrb[0].mxu0
      %v1358 = vadd.f32 %v1288, %v1357
      %v1359 = vpop.f32.mrb[0].mxu0
      %1360 = vdwg.mxu0
      %1361 = vmatprep.subr.mxu0 0.0
      %1362 = vmatpush1.msra.mxu0 %v640
      %1363 = vmatprep.subr.mxu0 0.0
      %1364 = vmatpush1.msra.mxu0 %v641
      %1365 = vmatprep.subr.mxu0 0.0
      %1366 = vmatpush1.msra.mxu0 %v642
      %1367 = vmatprep.subr.mxu0 0.0
      %1368 = vmatpush1.msra.mxu0 %v643
      %1369 = vmatprep.subr.mxu0 0.0
      %1370 = vmatpush1.msra.mxu0 %v644
      %1371 = vmatprep.subr.mxu0 0.0
      %1372 = vmatpush1.msra.mxu0 %v645
      %1373 = vmatprep.subr.mxu0 0.0
      %1374 = vmatpush1.msra.mxu0 %v646
      %1375 = vmatprep.subr.mxu0 0.0
      %1376 = vmatpush1.msra.mxu0 %v647
      %1377 = vmatprep.subr.mxu0 0.0
      %1378 = vmatpush1.msra.mxu0 %v648
      %1379 = vmatprep.subr.mxu0 0.0
      %1380 = vmatpush1.msra.mxu0 %v649
      %1381 = vmatprep.subr.mxu0 0.0
      %1382 = vmatpush1.msra.mxu0 %v650
      %1383 = vmatprep.subr.mxu0 0.0
      %1384 = vmatpush1.msra.mxu0 %v651
      %1385 = vmatprep.subr.mxu0 0.0
      %1386 = vmatpush1.msra.mxu0 %v652
      %1387 = vmatprep.subr.mxu0 0.0
      %1388 = vmatpush1.msra.mxu0 %v653
      %1389 = vmatprep.subr.mxu0 0.0
      %1390 = vmatpush1.msra.mxu0 %v654
      %1391 = vmatprep.subr.mxu0 0.0
      %1392 = vmatpush1.msra.mxu0 %v655
      %1393 = vmatprep.subr.mxu0 0.0
      %1394 = vmatpush1.msra.mxu0 %v656
      %1395 = vmatprep.subr.mxu0 0.0
      %1396 = vmatpush1.msra.mxu0 %v657
      %1397 = vmatprep.subr.mxu0 0.0
      %1398 = vmatpush1.msra.mxu0 %v658
      %1399 = vmatprep.subr.mxu0 0.0
      %1400 = vmatpush1.msra.mxu0 %v659
      %1401 = vmatprep.subr.mxu0 0.0
      %1402 = vmatpush1.msra.mxu0 %v660
      %1403 = vmatprep.subr.mxu0 0.0
      %1404 = vmatpush1.msra.mxu0 %v661
      %1405 = vmatprep.subr.mxu0 0.0
      %1406 = vmatpush1.msra.mxu0 %v662
      %1407 = vmatprep.subr.mxu0 0.0
      %1408 = vmatpush1.msra.mxu0 %v663
      %1409 = vmatprep.subr.mxu0 0.0
      %1410 = vmatpush1.msra.mxu0 %v664
      %1411 = vmatprep.subr.mxu0 0.0
      %1412 = vmatpush1.msra.mxu0 %v665
      %1413 = vmatprep.subr.mxu0 0.0
      %1414 = vmatpush1.msra.mxu0 %v666
      %1415 = vmatprep.subr.mxu0 0.0
      %1416 = vmatpush1.msra.mxu0 %v667
      %1417 = vmatprep.subr.mxu0 0.0
      %1418 = vmatpush1.msra.mxu0 %v668
      %1419 = vmatprep.subr.mxu0 0.0
      %1420 = vmatpush1.msra.mxu0 %v669
      %1421 = vmatprep.subr.mxu0 0.0
      %1422 = vmatpush1.msra.mxu0 %v670
      %1423 = vmatprep.subr.mxu0 0.0
      %1424 = vmatpush1.msra.mxu0 %v671
      %1425 = vmatprep.mubr.f32.mxu0 %v779
      %1426 = vmatmul.mubr.f32.gmra.mrb[0].mxu0 %v771
      %v1427 = vpop.f32.mrb[0].mxu0
      %v1428 = vadd.f32 %v1358, %v1427
      %v1429 = vpop.f32.mrb[0].mxu0
      %1430 = vdwg.mxu0
      %1431 = vmatprep.subr.mxu0 0.0
      %1432 = vmatpush1.msra.mxu0 %v672
      %1433 = vmatprep.subr.mxu0 0.0
      %1434 = vmatpush1.msra.mxu0 %v673
      %1435 = vmatprep.subr.mxu0 0.0
      %1436 = vmatpush1.msra.mxu0 %v674
      %1437 = vmatprep.subr.mxu0 0.0
      %1438 = vmatpush1.msra.mxu0 %v675
      %1439 = vmatprep.subr.mxu0 0.0
      %1440 = vmatpush1.msra.mxu0 %v676
      %1441 = vmatprep.subr.mxu0 0.0
      %1442 = vmatpush1.msra.mxu0 %v677
      %1443 = vmatprep.subr.mxu0 0.0
      %1444 = vmatpush1.msra.mxu0 %v678
      %1445 = vmatprep.subr.mxu0 0.0
      %1446 = vmatpush1.msra.mxu0 %v679
      %1447 = vmatprep.subr.mxu0 0.0
      %1448 = vmatpush1.msra.mxu0 %v680
      %1449 = vmatprep.subr.mxu0 0.0
      %1450 = vmatpush1.msra.mxu0 %v681
      %1451 = vmatprep.subr.mxu0 0.0
      %1452 = vmatpush1.msra.mxu0 %v682
      %1453 = vmatprep.subr.mxu0 0.0
      %1454 = vmatpush1.msra.mxu0 %v683
      %1455 = vmatprep.subr.mxu0 0.0
      %1456 = vmatpush1.msra.mxu0 0.0
      %1457 = vmatprep.subr.mxu0 0.0
      %1458 = vmatpush1.msra.mxu0 0.0
      %1459 = vmatprep.subr.mxu0 0.0
      %1460 = vmatpush1.msra.mxu0 0.0
      %1461 = vmatprep.subr.mxu0 0.0
      %1462 = vmatpush1.msra.mxu0 0.0
      %1463 = vmatprep.subr.mxu0 0.0
      %1464 = vmatpush1.msra.mxu0 0.0
      %1465 = vmatprep.subr.mxu0 0.0
      %1466 = vmatpush1.msra.mxu0 0.0
      %1467 = vmatprep.subr.mxu0 0.0
      %1468 = vmatpush1.msra.mxu0 0.0
      %1469 = vmatprep.subr.mxu0 0.0
      %1470 = vmatpush1.msra.mxu0 0.0
      %1471 = vmatprep.subr.mxu0 0.0
      %1472 = vmatpush1.msra.mxu0 0.0
      %1473 = vmatprep.subr.mxu0 0.0
      %1474 = vmatpush1.msra.mxu0 0.0
      %1475 = vmatprep.subr.mxu0 0.0
      %1476 = vmatpush1.msra.mxu0 0.0
      %1477 = vmatprep.subr.mxu0 0.0
      %1478 = vmatpush1.msra.mxu0 0.0
      %1479 = vmatprep.subr.mxu0 0.0
      %1480 = vmatpush1.msra.mxu0 0.0
      %1481 = vmatprep.subr.mxu0 0.0
      %1482 = vmatpush1.msra.mxu0 0.0
      %1483 = vmatprep.subr.mxu0 0.0
      %1484 = vmatpush1.msra.mxu0 0.0
      %1485 = vmatprep.subr.mxu0 0.0
      %1486 = vmatpush1.msra.mxu0 0.0
      %1487 = vmatprep.subr.mxu0 0.0
      %1488 = vmatpush1.msra.mxu0 0.0
      %1489 = vmatprep.subr.mxu0 0.0
      %1490 = vmatpush1.msra.mxu0 0.0
      %1491 = vmatprep.subr.mxu0 0.0
      %1492 = vmatpush1.msra.mxu0 0.0
      %1493 = vmatprep.subr.mxu0 0.0
      %1494 = vmatpush1.msra.mxu0 0.0
      %1495 = vmatprep.mubr.f32.mxu0 0.0
      %1496 = vmatmul.mubr.f32.gmra.mrb[0].mxu0 %v799
      %v1497 = vpop.f32.mrb[0].mxu0
      %v1498 = vadd.f32 %v1428, %v1497
      %v1499 = vpop.f32.mrb[0].mxu0
      %1500 = vdwg.mxu0
      %v1501 = vtanh.pop %v1498
      %v1502 = vld [vmem:[%s363] sm:$0xff]
      %v1503 = vld [vmem:[%s363 + $0x8] sm:$0xff]
      %v1504 = vld [vmem:[%s363 + $0x10] sm:$0xff]
      %v1505 = vld [vmem:[%s363 + $0x18] sm:$0xff]
      %v1506 = vld [vmem:[%s363 + $0x20] sm:$0xff]
      %v1507 = vld [vmem:[%s363 + $0x28] sm:$0xff]
      %v1508 = vld [vmem:[%s363 + $0x30] sm:$0xff]
      %v1509 = vld [vmem:[%s363 + $0x38] sm:$0xff]
      %v1510 = vld [vmem:[%s366] sm:$0x1]
      %v1512 = vlaneseq
      %v1513 = vshrl.u32 %v1512, 7
      %v1514 = vsub.s32 0, %v1513
      %v1515 = vrot.slane %v1510, %v1514
      %vm1517 = vcmask 523264
      %v1519 = vsel %vm1517, %v1501, 0
      %1521 = vmatprep.subr.mxu0 0.0
      %1522 = vmatpush1.msra.mxu0 %v1502
      %1523 = vmatprep.subr.mxu0 0.0
      %1524 = vmatpush1.msra.mxu0 %v1503
      %1525 = vmatprep.subr.mxu0 0.0
      %1526 = vmatpush1.msra.mxu0 %v1504
      %1527 = vmatprep.subr.mxu0 0.0
      %1528 = vmatpush1.msra.mxu0 %v1505
      %1529 = vmatprep.subr.mxu0 0.0
      %1530 = vmatpush1.msra.mxu0 %v1506
      %1531 = vmatprep.subr.mxu0 0.0
      %1532 = vmatpush1.msra.mxu0 %v1507
      %1533 = vmatprep.subr.mxu0 0.0
      %1534 = vmatpush1.msra.mxu0 %v1508
      %1535 = vmatprep.subr.mxu0 0.0
      %1536 = vmatpush1.msra.mxu0 %v1509
      %1537 = vmatprep.subr.mxu0 0.0
      %1538 = vmatpush1.msra.mxu0 0.0
      %1539 = vmatprep.subr.mxu0 0.0
      %1540 = vmatpush1.msra.mxu0 0.0
      %1541 = vmatprep.subr.mxu0 0.0
      %1542 = vmatpush1.msra.mxu0 0.0
      %1543 = vmatprep.subr.mxu0 0.0
      %1544 = vmatpush1.msra.mxu0 0.0
      %1545 = vmatprep.subr.mxu0 0.0
      %1546 = vmatpush1.msra.mxu0 0.0
      %1547 = vmatprep.subr.mxu0 0.0
      %1548 = vmatpush1.msra.mxu0 0.0
      %1549 = vmatprep.subr.mxu0 0.0
      %1550 = vmatpush1.msra.mxu0 0.0
      %1551 = vmatprep.subr.mxu0 0.0
      %1552 = vmatpush1.msra.mxu0 0.0
      %1553 = vmatprep.subr.mxu0 0.0
      %1554 = vmatpush1.msra.mxu0 0.0
      %1555 = vmatprep.subr.mxu0 0.0
      %1556 = vmatpush1.msra.mxu0 0.0
      %1557 = vmatprep.subr.mxu0 0.0
      %1558 = vmatpush1.msra.mxu0 0.0
      %1559 = vmatprep.subr.mxu0 0.0
      %1560 = vmatpush1.msra.mxu0 0.0
      %1561 = vmatprep.subr.mxu0 0.0
      %1562 = vmatpush1.msra.mxu0 0.0
      %1563 = vmatprep.subr.mxu0 0.0
      %1564 = vmatpush1.msra.mxu0 0.0
      %1565 = vmatprep.subr.mxu0 0.0
      %1566 = vmatpush1.msra.mxu0 0.0
      %1567 = vmatprep.subr.mxu0 0.0
      %1568 = vmatpush1.msra.mxu0 0.0
      %1569 = vmatprep.subr.mxu0 0.0
      %1570 = vmatpush1.msra.mxu0 0.0
      %1571 = vmatprep.subr.mxu0 0.0
      %1572 = vmatpush1.msra.mxu0 0.0
      %1573 = vmatprep.subr.mxu0 0.0
      %1574 = vmatpush1.msra.mxu0 0.0
      %1575 = vmatprep.subr.mxu0 0.0
      %1576 = vmatpush1.msra.mxu0 0.0
      %1577 = vmatprep.subr.mxu0 0.0
      %1578 = vmatpush1.msra.mxu0 0.0
      %1579 = vmatprep.subr.mxu0 0.0
      %1580 = vmatpush1.msra.mxu0 0.0
      %1581 = vmatprep.subr.mxu0 0.0
      %1582 = vmatpush1.msra.mxu0 0.0
      %1583 = vmatprep.subr.mxu0 0.0
      %1584 = vmatpush1.msra.mxu0 0.0
      %1585 = vmatprep.mubr.f32.mxu0 0.0
      %1586 = vmatmul.mubr.f32.gmra.mrb[0].mxu0 %v1519
      %v1587 = vpop.f32.mrb[0].mxu0
      %v1588 = vadd.f32 %v1515, %v1587
      %v1589 = vpop.f32.mrb[0].mxu0
      %1590 = vdwg.mxu0
      %v1591 = vtanh.pop %v1588
      %v1592 = vld [vmem:[%s371] sm:$0xff]
      %v1593 = vld [vmem:[%s371 + $0x8] sm:$0xff]
      %v1594 = vld [vmem:[%s371 + $0x10] sm:$0xff]
      %v1595 = vld [vmem:[%s371 + $0x18] sm:$0xff]
      %v1596 = vld [vmem:[%s371 + $0x20] sm:$0xff]
      %v1597 = vld [vmem:[%s371 + $0x28] sm:$0xff]
      %v1598 = vld [vmem:[%s371 + $0x30] sm:$0xff]
      %v1599 = vld [vmem:[%s371 + $0x38] sm:$0xff]
      %v1600 = vld [vmem:[%s374] sm:$0x1]
      %v1602 = vlaneseq
      %v1603 = vshrl.u32 %v1602, 7
      %v1604 = vsub.s32 0, %v1603
      %v1605 = vrot.slane %v1600, %v1604
      %v1608 = vsel %vm1517, %v1591, 0
      %1610 = vmatprep.subr.mxu0 0.0
      %1611 = vmatpush1.msra.mxu0 %v1592
      %1612 = vmatprep.subr.mxu0 0.0
      %1613 = vmatpush1.msra.mxu0 %v1593
      %1614 = vmatprep.subr.mxu0 0.0
      %1615 = vmatpush1.msra.mxu0 %v1594
      %1616 = vmatprep.subr.mxu0 0.0
      %1617 = vmatpush1.msra.mxu0 %v1595
      %1618 = vmatprep.subr.mxu0 0.0
      %1619 = vmatpush1.msra.mxu0 %v1596
      %1620 = vmatprep.subr.mxu0 0.0
      %1621 = vmatpush1.msra.mxu0 %v1597
      %1622 = vmatprep.subr.mxu0 0.0
      %1623 = vmatpush1.msra.mxu0 %v1598
      %1624 = vmatprep.subr.mxu0 0.0
      %1625 = vmatpush1.msra.mxu0 %v1599
      %1626 = vmatprep.subr.mxu0 0.0
      %1627 = vmatpush1.msra.mxu0 0.0
      %1628 = vmatprep.subr.mxu0 0.0
      %1629 = vmatpush1.msra.mxu0 0.0
      %1630 = vmatprep.subr.mxu0 0.0
      %1631 = vmatpush1.msra.mxu0 0.0
      %1632 = vmatprep.subr.mxu0 0.0
      %1633 = vmatpush1.msra.mxu0 0.0
      %1634 = vmatprep.subr.mxu0 0.0
      %1635 = vmatpush1.msra.mxu0 0.0
      %1636 = vmatprep.subr.mxu0 0.0
      %1637 = vmatpush1.msra.mxu0 0.0
      %1638 = vmatprep.subr.mxu0 0.0
      %1639 = vmatpush1.msra.mxu0 0.0
      %1640 = vmatprep.subr.mxu0 0.0
      %1641 = vmatpush1.msra.mxu0 0.0
      %1642 = vmatprep.subr.mxu0 0.0
      %1643 = vmatpush1.msra.mxu0 0.0
      %1644 = vmatprep.subr.mxu0 0.0
      %1645 = vmatpush1.msra.mxu0 0.0
      %1646 = vmatprep.subr.mxu0 0.0
      %1647 = vmatpush1.msra.mxu0 0.0
      %1648 = vmatprep.subr.mxu0 0.0
      %1649 = vmatpush1.msra.mxu0 0.0
      %1650 = vmatprep.subr.mxu0 0.0
      %1651 = vmatpush1.msra.mxu0 0.0
      %1652 = vmatprep.subr.mxu0 0.0
      %1653 = vmatpush1.msra.mxu0 0.0
      %1654 = vmatprep.subr.mxu0 0.0
      %1655 = vmatpush1.msra.mxu0 0.0
      %1656 = vmatprep.subr.mxu0 0.0
      %1657 = vmatpush1.msra.mxu0 0.0
      %1658 = vmatprep.subr.mxu0 0.0
      %1659 = vmatpush1.msra.mxu0 0.0
      %1660 = vmatprep.subr.mxu0 0.0
      %1661 = vmatpush1.msra.mxu0 0.0
      %1662 = vmatprep.subr.mxu0 0.0
      %1663 = vmatpush1.msra.mxu0 0.0
      %1664 = vmatprep.subr.mxu0 0.0
      %1665 = vmatpush1.msra.mxu0 0.0
      %1666 = vmatprep.subr.mxu0 0.0
      %1667 = vmatpush1.msra.mxu0 0.0
      %1668 = vmatprep.subr.mxu0 0.0
      %1669 = vmatpush1.msra.mxu0 0.0
      %1670 = vmatprep.subr.mxu0 0.0
      %1671 = vmatpush1.msra.mxu0 0.0
      %1672 = vmatprep.subr.mxu0 0.0
      %1673 = vmatpush1.msra.mxu0 0.0
      %1674 = vmatprep.mubr.f32.mxu0 0.0
      %1675 = vmatmul.mubr.f32.gmra.mrb[0].mxu0 %v1608
      %v1676 = vpop.f32.mrb[0].mxu0
      %v1677 = vadd.f32 %v1605, %v1676
      %v1678 = vpop.f32.mrb[0].mxu0
      %1679 = vdwg.mxu0
      %vm1680 = vcmask 58368
      %1681 = vst.msk [vmem:[%s378] sm:$0x3] %vm1680, %v1677
      %p1682 = scmp.lt.s32.totalorder %s18, 1
      %s1683 = scalar_select %p1682, %s18, 1
      %s1684 = smul.addr %s1683, 2
      %s1685 = scalar_lea.vmem %s7, %s1684
      // Predicated region
      $region49: #{actor_critic_forward.3} parent=47 // pred_check
        %p1686 = pneg %p218
      $region50: #{actor_critic_forward.3} parent=47 // pred_check_branch
        %1688 = sbr.rel (%p1686) target = $region52
      $region51: #{actor_critic_forward.3} parent=47 // pred_region
        _
      $region52: #{actor_critic_forward.3} parent=47 // pred_fallthru
        _
    $region48: #{actor_critic_forward.3} parent=5 // pred_fallthru
      _
    %p1689 = scmp.le.s32.totalorder 2, %s13
    // Predicated region
    $region53: #{actor_critic_forward.3} parent=5 // pred_check
      %p1690 = pneg %p1689
    $region54: #{actor_critic_forward.3} parent=5 // pred_check_branch
      %1692 = sbr.rel (%p1690) target = $region56
    $region55: #{actor_critic_forward.3} parent=5 // pred_region
      %s1693 = ssub.s32 %s13, 2
      // Predicated region
      $region57: #{actor_critic_forward.3} parent=55 // pred_check
        %p1694 = pneg %p224
      $region58: #{actor_critic_forward.3} parent=55 // pred_check_branch
        %1696 = sbr.rel (%p1694) target = $region60
      $region59: #{actor_critic_forward.3} parent=55 // pred_region
        %p1697 = scmp.lt.s32.totalorder %s19, 1
        %s1698 = scalar_select %p1697, %s19, 1
        %s1699 = smul.addr %s1698, 2
        %s1700 = scalar_lea.vmem %s7, %s1699
      $region60: #{actor_critic_forward.3} parent=55 // pred_fallthru
        _
    $region56: #{actor_critic_forward.3} parent=5 // pred_fallthru
      _
  $region6: #{actor_critic_forward.3} parent=0 // loop_footer
    %s17 = sadd.s32 1, %s13
  $region7: #{actor_critic_forward.3} parent=0 // loop_footer_branch
    %12 = sbr.rel target = $region3
  $region8: #{actor_critic_forward.3} parent=0 // loop_exit
    _

// kernel: actor_critic_forward.2
$region0: #{actor_critic_forward.2}
  #allocation0 [shape = 'u32[]', space=smem, size = 0x4, offset = 0x4, fixed_abs, tag = 'smem constant byte address 0x4 - core index']
  #allocation1 [shape = 'u32[144,128]{1,0:T(1,128)}', space=vmem, size = 0x12000, scoped, tag = 'internal scratch']
  #allocation2 [shape = 'f32[224,25]{1,0:T(8,128)}', space=vmem, size = 0x1c000, scoped, tag = 'scratch operand']
  %s0 = inlined_call_operand.vmem [shape: f32[9,192,1], index: 0, kind: input, shape index: {}]
  %s1 = inlined_call_operand.vmem [shape: f32[192,25], index: 1, kind: input, shape index: {}]
  %s2 = inlined_call_operand.vmem [shape: f32[2,25,25], index: 2, kind: input, shape index: {}]
  %s3 = inlined_call_operand.hbm [shape: f32[2,1,25], index: 3, kind: input, shape index: {}]
  %s4 = inlined_call_operand.vmem [shape: f32[2,9,25,25], index: 4, kind: input, shape index: {}]
  %s5 = inlined_call_operand.hbm [shape: f32[2,1,25], index: 5, kind: input, shape index: {}]
  %s6 = inlined_call_operand.vmem [shape: f32[2,9,25,25], index: 6, kind: input, shape index: {}]
  %s7 = inlined_call_operand.hbm [shape: f32[2,1,25], index: 7, kind: input, shape index: {}]
  %s8 = inlined_call_operand.vmem [shape: f32[2,192,25], index: 8, kind: output, shape index: {}]
  %s9 = sld [smem:[#allocation0]]
  $region77: #{actor_critic_forward.2} parent=0
    _
  %s11 = ssub.s32 1, %s9
  %s12 = scalar_select 0, %s11, %s9
  $region1: #{actor_critic_forward.2} parent=0
    #allocation3 [shape = 'u8[1024]{0}', space=vmem, size = 0x400, scoped, tag = 'input window, operand 3']
    #allocation4 [shape = 's32[2]{0}', space=sflag, size = 0x8, scoped, tag = 'scoped memory for actor_critic_forward.2']
    #allocation5 [shape = 'u8[1024]{0}', space=vmem, size = 0x400, scoped, tag = 'input window, operand 5']
    #allocation6 [shape = 's32[2]{0}', space=sflag, size = 0x8, scoped, tag = 'scoped memory for actor_critic_forward.2']
    #allocation7 [shape = 'u8[1024]{0}', space=vmem, size = 0x400, scoped, tag = 'input window, operand 7']
    %13 = vsyncpa [#allocation4], 0
    %s14 = scalar_lea.sflag [#allocation4], 1
    %15 = vsyncpa %s14, 0
    %16 = vsyncpa [#allocation6], 0
    %s17 = scalar_lea.sflag [#allocation6], 1
    %18 = vsyncpa %s17, 0
    loop: start=0, step=1, limit=4
    $region2: #{actor_critic_forward.2} parent=1 // loop_pre_header
      _
    $region3: #{actor_critic_forward.2} parent=1 // loop_header
      %s20 = sphi 0, %s24
      %p21 = scmp.ge.s32.totalorder %s20, 4
      %s28 = sphi 0, %s28
      %s30 = sphi 0, %s28
      %s31 = sphi 0, %s30
      %s45 = sphi 0, %s31
      %s49 = sphi 0, %s49
      %s51 = sphi 0, %s49
      %s52 = sphi 0, %s51
      %s66 = sphi 0, %s52
      %s72 = sphi 0, %s74
      %s75 = sphi 0, %s72
      %s76 = sphi 0, %s75
      %s92 = sphi 0, %s76
      %s98 = sphi 0, %s100
      %s101 = sphi 0, %s98
      %s102 = sphi 0, %s101
      %s118 = sphi 0, %s102
      %s124 = sphi 0, %s126
      %s127 = sphi 0, %s124
      %s128 = sphi 0, %s127
      %s144 = sphi 0, %s128
      %s150 = sphi 0, %s152
      %s153 = sphi 0, %s150
      %s154 = sphi 0, %s153
      %s170 = sphi 0, %s154
      %s176 = sphi 0, %s178
      %s179 = sphi 0, %s176
      %s180 = sphi 0, %s179
      %s196 = sphi 0, %s180
      %s202 = sphi 0, %s204
      %s205 = sphi 0, %s202
      %s206 = sphi 0, %s205
      %s222 = sphi 0, %s206
      %s228 = sphi 0, %s230
      %s231 = sphi 0, %s228
      %s232 = sphi 0, %s231
      %s248 = sphi 0, %s232
    $region4: #{actor_critic_forward.2} parent=1 // loop_header_branch
      %23 = sbr.rel (%p21) target = $region8
    $region5: #{actor_critic_forward.2} parent=1 // loop_body
      %s25 = ssub.s32 %s20, 1
      %s26 = ssub.s32 %s20, 2
      %s27 = sadd.s32 %s20, 1
      %s29 = sadd.s32 %s28, 1
      %p32 = scmp.eq.s32.totalorder %s20, 1
      %p33 = scmp.ne.s32.totalorder %s28, %s30
      %p34 = scmp.eq.s32.totalorder %s20, 0
      %p35 = por %p33, %p34
      %p36 = scmp.ne.s32.totalorder %s28, %s30
      %p37 = scmp.eq.s32.totalorder %s25, 1
      %p38 = por %p36, %p37
      %p39 = scmp.ne.s32.totalorder %s30, %s31
      %p40 = scmp.eq.s32.totalorder %s25, 0
      %p41 = por %p39, %p40
      %p42 = scmp.ne.s32.totalorder %s30, %s31
      %p43 = scmp.eq.s32.totalorder %s26, 1
      %p44 = por %p42, %p43
      %p46 = scmp.ne.s32.totalorder %s31, %s45
      %p47 = scmp.eq.s32.totalorder %s26, 0
      %p48 = por %p46, %p47
      %s50 = sadd.s32 %s49, 1
      %p53 = scmp.eq.s32.totalorder %s20, 1
      %p54 = scmp.ne.s32.totalorder %s49, %s51
      %p55 = scmp.eq.s32.totalorder %s20, 0
      %p56 = por %p54, %p55
      %p57 = scmp.ne.s32.totalorder %s49, %s51
      %p58 = scmp.eq.s32.totalorder %s25, 1
      %p59 = por %p57, %p58
      %p60 = scmp.ne.s32.totalorder %s51, %s52
      %p61 = scmp.eq.s32.totalorder %s25, 0
      %p62 = por %p60, %p61
      %p63 = scmp.ne.s32.totalorder %s51, %s52
      %p64 = scmp.eq.s32.totalorder %s26, 1
      %p65 = por %p63, %p64
      %p67 = scmp.ne.s32.totalorder %s52, %s66
      %p68 = scmp.eq.s32.totalorder %s26, 0
      %p69 = por %p67, %p68
      %s70 = ssub.s32 %s20, %s27
      %p71 = scmp.eq.s32.totalorder %s70, 0
      %s73 = sadd.s32 %s72, 1
      %s74 = scalar_select %p71, %s72, %s73
      %p77 = pneg %p71
      %p78 = scmp.eq.s32.totalorder %s20, 1
      %p79 = por %p77, %p78
      %p80 = scmp.ne.s32.totalorder %s72, %s75
      %p81 = scmp.eq.s32.totalorder %s20, 0
      %p82 = por %p80, %p81
      %p83 = scmp.ne.s32.totalorder %s72, %s75
      %p84 = scmp.eq.s32.totalorder %s25, 1
      %p85 = por %p83, %p84
      %p86 = scmp.ne.s32.totalorder %s75, %s76
      %p87 = scmp.eq.s32.totalorder %s25, 0
      %p88 = por %p86, %p87
      %p89 = scmp.ne.s32.totalorder %s75, %s76
      %p90 = scmp.eq.s32.totalorder %s26, 1
      %p91 = por %p89, %p90
      %p93 = scmp.ne.s32.totalorder %s76, %s92
      %p94 = scmp.eq.s32.totalorder %s26, 0
      %p95 = por %p93, %p94
      %s96 = ssub.s32 %s20, %s27
      %p97 = scmp.eq.s32.totalorder %s96, 0
      %s99 = sadd.s32 %s98, 1
      %s100 = scalar_select %p97, %s98, %s99
      %p103 = pneg %p97
      %p104 = scmp.eq.s32.totalorder %s20, 1
      %p105 = por %p103, %p104
      %p106 = scmp.ne.s32.totalorder %s98, %s101
      %p107 = scmp.eq.s32.totalorder %s20, 0
      %p108 = por %p106, %p107
      %p109 = scmp.ne.s32.totalorder %s98, %s101
      %p110 = scmp.eq.s32.totalorder %s25, 1
      %p111 = por %p109, %p110
      %p112 = scmp.ne.s32.totalorder %s101, %s102
      %p113 = scmp.eq.s32.totalorder %s25, 0
      %p114 = por %p112, %p113
      %p115 = scmp.ne.s32.totalorder %s101, %s102
      %p116 = scmp.eq.s32.totalorder %s26, 1
      %p117 = por %p115, %p116
      %p119 = scmp.ne.s32.totalorder %s102, %s118
      %p120 = scmp.eq.s32.totalorder %s26, 0
      %p121 = por %p119, %p120
      %s122 = ssub.s32 %s20, %s27
      %p123 = scmp.eq.s32.totalorder %s122, 0
      %s125 = sadd.s32 %s124, 1
      %s126 = scalar_select %p123, %s124, %s125
      %p129 = pneg %p123
      %p130 = scmp.eq.s32.totalorder %s20, 1
      %p131 = por %p129, %p130
      %p132 = scmp.ne.s32.totalorder %s124, %s127
      %p133 = scmp.eq.s32.totalorder %s20, 0
      %p134 = por %p132, %p133
      %p135 = scmp.ne.s32.totalorder %s124, %s127
      %p136 = scmp.eq.s32.totalorder %s25, 1
      %p137 = por %p135, %p136
      %p138 = scmp.ne.s32.totalorder %s127, %s128
      %p139 = scmp.eq.s32.totalorder %s25, 0
      %p140 = por %p138, %p139
      %p141 = scmp.ne.s32.totalorder %s127, %s128
      %p142 = scmp.eq.s32.totalorder %s26, 1
      %p143 = por %p141, %p142
      %p145 = scmp.ne.s32.totalorder %s128, %s144
      %p146 = scmp.eq.s32.totalorder %s26, 0
      %p147 = por %p145, %p146
      %s148 = ssub.s32 %s20, %s27
      %p149 = scmp.eq.s32.totalorder %s148, 0
      %s151 = sadd.s32 %s150, 1
      %s152 = scalar_select %p149, %s150, %s151
      %p155 = pneg %p149
      %p156 = scmp.eq.s32.totalorder %s20, 1
      %p157 = por %p155, %p156
      %p158 = scmp.ne.s32.totalorder %s150, %s153
      %p159 = scmp.eq.s32.totalorder %s20, 0
      %p160 = por %p158, %p159
      %p161 = scmp.ne.s32.totalorder %s150, %s153
      %p162 = scmp.eq.s32.totalorder %s25, 1
      %p163 = por %p161, %p162
      %p164 = scmp.ne.s32.totalorder %s153, %s154
      %p165 = scmp.eq.s32.totalorder %s25, 0
      %p166 = por %p164, %p165
      %p167 = scmp.ne.s32.totalorder %s153, %s154
      %p168 = scmp.eq.s32.totalorder %s26, 1
      %p169 = por %p167, %p168
      %p171 = scmp.ne.s32.totalorder %s154, %s170
      %p172 = scmp.eq.s32.totalorder %s26, 0
      %p173 = por %p171, %p172
      %s174 = ssub.s32 %s20, %s27
      %p175 = scmp.eq.s32.totalorder %s174, 0
      %s177 = sadd.s32 %s176, 1
      %s178 = scalar_select %p175, %s176, %s177
      %p181 = pneg %p175
      %p182 = scmp.eq.s32.totalorder %s20, 1
      %p183 = por %p181, %p182
      %p184 = scmp.ne.s32.totalorder %s176, %s179
      %p185 = scmp.eq.s32.totalorder %s20, 0
      %p186 = por %p184, %p185
      %p187 = scmp.ne.s32.totalorder %s176, %s179
      %p188 = scmp.eq.s32.totalorder %s25, 1
      %p189 = por %p187, %p188
      %p190 = scmp.ne.s32.totalorder %s179, %s180
      %p191 = scmp.eq.s32.totalorder %s25, 0
      %p192 = por %p190, %p191
      %p193 = scmp.ne.s32.totalorder %s179, %s180
      %p194 = scmp.eq.s32.totalorder %s26, 1
      %p195 = por %p193, %p194
      %p197 = scmp.ne.s32.totalorder %s180, %s196
      %p198 = scmp.eq.s32.totalorder %s26, 0
      %p199 = por %p197, %p198
      %s200 = ssub.s32 %s20, %s27
      %p201 = scmp.eq.s32.totalorder %s200, 0
      %s203 = sadd.s32 %s202, 1
      %s204 = scalar_select %p201, %s202, %s203
      %p207 = pneg %p201
      %p208 = scmp.eq.s32.totalorder %s20, 1
      %p209 = por %p207, %p208
      %p210 = scmp.ne.s32.totalorder %s202, %s205
      %p211 = scmp.eq.s32.totalorder %s20, 0
      %p212 = por %p210, %p211
      %p213 = scmp.ne.s32.totalorder %s202, %s205
      %p214 = scmp.eq.s32.totalorder %s25, 1
      %p215 = por %p213, %p214
      %p216 = scmp.ne.s32.totalorder %s205, %s206
      %p217 = scmp.eq.s32.totalorder %s25, 0
      %p218 = por %p216, %p217
      %p219 = scmp.ne.s32.totalorder %s205, %s206
      %p220 = scmp.eq.s32.totalorder %s26, 1
      %p221 = por %p219, %p220
      %p223 = scmp.ne.s32.totalorder %s206, %s222
      %p224 = scmp.eq.s32.totalorder %s26, 0
      %p225 = por %p223, %p224
      %s226 = ssub.s32 %s20, %s27
      %p227 = scmp.eq.s32.totalorder %s226, 0
      %s229 = sadd.s32 %s228, 1
      %s230 = scalar_select %p227, %s228, %s229
      %p233 = pneg %p227
      %p234 = scmp.eq.s32.totalorder %s20, 1
      %p235 = por %p233, %p234
      %p236 = scmp.ne.s32.totalorder %s228, %s231
      %p237 = scmp.eq.s32.totalorder %s20, 0
      %p238 = por %p236, %p237
      %p239 = scmp.ne.s32.totalorder %s228, %s231
      %p240 = scmp.eq.s32.totalorder %s25, 1
      %p241 = por %p239, %p240
      %p242 = scmp.ne.s32.totalorder %s231, %s232
      %p243 = scmp.eq.s32.totalorder %s25, 0
      %p244 = por %p242, %p243
      %p245 = scmp.ne.s32.totalorder %s231, %s232
      %p246 = scmp.eq.s32.totalorder %s26, 1
      %p247 = por %p245, %p246
      %p249 = scmp.ne.s32.totalorder %s232, %s248
      %p250 = scmp.eq.s32.totalorder %s26, 0
      %p251 = por %p249, %p250
      %p252 = scmp.le.s32.totalorder 1, %s20
      %p253 = scmp.lt.s32.totalorder %s20, 3
      %p254 = pnand %p252, %p253
      %p255 = pneg %p254
      // Predicated region
      $region9: #{actor_critic_forward.2} parent=5 // pred_check
        _
      $region10: #{actor_critic_forward.2} parent=5 // pred_check_branch
        %257 = sbr.rel (%p254) target = $region12
      $region11: #{actor_critic_forward.2} parent=5 // pred_region
        %s258 = ssub.s32 %s20, 1
        // Predicated region
        $region13: #{actor_critic_forward.2} parent=11 // pred_check
          %p259 = pneg %p41
        $region14: #{actor_critic_forward.2} parent=11 // pred_check_branch
          %261 = sbr.rel (%p259) target = $region16
        $region15: #{actor_critic_forward.2} parent=11 // pred_region
          _
        $region16: #{actor_critic_forward.2} parent=11 // pred_fallthru
          _
        // Predicated region
        $region17: #{actor_critic_forward.2} parent=11 // pred_check
          %p262 = pneg %p62
        $region18: #{actor_critic_forward.2} parent=11 // pred_check_branch
          %264 = sbr.rel (%p262) target = $region20
        $region19: #{actor_critic_forward.2} parent=11 // pred_region
          _
        $region20: #{actor_critic_forward.2} parent=11 // pred_fallthru
          _
      $region12: #{actor_critic_forward.2} parent=5 // pred_fallthru
        _
      %p265 = scmp.lt.s32.totalorder %s20, 2
      // Predicated region
      $region21: #{actor_critic_forward.2} parent=5 // pred_check
        %p266 = pneg %p265
      $region22: #{actor_critic_forward.2} parent=5 // pred_check_branch
        %268 = sbr.rel (%p266) target = $region24
      $region23: #{actor_critic_forward.2} parent=5 // pred_region
        // Predicated region
        $region25: #{actor_critic_forward.2} parent=23 // pred_check
          %p269 = pneg %p82
        $region26: #{actor_critic_forward.2} parent=23 // pred_check_branch
          %271 = sbr.rel (%p269) target = $region28
        $region27: #{actor_critic_forward.2} parent=23 // pred_region
          %p272 = scmp.lt.s32.totalorder %s20, 1
          %s273 = scalar_select %p272, %s20, 1
          %s274 = smul.addr %s273, 4
          %s275 = smul.addr %s274, 8
          %s276 = scalar_lea.vmem %s2, %s275
        $region28: #{actor_critic_forward.2} parent=23 // pred_fallthru
          _
        // Predicated region
        $region29: #{actor_critic_forward.2} parent=23 // pred_check
          %p277 = pneg %p108
        $region30: #{actor_critic_forward.2} parent=23 // pred_check_branch
          %279 = sbr.rel (%p277) target = $region32
        $region31: #{actor_critic_forward.2} parent=23 // pred_region
          %s280 = sand.u32 %s98, 1
          %s281 = scalar_lea.sflag [#allocation4], %s280
          %s282 = sand.u32 %s98, 1
          %s283 = scalar_lea.vmem [#allocation3], %s282
          %s285 = ssub.s32 16, 16
          %286 = vsyncadd %s281, %s285
          %s287 = smul.addr %s20, 16
          %s288 = scalar_lea.hbm %s3, %s287
          %s290 = sshll.u32 %s283, 4
          %s291 = int_to_ptr.vmem [resolvable:$true] %s290
          %293 = dma.hbm_to_vmem [thread:$0]  %s288, 16, %s291, %s281
        $region32: #{actor_critic_forward.2} parent=23 // pred_fallthru
          _
        // Predicated region
        $region33: #{actor_critic_forward.2} parent=23 // pred_check
          %p294 = pneg %p134
        $region34: #{actor_critic_forward.2} parent=23 // pred_check_branch
          %296 = sbr.rel (%p294) target = $region36
        $region35: #{actor_critic_forward.2} parent=23 // pred_region
          %p297 = scmp.lt.s32.totalorder %s20, 1
          %s298 = scalar_select %p297, %s20, 1
          %s299 = smul.addr %s298, 36
          %s300 = smul.addr %s299, 8
          %s301 = scalar_lea.vmem %s4, %s300
        $region36: #{actor_critic_forward.2} parent=23 // pred_fallthru
          _
        // Predicated region
        $region37: #{actor_critic_forward.2} parent=23 // pred_check
          %p302 = pneg %p160
        $region38: #{actor_critic_forward.2} parent=23 // pred_check_branch
          %304 = sbr.rel (%p302) target = $region40
        $region39: #{actor_critic_forward.2} parent=23 // pred_region
          %s305 = sand.u32 %s20, 1
          %s306 = scalar_lea.sflag [#allocation6], %s305
          %s307 = sand.u32 %s150, 1
          %s308 = scalar_lea.vmem [#allocation5], %s307
          %s310 = ssub.s32 16, 16
          %311 = vsyncadd %s306, %s310
          %s312 = smul.addr %s20, 16
          %s313 = scalar_lea.hbm %s5, %s312
          %s315 = sshll.u32 %s308, 4
          %s316 = int_to_ptr.vmem [resolvable:$true] %s315
          %318 = dma.hbm_to_vmem [thread:$0]  %s313, 16, %s316, %s306
        $region40: #{actor_critic_forward.2} parent=23 // pred_fallthru
          _
        // Predicated region
        $region41: #{actor_critic_forward.2} parent=23 // pred_check
          %p319 = pneg %p186
        $region42: #{actor_critic_forward.2} parent=23 // pred_check_branch
          %321 = sbr.rel (%p319) target = $region44
        $region43: #{actor_critic_forward.2} parent=23 // pred_region
          %p322 = scmp.lt.s32.totalorder %s20, 1
          %s323 = scalar_select %p322, %s20, 1
          %s324 = smul.addr %s323, 36
          %s325 = smul.addr %s324, 8
          %s326 = scalar_lea.vmem %s6, %s325
        $region44: #{actor_critic_forward.2} parent=23 // pred_fallthru
          _
        // Predicated region
        $region45: #{actor_critic_forward.2} parent=23 // pred_check
          %p327 = pneg %p212
        $region46: #{actor_critic_forward.2} parent=23 // pred_check_branch
          %329 = sbr.rel (%p327) target = $region48
        $region47: #{actor_critic_forward.2} parent=23 // pred_region
          %s330 = sand.u32 %s20, 1
          %s331 = scalar_lea.sflag [#allocation6], %s330
          %s332 = sand.u32 %s202, 1
          %s333 = scalar_lea.vmem [#allocation7], %s332
          %s335 = ssub.s32 16, 16
          %336 = vsyncadd %s331, %s335
          %s337 = smul.addr %s20, 16
          %s338 = scalar_lea.hbm %s7, %s337
          %s340 = sshll.u32 %s333, 4
          %s341 = int_to_ptr.vmem [resolvable:$true] %s340
          %343 = dma.hbm_to_vmem [thread:$0]  %s338, 16, %s341, %s331
        $region48: #{actor_critic_forward.2} parent=23 // pred_fallthru
          _
      $region24: #{actor_critic_forward.2} parent=5 // pred_fallthru
        _
      %p344 = scmp.le.s32.totalorder 1, %s20
      %p345 = scmp.lt.s32.totalorder %s20, 3
      %p346 = pnand %p344, %p345
      %p347 = pneg %p346
      // Predicated region
      $region49: #{actor_critic_forward.2} parent=5 // pred_check
        _
      $region50: #{actor_critic_forward.2} parent=5 // pred_check_branch
        %349 = sbr.rel (%p346) target = $region52
      $region51: #{actor_critic_forward.2} parent=5 // pred_region
        %s350 = ssub.s32 %s20, 1
        %s351 = sand.u32 %s101, 1
        %s352 = scalar_lea.sflag [#allocation4], %s351
        %s353 = sand.u32 %s101, 1
        %s354 = scalar_lea.vmem [#allocation3], %s353
        // Predicated region
        $region53: #{actor_critic_forward.2} parent=51 // pred_check
          %p355 = pneg %p114
        $region54: #{actor_critic_forward.2} parent=51 // pred_check_branch
          %357 = sbr.rel (%p355) target = $region56
        $region55: #{actor_critic_forward.2} parent=51 // pred_region
          %358 = dma.done %s352, 16
        $region56: #{actor_critic_forward.2} parent=51 // pred_fallthru
          _
        %s359 = sand.u32 %s25, 1
        %s360 = scalar_lea.sflag [#allocation6], %s359
        %s361 = sand.u32 %s153, 1
        %s362 = scalar_lea.vmem [#allocation5], %s361
        // Predicated region
        $region57: #{actor_critic_forward.2} parent=51 // pred_check
          %p363 = pneg %p166
        $region58: #{actor_critic_forward.2} parent=51 // pred_check_branch
          %365 = sbr.rel (%p363) target = $region60
        $region59: #{actor_critic_forward.2} parent=51 // pred_region
          %366 = dma.done %s360, 16
        $region60: #{actor_critic_forward.2} parent=51 // pred_fallthru
          _
        %s367 = sand.u32 %s25, 1
        %s368 = scalar_lea.sflag [#allocation6], %s367
        %s369 = sand.u32 %s205, 1
        %s370 = scalar_lea.vmem [#allocation7], %s369
        // Predicated region
        $region61: #{actor_critic_forward.2} parent=51 // pred_check
          %p371 = pneg %p218
        $region62: #{actor_critic_forward.2} parent=51 // pred_check_branch
          %373 = sbr.rel (%p371) target = $region64
        $region63: #{actor_critic_forward.2} parent=51 // pred_region
          %374 = dma.done %s368, 16
        $region64: #{actor_critic_forward.2} parent=51 // pred_fallthru
          _
        %p375 = pneg %p41
        %p376 = pneg %p38
        %p377 = pneg %p62
        %p378 = pneg %p59
        %p379 = scmp.lt.s32.totalorder %s25, 1
        %s380 = scalar_select %p379, %s25, 1
        %s381 = smul.addr %s380, 4
        %s382 = smul.addr %s381, 8
        %s383 = scalar_lea.vmem %s2, %s382
        %p384 = pneg %p88
        %p385 = pneg %p85
        %s386 = sand.u32 %s101, 1
        %s387 = scalar_lea.sflag [#allocation4], %s386
        %s388 = sand.u32 %s101, 1
        %s389 = scalar_lea.vmem [#allocation3], %s388
        %p390 = pneg %p114
        %p391 = pneg %p111
        %p392 = scmp.lt.s32.totalorder %s25, 1
        %s393 = scalar_select %p392, %s25, 1
        %s394 = smul.addr %s393, 36
        %s395 = smul.addr %s394, 8
        %s396 = scalar_lea.vmem %s4, %s395
        %p397 = pneg %p140
        %p398 = pneg %p137
        %s399 = sand.u32 %s25, 1
        %s400 = scalar_lea.sflag [#allocation6], %s399
        %s401 = sand.u32 %s153, 1
        %s402 = scalar_lea.vmem [#allocation5], %s401
        %p403 = pneg %p166
        %p404 = pneg %p163
        %p405 = scmp.lt.s32.totalorder %s25, 1
        %s406 = scalar_select %p405, %s25, 1
        %s407 = smul.addr %s406, 36
        %s408 = smul.addr %s407, 8
        %s409 = scalar_lea.vmem %s6, %s408
        %p410 = pneg %p192
        %p411 = pneg %p189
        %s412 = sand.u32 %s25, 1
        %s413 = scalar_lea.sflag [#allocation6], %s412
        %s414 = sand.u32 %s205, 1
        %s415 = scalar_lea.vmem [#allocation7], %s414
        %p416 = pneg %p218
        %p417 = pneg %p215
        %p418 = pneg %p244
        %p419 = pneg %p241
        %p420 = scmp.lt.s32.totalorder %s25, 1
        %s421 = scalar_select %p420, %s25, 1
        %s422 = smul.addr %s421, 24
        %s423 = smul.addr %s422, 8
        %s424 = scalar_lea.vmem %s8, %s423
        %p425 = scmp.lt.s32.totalorder %s25, 1
        %s426 = scalar_select %p425, %s25, 1
        %s427 = smul.addr %s426, 4
        %s428 = smul.addr %s427, 8
        %s429 = scalar_lea.vmem %s2, %s428
        %p430 = scmp.lt.s32.totalorder %s25, 1
        %s431 = scalar_select %p430, %s25, 1
        %s432 = smul.addr %s431, 36
        %s433 = smul.addr %s432, 8
        %s434 = scalar_lea.vmem %s4, %s433
        %p435 = scmp.lt.s32.totalorder %s25, 1
        %s436 = scalar_select %p435, %s25, 1
        %s437 = smul.addr %s436, 36
        %s438 = smul.addr %s437, 8
        %s439 = scalar_lea.vmem %s6, %s438
        %p440 = scmp.lt.s32.totalorder %s25, 1
        %s441 = scalar_select %p440, %s25, 1
        %s442 = smul.addr %s441, 24
        %s443 = smul.addr %s442, 8
        %s444 = scalar_lea.vmem %s8, %s443
        %vm445 = vcmask 203776
        %446 = vst.msk [vmem:[#allocation2] sm:$0xff] %vm445, 0.0
        %447 = vst.msk [vmem:[#allocation2 + $0x8] sm:$0xff] %vm445, 0.0
        %448 = vst.msk [vmem:[#allocation2 + $0x10] sm:$0xff] %vm445, 0.0
        %449 = vst.msk [vmem:[#allocation2 + $0x18] sm:$0xff] %vm445, 0.0
        %450 = vst.msk [vmem:[#allocation2 + $0x20] sm:$0xff] %vm445, 0.0
        %451 = vst.msk [vmem:[#allocation2 + $0x28] sm:$0xff] %vm445, 0.0
        %452 = vst.msk [vmem:[#allocation2 + $0x30] sm:$0xff] %vm445, 0.0
        %453 = vst.msk [vmem:[#allocation2 + $0x38] sm:$0xff] %vm445, 0.0
        %454 = vst.msk [vmem:[#allocation2 + $0x40] sm:$0xff] %vm445, 0.0
        %455 = vst.msk [vmem:[#allocation2 + $0x48] sm:$0xff] %vm445, 0.0
        %456 = vst.msk [vmem:[#allocation2 + $0x50] sm:$0xff] %vm445, 0.0
        %457 = vst.msk [vmem:[#allocation2 + $0x58] sm:$0xff] %vm445, 0.0
        %458 = vst.msk [vmem:[#allocation2 + $0x60] sm:$0xff] %vm445, 0.0
        %459 = vst.msk [vmem:[#allocation2 + $0x68] sm:$0xff] %vm445, 0.0
        %460 = vst.msk [vmem:[#allocation2 + $0x70] sm:$0xff] %vm445, 0.0
        %461 = vst.msk [vmem:[#allocation2 + $0x78] sm:$0xff] %vm445, 0.0
        %462 = vst.msk [vmem:[#allocation2 + $0x80] sm:$0xff] %vm445, 0.0
        %463 = vst.msk [vmem:[#allocation2 + $0x88] sm:$0xff] %vm445, 0.0
        %464 = vst.msk [vmem:[#allocation2 + $0x90] sm:$0xff] %vm445, 0.0
        %465 = vst.msk [vmem:[#allocation2 + $0x98] sm:$0xff] %vm445, 0.0
        %466 = vst.msk [vmem:[#allocation2 + $0xa0] sm:$0xff] %vm445, 0.0
        %467 = vst.msk [vmem:[#allocation2 + $0xa8] sm:$0xff] %vm445, 0.0
        %468 = vst.msk [vmem:[#allocation2 + $0xb0] sm:$0xff] %vm445, 0.0
        %469 = vst.msk [vmem:[#allocation2 + $0xb8] sm:$0xff] %vm445, 0.0
        %470 = vst.msk [vmem:[#allocation2 + $0xc0] sm:$0xff] %vm445, 0.0
        %471 = vst.msk [vmem:[#allocation2 + $0xc8] sm:$0xff] %vm445, 0.0
        %472 = vst.msk [vmem:[#allocation2 + $0xd0] sm:$0xff] %vm445, 0.0
        %473 = vst.msk [vmem:[#allocation2 + $0xd8] sm:$0xff] %vm445, 0.0
        %v474 = vld [vmem:[%s1] sm:$0xff]
        %v475 = vld [vmem:[%s1 + $0x8] sm:$0xff]
        %v476 = vld [vmem:[%s1 + $0x10] sm:$0xff]
        %v477 = vld [vmem:[%s1 + $0x18] sm:$0xff]
        %v478 = vld [vmem:[%s1 + $0x20] sm:$0xff]
        %v479 = vld [vmem:[%s1 + $0x28] sm:$0xff]
        %v480 = vld [vmem:[%s1 + $0x30] sm:$0xff]
        %v481 = vld [vmem:[%s1 + $0x38] sm:$0xff]
        %v482 = vld [vmem:[%s1 + $0x40] sm:$0xff]
        %v483 = vld [vmem:[%s1 + $0x48] sm:$0xff]
        %v484 = vld [vmem:[%s1 + $0x50] sm:$0xff]
        %v485 = vld [vmem:[%s1 + $0x58] sm:$0xff]
        %v486 = vld [vmem:[%s1 + $0x60] sm:$0xff]
        %v487 = vld [vmem:[%s1 + $0x68] sm:$0xff]
        %v488 = vld [vmem:[%s1 + $0x70] sm:$0xff]
        %v489 = vld [vmem:[%s1 + $0x78] sm:$0xff]
        %v490 = vld [vmem:[%s1 + $0x80] sm:$0xff]
        %v491 = vld [vmem:[%s1 + $0x88] sm:$0xff]
        %v492 = vld [vmem:[%s1 + $0x90] sm:$0xff]
        %v493 = vld [vmem:[%s1 + $0x98] sm:$0xff]
        %v494 = vld [vmem:[%s1 + $0xa0] sm:$0xff]
        %v495 = vld [vmem:[%s1 + $0xa8] sm:$0xff]
        %v496 = vld [vmem:[%s1 + $0xb0] sm:$0xff]
        %v497 = vld [vmem:[%s1 + $0xb8] sm:$0xff]
        %v498 = vld [vmem:[%s429] sm:$0xff]
        %v499 = vld [vmem:[%s429 + $0x8] sm:$0xff]
        %v500 = vld [vmem:[%s429 + $0x10] sm:$0xff]
        %v501 = vld [vmem:[%s429 + $0x18] sm:$0x1]
        %v502 = vld [vmem:[%s354] sm:$0x1]
        %v504 = vlaneseq
        %v505 = vshrl.u32 %v504, 7
        %v506 = vsub.s32 0, %v505
        %v507 = vrot.slane %v502, %v506
        %v510 = vsel %vm445, %v474, 0
        %v513 = vsel %vm445, %v475, 0
        %v516 = vsel %vm445, %v476, 0
        %v519 = vsel %vm445, %v477, 0
        %v522 = vsel %vm445, %v478, 0
        %v525 = vsel %vm445, %v479, 0
        %v528 = vsel %vm445, %v480, 0
        %v531 = vsel %vm445, %v481, 0
        %v534 = vsel %vm445, %v482, 0
        %v537 = vsel %vm445, %v483, 0
        %v540 = vsel %vm445, %v484, 0
        %v543 = vsel %vm445, %v485, 0
        %v546 = vsel %vm445, %v486, 0
        %v549 = vsel %vm445, %v487, 0
        %v552 = vsel %vm445, %v488, 0
        %v555 = vsel %vm445, %v489, 0
        %v558 = vsel %vm445, %v490, 0
        %v561 = vsel %vm445, %v491, 0
        %v564 = vsel %vm445, %v492, 0
        %v567 = vsel %vm445, %v493, 0
        %v570 = vsel %vm445, %v494, 0
        %v573 = vsel %vm445, %v495, 0
        %v576 = vsel %vm445, %v496, 0
        %v579 = vsel %vm445, %v497, 0
        %vm581 = vcmask 1040384
        %v583 = vsel %vm581, %v501, 0
        %585 = vmatprep.subr.mxu0 0.0
        %586 = vmatpush1.msra.mxu0 %v498
        %587 = vmatprep.subr.mxu0 0.0
        %588 = vmatpush1.msra.mxu0 %v499
        %589 = vmatprep.subr.mxu0 0.0
        %590 = vmatpush1.msra.mxu0 %v500
        %591 = vmatprep.subr.mxu0 0.0
        %592 = vmatpush1.msra.mxu0 %v583
        %593 = vmatprep.subr.mxu0 0.0
        %594 = vmatpush1.msra.mxu0 0.0
        %595 = vmatprep.subr.mxu0 0.0
        %596 = vmatpush1.msra.mxu0 0.0
        %597 = vmatprep.subr.mxu0 0.0
        %598 = vmatpush1.msra.mxu0 0.0
        %599 = vmatprep.subr.mxu0 0.0
        %600 = vmatpush1.msra.mxu0 0.0
        %601 = vmatprep.subr.mxu0 0.0
        %602 = vmatpush1.msra.mxu0 0.0
        %603 = vmatprep.subr.mxu0 0.0
        %604 = vmatpush1.msra.mxu0 0.0
        %605 = vmatprep.subr.mxu0 0.0
        %606 = vmatpush1.msra.mxu0 0.0
        %607 = vmatprep.subr.mxu0 0.0
        %608 = vmatpush1.msra.mxu0 0.0
        %609 = vmatprep.subr.mxu0 0.0
        %610 = vmatpush1.msra.mxu0 0.0
        %611 = vmatprep.subr.mxu0 0.0
        %612 = vmatpush1.msra.mxu0 0.0
        %613 = vmatprep.subr.mxu0 0.0
        %614 = vmatpush1.msra.mxu0 0.0
        %615 = vmatprep.subr.mxu0 0.0
        %616 = vmatpush1.msra.mxu0 0.0
        %617 = vmatprep.subr.mxu0 0.0
        %618 = vmatpush1.msra.mxu0 0.0
        %619 = vmatprep.subr.mxu0 0.0
        %620 = vmatpush1.msra.mxu0 0.0
        %621 = vmatprep.subr.mxu0 0.0
        %622 = vmatpush1.msra.mxu0 0.0
        %623 = vmatprep.subr.mxu0 0.0
        %624 = vmatpush1.msra.mxu0 0.0
        %625 = vmatprep.subr.mxu0 0.0
        %626 = vmatpush1.msra.mxu0 0.0
        %627 = vmatprep.subr.mxu0 0.0
        %628 = vmatpush1.msra.mxu0 0.0
        %629 = vmatprep.subr.mxu0 0.0
        %630 = vmatpush1.msra.mxu0 0.0
        %631 = vmatprep.subr.mxu0 0.0
        %632 = vmatpush1.msra.mxu0 0.0
        %633 = vmatprep.subr.mxu0 0.0
        %634 = vmatpush1.msra.mxu0 0.0
        %635 = vmatprep.subr.mxu0 0.0
        %636 = vmatpush1.msra.mxu0 0.0
        %637 = vmatprep.subr.mxu0 0.0
        %638 = vmatpush1.msra.mxu0 0.0
        %639 = vmatprep.subr.mxu0 0.0
        %640 = vmatpush1.msra.mxu0 0.0
        %641 = vmatprep.subr.mxu0 0.0
        %642 = vmatpush1.msra.mxu0 0.0
        %643 = vmatprep.subr.mxu0 0.0
        %644 = vmatpush1.msra.mxu0 0.0
        %645 = vmatprep.subr.mxu0 0.0
        %646 = vmatpush1.msra.mxu0 0.0
        %647 = vmatprep.subr.mxu0 0.0
        %648 = vmatpush1.msra.mxu0 0.0
        %649 = vmatprep.mubr.f32.mxu0 0.0
        %650 = vmatmul.mubr.f32.gmra.mrb[0].mxu0 %v510
        %v651 = vpop.f32.mrb[0].mxu0
        %v652 = vadd.f32 %v507, %v651
        %v653 = vpop.f32.mrb[0].mxu0
        %654 = vmatprep.mubr.f32.mxu0 0.0
        %655 = vmatmul.mubr.f32.gmra.mrb[0].mxu0 %v513
        %v656 = vpop.f32.mrb[0].mxu0
        %v657 = vadd.f32 %v507, %v656
        %v658 = vpop.f32.mrb[0].mxu0
        %659 = vmatprep.mubr.f32.mxu0 0.0
        %660 = vmatmul.mubr.f32.gmra.mrb[0].mxu0 %v516
        %v661 = vpop.f32.mrb[0].mxu0
        %v662 = vadd.f32 %v507, %v661
        %v663 = vpop.f32.mrb[0].mxu0
        %664 = vmatprep.mubr.f32.mxu0 0.0
        %665 = vmatmul.mubr.f32.gmra.mrb[0].mxu0 %v519
        %v666 = vpop.f32.mrb[0].mxu0
        %v667 = vadd.f32 %v507, %v666
        %v668 = vpop.f32.mrb[0].mxu0
        %669 = vmatprep.mubr.f32.mxu0 0.0
        %670 = vmatmul.mubr.f32.gmra.mrb[0].mxu0 %v522
        %v671 = vpop.f32.mrb[0].mxu0
        %v672 = vadd.f32 %v507, %v671
        %v673 = vpop.f32.mrb[0].mxu0
        %674 = vmatprep.mubr.f32.mxu0 0.0
        %675 = vmatmul.mubr.f32.gmra.mrb[0].mxu0 %v525
        %v676 = vpop.f32.mrb[0].mxu0
        %v677 = vadd.f32 %v507, %v676
        %v678 = vpop.f32.mrb[0].mxu0
        %679 = vmatprep.mubr.f32.mxu0 0.0
        %680 = vmatmul.mubr.f32.gmra.mrb[0].mxu0 %v528
        %v681 = vpop.f32.mrb[0].mxu0
        %v682 = vadd.f32 %v507, %v681
        %v683 = vpop.f32.mrb[0].mxu0
        %684 = vmatprep.mubr.f32.mxu0 0.0
        %685 = vmatmul.mubr.f32.gmra.mrb[0].mxu0 %v531
        %v686 = vpop.f32.mrb[0].mxu0
        %v687 = vadd.f32 %v507, %v686
        %v688 = vpop.f32.mrb[0].mxu0
        %689 = vmatprep.mubr.f32.mxu0 0.0
        %690 = vmatmul.mubr.f32.gmra.mrb[0].mxu0 %v534
        %v691 = vpop.f32.mrb[0].mxu0
        %v692 = vadd.f32 %v507, %v691
        %v693 = vpop.f32.mrb[0].mxu0
        %694 = vmatprep.mubr.f32.mxu0 0.0
        %695 = vmatmul.mubr.f32.gmra.mrb[0].mxu0 %v537
        %v696 = vpop.f32.mrb[0].mxu0
        %v697 = vadd.f32 %v507, %v696
        %v698 = vpop.f32.mrb[0].mxu0
        %699 = vmatprep.mubr.f32.mxu0 0.0
        %700 = vmatmul.mubr.f32.gmra.mrb[0].mxu0 %v540
        %v701 = vpop.f32.mrb[0].mxu0
        %v702 = vadd.f32 %v507, %v701
        %v703 = vpop.f32.mrb[0].mxu0
        %704 = vmatprep.mubr.f32.mxu0 0.0
        %705 = vmatmul.mubr.f32.gmra.mrb[0].mxu0 %v543
        %v706 = vpop.f32.mrb[0].mxu0
        %v707 = vadd.f32 %v507, %v706
        %v708 = vpop.f32.mrb[0].mxu0
        %709 = vmatprep.mubr.f32.mxu0 0.0
        %710 = vmatmul.mubr.f32.gmra.mrb[0].mxu0 %v546
        %v711 = vpop.f32.mrb[0].mxu0
        %v712 = vadd.f32 %v507, %v711
        %v713 = vpop.f32.mrb[0].mxu0
        %714 = vmatprep.mubr.f32.mxu0 0.0
        %715 = vmatmul.mubr.f32.gmra.mrb[0].mxu0 %v549
        %v716 = vpop.f32.mrb[0].mxu0
        %v717 = vadd.f32 %v507, %v716
        %v718 = vpop.f32.mrb[0].mxu0
        %719 = vmatprep.mubr.f32.mxu0 0.0
        %720 = vmatmul.mubr.f32.gmra.mrb[0].mxu0 %v552
        %v721 = vpop.f32.mrb[0].mxu0
        %v722 = vadd.f32 %v507, %v721
        %v723 = vpop.f32.mrb[0].mxu0
        %724 = vmatprep.mubr.f32.mxu0 0.0
        %725 = vmatmul.mubr.f32.gmra.mrb[0].mxu0 %v555
        %v726 = vpop.f32.mrb[0].mxu0
        %v727 = vadd.f32 %v507, %v726
        %v728 = vpop.f32.mrb[0].mxu0
        %729 = vmatprep.mubr.f32.mxu0 0.0
        %730 = vmatmul.mubr.f32.gmra.mrb[0].mxu0 %v558
        %v731 = vpop.f32.mrb[0].mxu0
        %v732 = vadd.f32 %v507, %v731
        %v733 = vpop.f32.mrb[0].mxu0
        %734 = vmatprep.mubr.f32.mxu0 0.0
        %735 = vmatmul.mubr.f32.gmra.mrb[0].mxu0 %v561
        %v736 = vpop.f32.mrb[0].mxu0
        %v737 = vadd.f32 %v507, %v736
        %v738 = vpop.f32.mrb[0].mxu0
        %739 = vmatprep.mubr.f32.mxu0 0.0
        %740 = vmatmul.mubr.f32.gmra.mrb[0].mxu0 %v564
        %v741 = vpop.f32.mrb[0].mxu0
        %v742 = vadd.f32 %v507, %v741
        %v743 = vpop.f32.mrb[0].mxu0
        %744 = vmatprep.mubr.f32.mxu0 0.0
        %745 = vmatmul.mubr.f32.gmra.mrb[0].mxu0 %v567
        %v746 = vpop.f32.mrb[0].mxu0
        %v747 = vadd.f32 %v507, %v746
        %v748 = vpop.f32.mrb[0].mxu0
        %749 = vmatprep.mubr.f32.mxu0 0.0
        %750 = vmatmul.mubr.f32.gmra.mrb[0].mxu0 %v570
        %v751 = vpop.f32.mrb[0].mxu0
        %v752 = vadd.f32 %v507, %v751
        %v753 = vpop.f32.mrb[0].mxu0
        %754 = vmatprep.mubr.f32.mxu0 0.0
        %755 = vmatmul.mubr.f32.gmra.mrb[0].mxu0 %v573
        %v756 = vpop.f32.mrb[0].mxu0
        %v757 = vadd.f32 %v507, %v756
        %v758 = vpop.f32.mrb[0].mxu0
        %759 = vmatprep.mubr.f32.mxu0 0.0
        %760 = vmatmul.mubr.f32.gmra.mrb[0].mxu0 %v576
        %v761 = vpop.f32.mrb[0].mxu0
        %v762 = vadd.f32 %v507, %v761
        %v763 = vpop.f32.mrb[0].mxu0
        %764 = vmatprep.mubr.f32.mxu0 0.0
        %765 = vmatmul.mubr.f32.gmra.mrb[0].mxu0 %v579
        %v766 = vpop.f32.mrb[0].mxu0
        %v767 = vadd.f32 %v507, %v766
        %v768 = vpop.f32.mrb[0].mxu0
        %769 = vdwg.mxu0
        %v770 = vtanh.pop %v652
        %v771 = vtanh.pop %v657
        %v772 = vtanh.pop %v662
        %v773 = vtanh.pop %v667
        %v774 = vtanh.pop %v672
        %v775 = vtanh.pop %v677
        %v776 = vtanh.pop %v682
        %v777 = vtanh.pop %v687
        %v778 = vtanh.pop %v692
        %v779 = vtanh.pop %v697
        %v780 = vtanh.pop %v702
        %v781 = vtanh.pop %v707
        %v782 = vtanh.pop %v712
        %v783 = vtanh.pop %v717
        %v784 = vtanh.pop %v722
        %v785 = vtanh.pop %v727
        %v786 = vtanh.pop %v732
        %v787 = vtanh.pop %v737
        %v788 = vtanh.pop %v742
        %v789 = vtanh.pop %v747
        %v790 = vtanh.pop %v752
        %v791 = vtanh.pop %v757
        %v792 = vtanh.pop %v762
        %v793 = vtanh.pop %v767
        %794 = vst.msk [vmem:[#allocation2 + $0x10] sm:$0xff] %vm445, %v770
        %795 = vst.msk [vmem:[#allocation2 + $0x18] sm:$0xff] %vm445, %v771
        %796 = vst.msk [vmem:[#allocation2 + $0x20] sm:$0xff] %vm445, %v772
        %797 = vst.msk [vmem:[#allocation2 + $0x28] sm:$0xff] %vm445, %v773
        %798 = vst.msk [vmem:[#allocation2 + $0x30] sm:$0xff] %vm445, %v774
        %799 = vst.msk [vmem:[#allocation2 + $0x38] sm:$0xff] %vm445, %v775
        %800 = vst.msk [vmem:[#allocation2 + $0x40] sm:$0xff] %vm445, %v776
        %801 = vst.msk [vmem:[#allocation2 + $0x48] sm:$0xff] %vm445, %v777
        %802 = vst.msk [vmem:[#allocation2 + $0x50] sm:$0xff] %vm445, %v778
        %803 = vst.msk [vmem:[#allocation2 + $0x58] sm:$0xff] %vm445, %v779
        %804 = vst.msk [vmem:[#allocation2 + $0x60] sm:$0xff] %vm445, %v780
        %805 = vst.msk [vmem:[#allocation2 + $0x68] sm:$0xff] %vm445, %v781
        %806 = vst.msk [vmem:[#allocation2 + $0x70] sm:$0xff] %vm445, %v782
        %807 = vst.msk [vmem:[#allocation2 + $0x78] sm:$0xff] %vm445, %v783
        %808 = vst.msk [vmem:[#allocation2 + $0x80] sm:$0xff] %vm445, %v784
        %809 = vst.msk [vmem:[#allocation2 + $0x88] sm:$0xff] %vm445, %v785
        %810 = vst.msk [vmem:[#allocation2 + $0x90] sm:$0xff] %vm445, %v786
        %811 = vst.msk [vmem:[#allocation2 + $0x98] sm:$0xff] %vm445, %v787
        %812 = vst.msk [vmem:[#allocation2 + $0xa0] sm:$0xff] %vm445, %v788
        %813 = vst.msk [vmem:[#allocation2 + $0xa8] sm:$0xff] %vm445, %v789
        %814 = vst.msk [vmem:[#allocation2 + $0xb0] sm:$0xff] %vm445, %v790
        %815 = vst.msk [vmem:[#allocation2 + $0xb8] sm:$0xff] %vm445, %v791
        %816 = vst.msk [vmem:[#allocation2 + $0xc0] sm:$0xff] %vm445, %v792
        %817 = vst.msk [vmem:[#allocation2 + $0xc8] sm:$0xff] %vm445, %v793
        %v818 = vld [vmem:[#allocation2 + $0x7] sm:$0xff]
        %v819 = vld [vmem:[#allocation2 + $0xf] sm:$0xff]
        %v820 = vld [vmem:[#allocation2 + $0x17] sm:$0xff]
        %v821 = vld [vmem:[#allocation2 + $0x1f] sm:$0xff]
        %v822 = vld [vmem:[#allocation2 + $0x27] sm:$0xff]
        %v823 = vld [vmem:[#allocation2 + $0x2f] sm:$0xff]
        %v824 = vld [vmem:[#allocation2 + $0x37] sm:$0xff]
        %v825 = vld [vmem:[#allocation2 + $0x3f] sm:$0xff]
        %v826 = vld [vmem:[#allocation2 + $0x47] sm:$0xff]
        %v827 = vld [vmem:[#allocation2 + $0x4f] sm:$0xff]
        %v828 = vld [vmem:[#allocation2 + $0x57] sm:$0xff]
        %v829 = vld [vmem:[#allocation2 + $0x5f] sm:$0xff]
        %v830 = vld [vmem:[#allocation2 + $0x67] sm:$0xff]
        %v831 = vld [vmem:[#allocation2 + $0x6f] sm:$0xff]
        %v832 = vld [vmem:[#allocation2 + $0x77] sm:$0xff]
        %v833 = vld [vmem:[#allocation2 + $0x7f] sm:$0xff]
        %v834 = vld [vmem:[#allocation2 + $0x87] sm:$0xff]
        %v835 = vld [vmem:[#allocation2 + $0x8f] sm:$0xff]
        %v836 = vld [vmem:[#allocation2 + $0x97] sm:$0xff]
        %v837 = vld [vmem:[#allocation2 + $0x9f] sm:$0xff]
        %v838 = vld [vmem:[#allocation2 + $0xa7] sm:$0xff]
        %v839 = vld [vmem:[#allocation2 + $0xaf] sm:$0xff]
        %v840 = vld [vmem:[#allocation2 + $0xb7] sm:$0xff]
        %v841 = vld [vmem:[#allocation2 + $0xbf] sm:$0xff]
        %v842 = vld [vmem:[%s0] sm:$0xff]
        %v843 = vld [vmem:[%s0 + $0x8] sm:$0xff]
        %v844 = vld [vmem:[%s0 + $0x10] sm:$0xff]
        %v845 = vld [vmem:[%s0 + $0x18] sm:$0xff]
        %v846 = vld [vmem:[%s0 + $0x20] sm:$0xff]
        %v847 = vld [vmem:[%s0 + $0x28] sm:$0xff]
        %v848 = vld [vmem:[%s0 + $0x30] sm:$0xff]
        %v849 = vld [vmem:[%s0 + $0x38] sm:$0xff]
        %v850 = vld [vmem:[%s0 + $0x40] sm:$0xff]
        %v851 = vld [vmem:[%s0 + $0x48] sm:$0xff]
        %v852 = vld [vmem:[%s0 + $0x50] sm:$0xff]
        %v853 = vld [vmem:[%s0 + $0x58] sm:$0xff]
        %v854 = vld [vmem:[%s0 + $0x60] sm:$0xff]
        %v855 = vld [vmem:[%s0 + $0x68] sm:$0xff]
        %v856 = vld [vmem:[%s0 + $0x70] sm:$0xff]
        %v857 = vld [vmem:[%s0 + $0x78] sm:$0xff]
        %v858 = vld [vmem:[%s0 + $0x80] sm:$0xff]
        %v859 = vld [vmem:[%s0 + $0x88] sm:$0xff]
        %v860 = vld [vmem:[%s0 + $0x90] sm:$0xff]
        %v861 = vld [vmem:[%s0 + $0x98] sm:$0xff]
        %v862 = vld [vmem:[%s0 + $0xa0] sm:$0xff]
        %v863 = vld [vmem:[%s0 + $0xa8] sm:$0xff]
        %v864 = vld [vmem:[%s0 + $0xb0] sm:$0xff]
        %v865 = vld [vmem:[%s0 + $0xb8] sm:$0xff]
        %867 = vset.pattern.permute.xlu0 0
        %868 = vperm.xlu0 %867, %v842
        %v869 = vpop.permute.xlu0 %868
        %872 = vset.pattern.permute.xlu0 0
        %873 = vperm.xlu0 %872, %v843
        %v874 = vpop.permute.xlu0 %873
        %877 = vset.pattern.permute.xlu0 0
        %878 = vperm.xlu0 %877, %v844
        %v879 = vpop.permute.xlu0 %878
        %882 = vset.pattern.permute.xlu0 0
        %883 = vperm.xlu0 %882, %v845
        %v884 = vpop.permute.xlu0 %883
        %887 = vset.pattern.permute.xlu0 0
        %888 = vperm.xlu0 %887, %v846
        %v889 = vpop.permute.xlu0 %888
        %892 = vset.pattern.permute.xlu0 0
        %893 = vperm.xlu0 %892, %v847
        %v894 = vpop.permute.xlu0 %893
        %897 = vset.pattern.permute.xlu0 0
        %898 = vperm.xlu0 %897, %v848
        %v899 = vpop.permute.xlu0 %898
        %902 = vset.pattern.permute.xlu0 0
        %903 = vperm.xlu0 %902, %v849
        %v904 = vpop.permute.xlu0 %903
        %907 = vset.pattern.permute.xlu0 0
        %908 = vperm.xlu0 %907, %v850
        %v909 = vpop.permute.xlu0 %908
        %912 = vset.pattern.permute.xlu0 0
        %913 = vperm.xlu0 %912, %v851
        %v914 = vpop.permute.xlu0 %913
        %917 = vset.pattern.permute.xlu0 0
        %918 = vperm.xlu0 %917, %v852
        %v919 = vpop.permute.xlu0 %918
        %922 = vset.pattern.permute.xlu0 0
        %923 = vperm.xlu0 %922, %v853
        %v924 = vpop.permute.xlu0 %923
        %927 = vset.pattern.permute.xlu0 0
        %928 = vperm.xlu0 %927, %v854
        %v929 = vpop.permute.xlu0 %928
        %932 = vset.pattern.permute.xlu0 0
        %933 = vperm.xlu0 %932, %v855
        %v934 = vpop.permute.xlu0 %933
        %937 = vset.pattern.permute.xlu0 0
        %938 = vperm.xlu0 %937, %v856
        %v939 = vpop.permute.xlu0 %938
        %942 = vset.pattern.permute.xlu0 0
        %943 = vperm.xlu0 %942, %v857
        %v944 = vpop.permute.xlu0 %943
        %947 = vset.pattern.permute.xlu0 0
        %948 = vperm.xlu0 %947, %v858
        %v949 = vpop.permute.xlu0 %948
        %952 = vset.pattern.permute.xlu0 0
        %953 = vperm.xlu0 %952, %v859
        %v954 = vpop.permute.xlu0 %953
        %957 = vset.pattern.permute.xlu0 0
        %958 = vperm.xlu0 %957, %v860
        %v959 = vpop.permute.xlu0 %958
        %962 = vset.pattern.permute.xlu0 0
        %963 = vperm.xlu0 %962, %v861
        %v964 = vpop.permute.xlu0 %963
        %967 = vset.pattern.permute.xlu0 0
        %968 = vperm.xlu0 %967, %v862
        %v969 = vpop.permute.xlu0 %968
        %972 = vset.pattern.permute.xlu0 0
        %973 = vperm.xlu0 %972, %v863
        %v974 = vpop.permute.xlu0 %973
        %977 = vset.pattern.permute.xlu0 0
        %978 = vperm.xlu0 %977, %v864
        %v979 = vpop.permute.xlu0 %978
        %982 = vset.pattern.permute.xlu0 0
        %983 = vperm.xlu0 %982, %v865
        %v984 = vpop.permute.xlu0 %983
        %v986 = vmul.f32 %v818, %v869
        %v987 = vmul.f32 %v819, %v874
        %v988 = vmul.f32 %v820, %v879
        %v989 = vmul.f32 %v821, %v884
        %v990 = vmul.f32 %v822, %v889
        %v991 = vmul.f32 %v823, %v894
        %v992 = vmul.f32 %v824, %v899
        %v993 = vmul.f32 %v825, %v904
        %v994 = vmul.f32 %v826, %v909
        %v995 = vmul.f32 %v827, %v914
        %v996 = vmul.f32 %v828, %v919
        %v997 = vmul.f32 %v829, %v924
        %v998 = vmul.f32 %v830, %v929
        %v999 = vmul.f32 %v831, %v934
        %v1000 = vmul.f32 %v832, %v939
        %v1001 = vmul.f32 %v833, %v944
        %v1002 = vmul.f32 %v834, %v949
        %v1003 = vmul.f32 %v835, %v954
        %v1004 = vmul.f32 %v836, %v959
        %v1005 = vmul.f32 %v837, %v964
        %v1006 = vmul.f32 %v838, %v969
        %v1007 = vmul.f32 %v839, %v974
        %v1008 = vmul.f32 %v840, %v979
        %v1009 = vmul.f32 %v841, %v984
        %v1010 = vld [vmem:[%s434] sm:$0xff]
        %v1011 = vld [vmem:[%s434 + $0x8] sm:$0xff]
        %v1012 = vld [vmem:[%s434 + $0x10] sm:$0xff]
        %v1013 = vld [vmem:[%s434 + $0x18] sm:$0x1]
        %v1014 = vld [vmem:[#allocation2 + $0x8] sm:$0xff]
        %v1015 = vld [vmem:[#allocation2 + $0x10] sm:$0xff]
        %v1016 = vld [vmem:[#allocation2 + $0x18] sm:$0xff]
        %v1017 = vld [vmem:[#allocation2 + $0x20] sm:$0xff]
        %v1018 = vld [vmem:[#allocation2 + $0x28] sm:$0xff]
        %v1019 = vld [vmem:[#allocation2 + $0x30] sm:$0xff]
        %v1020 = vld [vmem:[#allocation2 + $0x38] sm:$0xff]
        %v1021 = vld [vmem:[#allocation2 + $0x40] sm:$0xff]
        %v1022 = vld [vmem:[#allocation2 + $0x48] sm:$0xff]
        %v1023 = vld [vmem:[#allocation2 + $0x50] sm:$0xff]
        %v1024 = vld [vmem:[#allocation2 + $0x58] sm:$0xff]
        %v1025 = vld [vmem:[#allocation2 + $0x60] sm:$0xff]
        %v1026 = vld [vmem:[#allocation2 + $0x68] sm:$0xff]
        %v1027 = vld [vmem:[#allocation2 + $0x70] sm:$0xff]
        %v1028 = vld [vmem:[#allocation2 + $0x78] sm:$0xff]
        %v1029 = vld [vmem:[#allocation2 + $0x80] sm:$0xff]
        %v1030 = vld [vmem:[#allocation2 + $0x88] sm:$0xff]
        %v1031 = vld [vmem:[#allocation2 + $0x90] sm:$0xff]
        %v1032 = vld [vmem:[#allocation2 + $0x98] sm:$0xff]
        %v1033 = vld [vmem:[#allocation2 + $0xa0] sm:$0xff]
        %v1034 = vld [vmem:[#allocation2 + $0xa8] sm:$0xff]
        %v1035 = vld [vmem:[#allocation2 + $0xb0] sm:$0xff]
        %v1036 = vld [vmem:[#allocation2 + $0xb8] sm:$0xff]
        %v1037 = vld [vmem:[#allocation2 + $0xc0] sm:$0xff]
        %s1038 = scalar_lea.vmem %s0, 192
        %v1039 = vld [vmem:[%s1038] sm:$0xff]
        %v1040 = vld [vmem:[%s1038 + $0x8] sm:$0xff]
        %v1041 = vld [vmem:[%s1038 + $0x10] sm:$0xff]
        %v1042 = vld [vmem:[%s1038 + $0x18] sm:$0xff]
        %v1043 = vld [vmem:[%s1038 + $0x20] sm:$0xff]
        %v1044 = vld [vmem:[%s1038 + $0x28] sm:$0xff]
        %v1045 = vld [vmem:[%s1038 + $0x30] sm:$0xff]
        %v1046 = vld [vmem:[%s1038 + $0x38] sm:$0xff]
        %v1047 = vld [vmem:[%s1038 + $0x40] sm:$0xff]
        %v1048 = vld [vmem:[%s1038 + $0x48] sm:$0xff]
        %v1049 = vld [vmem:[%s1038 + $0x50] sm:$0xff]
        %v1050 = vld [vmem:[%s1038 + $0x58] sm:$0xff]
        %v1051 = vld [vmem:[%s1038 + $0x60] sm:$0xff]
        %v1052 = vld [vmem:[%s1038 + $0x68] sm:$0xff]
        %v1053 = vld [vmem:[%s1038 + $0x70] sm:$0xff]
        %v1054 = vld [vmem:[%s1038 + $0x78] sm:$0xff]
        %v1055 = vld [vmem:[%s1038 + $0x80] sm:$0xff]
        %v1056 = vld [vmem:[%s1038 + $0x88] sm:$0xff]
        %v1057 = vld [vmem:[%s1038 + $0x90] sm:$0xff]
        %v1058 = vld [vmem:[%s1038 + $0x98] sm:$0xff]
        %v1059 = vld [vmem:[%s1038 + $0xa0] sm:$0xff]
        %v1060 = vld [vmem:[%s1038 + $0xa8] sm:$0xff]
        %v1061 = vld [vmem:[%s1038 + $0xb0] sm:$0xff]
        %v1062 = vld [vmem:[%s1038 + $0xb8] sm:$0xff]
        %1064 = vset.pattern.permute.xlu0 0
        %1065 = vperm.xlu0 %1064, %v1039
        %v1066 = vpop.permute.xlu0 %1065
        %1069 = vset.pattern.permute.xlu0 0
        %1070 = vperm.xlu0 %1069, %v1040
        %v1071 = vpop.permute.xlu0 %1070
        %1074 = vset.pattern.permute.xlu0 0
        %1075 = vperm.xlu0 %1074, %v1041
        %v1076 = vpop.permute.xlu0 %1075
        %1079 = vset.pattern.permute.xlu0 0
        %1080 = vperm.xlu0 %1079, %v1042
        %v1081 = vpop.permute.xlu0 %1080
        %1084 = vset.pattern.permute.xlu0 0
        %1085 = vperm.xlu0 %1084, %v1043
        %v1086 = vpop.permute.xlu0 %1085
        %1089 = vset.pattern.permute.xlu0 0
        %1090 = vperm.xlu0 %1089, %v1044
        %v1091 = vpop.permute.xlu0 %1090
        %1094 = vset.pattern.permute.xlu0 0
        %1095 = vperm.xlu0 %1094, %v1045
        %v1096 = vpop.permute.xlu0 %1095
        %1099 = vset.pattern.permute.xlu0 0
        %1100 = vperm.xlu0 %1099, %v1046
        %v1101 = vpop.permute.xlu0 %1100
        %1104 = vset.pattern.permute.xlu0 0
        %1105 = vperm.xlu0 %1104, %v1047
        %v1106 = vpop.permute.xlu0 %1105
        %1109 = vset.pattern.permute.xlu0 0
        %1110 = vperm.xlu0 %1109, %v1048
        %v1111 = vpop.permute.xlu0 %1110
        %1114 = vset.pattern.permute.xlu0 0
        %1115 = vperm.xlu0 %1114, %v1049
        %v1116 = vpop.permute.xlu0 %1115
        %1119 = vset.pattern.permute.xlu0 0
        %1120 = vperm.xlu0 %1119, %v1050
        %v1121 = vpop.permute.xlu0 %1120
        %1124 = vset.pattern.permute.xlu0 0
        %1125 = vperm.xlu0 %1124, %v1051
        %v1126 = vpop.permute.xlu0 %1125
        %1129 = vset.pattern.permute.xlu0 0
        %1130 = vperm.xlu0 %1129, %v1052
        %v1131 = vpop.permute.xlu0 %1130
        %1134 = vset.pattern.permute.xlu0 0
        %1135 = vperm.xlu0 %1134, %v1053
        %v1136 = vpop.permute.xlu0 %1135
        %1139 = vset.pattern.permute.xlu0 0
        %1140 = vperm.xlu0 %1139, %v1054
        %v1141 = vpop.permute.xlu0 %1140
        %1144 = vset.pattern.permute.xlu0 0
        %1145 = vperm.xlu0 %1144, %v1055
        %v1146 = vpop.permute.xlu0 %1145
        %1149 = vset.pattern.permute.xlu0 0
        %1150 = vperm.xlu0 %1149, %v1056
        %v1151 = vpop.permute.xlu0 %1150
        %1154 = vset.pattern.permute.xlu0 0
        %1155 = vperm.xlu0 %1154, %v1057
        %v1156 = vpop.permute.xlu0 %1155
        %1159 = vset.pattern.permute.xlu0 0
        %1160 = vperm.xlu0 %1159, %v1058
        %v1161 = vpop.permute.xlu0 %1160
        %1164 = vset.pattern.permute.xlu0 0
        %1165 = vperm.xlu0 %1164, %v1059
        %v1166 = vpop.permute.xlu0 %1165
        %1169 = vset.pattern.permute.xlu0 0
        %1170 = vperm.xlu0 %1169, %v1060
        %v1171 = vpop.permute.xlu0 %1170
        %1174 = vset.pattern.permute.xlu0 0
        %1175 = vperm.xlu0 %1174, %v1061
        %v1176 = vpop.permute.xlu0 %1175
        %1179 = vset.pattern.permute.xlu0 0
        %1180 = vperm.xlu0 %1179, %v1062
        %v1181 = vpop.permute.xlu0 %1180
        %v1183 = vmul.f32 %v1014, %v1066
        %v1184 = vmul.f32 %v1015, %v1071
        %v1185 = vmul.f32 %v1016, %v1076
        %v1186 = vmul.f32 %v1017, %v1081
        %v1187 = vmul.f32 %v1018, %v1086
        %v1188 = vmul.f32 %v1019, %v1091
        %v1189 = vmul.f32 %v1020, %v1096
        %v1190 = vmul.f32 %v1021, %v1101
        %v1191 = vmul.f32 %v1022, %v1106
        %v1192 = vmul.f32 %v1023, %v1111
        %v1193 = vmul.f32 %v1024, %v1116
        %v1194 = vmul.f32 %v1025, %v1121
        %v1195 = vmul.f32 %v1026, %v1126
        %v1196 = vmul.f32 %v1027, %v1131
        %v1197 = vmul.f32 %v1028, %v1136
        %v1198 = vmul.f32 %v1029, %v1141
        %v1199 = vmul.f32 %v1030, %v1146
        %v1200 = vmul.f32 %v1031, %v1151
        %v1201 = vmul.f32 %v1032, %v1156
        %v1202 = vmul.f32 %v1033, %v1161
        %v1203 = vmul.f32 %v1034, %v1166
        %v1204 = vmul.f32 %v1035, %v1171
        %v1205 = vmul.f32 %v1036, %v1176
        %v1206 = vmul.f32 %v1037, %v1181
        %s1207 = scalar_lea.vmem %s434, 32
        %v1208 = vld [vmem:[%s1207] sm:$0xff]
        %v1209 = vld [vmem:[%s1207 + $0x8] sm:$0xff]
        %v1210 = vld [vmem:[%s1207 + $0x10] sm:$0xff]
        %v1211 = vld [vmem:[%s1207 + $0x18] sm:$0x1]
        %v1213 = vsel %vm445, %v1183, 0
        %v1216 = vsel %vm445, %v1184, 0
        %v1219 = vsel %vm445, %v1185, 0
        %v1222 = vsel %vm445, %v1186, 0
        %v1225 = vsel %vm445, %v1187, 0
        %v1228 = vsel %vm445, %v1188, 0
        %v1231 = vsel %vm445, %v1189, 0
        %v1234 = vsel %vm445, %v1190, 0
        %v1237 = vsel %vm445, %v1191, 0
        %v1240 = vsel %vm445, %v1192, 0
        %v1243 = vsel %vm445, %v1193, 0
        %v1246 = vsel %vm445, %v1194, 0
        %v1249 = vsel %vm445, %v1195, 0
        %v1252 = vsel %vm445, %v1196, 0
        %v1255 = vsel %vm445, %v1197, 0
        %v1258 = vsel %vm445, %v1198, 0
        %v1261 = vsel %vm445, %v1199, 0
        %v1264 = vsel %vm445, %v1200, 0
        %v1267 = vsel %vm445, %v1201, 0
        %v1270 = vsel %vm445, %v1202, 0
        %v1273 = vsel %vm445, %v1203, 0
        %v1276 = vsel %vm445, %v1204, 0
        %v1279 = vsel %vm445, %v1205, 0
        %v1282 = vsel %vm445, %v1206, 0
        %v1285 = vsel %vm581, %v1211, 0
        %1287 = vmatprep.subr.mxu0 0.0
        %1288 = vmatpush1.msra.mxu0 %v1208
        %1289 = vmatprep.subr.mxu0 0.0
        %1290 = vmatpush1.msra.mxu0 %v1209
        %1291 = vmatprep.subr.mxu0 0.0
        %1292 = vmatpush1.msra.mxu0 %v1210
        %1293 = vmatprep.subr.mxu0 0.0
        %1294 = vmatpush1.msra.mxu0 %v1285
        %1295 = vmatprep.subr.mxu0 0.0
        %1296 = vmatpush1.msra.mxu0 0.0
        %1297 = vmatprep.subr.mxu0 0.0
        %1298 = vmatpush1.msra.mxu0 0.0
        %1299 = vmatprep.subr.mxu0 0.0
        %1300 = vmatpush1.msra.mxu0 0.0
        %1301 = vmatprep.subr.mxu0 0.0
        %1302 = vmatpush1.msra.mxu0 0.0
        %1303 = vmatprep.subr.mxu0 0.0
        %1304 = vmatpush1.msra.mxu0 0.0
        %1305 = vmatprep.subr.mxu0 0.0
        %1306 = vmatpush1.msra.mxu0 0.0
        %1307 = vmatprep.subr.mxu0 0.0
        %1308 = vmatpush1.msra.mxu0 0.0
        %1309 = vmatprep.subr.mxu0 0.0
        %1310 = vmatpush1.msra.mxu0 0.0
        %1311 = vmatprep.subr.mxu0 0.0
        %1312 = vmatpush1.msra.mxu0 0.0
        %1313 = vmatprep.subr.mxu0 0.0
        %1314 = vmatpush1.msra.mxu0 0.0
        %1315 = vmatprep.subr.mxu0 0.0
        %1316 = vmatpush1.msra.mxu0 0.0
        %1317 = vmatprep.subr.mxu0 0.0
        %1318 = vmatpush1.msra.mxu0 0.0
        %1319 = vmatprep.subr.mxu0 0.0
        %1320 = vmatpush1.msra.mxu0 0.0
        %1321 = vmatprep.subr.mxu0 0.0
        %1322 = vmatpush1.msra.mxu0 0.0
        %1323 = vmatprep.subr.mxu0 0.0
        %1324 = vmatpush1.msra.mxu0 0.0
        %1325 = vmatprep.subr.mxu0 0.0
        %1326 = vmatpush1.msra.mxu0 0.0
        %1327 = vmatprep.subr.mxu0 0.0
        %1328 = vmatpush1.msra.mxu0 0.0
        %1329 = vmatprep.subr.mxu0 0.0
        %1330 = vmatpush1.msra.mxu0 0.0
        %1331 = vmatprep.subr.mxu0 0.0
        %1332 = vmatpush1.msra.mxu0 0.0
        %1333 = vmatprep.subr.mxu0 0.0
        %1334 = vmatpush1.msra.mxu0 0.0
        %1335 = vmatprep.subr.mxu0 0.0
        %1336 = vmatpush1.msra.mxu0 0.0
        %1337 = vmatprep.subr.mxu0 0.0
        %1338 = vmatpush1.msra.mxu0 0.0
        %1339 = vmatprep.subr.mxu0 0.0
        %1340 = vmatpush1.msra.mxu0 0.0
        %1341 = vmatprep.subr.mxu0 0.0
        %1342 = vmatpush1.msra.mxu0 0.0
        %1343 = vmatprep.subr.mxu0 0.0
        %1344 = vmatpush1.msra.mxu0 0.0
        %1345 = vmatprep.subr.mxu0 0.0
        %1346 = vmatpush1.msra.mxu0 0.0
        %1347 = vmatprep.subr.mxu0 0.0
        %1348 = vmatpush1.msra.mxu0 0.0
        %1349 = vmatprep.subr.mxu0 0.0
        %1350 = vmatpush1.msra.mxu0 0.0
        %1351 = vmatprep.mubr.f32.mxu0 0.0
        %1352 = vmatmul.mubr.f32.gmra.mrb[0].mxu0 %v1213
        %v1353 = vpop.f32.mrb[0].mxu0
        %v1354 = vadd.f32 0.0, %v1353
        %v1355 = vpop.f32.mrb[0].mxu0
        %1356 = vmatprep.mubr.f32.mxu0 0.0
        %1357 = vmatmul.mubr.f32.gmra.mrb[0].mxu0 %v1216
        %v1358 = vpop.f32.mrb[0].mxu0
        %v1359 = vadd.f32 0.0, %v1358
        %v1360 = vpop.f32.mrb[0].mxu0
        %1361 = vmatprep.mubr.f32.mxu0 0.0
        %1362 = vmatmul.mubr.f32.gmra.mrb[0].mxu0 %v1219
        %v1363 = vpop.f32.mrb[0].mxu0
        %v1364 = vadd.f32 0.0, %v1363
        %v1365 = vpop.f32.mrb[0].mxu0
        %1366 = vmatprep.mubr.f32.mxu0 0.0
        %1367 = vmatmul.mubr.f32.gmra.mrb[0].mxu0 %v1222
        %v1368 = vpop.f32.mrb[0].mxu0
        %v1369 = vadd.f32 0.0, %v1368
        %v1370 = vpop.f32.mrb[0].mxu0
        %1371 = vmatprep.mubr.f32.mxu0 0.0
        %1372 = vmatmul.mubr.f32.gmra.mrb[0].mxu0 %v1225
        %v1373 = vpop.f32.mrb[0].mxu0
        %v1374 = vadd.f32 0.0, %v1373
        %v1375 = vpop.f32.mrb[0].mxu0
        %1376 = vmatprep.mubr.f32.mxu0 0.0
        %1377 = vmatmul.mubr.f32.gmra.mrb[0].mxu0 %v1228
        %v1378 = vpop.f32.mrb[0].mxu0
        %v1379 = vadd.f32 0.0, %v1378
        %v1380 = vpop.f32.mrb[0].mxu0
        %1381 = vmatprep.mubr.f32.mxu0 0.0
        %1382 = vmatmul.mubr.f32.gmra.mrb[0].mxu0 %v1231
        %v1383 = vpop.f32.mrb[0].mxu0
        %v1384 = vadd.f32 0.0, %v1383
        %v1385 = vpop.f32.mrb[0].mxu0
        %1386 = vmatprep.mubr.f32.mxu0 0.0
        %1387 = vmatmul.mubr.f32.gmra.mrb[0].mxu0 %v1234
        %v1388 = vpop.f32.mrb[0].mxu0
        %v1389 = vadd.f32 0.0, %v1388
        %v1390 = vpop.f32.mrb[0].mxu0
        %1391 = vmatprep.mubr.f32.mxu0 0.0
        %1392 = vmatmul.mubr.f32.gmra.mrb[0].mxu0 %v1237
        %v1393 = vpop.f32.mrb[0].mxu0
        %v1394 = vadd.f32 0.0, %v1393
        %v1395 = vpop.f32.mrb[0].mxu0
        %1396 = vmatprep.mubr.f32.mxu0 0.0
        %1397 = vmatmul.mubr.f32.gmra.mrb[0].mxu0 %v1240
        %v1398 = vpop.f32.mrb[0].mxu0
        %v1399 = vadd.f32 0.0, %v1398
        %v1400 = vpop.f32.mrb[0].mxu0
        %1401 = vmatprep.mubr.f32.mxu0 0.0
        %1402 = vmatmul.mubr.f32.gmra.mrb[0].mxu0 %v1243
        %v1403 = vpop.f32.mrb[0].mxu0
        %v1404 = vadd.f32 0.0, %v1403
        %v1405 = vpop.f32.mrb[0].mxu0
        %1406 = vmatprep.mubr.f32.mxu0 0.0
        %1407 = vmatmul.mubr.f32.gmra.mrb[0].mxu0 %v1246
        %v1408 = vpop.f32.mrb[0].mxu0
        %v1409 = vadd.f32 0.0, %v1408
        %v1410 = vpop.f32.mrb[0].mxu0
        %1411 = vmatprep.mubr.f32.mxu0 0.0
        %1412 = vmatmul.mubr.f32.gmra.mrb[0].mxu0 %v1249
        %v1413 = vpop.f32.mrb[0].mxu0
        %v1414 = vadd.f32 0.0, %v1413
        %v1415 = vpop.f32.mrb[0].mxu0
        %1416 = vmatprep.mubr.f32.mxu0 0.0
        %1417 = vmatmul.mubr.f32.gmra.mrb[0].mxu0 %v1252
        %v1418 = vpop.f32.mrb[0].mxu0
        %v1419 = vadd.f32 0.0, %v1418
        %v1420 = vpop.f32.mrb[0].mxu0
        %1421 = vmatprep.mubr.f32.mxu0 0.0
        %1422 = vmatmul.mubr.f32.gmra.mrb[0].mxu0 %v1255
        %v1423 = vpop.f32.mrb[0].mxu0
        %v1424 = vadd.f32 0.0, %v1423
        %v1425 = vpop.f32.mrb[0].mxu0
        %1426 = vmatprep.mubr.f32.mxu0 0.0
        %1427 = vmatmul.mubr.f32.gmra.mrb[0].mxu0 %v1258
        %v1428 = vpop.f32.mrb[0].mxu0
        %v1429 = vadd.f32 0.0, %v1428
        %v1430 = vpop.f32.mrb[0].mxu0
        %1431 = vmatprep.mubr.f32.mxu0 0.0
        %1432 = vmatmul.mubr.f32.gmra.mrb[0].mxu0 %v1261
        %v1433 = vpop.f32.mrb[0].mxu0
        %v1434 = vadd.f32 0.0, %v1433
        %v1435 = vpop.f32.mrb[0].mxu0
        %1436 = vmatprep.mubr.f32.mxu0 0.0
        %1437 = vmatmul.mubr.f32.gmra.mrb[0].mxu0 %v1264
        %v1438 = vpop.f32.mrb[0].mxu0
        %v1439 = vadd.f32 0.0, %v1438
        %v1440 = vpop.f32.mrb[0].mxu0
        %1441 = vmatprep.mubr.f32.mxu0 0.0
        %1442 = vmatmul.mubr.f32.gmra.mrb[0].mxu0 %v1267
        %v1443 = vpop.f32.mrb[0].mxu0
        %v1444 = vadd.f32 0.0, %v1443
        %v1445 = vpop.f32.mrb[0].mxu0
        %1446 = vmatprep.mubr.f32.mxu0 0.0
        %1447 = vmatmul.mubr.f32.gmra.mrb[0].mxu0 %v1270
        %v1448 = vpop.f32.mrb[0].mxu0
        %v1449 = vadd.f32 0.0, %v1448
        %v1450 = vpop.f32.mrb[0].mxu0
        %1451 = vmatprep.mubr.f32.mxu0 0.0
        %1452 = vmatmul.mubr.f32.gmra.mrb[0].mxu0 %v1273
        %v1453 = vpop.f32.mrb[0].mxu0
        %v1454 = vadd.f32 0.0, %v1453
        %v1455 = vpop.f32.mrb[0].mxu0
        %1456 = vmatprep.mubr.f32.mxu0 0.0
        %1457 = vmatmul.mubr.f32.gmra.mrb[0].mxu0 %v1276
        %v1458 = vpop.f32.mrb[0].mxu0
        %v1459 = vadd.f32 0.0, %v1458
        %v1460 = vpop.f32.mrb[0].mxu0
        %1461 = vmatprep.mubr.f32.mxu0 0.0
        %1462 = vmatmul.mubr.f32.gmra.mrb[0].mxu0 %v1279
        %v1463 = vpop.f32.mrb[0].mxu0
        %v1464 = vadd.f32 0.0, %v1463
        %v1465 = vpop.f32.mrb[0].mxu0
        %1466 = vmatprep.mubr.f32.mxu0 0.0
        %1467 = vmatmul.mubr.f32.gmra.mrb[0].mxu0 %v1282
        %v1468 = vpop.f32.mrb[0].mxu0
        %v1469 = vadd.f32 0.0, %v1468
        %v1470 = vpop.f32.mrb[0].mxu0
        %1471 = vdwg.mxu0
        %v1473 = vsel %vm445, %v986, 0
        %v1476 = vsel %vm445, %v987, 0
        %v1479 = vsel %vm445, %v988, 0
        %v1482 = vsel %vm445, %v989, 0
        %v1485 = vsel %vm445, %v990, 0
        %v1488 = vsel %vm445, %v991, 0
        %v1491 = vsel %vm445, %v992, 0
        %v1494 = vsel %vm445, %v993, 0
        %v1497 = vsel %vm445, %v994, 0
        %v1500 = vsel %vm445, %v995, 0
        %v1503 = vsel %vm445, %v996, 0
        %v1506 = vsel %vm445, %v997, 0
        %v1509 = vsel %vm445, %v998, 0
        %v1512 = vsel %vm445, %v999, 0
        %v1515 = vsel %vm445, %v1000, 0
        %v1518 = vsel %vm445, %v1001, 0
        %v1521 = vsel %vm445, %v1002, 0
        %v1524 = vsel %vm445, %v1003, 0
        %v1527 = vsel %vm445, %v1004, 0
        %v1530 = vsel %vm445, %v1005, 0
        %v1533 = vsel %vm445, %v1006, 0
        %v1536 = vsel %vm445, %v1007, 0
        %v1539 = vsel %vm445, %v1008, 0
        %v1542 = vsel %vm445, %v1009, 0
        %v1545 = vsel %vm581, %v1013, 0
        %1547 = vmatprep.subr.mxu0 0.0
        %1548 = vmatpush1.msra.mxu0 %v1010
        %1549 = vmatprep.subr.mxu0 0.0
        %1550 = vmatpush1.msra.mxu0 %v1011
        %1551 = vmatprep.subr.mxu0 0.0
        %1552 = vmatpush1.msra.mxu0 %v1012
        %1553 = vmatprep.subr.mxu0 0.0
        %1554 = vmatpush1.msra.mxu0 %v1545
        %1555 = vmatprep.subr.mxu0 0.0
        %1556 = vmatpush1.msra.mxu0 0.0
        %1557 = vmatprep.subr.mxu0 0.0
        %1558 = vmatpush1.msra.mxu0 0.0
        %1559 = vmatprep.subr.mxu0 0.0
        %1560 = vmatpush1.msra.mxu0 0.0
        %1561 = vmatprep.subr.mxu0 0.0
        %1562 = vmatpush1.msra.mxu0 0.0
        %1563 = vmatprep.subr.mxu0 0.0
        %1564 = vmatpush1.msra.mxu0 0.0
        %1565 = vmatprep.subr.mxu0 0.0
        %1566 = vmatpush1.msra.mxu0 0.0
        %1567 = vmatprep.subr.mxu0 0.0
        %1568 = vmatpush1.msra.mxu0 0.0
        %1569 = vmatprep.subr.mxu0 0.0
        %1570 = vmatpush1.msra.mxu0 0.0
        %1571 = vmatprep.subr.mxu0 0.0
        %1572 = vmatpush1.msra.mxu0 0.0
        %1573 = vmatprep.subr.mxu0 0.0
        %1574 = vmatpush1.msra.mxu0 0.0
        %1575 = vmatprep.subr.mxu0 0.0
        %1576 = vmatpush1.msra.mxu0 0.0
        %1577 = vmatprep.subr.mxu0 0.0
        %1578 = vmatpush1.msra.mxu0 0.0
        %1579 = vmatprep.subr.mxu0 0.0
        %1580 = vmatpush1.msra.mxu0 0.0
        %1581 = vmatprep.subr.mxu0 0.0
        %1582 = vmatpush1.msra.mxu0 0.0
        %1583 = vmatprep.subr.mxu0 0.0
        %1584 = vmatpush1.msra.mxu0 0.0
        %1585 = vmatprep.subr.mxu0 0.0
        %1586 = vmatpush1.msra.mxu0 0.0
        %1587 = vmatprep.subr.mxu0 0.0
        %1588 = vmatpush1.msra.mxu0 0.0
        %1589 = vmatprep.subr.mxu0 0.0
        %1590 = vmatpush1.msra.mxu0 0.0
        %1591 = vmatprep.subr.mxu0 0.0
        %1592 = vmatpush1.msra.mxu0 0.0
        %1593 = vmatprep.subr.mxu0 0.0
        %1594 = vmatpush1.msra.mxu0 0.0
        %1595 = vmatprep.subr.mxu0 0.0
        %1596 = vmatpush1.msra.mxu0 0.0
        %1597 = vmatprep.subr.mxu0 0.0
        %1598 = vmatpush1.msra.mxu0 0.0
        %1599 = vmatprep.subr.mxu0 0.0
        %1600 = vmatpush1.msra.mxu0 0.0
        %1601 = vmatprep.subr.mxu0 0.0
        %1602 = vmatpush1.msra.mxu0 0.0
        %1603 = vmatprep.subr.mxu0 0.0
        %1604 = vmatpush1.msra.mxu0 0.0
        %1605 = vmatprep.subr.mxu0 0.0
        %1606 = vmatpush1.msra.mxu0 0.0
        %1607 = vmatprep.subr.mxu0 0.0
        %1608 = vmatpush1.msra.mxu0 0.0
        %1609 = vmatprep.subr.mxu0 0.0
        %1610 = vmatpush1.msra.mxu0 0.0
        %1611 = vmatprep.mubr.f32.mxu0 0.0
        %1612 = vmatmul.mubr.f32.gmra.mrb[0].mxu0 %v1473
        %v1613 = vpop.f32.mrb[0].mxu0
        %v1614 = vadd.f32 %v1354, %v1613
        %v1615 = vpop.f32.mrb[0].mxu0
        %1616 = vmatprep.mubr.f32.mxu0 0.0
        %1617 = vmatmul.mubr.f32.gmra.mrb[0].mxu0 %v1476
        %v1618 = vpop.f32.mrb[0].mxu0
        %v1619 = vadd.f32 %v1359, %v1618
        %v1620 = vpop.f32.mrb[0].mxu0
        %1621 = vmatprep.mubr.f32.mxu0 0.0
        %1622 = vmatmul.mubr.f32.gmra.mrb[0].mxu0 %v1479
        %v1623 = vpop.f32.mrb[0].mxu0
        %v1624 = vadd.f32 %v1364, %v1623
        %v1625 = vpop.f32.mrb[0].mxu0
        %1626 = vmatprep.mubr.f32.mxu0 0.0
        %1627 = vmatmul.mubr.f32.gmra.mrb[0].mxu0 %v1482
        %v1628 = vpop.f32.mrb[0].mxu0
        %v1629 = vadd.f32 %v1369, %v1628
        %v1630 = vpop.f32.mrb[0].mxu0
        %1631 = vmatprep.mubr.f32.mxu0 0.0
        %1632 = vmatmul.mubr.f32.gmra.mrb[0].mxu0 %v1485
        %v1633 = vpop.f32.mrb[0].mxu0
        %v1634 = vadd.f32 %v1374, %v1633
        %v1635 = vpop.f32.mrb[0].mxu0
        %1636 = vmatprep.mubr.f32.mxu0 0.0
        %1637 = vmatmul.mubr.f32.gmra.mrb[0].mxu0 %v1488
        %v1638 = vpop.f32.mrb[0].mxu0
        %v1639 = vadd.f32 %v1379, %v1638
        %v1640 = vpop.f32.mrb[0].mxu0
        %1641 = vmatprep.mubr.f32.mxu0 0.0
        %1642 = vmatmul.mubr.f32.gmra.mrb[0].mxu0 %v1491
        %v1643 = vpop.f32.mrb[0].mxu0
        %v1644 = vadd.f32 %v1384, %v1643
        %v1645 = vpop.f32.mrb[0].mxu0
        %1646 = vmatprep.mubr.f32.mxu0 0.0
        %1647 = vmatmul.mubr.f32.gmra.mrb[0].mxu0 %v1494
        %v1648 = vpop.f32.mrb[0].mxu0
        %v1649 = vadd.f32 %v1389, %v1648
        %v1650 = vpop.f32.mrb[0].mxu0
        %1651 = vmatprep.mubr.f32.mxu0 0.0
        %1652 = vmatmul.mubr.f32.gmra.mrb[0].mxu0 %v1497
        %v1653 = vpop.f32.mrb[0].mxu0
        %v1654 = vadd.f32 %v1394, %v1653
        %v1655 = vpop.f32.mrb[0].mxu0
        %1656 = vmatprep.mubr.f32.mxu0 0.0
        %1657 = vmatmul.mubr.f32.gmra.mrb[0].mxu0 %v1500
        %v1658 = vpop.f32.mrb[0].mxu0
        %v1659 = vadd.f32 %v1399, %v1658
        %v1660 = vpop.f32.mrb[0].mxu0
        %1661 = vmatprep.mubr.f32.mxu0 0.0
        %1662 = vmatmul.mubr.f32.gmra.mrb[0].mxu0 %v1503
        %v1663 = vpop.f32.mrb[0].mxu0
        %v1664 = vadd.f32 %v1404, %v1663
        %v1665 = vpop.f32.mrb[0].mxu0
        %1666 = vmatprep.mubr.f32.mxu0 0.0
        %1667 = vmatmul.mubr.f32.gmra.mrb[0].mxu0 %v1506
        %v1668 = vpop.f32.mrb[0].mxu0
        %v1669 = vadd.f32 %v1409, %v1668
        %v1670 = vpop.f32.mrb[0].mxu0
        %1671 = vmatprep.mubr.f32.mxu0 0.0
        %1672 = vmatmul.mubr.f32.gmra.mrb[0].mxu0 %v1509
        %v1673 = vpop.f32.mrb[0].mxu0
        %v1674 = vadd.f32 %v1414, %v1673
        %v1675 = vpop.f32.mrb[0].mxu0
        %1676 = vmatprep.mubr.f32.mxu0 0.0
        %1677 = vmatmul.mubr.f32.gmra.mrb[0].mxu0 %v1512
        %v1678 = vpop.f32.mrb[0].mxu0
        %v1679 = vadd.f32 %v1419, %v1678
        %v1680 = vpop.f32.mrb[0].mxu0
        %1681 = vmatprep.mubr.f32.mxu0 0.0
        %1682 = vmatmul.mubr.f32.gmra.mrb[0].mxu0 %v1515
        %v1683 = vpop.f32.mrb[0].mxu0
        %v1684 = vadd.f32 %v1424, %v1683
        %v1685 = vpop.f32.mrb[0].mxu0
        %1686 = vmatprep.mubr.f32.mxu0 0.0
        %1687 = vmatmul.mubr.f32.gmra.mrb[0].mxu0 %v1518
        %v1688 = vpop.f32.mrb[0].mxu0
        %v1689 = vadd.f32 %v1429, %v1688
        %v1690 = vpop.f32.mrb[0].mxu0
        %1691 = vmatprep.mubr.f32.mxu0 0.0
        %1692 = vmatmul.mubr.f32.gmra.mrb[0].mxu0 %v1521
        %v1693 = vpop.f32.mrb[0].mxu0
        %v1694 = vadd.f32 %v1434, %v1693
        %v1695 = vpop.f32.mrb[0].mxu0
        %1696 = vmatprep.mubr.f32.mxu0 0.0
        %1697 = vmatmul.mubr.f32.gmra.mrb[0].mxu0 %v1524
        %v1698 = vpop.f32.mrb[0].mxu0
        %v1699 = vadd.f32 %v1439, %v1698
        %v1700 = vpop.f32.mrb[0].mxu0
        %1701 = vmatprep.mubr.f32.mxu0 0.0
        %1702 = vmatmul.mubr.f32.gmra.mrb[0].mxu0 %v1527
        %v1703 = vpop.f32.mrb[0].mxu0
        %v1704 = vadd.f32 %v1444, %v1703
        %v1705 = vpop.f32.mrb[0].mxu0
        %1706 = vmatprep.mubr.f32.mxu0 0.0
        %1707 = vmatmul.mubr.f32.gmra.mrb[0].mxu0 %v1530
        %v1708 = vpop.f32.mrb[0].mxu0
        %v1709 = vadd.f32 %v1449, %v1708
        %v1710 = vpop.f32.mrb[0].mxu0
        %1711 = vmatprep.mubr.f32.mxu0 0.0
        %1712 = vmatmul.mubr.f32.gmra.mrb[0].mxu0 %v1533
        %v1713 = vpop.f32.mrb[0].mxu0
        %v1714 = vadd.f32 %v1454, %v1713
        %v1715 = vpop.f32.mrb[0].mxu0
        %1716 = vmatprep.mubr.f32.mxu0 0.0
        %1717 = vmatmul.mubr.f32.gmra.mrb[0].mxu0 %v1536
        %v1718 = vpop.f32.mrb[0].mxu0
        %v1719 = vadd.f32 %v1459, %v1718
        %v1720 = vpop.f32.mrb[0].mxu0
        %1721 = vmatprep.mubr.f32.mxu0 0.0
        %1722 = vmatmul.mubr.f32.gmra.mrb[0].mxu0 %v1539
        %v1723 = vpop.f32.mrb[0].mxu0
        %v1724 = vadd.f32 %v1464, %v1723
        %v1725 = vpop.f32.mrb[0].mxu0
        %1726 = vmatprep.mubr.f32.mxu0 0.0
        %1727 = vmatmul.mubr.f32.gmra.mrb[0].mxu0 %v1542
        %v1728 = vpop.f32.mrb[0].mxu0
        %v1729 = vadd.f32 %v1469, %v1728
        %v1730 = vpop.f32.mrb[0].mxu0
        %1731 = vdwg.mxu0
        %v1732 = vld [vmem:[#allocation2 + $0x9] sm:$0xff]
        %v1733 = vld [vmem:[#allocation2 + $0x11] sm:$0xff]
        %v1734 = vld [vmem:[#allocation2 + $0x19] sm:$0xff]
        %v1735 = vld [vmem:[#allocation2 + $0x21] sm:$0xff]
        %v1736 = vld [vmem:[#allocation2 + $0x29] sm:$0xff]
        %v1737 = vld [vmem:[#allocation2 + $0x31] sm:$0xff]
        %v1738 = vld [vmem:[#allocation2 + $0x39] sm:$0xff]
        %v1739 = vld [vmem:[#allocation2 + $0x41] sm:$0xff]
        %v1740 = vld [vmem:[#allocation2 + $0x49] sm:$0xff]
        %v1741 = vld [vmem:[#allocation2 + $0x51] sm:$0xff]
        %v1742 = vld [vmem:[#allocation2 + $0x59] sm:$0xff]
        %v1743 = vld [vmem:[#allocation2 + $0x61] sm:$0xff]
        %v1744 = vld [vmem:[#allocation2 + $0x69] sm:$0xff]
        %v1745 = vld [vmem:[#allocation2 + $0x71] sm:$0xff]
        %v1746 = vld [vmem:[#allocation2 + $0x79] sm:$0xff]
        %v1747 = vld [vmem:[#allocation2 + $0x81] sm:$0xff]
        %v1748 = vld [vmem:[#allocation2 + $0x89] sm:$0xff]
        %v1749 = vld [vmem:[#allocation2 + $0x91] sm:$0xff]
        %v1750 = vld [vmem:[#allocation2 + $0x99] sm:$0xff]
        %v1751 = vld [vmem:[#allocation2 + $0xa1] sm:$0xff]
        %v1752 = vld [vmem:[#allocation2 + $0xa9] sm:$0xff]
        %v1753 = vld [vmem:[#allocation2 + $0xb1] sm:$0xff]
        %v1754 = vld [vmem:[#allocation2 + $0xb9] sm:$0xff]
        %v1755 = vld [vmem:[#allocation2 + $0xc1] sm:$0xff]
        %s1756 = scalar_lea.vmem %s0, 384
        %v1757 = vld [vmem:[%s1756] sm:$0xff]
        %v1758 = vld [vmem:[%s1756 + $0x8] sm:$0xff]
        %v1759 = vld [vmem:[%s1756 + $0x10] sm:$0xff]
        %v1760 = vld [vmem:[%s1756 + $0x18] sm:$0xff]
        %v1761 = vld [vmem:[%s1756 + $0x20] sm:$0xff]
        %v1762 = vld [vmem:[%s1756 + $0x28] sm:$0xff]
        %v1763 = vld [vmem:[%s1756 + $0x30] sm:$0xff]
        %v1764 = vld [vmem:[%s1756 + $0x38] sm:$0xff]
        %v1765 = vld [vmem:[%s1756 + $0x40] sm:$0xff]
        %v1766 = vld [vmem:[%s1756 + $0x48] sm:$0xff]
        %v1767 = vld [vmem:[%s1756 + $0x50] sm:$0xff]
        %v1768 = vld [vmem:[%s1756 + $0x58] sm:$0xff]
        %v1769 = vld [vmem:[%s1756 + $0x60] sm:$0xff]
        %v1770 = vld [vmem:[%s1756 + $0x68] sm:$0xff]
        %v1771 = vld [vmem:[%s1756 + $0x70] sm:$0xff]
        %v1772 = vld [vmem:[%s1756 + $0x78] sm:$0xff]
        %v1773 = vld [vmem:[%s1756 + $0x80] sm:$0xff]
        %v1774 = vld [vmem:[%s1756 + $0x88] sm:$0xff]
        %v1775 = vld [vmem:[%s1756 + $0x90] sm:$0xff]
        %v1776 = vld [vmem:[%s1756 + $0x98] sm:$0xff]
        %v1777 = vld [vmem:[%s1756 + $0xa0] sm:$0xff]
        %v1778 = vld [vmem:[%s1756 + $0xa8] sm:$0xff]
        %v1779 = vld [vmem:[%s1756 + $0xb0] sm:$0xff]
        %v1780 = vld [vmem:[%s1756 + $0xb8] sm:$0xff]
        %1782 = vset.pattern.permute.xlu0 0
        %1783 = vperm.xlu0 %1782, %v1757
        %v1784 = vpop.permute.xlu0 %1783
        %1787 = vset.pattern.permute.xlu0 0
        %1788 = vperm.xlu0 %1787, %v1758
        %v1789 = vpop.permute.xlu0 %1788
        %1792 = vset.pattern.permute.xlu0 0
        %1793 = vperm.xlu0 %1792, %v1759
        %v1794 = vpop.permute.xlu0 %1793
        %1797 = vset.pattern.permute.xlu0 0
        %1798 = vperm.xlu0 %1797, %v1760
        %v1799 = vpop.permute.xlu0 %1798
        %1802 = vset.pattern.permute.xlu0 0
        %1803 = vperm.xlu0 %1802, %v1761
        %v1804 = vpop.permute.xlu0 %1803
        %1807 = vset.pattern.permute.xlu0 0
        %1808 = vperm.xlu0 %1807, %v1762
        %v1809 = vpop.permute.xlu0 %1808
        %1812 = vset.pattern.permute.xlu0 0
        %1813 = vperm.xlu0 %1812, %v1763
        %v1814 = vpop.permute.xlu0 %1813
        %1817 = vset.pattern.permute.xlu0 0
        %1818 = vperm.xlu0 %1817, %v1764
        %v1819 = vpop.permute.xlu0 %1818
        %1822 = vset.pattern.permute.xlu0 0
        %1823 = vperm.xlu0 %1822, %v1765
        %v1824 = vpop.permute.xlu0 %1823
        %1827 = vset.pattern.permute.xlu0 0
        %1828 = vperm.xlu0 %1827, %v1766
        %v1829 = vpop.permute.xlu0 %1828
        %1832 = vset.pattern.permute.xlu0 0
        %1833 = vperm.xlu0 %1832, %v1767
        %v1834 = vpop.permute.xlu0 %1833
        %1837 = vset.pattern.permute.xlu0 0
        %1838 = vperm.xlu0 %1837, %v1768
        %v1839 = vpop.permute.xlu0 %1838
        %1842 = vset.pattern.permute.xlu0 0
        %1843 = vperm.xlu0 %1842, %v1769
        %v1844 = vpop.permute.xlu0 %1843
        %1847 = vset.pattern.permute.xlu0 0
        %1848 = vperm.xlu0 %1847, %v1770
        %v1849 = vpop.permute.xlu0 %1848
        %1852 = vset.pattern.permute.xlu0 0
        %1853 = vperm.xlu0 %1852, %v1771
        %v1854 = vpop.permute.xlu0 %1853
        %1857 = vset.pattern.permute.xlu0 0
        %1858 = vperm.xlu0 %1857, %v1772
        %v1859 = vpop.permute.xlu0 %1858
        %1862 = vset.pattern.permute.xlu0 0
        %1863 = vperm.xlu0 %1862, %v1773
        %v1864 = vpop.permute.xlu0 %1863
        %1867 = vset.pattern.permute.xlu0 0
        %1868 = vperm.xlu0 %1867, %v1774
        %v1869 = vpop.permute.xlu0 %1868
        %1872 = vset.pattern.permute.xlu0 0
        %1873 = vperm.xlu0 %1872, %v1775
        %v1874 = vpop.permute.xlu0 %1873
        %1877 = vset.pattern.permute.xlu0 0
        %1878 = vperm.xlu0 %1877, %v1776
        %v1879 = vpop.permute.xlu0 %1878
        %1882 = vset.pattern.permute.xlu0 0
        %1883 = vperm.xlu0 %1882, %v1777
        %v1884 = vpop.permute.xlu0 %1883
        %1887 = vset.pattern.permute.xlu0 0
        %1888 = vperm.xlu0 %1887, %v1778
        %v1889 = vpop.permute.xlu0 %1888
        %1892 = vset.pattern.permute.xlu0 0
        %1893 = vperm.xlu0 %1892, %v1779
        %v1894 = vpop.permute.xlu0 %1893
        %1897 = vset.pattern.permute.xlu0 0
        %1898 = vperm.xlu0 %1897, %v1780
        %v1899 = vpop.permute.xlu0 %1898
        %v1901 = vmul.f32 %v1732, %v1784
        %v1902 = vmul.f32 %v1733, %v1789
        %v1903 = vmul.f32 %v1734, %v1794
        %v1904 = vmul.f32 %v1735, %v1799
        %v1905 = vmul.f32 %v1736, %v1804
        %v1906 = vmul.f32 %v1737, %v1809
        %v1907 = vmul.f32 %v1738, %v1814
        %v1908 = vmul.f32 %v1739, %v1819
        %v1909 = vmul.f32 %v1740, %v1824
        %v1910 = vmul.f32 %v1741, %v1829
        %v1911 = vmul.f32 %v1742, %v1834
        %v1912 = vmul.f32 %v1743, %v1839
        %v1913 = vmul.f32 %v1744, %v1844
        %v1914 = vmul.f32 %v1745, %v1849
        %v1915 = vmul.f32 %v1746, %v1854
        %v1916 = vmul.f32 %v1747, %v1859
        %v1917 = vmul.f32 %v1748, %v1864
        %v1918 = vmul.f32 %v1749, %v1869
        %v1919 = vmul.f32 %v1750, %v1874
        %v1920 = vmul.f32 %v1751, %v1879
        %v1921 = vmul.f32 %v1752, %v1884
        %v1922 = vmul.f32 %v1753, %v1889
        %v1923 = vmul.f32 %v1754, %v1894
        %v1924 = vmul.f32 %v1755, %v1899
        %s1925 = scalar_lea.vmem %s434, 64
        %v1926 = vld [vmem:[%s1925] sm:$0xff]
        %v1927 = vld [vmem:[%s1925 + $0x8] sm:$0xff]
        %v1928 = vld [vmem:[%s1925 + $0x10] sm:$0xff]
        %v1929 = vld [vmem:[%s1925 + $0x18] sm:$0x1]
        %v1931 = vsel %vm445, %v1901, 0
        %v1934 = vsel %vm445, %v1902, 0
        %v1937 = vsel %vm445, %v1903, 0
        %v1940 = vsel %vm445, %v1904, 0
        %v1943 = vsel %vm445, %v1905, 0
        %v1946 = vsel %vm445, %v1906, 0
        %v1949 = vsel %vm445, %v1907, 0
        %v1952 = vsel %vm445, %v1908, 0
        %v1955 = vsel %vm445, %v1909, 0
        %v1958 = vsel %vm445, %v1910, 0
        %v1961 = vsel %vm445, %v1911, 0
        %v1964 = vsel %vm445, %v1912, 0
        %v1967 = vsel %vm445, %v1913, 0
        %v1970 = vsel %vm445, %v1914, 0
        %v1973 = vsel %vm445, %v1915, 0
        %v1976 = vsel %vm445, %v1916, 0
        %v1979 = vsel %vm445, %v1917, 0
        %v1982 = vsel %vm445, %v1918, 0
        %v1985 = vsel %vm445, %v1919, 0
        %v1988 = vsel %vm445, %v1920, 0
        %v1991 = vsel %vm445, %v1921, 0
        %v1994 = vsel %vm445, %v1922, 0
        %v1997 = vsel %vm445, %v1923, 0
        %v2000 = vsel %vm445, %v1924, 0
        %v2003 = vsel %vm581, %v1929, 0
        %2005 = vmatprep.subr.mxu0 0.0
        %2006 = vmatpush1.msra.mxu0 %v1926
        %2007 = vmatprep.subr.mxu0 0.0
        %2008 = vmatpush1.msra.mxu0 %v1927
        %2009 = vmatprep.subr.mxu0 0.0
        %2010 = vmatpush1.msra.mxu0 %v1928
        %2011 = vmatprep.subr.mxu0 0.0
        %2012 = vmatpush1.msra.mxu0 %v2003
        %2013 = vmatprep.subr.mxu0 0.0
        %2014 = vmatpush1.msra.mxu0 0.0
        %2015 = vmatprep.subr.mxu0 0.0
        %2016 = vmatpush1.msra.mxu0 0.0
        %2017 = vmatprep.subr.mxu0 0.0
        %2018 = vmatpush1.msra.mxu0 0.0
        %2019 = vmatprep.subr.mxu0 0.0
        %2020 = vmatpush1.msra.mxu0 0.0
        %2021 = vmatprep.subr.mxu0 0.0
        %2022 = vmatpush1.msra.mxu0 0.0
        %2023 = vmatprep.subr.mxu0 0.0
        %2024 = vmatpush1.msra.mxu0 0.0
        %2025 = vmatprep.subr.mxu0 0.0
        %2026 = vmatpush1.msra.mxu0 0.0
        %2027 = vmatprep.subr.mxu0 0.0
        %2028 = vmatpush1.msra.mxu0 0.0
        %2029 = vmatprep.subr.mxu0 0.0
        %2030 = vmatpush1.msra.mxu0 0.0
        %2031 = vmatprep.subr.mxu0 0.0
        %2032 = vmatpush1.msra.mxu0 0.0
        %2033 = vmatprep.subr.mxu0 0.0
        %2034 = vmatpush1.msra.mxu0 0.0
        %2035 = vmatprep.subr.mxu0 0.0
        %2036 = vmatpush1.msra.mxu0 0.0
        %2037 = vmatprep.subr.mxu0 0.0
        %2038 = vmatpush1.msra.mxu0 0.0
        %2039 = vmatprep.subr.mxu0 0.0
        %2040 = vmatpush1.msra.mxu0 0.0
        %2041 = vmatprep.subr.mxu0 0.0
        %2042 = vmatpush1.msra.mxu0 0.0
        %2043 = vmatprep.subr.mxu0 0.0
        %2044 = vmatpush1.msra.mxu0 0.0
        %2045 = vmatprep.subr.mxu0 0.0
        %2046 = vmatpush1.msra.mxu0 0.0
        %2047 = vmatprep.subr.mxu0 0.0
        %2048 = vmatpush1.msra.mxu0 0.0
        %2049 = vmatprep.subr.mxu0 0.0
        %2050 = vmatpush1.msra.mxu0 0.0
        %2051 = vmatprep.subr.mxu0 0.0
        %2052 = vmatpush1.msra.mxu0 0.0
        %2053 = vmatprep.subr.mxu0 0.0
        %2054 = vmatpush1.msra.mxu0 0.0
        %2055 = vmatprep.subr.mxu0 0.0
        %2056 = vmatpush1.msra.mxu0 0.0
        %2057 = vmatprep.subr.mxu0 0.0
        %2058 = vmatpush1.msra.mxu0 0.0
        %2059 = vmatprep.subr.mxu0 0.0
        %2060 = vmatpush1.msra.mxu0 0.0
        %2061 = vmatprep.subr.mxu0 0.0
        %2062 = vmatpush1.msra.mxu0 0.0
        %2063 = vmatprep.subr.mxu0 0.0
        %2064 = vmatpush1.msra.mxu0 0.0
        %2065 = vmatprep.subr.mxu0 0.0
        %2066 = vmatpush1.msra.mxu0 0.0
        %2067 = vmatprep.subr.mxu0 0.0
        %2068 = vmatpush1.msra.mxu0 0.0
        %2069 = vmatprep.mubr.f32.mxu0 0.0
        %2070 = vmatmul.mubr.f32.gmra.mrb[0].mxu0 %v1931
        %v2071 = vpop.f32.mrb[0].mxu0
        %v2072 = vadd.f32 0.0, %v2071
        %v2073 = vpop.f32.mrb[0].mxu0
        %2074 = vmatprep.mubr.f32.mxu0 0.0
        %2075 = vmatmul.mubr.f32.gmra.mrb[0].mxu0 %v1934
        %v2076 = vpop.f32.mrb[0].mxu0
        %v2077 = vadd.f32 0.0, %v2076
        %v2078 = vpop.f32.mrb[0].mxu0
        %2079 = vmatprep.mubr.f32.mxu0 0.0
        %2080 = vmatmul.mubr.f32.gmra.mrb[0].mxu0 %v1937
        %v2081 = vpop.f32.mrb[0].mxu0
        %v2082 = vadd.f32 0.0, %v2081
        %v2083 = vpop.f32.mrb[0].mxu0
        %2084 = vmatprep.mubr.f32.mxu0 0.0
        %2085 = vmatmul.mubr.f32.gmra.mrb[0].mxu0 %v1940
        %v2086 = vpop.f32.mrb[0].mxu0
        %v2087 = vadd.f32 0.0, %v2086
        %v2088 = vpop.f32.mrb[0].mxu0
        %2089 = vmatprep.mubr.f32.mxu0 0.0
        %2090 = vmatmul.mubr.f32.gmra.mrb[0].mxu0 %v1943
        %v2091 = vpop.f32.mrb[0].mxu0
        %v2092 = vadd.f32 0.0, %v2091
        %v2093 = vpop.f32.mrb[0].mxu0
        %2094 = vmatprep.mubr.f32.mxu0 0.0
        %2095 = vmatmul.mubr.f32.gmra.mrb[0].mxu0 %v1946
        %v2096 = vpop.f32.mrb[0].mxu0
        %v2097 = vadd.f32 0.0, %v2096
        %v2098 = vpop.f32.mrb[0].mxu0
        %2099 = vmatprep.mubr.f32.mxu0 0.0
        %2100 = vmatmul.mubr.f32.gmra.mrb[0].mxu0 %v1949
        %v2101 = vpop.f32.mrb[0].mxu0
        %v2102 = vadd.f32 0.0, %v2101
        %v2103 = vpop.f32.mrb[0].mxu0
        %2104 = vmatprep.mubr.f32.mxu0 0.0
        %2105 = vmatmul.mubr.f32.gmra.mrb[0].mxu0 %v1952
        %v2106 = vpop.f32.mrb[0].mxu0
        %v2107 = vadd.f32 0.0, %v2106
        %v2108 = vpop.f32.mrb[0].mxu0
        %2109 = vmatprep.mubr.f32.mxu0 0.0
        %2110 = vmatmul.mubr.f32.gmra.mrb[0].mxu0 %v1955
        %v2111 = vpop.f32.mrb[0].mxu0
        %v2112 = vadd.f32 0.0, %v2111
        %v2113 = vpop.f32.mrb[0].mxu0
        %2114 = vmatprep.mubr.f32.mxu0 0.0
        %2115 = vmatmul.mubr.f32.gmra.mrb[0].mxu0 %v1958
        %v2116 = vpop.f32.mrb[0].mxu0
        %v2117 = vadd.f32 0.0, %v2116
        %v2118 = vpop.f32.mrb[0].mxu0
        %2119 = vmatprep.mubr.f32.mxu0 0.0
        %2120 = vmatmul.mubr.f32.gmra.mrb[0].mxu0 %v1961
        %v2121 = vpop.f32.mrb[0].mxu0
        %v2122 = vadd.f32 0.0, %v2121
        %v2123 = vpop.f32.mrb[0].mxu0
        %2124 = vmatprep.mubr.f32.mxu0 0.0
        %2125 = vmatmul.mubr.f32.gmra.mrb[0].mxu0 %v1964
        %v2126 = vpop.f32.mrb[0].mxu0
        %v2127 = vadd.f32 0.0, %v2126
        %v2128 = vpop.f32.mrb[0].mxu0
        %2129 = vmatprep.mubr.f32.mxu0 0.0
        %2130 = vmatmul.mubr.f32.gmra.mrb[0].mxu0 %v1967
        %v2131 = vpop.f32.mrb[0].mxu0
        %v2132 = vadd.f32 0.0, %v2131
        %v2133 = vpop.f32.mrb[0].mxu0
        %2134 = vmatprep.mubr.f32.mxu0 0.0
        %2135 = vmatmul.mubr.f32.gmra.mrb[0].mxu0 %v1970
        %v2136 = vpop.f32.mrb[0].mxu0
        %v2137 = vadd.f32 0.0, %v2136
        %v2138 = vpop.f32.mrb[0].mxu0
        %2139 = vmatprep.mubr.f32.mxu0 0.0
        %2140 = vmatmul.mubr.f32.gmra.mrb[0].mxu0 %v1973
        %v2141 = vpop.f32.mrb[0].mxu0
        %v2142 = vadd.f32 0.0, %v2141
        %v2143 = vpop.f32.mrb[0].mxu0
        %2144 = vmatprep.mubr.f32.mxu0 0.0
        %2145 = vmatmul.mubr.f32.gmra.mrb[0].mxu0 %v1976
        %v2146 = vpop.f32.mrb[0].mxu0
        %v2147 = vadd.f32 0.0, %v2146
        %v2148 = vpop.f32.mrb[0].mxu0
        %2149 = vmatprep.mubr.f32.mxu0 0.0
        %2150 = vmatmul.mubr.f32.gmra.mrb[0].mxu0 %v1979
        %v2151 = vpop.f32.mrb[0].mxu0
        %v2152 = vadd.f32 0.0, %v2151
        %v2153 = vpop.f32.mrb[0].mxu0
        %2154 = vmatprep.mubr.f32.mxu0 0.0
        %2155 = vmatmul.mubr.f32.gmra.mrb[0].mxu0 %v1982
        %v2156 = vpop.f32.mrb[0].mxu0
        %v2157 = vadd.f32 0.0, %v2156
        %v2158 = vpop.f32.mrb[0].mxu0
        %2159 = vmatprep.mubr.f32.mxu0 0.0
        %2160 = vmatmul.mubr.f32.gmra.mrb[0].mxu0 %v1985
        %v2161 = vpop.f32.mrb[0].mxu0
        %v2162 = vadd.f32 0.0, %v2161
        %v2163 = vpop.f32.mrb[0].mxu0
        %2164 = vmatprep.mubr.f32.mxu0 0.0
        %2165 = vmatmul.mubr.f32.gmra.mrb[0].mxu0 %v1988
        %v2166 = vpop.f32.mrb[0].mxu0
        %v2167 = vadd.f32 0.0, %v2166
        %v2168 = vpop.f32.mrb[0].mxu0
        %2169 = vmatprep.mubr.f32.mxu0 0.0
        %2170 = vmatmul.mubr.f32.gmra.mrb[0].mxu0 %v1991
        %v2171 = vpop.f32.mrb[0].mxu0
        %v2172 = vadd.f32 0.0, %v2171
        %v2173 = vpop.f32.mrb[0].mxu0
        %2174 = vmatprep.mubr.f32.mxu0 0.0
        %2175 = vmatmul.mubr.f32.gmra.mrb[0].mxu0 %v1994
        %v2176 = vpop.f32.mrb[0].mxu0
        %v2177 = vadd.f32 0.0, %v2176
        %v2178 = vpop.f32.mrb[0].mxu0
        %2179 = vmatprep.mubr.f32.mxu0 0.0
        %2180 = vmatmul.mubr.f32.gmra.mrb[0].mxu0 %v1997
        %v2181 = vpop.f32.mrb[0].mxu0
        %v2182 = vadd.f32 0.0, %v2181
        %v2183 = vpop.f32.mrb[0].mxu0
        %2184 = vmatprep.mubr.f32.mxu0 0.0
        %2185 = vmatmul.mubr.f32.gmra.mrb[0].mxu0 %v2000
        %v2186 = vpop.f32.mrb[0].mxu0
        %v2187 = vadd.f32 0.0, %v2186
        %v2188 = vpop.f32.mrb[0].mxu0
        %2189 = vdwg.mxu0
        %v2190 = vadd.f32 %v1614, %v2072
        %v2191 = vadd.f32 %v1619, %v2077
        %v2192 = vadd.f32 %v1624, %v2082
        %v2193 = vadd.f32 %v1629, %v2087
        %v2194 = vadd.f32 %v1634, %v2092
        %v2195 = vadd.f32 %v1639, %v2097
        %v2196 = vadd.f32 %v1644, %v2102
        %v2197 = vadd.f32 %v1649, %v2107
        %v2198 = vadd.f32 %v1654, %v2112
        %v2199 = vadd.f32 %v1659, %v2117
        %v2200 = vadd.f32 %v1664, %v2122
        %v2201 = vadd.f32 %v1669, %v2127
        %v2202 = vadd.f32 %v1674, %v2132
        %v2203 = vadd.f32 %v1679, %v2137
        %v2204 = vadd.f32 %v1684, %v2142
        %v2205 = vadd.f32 %v1689, %v2147
        %v2206 = vadd.f32 %v1694, %v2152
        %v2207 = vadd.f32 %v1699, %v2157
        %v2208 = vadd.f32 %v1704, %v2162
        %v2209 = vadd.f32 %v1709, %v2167
        %v2210 = vadd.f32 %v1714, %v2172
        %v2211 = vadd.f32 %v1719, %v2177
        %v2212 = vadd.f32 %v1724, %v2182
        %v2213 = vadd.f32 %v1729, %v2187
        %v2214 = vld [vmem:[#allocation2 + $0xf] sm:$0xff]
        %v2215 = vld [vmem:[#allocation2 + $0x17] sm:$0xff]
        %v2216 = vld [vmem:[#allocation2 + $0x1f] sm:$0xff]
        %v2217 = vld [vmem:[#allocation2 + $0x27] sm:$0xff]
        %v2218 = vld [vmem:[#allocation2 + $0x2f] sm:$0xff]
        %v2219 = vld [vmem:[#allocation2 + $0x37] sm:$0xff]
        %v2220 = vld [vmem:[#allocation2 + $0x3f] sm:$0xff]
        %v2221 = vld [vmem:[#allocation2 + $0x47] sm:$0xff]
        %v2222 = vld [vmem:[#allocation2 + $0x4f] sm:$0xff]
        %v2223 = vld [vmem:[#allocation2 + $0x57] sm:$0xff]
        %v2224 = vld [vmem:[#allocation2 + $0x5f] sm:$0xff]
        %v2225 = vld [vmem:[#allocation2 + $0x67] sm:$0xff]
        %v2226 = vld [vmem:[#allocation2 + $0x6f] sm:$0xff]
        %v2227 = vld [vmem:[#allocation2 + $0x77] sm:$0xff]
        %v2228 = vld [vmem:[#allocation2 + $0x7f] sm:$0xff]
        %v2229 = vld [vmem:[#allocation2 + $0x87] sm:$0xff]
        %v2230 = vld [vmem:[#allocation2 + $0x8f] sm:$0xff]
        %v2231 = vld [vmem:[#allocation2 + $0x97] sm:$0xff]
        %v2232 = vld [vmem:[#allocation2 + $0x9f] sm:$0xff]
        %v2233 = vld [vmem:[#allocation2 + $0xa7] sm:$0xff]
        %v2234 = vld [vmem:[#allocation2 + $0xaf] sm:$0xff]
        %v2235 = vld [vmem:[#allocation2 + $0xb7] sm:$0xff]
        %v2236 = vld [vmem:[#allocation2 + $0xbf] sm:$0xff]
        %v2237 = vld [vmem:[#allocation2 + $0xc7] sm:$0xff]
        %s2238 = scalar_lea.vmem %s0, 576
        %v2239 = vld [vmem:[%s2238] sm:$0xff]
        %v2240 = vld [vmem:[%s2238 + $0x8] sm:$0xff]
        %v2241 = vld [vmem:[%s2238 + $0x10] sm:$0xff]
        %v2242 = vld [vmem:[%s2238 + $0x18] sm:$0xff]
        %v2243 = vld [vmem:[%s2238 + $0x20] sm:$0xff]
        %v2244 = vld [vmem:[%s2238 + $0x28] sm:$0xff]
        %v2245 = vld [vmem:[%s2238 + $0x30] sm:$0xff]
        %v2246 = vld [vmem:[%s2238 + $0x38] sm:$0xff]
        %v2247 = vld [vmem:[%s2238 + $0x40] sm:$0xff]
        %v2248 = vld [vmem:[%s2238 + $0x48] sm:$0xff]
        %v2249 = vld [vmem:[%s2238 + $0x50] sm:$0xff]
        %v2250 = vld [vmem:[%s2238 + $0x58] sm:$0xff]
        %v2251 = vld [vmem:[%s2238 + $0x60] sm:$0xff]
        %v2252 = vld [vmem:[%s2238 + $0x68] sm:$0xff]
        %v2253 = vld [vmem:[%s2238 + $0x70] sm:$0xff]
        %v2254 = vld [vmem:[%s2238 + $0x78] sm:$0xff]
        %v2255 = vld [vmem:[%s2238 + $0x80] sm:$0xff]
        %v2256 = vld [vmem:[%s2238 + $0x88] sm:$0xff]
        %v2257 = vld [vmem:[%s2238 + $0x90] sm:$0xff]
        %v2258 = vld [vmem:[%s2238 + $0x98] sm:$0xff]
        %v2259 = vld [vmem:[%s2238 + $0xa0] sm:$0xff]
        %v2260 = vld [vmem:[%s2238 + $0xa8] sm:$0xff]
        %v2261 = vld [vmem:[%s2238 + $0xb0] sm:$0xff]
        %v2262 = vld [vmem:[%s2238 + $0xb8] sm:$0xff]
        %2264 = vset.pattern.permute.xlu0 0
        %2265 = vperm.xlu0 %2264, %v2239
        %v2266 = vpop.permute.xlu0 %2265
        %2269 = vset.pattern.permute.xlu0 0
        %2270 = vperm.xlu0 %2269, %v2240
        %v2271 = vpop.permute.xlu0 %2270
        %2274 = vset.pattern.permute.xlu0 0
        %2275 = vperm.xlu0 %2274, %v2241
        %v2276 = vpop.permute.xlu0 %2275
        %2279 = vset.pattern.permute.xlu0 0
        %2280 = vperm.xlu0 %2279, %v2242
        %v2281 = vpop.permute.xlu0 %2280
        %2284 = vset.pattern.permute.xlu0 0
        %2285 = vperm.xlu0 %2284, %v2243
        %v2286 = vpop.permute.xlu0 %2285
        %2289 = vset.pattern.permute.xlu0 0
        %2290 = vperm.xlu0 %2289, %v2244
        %v2291 = vpop.permute.xlu0 %2290
        %2294 = vset.pattern.permute.xlu0 0
        %2295 = vperm.xlu0 %2294, %v2245
        %v2296 = vpop.permute.xlu0 %2295
        %2299 = vset.pattern.permute.xlu0 0
        %2300 = vperm.xlu0 %2299, %v2246
        %v2301 = vpop.permute.xlu0 %2300
        %2304 = vset.pattern.permute.xlu0 0
        %2305 = vperm.xlu0 %2304, %v2247
        %v2306 = vpop.permute.xlu0 %2305
        %2309 = vset.pattern.permute.xlu0 0
        %2310 = vperm.xlu0 %2309, %v2248
        %v2311 = vpop.permute.xlu0 %2310
        %2314 = vset.pattern.permute.xlu0 0
        %2315 = vperm.xlu0 %2314, %v2249
        %v2316 = vpop.permute.xlu0 %2315
        %2319 = vset.pattern.permute.xlu0 0
        %2320 = vperm.xlu0 %2319, %v2250
        %v2321 = vpop.permute.xlu0 %2320
        %2324 = vset.pattern.permute.xlu0 0
        %2325 = vperm.xlu0 %2324, %v2251
        %v2326 = vpop.permute.xlu0 %2325
        %2329 = vset.pattern.permute.xlu0 0
        %2330 = vperm.xlu0 %2329, %v2252
        %v2331 = vpop.permute.xlu0 %2330
        %2334 = vset.pattern.permute.xlu0 0
        %2335 = vperm.xlu0 %2334, %v2253
        %v2336 = vpop.permute.xlu0 %2335
        %2339 = vset.pattern.permute.xlu0 0
        %2340 = vperm.xlu0 %2339, %v2254
        %v2341 = vpop.permute.xlu0 %2340
        %2344 = vset.pattern.permute.xlu0 0
        %2345 = vperm.xlu0 %2344, %v2255
        %v2346 = vpop.permute.xlu0 %2345
        %2349 = vset.pattern.permute.xlu0 0
        %2350 = vperm.xlu0 %2349, %v2256
        %v2351 = vpop.permute.xlu0 %2350
        %2354 = vset.pattern.permute.xlu0 0
        %2355 = vperm.xlu0 %2354, %v2257
        %v2356 = vpop.permute.xlu0 %2355
        %2359 = vset.pattern.permute.xlu0 0
        %2360 = vperm.xlu0 %2359, %v2258
        %v2361 = vpop.permute.xlu0 %2360
        %2364 = vset.pattern.permute.xlu0 0
        %2365 = vperm.xlu0 %2364, %v2259
        %v2366 = vpop.permute.xlu0 %2365
        %2369 = vset.pattern.permute.xlu0 0
        %2370 = vperm.xlu0 %2369, %v2260
        %v2371 = vpop.permute.xlu0 %2370
        %2374 = vset.pattern.permute.xlu0 0
        %2375 = vperm.xlu0 %2374, %v2261
        %v2376 = vpop.permute.xlu0 %2375
        %2379 = vset.pattern.permute.xlu0 0
        %2380 = vperm.xlu0 %2379, %v2262
        %v2381 = vpop.permute.xlu0 %2380
        %v2383 = vmul.f32 %v2214, %v2266
        %v2384 = vmul.f32 %v2215, %v2271
        %v2385 = vmul.f32 %v2216, %v2276
        %v2386 = vmul.f32 %v2217, %v2281
        %v2387 = vmul.f32 %v2218, %v2286
        %v2388 = vmul.f32 %v2219, %v2291
        %v2389 = vmul.f32 %v2220, %v2296
        %v2390 = vmul.f32 %v2221, %v2301
        %v2391 = vmul.f32 %v2222, %v2306
        %v2392 = vmul.f32 %v2223, %v2311
        %v2393 = vmul.f32 %v2224, %v2316
        %v2394 = vmul.f32 %v2225, %v2321
        %v2395 = vmul.f32 %v2226, %v2326
        %v2396 = vmul.f32 %v2227, %v2331
        %v2397 = vmul.f32 %v2228, %v2336
        %v2398 = vmul.f32 %v2229, %v2341
        %v2399 = vmul.f32 %v2230, %v2346
        %v2400 = vmul.f32 %v2231, %v2351
        %v2401 = vmul.f32 %v2232, %v2356
        %v2402 = vmul.f32 %v2233, %v2361
        %v2403 = vmul.f32 %v2234, %v2366
        %v2404 = vmul.f32 %v2235, %v2371
        %v2405 = vmul.f32 %v2236, %v2376
        %v2406 = vmul.f32 %v2237, %v2381
        %s2407 = scalar_lea.vmem %s434, 96
        %v2408 = vld [vmem:[%s2407] sm:$0xff]
        %v2409 = vld [vmem:[%s2407 + $0x8] sm:$0xff]
        %v2410 = vld [vmem:[%s2407 + $0x10] sm:$0xff]
        %v2411 = vld [vmem:[%s2407 + $0x18] sm:$0x1]
        %v2413 = vsel %vm445, %v2383, 0
        %v2416 = vsel %vm445, %v2384, 0
        %v2419 = vsel %vm445, %v2385, 0
        %v2422 = vsel %vm445, %v2386, 0
        %v2425 = vsel %vm445, %v2387, 0
        %v2428 = vsel %vm445, %v2388, 0
        %v2431 = vsel %vm445, %v2389, 0
        %v2434 = vsel %vm445, %v2390, 0
        %v2437 = vsel %vm445, %v2391, 0
        %v2440 = vsel %vm445, %v2392, 0
        %v2443 = vsel %vm445, %v2393, 0
        %v2446 = vsel %vm445, %v2394, 0
        %v2449 = vsel %vm445, %v2395, 0
        %v2452 = vsel %vm445, %v2396, 0
        %v2455 = vsel %vm445, %v2397, 0
        %v2458 = vsel %vm445, %v2398, 0
        %v2461 = vsel %vm445, %v2399, 0
        %v2464 = vsel %vm445, %v2400, 0
        %v2467 = vsel %vm445, %v2401, 0
        %v2470 = vsel %vm445, %v2402, 0
        %v2473 = vsel %vm445, %v2403, 0
        %v2476 = vsel %vm445, %v2404, 0
        %v2479 = vsel %vm445, %v2405, 0
        %v2482 = vsel %vm445, %v2406, 0
        %v2485 = vsel %vm581, %v2411, 0
        %2487 = vmatprep.subr.mxu0 0.0
        %2488 = vmatpush1.msra.mxu0 %v2408
        %2489 = vmatprep.subr.mxu0 0.0
        %2490 = vmatpush1.msra.mxu0 %v2409
        %2491 = vmatprep.subr.mxu0 0.0
        %2492 = vmatpush1.msra.mxu0 %v2410
        %2493 = vmatprep.subr.mxu0 0.0
        %2494 = vmatpush1.msra.mxu0 %v2485
        %2495 = vmatprep.subr.mxu0 0.0
        %2496 = vmatpush1.msra.mxu0 0.0
        %2497 = vmatprep.subr.mxu0 0.0
        %2498 = vmatpush1.msra.mxu0 0.0
        %2499 = vmatprep.subr.mxu0 0.0
        %2500 = vmatpush1.msra.mxu0 0.0
        %2501 = vmatprep.subr.mxu0 0.0
        %2502 = vmatpush1.msra.mxu0 0.0
        %2503 = vmatprep.subr.mxu0 0.0
        %2504 = vmatpush1.msra.mxu0 0.0
        %2505 = vmatprep.subr.mxu0 0.0
        %2506 = vmatpush1.msra.mxu0 0.0
        %2507 = vmatprep.subr.mxu0 0.0
        %2508 = vmatpush1.msra.mxu0 0.0
        %2509 = vmatprep.subr.mxu0 0.0
        %2510 = vmatpush1.msra.mxu0 0.0
        %2511 = vmatprep.subr.mxu0 0.0
        %2512 = vmatpush1.msra.mxu0 0.0
        %2513 = vmatprep.subr.mxu0 0.0
        %2514 = vmatpush1.msra.mxu0 0.0
        %2515 = vmatprep.subr.mxu0 0.0
        %2516 = vmatpush1.msra.mxu0 0.0
        %2517 = vmatprep.subr.mxu0 0.0
        %2518 = vmatpush1.msra.mxu0 0.0
        %2519 = vmatprep.subr.mxu0 0.0
        %2520 = vmatpush1.msra.mxu0 0.0
        %2521 = vmatprep.subr.mxu0 0.0
        %2522 = vmatpush1.msra.mxu0 0.0
        %2523 = vmatprep.subr.mxu0 0.0
        %2524 = vmatpush1.msra.mxu0 0.0
        %2525 = vmatprep.subr.mxu0 0.0
        %2526 = vmatpush1.msra.mxu0 0.0
        %2527 = vmatprep.subr.mxu0 0.0
        %2528 = vmatpush1.msra.mxu0 0.0
        %2529 = vmatprep.subr.mxu0 0.0
        %2530 = vmatpush1.msra.mxu0 0.0
        %2531 = vmatprep.subr.mxu0 0.0
        %2532 = vmatpush1.msra.mxu0 0.0
        %2533 = vmatprep.subr.mxu0 0.0
        %2534 = vmatpush1.msra.mxu0 0.0
        %2535 = vmatprep.subr.mxu0 0.0
        %2536 = vmatpush1.msra.mxu0 0.0
        %2537 = vmatprep.subr.mxu0 0.0
        %2538 = vmatpush1.msra.mxu0 0.0
        %2539 = vmatprep.subr.mxu0 0.0
        %2540 = vmatpush1.msra.mxu0 0.0
        %2541 = vmatprep.subr.mxu0 0.0
        %2542 = vmatpush1.msra.mxu0 0.0
        %2543 = vmatprep.subr.mxu0 0.0
        %2544 = vmatpush1.msra.mxu0 0.0
        %2545 = vmatprep.subr.mxu0 0.0
        %2546 = vmatpush1.msra.mxu0 0.0
        %2547 = vmatprep.subr.mxu0 0.0
        %2548 = vmatpush1.msra.mxu0 0.0
        %2549 = vmatprep.subr.mxu0 0.0
        %2550 = vmatpush1.msra.mxu0 0.0
        %2551 = vmatprep.mubr.f32.mxu0 0.0
        %2552 = vmatmul.mubr.f32.gmra.mrb[0].mxu0 %v2413
        %v2553 = vpop.f32.mrb[0].mxu0
        %v2554 = vadd.f32 0.0, %v2553
        %v2555 = vpop.f32.mrb[0].mxu0
        %2556 = vmatprep.mubr.f32.mxu0 0.0
        %2557 = vmatmul.mubr.f32.gmra.mrb[0].mxu0 %v2416
        %v2558 = vpop.f32.mrb[0].mxu0
        %v2559 = vadd.f32 0.0, %v2558
        %v2560 = vpop.f32.mrb[0].mxu0
        %2561 = vmatprep.mubr.f32.mxu0 0.0
        %2562 = vmatmul.mubr.f32.gmra.mrb[0].mxu0 %v2419
        %v2563 = vpop.f32.mrb[0].mxu0
        %v2564 = vadd.f32 0.0, %v2563
        %v2565 = vpop.f32.mrb[0].mxu0
        %2566 = vmatprep.mubr.f32.mxu0 0.0
        %2567 = vmatmul.mubr.f32.gmra.mrb[0].mxu0 %v2422
        %v2568 = vpop.f32.mrb[0].mxu0
        %v2569 = vadd.f32 0.0, %v2568
        %v2570 = vpop.f32.mrb[0].mxu0
        %2571 = vmatprep.mubr.f32.mxu0 0.0
        %2572 = vmatmul.mubr.f32.gmra.mrb[0].mxu0 %v2425
        %v2573 = vpop.f32.mrb[0].mxu0
        %v2574 = vadd.f32 0.0, %v2573
        %v2575 = vpop.f32.mrb[0].mxu0
        %2576 = vmatprep.mubr.f32.mxu0 0.0
        %2577 = vmatmul.mubr.f32.gmra.mrb[0].mxu0 %v2428
        %v2578 = vpop.f32.mrb[0].mxu0
        %v2579 = vadd.f32 0.0, %v2578
        %v2580 = vpop.f32.mrb[0].mxu0
        %2581 = vmatprep.mubr.f32.mxu0 0.0
        %2582 = vmatmul.mubr.f32.gmra.mrb[0].mxu0 %v2431
        %v2583 = vpop.f32.mrb[0].mxu0
        %v2584 = vadd.f32 0.0, %v2583
        %v2585 = vpop.f32.mrb[0].mxu0
        %2586 = vmatprep.mubr.f32.mxu0 0.0
        %2587 = vmatmul.mubr.f32.gmra.mrb[0].mxu0 %v2434
        %v2588 = vpop.f32.mrb[0].mxu0
        %v2589 = vadd.f32 0.0, %v2588
        %v2590 = vpop.f32.mrb[0].mxu0
        %2591 = vmatprep.mubr.f32.mxu0 0.0
        %2592 = vmatmul.mubr.f32.gmra.mrb[0].mxu0 %v2437
        %v2593 = vpop.f32.mrb[0].mxu0
        %v2594 = vadd.f32 0.0, %v2593
        %v2595 = vpop.f32.mrb[0].mxu0
        %2596 = vmatprep.mubr.f32.mxu0 0.0
        %2597 = vmatmul.mubr.f32.gmra.mrb[0].mxu0 %v2440
        %v2598 = vpop.f32.mrb[0].mxu0
        %v2599 = vadd.f32 0.0, %v2598
        %v2600 = vpop.f32.mrb[0].mxu0
        %2601 = vmatprep.mubr.f32.mxu0 0.0
        %2602 = vmatmul.mubr.f32.gmra.mrb[0].mxu0 %v2443
        %v2603 = vpop.f32.mrb[0].mxu0
        %v2604 = vadd.f32 0.0, %v2603
        %v2605 = vpop.f32.mrb[0].mxu0
        %2606 = vmatprep.mubr.f32.mxu0 0.0
        %2607 = vmatmul.mubr.f32.gmra.mrb[0].mxu0 %v2446
        %v2608 = vpop.f32.mrb[0].mxu0
        %v2609 = vadd.f32 0.0, %v2608
        %v2610 = vpop.f32.mrb[0].mxu0
        %2611 = vmatprep.mubr.f32.mxu0 0.0
        %2612 = vmatmul.mubr.f32.gmra.mrb[0].mxu0 %v2449
        %v2613 = vpop.f32.mrb[0].mxu0
        %v2614 = vadd.f32 0.0, %v2613
        %v2615 = vpop.f32.mrb[0].mxu0
        %2616 = vmatprep.mubr.f32.mxu0 0.0
        %2617 = vmatmul.mubr.f32.gmra.mrb[0].mxu0 %v2452
        %v2618 = vpop.f32.mrb[0].mxu0
        %v2619 = vadd.f32 0.0, %v2618
        %v2620 = vpop.f32.mrb[0].mxu0
        %2621 = vmatprep.mubr.f32.mxu0 0.0
        %2622 = vmatmul.mubr.f32.gmra.mrb[0].mxu0 %v2455
        %v2623 = vpop.f32.mrb[0].mxu0
        %v2624 = vadd.f32 0.0, %v2623
        %v2625 = vpop.f32.mrb[0].mxu0
        %2626 = vmatprep.mubr.f32.mxu0 0.0
        %2627 = vmatmul.mubr.f32.gmra.mrb[0].mxu0 %v2458
        %v2628 = vpop.f32.mrb[0].mxu0
        %v2629 = vadd.f32 0.0, %v2628
        %v2630 = vpop.f32.mrb[0].mxu0
        %2631 = vmatprep.mubr.f32.mxu0 0.0
        %2632 = vmatmul.mubr.f32.gmra.mrb[0].mxu0 %v2461
        %v2633 = vpop.f32.mrb[0].mxu0
        %v2634 = vadd.f32 0.0, %v2633
        %v2635 = vpop.f32.mrb[0].mxu0
        %2636 = vmatprep.mubr.f32.mxu0 0.0
        %2637 = vmatmul.mubr.f32.gmra.mrb[0].mxu0 %v2464
        %v2638 = vpop.f32.mrb[0].mxu0
        %v2639 = vadd.f32 0.0, %v2638
        %v2640 = vpop.f32.mrb[0].mxu0
        %2641 = vmatprep.mubr.f32.mxu0 0.0
        %2642 = vmatmul.mubr.f32.gmra.mrb[0].mxu0 %v2467
        %v2643 = vpop.f32.mrb[0].mxu0
        %v2644 = vadd.f32 0.0, %v2643
        %v2645 = vpop.f32.mrb[0].mxu0
        %2646 = vmatprep.mubr.f32.mxu0 0.0
        %2647 = vmatmul.mubr.f32.gmra.mrb[0].mxu0 %v2470
        %v2648 = vpop.f32.mrb[0].mxu0
        %v2649 = vadd.f32 0.0, %v2648
        %v2650 = vpop.f32.mrb[0].mxu0
        %2651 = vmatprep.mubr.f32.mxu0 0.0
        %2652 = vmatmul.mubr.f32.gmra.mrb[0].mxu0 %v2473
        %v2653 = vpop.f32.mrb[0].mxu0
        %v2654 = vadd.f32 0.0, %v2653
        %v2655 = vpop.f32.mrb[0].mxu0
        %2656 = vmatprep.mubr.f32.mxu0 0.0
        %2657 = vmatmul.mubr.f32.gmra.mrb[0].mxu0 %v2476
        %v2658 = vpop.f32.mrb[0].mxu0
        %v2659 = vadd.f32 0.0, %v2658
        %v2660 = vpop.f32.mrb[0].mxu0
        %2661 = vmatprep.mubr.f32.mxu0 0.0
        %2662 = vmatmul.mubr.f32.gmra.mrb[0].mxu0 %v2479
        %v2663 = vpop.f32.mrb[0].mxu0
        %v2664 = vadd.f32 0.0, %v2663
        %v2665 = vpop.f32.mrb[0].mxu0
        %2666 = vmatprep.mubr.f32.mxu0 0.0
        %2667 = vmatmul.mubr.f32.gmra.mrb[0].mxu0 %v2482
        %v2668 = vpop.f32.mrb[0].mxu0
        %v2669 = vadd.f32 0.0, %v2668
        %v2670 = vpop.f32.mrb[0].mxu0
        %2671 = vdwg.mxu0
        %v2672 = vadd.f32 %v2190, %v2554
        %v2673 = vadd.f32 %v2191, %v2559
        %v2674 = vadd.f32 %v2192, %v2564
        %v2675 = vadd.f32 %v2193, %v2569
        %v2676 = vadd.f32 %v2194, %v2574
        %v2677 = vadd.f32 %v2195, %v2579
        %v2678 = vadd.f32 %v2196, %v2584
        %v2679 = vadd.f32 %v2197, %v2589
        %v2680 = vadd.f32 %v2198, %v2594
        %v2681 = vadd.f32 %v2199, %v2599
        %v2682 = vadd.f32 %v2200, %v2604
        %v2683 = vadd.f32 %v2201, %v2609
        %v2684 = vadd.f32 %v2202, %v2614
        %v2685 = vadd.f32 %v2203, %v2619
        %v2686 = vadd.f32 %v2204, %v2624
        %v2687 = vadd.f32 %v2205, %v2629
        %v2688 = vadd.f32 %v2206, %v2634
        %v2689 = vadd.f32 %v2207, %v2639
        %v2690 = vadd.f32 %v2208, %v2644
        %v2691 = vadd.f32 %v2209, %v2649
        %v2692 = vadd.f32 %v2210, %v2654
        %v2693 = vadd.f32 %v2211, %v2659
        %v2694 = vadd.f32 %v2212, %v2664
        %v2695 = vadd.f32 %v2213, %v2669
        %v2696 = vld [vmem:[#allocation2 + $0x10] sm:$0xff]
        %v2697 = vld [vmem:[#allocation2 + $0x18] sm:$0xff]
        %v2698 = vld [vmem:[#allocation2 + $0x20] sm:$0xff]
        %v2699 = vld [vmem:[#allocation2 + $0x28] sm:$0xff]
        %v2700 = vld [vmem:[#allocation2 + $0x30] sm:$0xff]
        %v2701 = vld [vmem:[#allocation2 + $0x38] sm:$0xff]
        %v2702 = vld [vmem:[#allocation2 + $0x40] sm:$0xff]
        %v2703 = vld [vmem:[#allocation2 + $0x48] sm:$0xff]
        %v2704 = vld [vmem:[#allocation2 + $0x50] sm:$0xff]
        %v2705 = vld [vmem:[#allocation2 + $0x58] sm:$0xff]
        %v2706 = vld [vmem:[#allocation2 + $0x60] sm:$0xff]
        %v2707 = vld [vmem:[#allocation2 + $0x68] sm:$0xff]
        %v2708 = vld [vmem:[#allocation2 + $0x70] sm:$0xff]
        %v2709 = vld [vmem:[#allocation2 + $0x78] sm:$0xff]
        %v2710 = vld [vmem:[#allocation2 + $0x80] sm:$0xff]
        %v2711 = vld [vmem:[#allocation2 + $0x88] sm:$0xff]
        %v2712 = vld [vmem:[#allocation2 + $0x90] sm:$0xff]
        %v2713 = vld [vmem:[#allocation2 + $0x98] sm:$0xff]
        %v2714 = vld [vmem:[#allocation2 + $0xa0] sm:$0xff]
        %v2715 = vld [vmem:[#allocation2 + $0xa8] sm:$0xff]
        %v2716 = vld [vmem:[#allocation2 + $0xb0] sm:$0xff]
        %v2717 = vld [vmem:[#allocation2 + $0xb8] sm:$0xff]
        %v2718 = vld [vmem:[#allocation2 + $0xc0] sm:$0xff]
        %v2719 = vld [vmem:[#allocation2 + $0xc8] sm:$0xff]
        %s2720 = scalar_lea.vmem %s0, 768
        %v2721 = vld [vmem:[%s2720] sm:$0xff]
        %v2722 = vld [vmem:[%s2720 + $0x8] sm:$0xff]
        %v2723 = vld [vmem:[%s2720 + $0x10] sm:$0xff]
        %v2724 = vld [vmem:[%s2720 + $0x18] sm:$0xff]
        %v2725 = vld [vmem:[%s2720 + $0x20] sm:$0xff]
        %v2726 = vld [vmem:[%s2720 + $0x28] sm:$0xff]
        %v2727 = vld [vmem:[%s2720 + $0x30] sm:$0xff]
        %v2728 = vld [vmem:[%s2720 + $0x38] sm:$0xff]
        %v2729 = vld [vmem:[%s2720 + $0x40] sm:$0xff]
        %v2730 = vld [vmem:[%s2720 + $0x48] sm:$0xff]
        %v2731 = vld [vmem:[%s2720 + $0x50] sm:$0xff]
        %v2732 = vld [vmem:[%s2720 + $0x58] sm:$0xff]
        %v2733 = vld [vmem:[%s2720 + $0x60] sm:$0xff]
        %v2734 = vld [vmem:[%s2720 + $0x68] sm:$0xff]
        %v2735 = vld [vmem:[%s2720 + $0x70] sm:$0xff]
        %v2736 = vld [vmem:[%s2720 + $0x78] sm:$0xff]
        %v2737 = vld [vmem:[%s2720 + $0x80] sm:$0xff]
        %v2738 = vld [vmem:[%s2720 + $0x88] sm:$0xff]
        %v2739 = vld [vmem:[%s2720 + $0x90] sm:$0xff]
        %v2740 = vld [vmem:[%s2720 + $0x98] sm:$0xff]
        %v2741 = vld [vmem:[%s2720 + $0xa0] sm:$0xff]
        %v2742 = vld [vmem:[%s2720 + $0xa8] sm:$0xff]
        %v2743 = vld [vmem:[%s2720 + $0xb0] sm:$0xff]
        %v2744 = vld [vmem:[%s2720 + $0xb8] sm:$0xff]
        %2746 = vset.pattern.permute.xlu0 0
        %2747 = vperm.xlu0 %2746, %v2721
        %v2748 = vpop.permute.xlu0 %2747
        %2751 = vset.pattern.permute.xlu0 0
        %2752 = vperm.xlu0 %2751, %v2722
        %v2753 = vpop.permute.xlu0 %2752
        %2756 = vset.pattern.permute.xlu0 0
        %2757 = vperm.xlu0 %2756, %v2723
        %v2758 = vpop.permute.xlu0 %2757
        %2761 = vset.pattern.permute.xlu0 0
        %2762 = vperm.xlu0 %2761, %v2724
        %v2763 = vpop.permute.xlu0 %2762
        %2766 = vset.pattern.permute.xlu0 0
        %2767 = vperm.xlu0 %2766, %v2725
        %v2768 = vpop.permute.xlu0 %2767
        %2771 = vset.pattern.permute.xlu0 0
        %2772 = vperm.xlu0 %2771, %v2726
        %v2773 = vpop.permute.xlu0 %2772
        %2776 = vset.pattern.permute.xlu0 0
        %2777 = vperm.xlu0 %2776, %v2727
        %v2778 = vpop.permute.xlu0 %2777
        %2781 = vset.pattern.permute.xlu0 0
        %2782 = vperm.xlu0 %2781, %v2728
        %v2783 = vpop.permute.xlu0 %2782
        %2786 = vset.pattern.permute.xlu0 0
        %2787 = vperm.xlu0 %2786, %v2729
        %v2788 = vpop.permute.xlu0 %2787
        %2791 = vset.pattern.permute.xlu0 0
        %2792 = vperm.xlu0 %2791, %v2730
        %v2793 = vpop.permute.xlu0 %2792
        %2796 = vset.pattern.permute.xlu0 0
        %2797 = vperm.xlu0 %2796, %v2731
        %v2798 = vpop.permute.xlu0 %2797
        %2801 = vset.pattern.permute.xlu0 0
        %2802 = vperm.xlu0 %2801, %v2732
        %v2803 = vpop.permute.xlu0 %2802
        %2806 = vset.pattern.permute.xlu0 0
        %2807 = vperm.xlu0 %2806, %v2733
        %v2808 = vpop.permute.xlu0 %2807
        %2811 = vset.pattern.permute.xlu0 0
        %2812 = vperm.xlu0 %2811, %v2734
        %v2813 = vpop.permute.xlu0 %2812
        %2816 = vset.pattern.permute.xlu0 0
        %2817 = vperm.xlu0 %2816, %v2735
        %v2818 = vpop.permute.xlu0 %2817
        %2821 = vset.pattern.permute.xlu0 0
        %2822 = vperm.xlu0 %2821, %v2736
        %v2823 = vpop.permute.xlu0 %2822
        %2826 = vset.pattern.permute.xlu0 0
        %2827 = vperm.xlu0 %2826, %v2737
        %v2828 = vpop.permute.xlu0 %2827
        %2831 = vset.pattern.permute.xlu0 0
        %2832 = vperm.xlu0 %2831, %v2738
        %v2833 = vpop.permute.xlu0 %2832
        %2836 = vset.pattern.permute.xlu0 0
        %2837 = vperm.xlu0 %2836, %v2739
        %v2838 = vpop.permute.xlu0 %2837
        %2841 = vset.pattern.permute.xlu0 0
        %2842 = vperm.xlu0 %2841, %v2740
        %v2843 = vpop.permute.xlu0 %2842
        %2846 = vset.pattern.permute.xlu0 0
        %2847 = vperm.xlu0 %2846, %v2741
        %v2848 = vpop.permute.xlu0 %2847
        %2851 = vset.pattern.permute.xlu0 0
        %2852 = vperm.xlu0 %2851, %v2742
        %v2853 = vpop.permute.xlu0 %2852
        %2856 = vset.pattern.permute.xlu0 0
        %2857 = vperm.xlu0 %2856, %v2743
        %v2858 = vpop.permute.xlu0 %2857
        %2861 = vset.pattern.permute.xlu0 0
        %2862 = vperm.xlu0 %2861, %v2744
        %v2863 = vpop.permute.xlu0 %2862
        %v2865 = vmul.f32 %v2696, %v2748
        %v2866 = vmul.f32 %v2697, %v2753
        %v2867 = vmul.f32 %v2698, %v2758
        %v2868 = vmul.f32 %v2699, %v2763
        %v2869 = vmul.f32 %v2700, %v2768
        %v2870 = vmul.f32 %v2701, %v2773
        %v2871 = vmul.f32 %v2702, %v2778
        %v2872 = vmul.f32 %v2703, %v2783
        %v2873 = vmul.f32 %v2704, %v2788
        %v2874 = vmul.f32 %v2705, %v2793
        %v2875 = vmul.f32 %v2706, %v2798
        %v2876 = vmul.f32 %v2707, %v2803
        %v2877 = vmul.f32 %v2708, %v2808
        %v2878 = vmul.f32 %v2709, %v2813
        %v2879 = vmul.f32 %v2710, %v2818
        %v2880 = vmul.f32 %v2711, %v2823
        %v2881 = vmul.f32 %v2712, %v2828
        %v2882 = vmul.f32 %v2713, %v2833
        %v2883 = vmul.f32 %v2714, %v2838
        %v2884 = vmul.f32 %v2715, %v2843
        %v2885 = vmul.f32 %v2716, %v2848
        %v2886 = vmul.f32 %v2717, %v2853
        %v2887 = vmul.f32 %v2718, %v2858
        %v2888 = vmul.f32 %v2719, %v2863
        %s2889 = scalar_lea.vmem %s434, 128
        %v2890 = vld [vmem:[%s2889] sm:$0xff]
        %v2891 = vld [vmem:[%s2889 + $0x8] sm:$0xff]
        %v2892 = vld [vmem:[%s2889 + $0x10] sm:$0xff]
        %v2893 = vld [vmem:[%s2889 + $0x18] sm:$0x1]
        %v2895 = vsel %vm445, %v2865, 0
        %v2898 = vsel %vm445, %v2866, 0
        %v2901 = vsel %vm445, %v2867, 0
        %v2904 = vsel %vm445, %v2868, 0
        %v2907 = vsel %vm445, %v2869, 0
        %v2910 = vsel %vm445, %v2870, 0
        %v2913 = vsel %vm445, %v2871, 0
        %v2916 = vsel %vm445, %v2872, 0
        %v2919 = vsel %vm445, %v2873, 0
        %v2922 = vsel %vm445, %v2874, 0
        %v2925 = vsel %vm445, %v2875, 0
        %v2928 = vsel %vm445, %v2876, 0
        %v2931 = vsel %vm445, %v2877, 0
        %v2934 = vsel %vm445, %v2878, 0
        %v2937 = vsel %vm445, %v2879, 0
        %v2940 = vsel %vm445, %v2880, 0
        %v2943 = vsel %vm445, %v2881, 0
        %v2946 = vsel %vm445, %v2882, 0
        %v2949 = vsel %vm445, %v2883, 0
        %v2952 = vsel %vm445, %v2884, 0
        %v2955 = vsel %vm445, %v2885, 0
        %v2958 = vsel %vm445, %v2886, 0
        %v2961 = vsel %vm445, %v2887, 0
        %v2964 = vsel %vm445, %v2888, 0
        %v2967 = vsel %vm581, %v2893, 0
        %2969 = vmatprep.subr.mxu0 0.0
        %2970 = vmatpush1.msra.mxu0 %v2890
        %2971 = vmatprep.subr.mxu0 0.0
        %2972 = vmatpush1.msra.mxu0 %v2891
        %2973 = vmatprep.subr.mxu0 0.0
        %2974 = vmatpush1.msra.mxu0 %v2892
        %2975 = vmatprep.subr.mxu0 0.0
        %2976 = vmatpush1.msra.mxu0 %v2967
        %2977 = vmatprep.subr.mxu0 0.0
        %2978 = vmatpush1.msra.mxu0 0.0
        %2979 = vmatprep.subr.mxu0 0.0
        %2980 = vmatpush1.msra.mxu0 0.0
        %2981 = vmatprep.subr.mxu0 0.0
        %2982 = vmatpush1.msra.mxu0 0.0
        %2983 = vmatprep.subr.mxu0 0.0
        %2984 = vmatpush1.msra.mxu0 0.0
        %2985 = vmatprep.subr.mxu0 0.0
        %2986 = vmatpush1.msra.mxu0 0.0
        %2987 = vmatprep.subr.mxu0 0.0
        %2988 = vmatpush1.msra.mxu0 0.0
        %2989 = vmatprep.subr.mxu0 0.0
        %2990 = vmatpush1.msra.mxu0 0.0
        %2991 = vmatprep.subr.mxu0 0.0
        %2992 = vmatpush1.msra.mxu0 0.0
        %2993 = vmatprep.subr.mxu0 0.0
        %2994 = vmatpush1.msra.mxu0 0.0
        %2995 = vmatprep.subr.mxu0 0.0
        %2996 = vmatpush1.msra.mxu0 0.0
        %2997 = vmatprep.subr.mxu0 0.0
        %2998 = vmatpush1.msra.mxu0 0.0
        %2999 = vmatprep.subr.mxu0 0.0
        %3000 = vmatpush1.msra.mxu0 0.0
        %3001 = vmatprep.subr.mxu0 0.0
        %3002 = vmatpush1.msra.mxu0 0.0
        %3003 = vmatprep.subr.mxu0 0.0
        %3004 = vmatpush1.msra.mxu0 0.0
        %3005 = vmatprep.subr.mxu0 0.0
        %3006 = vmatpush1.msra.mxu0 0.0
        %3007 = vmatprep.subr.mxu0 0.0
        %3008 = vmatpush1.msra.mxu0 0.0
        %3009 = vmatprep.subr.mxu0 0.0
        %3010 = vmatpush1.msra.mxu0 0.0
        %3011 = vmatprep.subr.mxu0 0.0
        %3012 = vmatpush1.msra.mxu0 0.0
        %3013 = vmatprep.subr.mxu0 0.0
        %3014 = vmatpush1.msra.mxu0 0.0
        %3015 = vmatprep.subr.mxu0 0.0
        %3016 = vmatpush1.msra.mxu0 0.0
        %3017 = vmatprep.subr.mxu0 0.0
        %3018 = vmatpush1.msra.mxu0 0.0
        %3019 = vmatprep.subr.mxu0 0.0
        %3020 = vmatpush1.msra.mxu0 0.0
        %3021 = vmatprep.subr.mxu0 0.0
        %3022 = vmatpush1.msra.mxu0 0.0
        %3023 = vmatprep.subr.mxu0 0.0
        %3024 = vmatpush1.msra.mxu0 0.0
        %3025 = vmatprep.subr.mxu0 0.0
        %3026 = vmatpush1.msra.mxu0 0.0
        %3027 = vmatprep.subr.mxu0 0.0
        %3028 = vmatpush1.msra.mxu0 0.0
        %3029 = vmatprep.subr.mxu0 0.0
        %3030 = vmatpush1.msra.mxu0 0.0
        %3031 = vmatprep.subr.mxu0 0.0
        %3032 = vmatpush1.msra.mxu0 0.0
        %3033 = vmatprep.mubr.f32.mxu0 0.0
        %3034 = vmatmul.mubr.f32.gmra.mrb[0].mxu0 %v2895
        %v3035 = vpop.f32.mrb[0].mxu0
        %v3036 = vadd.f32 0.0, %v3035
        %v3037 = vpop.f32.mrb[0].mxu0
        %3038 = vmatprep.mubr.f32.mxu0 0.0
        %3039 = vmatmul.mubr.f32.gmra.mrb[0].mxu0 %v2898
        %v3040 = vpop.f32.mrb[0].mxu0
        %v3041 = vadd.f32 0.0, %v3040
        %v3042 = vpop.f32.mrb[0].mxu0
        %3043 = vmatprep.mubr.f32.mxu0 0.0
        %3044 = vmatmul.mubr.f32.gmra.mrb[0].mxu0 %v2901
        %v3045 = vpop.f32.mrb[0].mxu0
        %v3046 = vadd.f32 0.0, %v3045
        %v3047 = vpop.f32.mrb[0].mxu0
        %3048 = vmatprep.mubr.f32.mxu0 0.0
        %3049 = vmatmul.mubr.f32.gmra.mrb[0].mxu0 %v2904
        %v3050 = vpop.f32.mrb[0].mxu0
        %v3051 = vadd.f32 0.0, %v3050
        %v3052 = vpop.f32.mrb[0].mxu0
        %3053 = vmatprep.mubr.f32.mxu0 0.0
        %3054 = vmatmul.mubr.f32.gmra.mrb[0].mxu0 %v2907
        %v3055 = vpop.f32.mrb[0].mxu0
        %v3056 = vadd.f32 0.0, %v3055
        %v3057 = vpop.f32.mrb[0].mxu0
        %3058 = vmatprep.mubr.f32.mxu0 0.0
        %3059 = vmatmul.mubr.f32.gmra.mrb[0].mxu0 %v2910
        %v3060 = vpop.f32.mrb[0].mxu0
        %v3061 = vadd.f32 0.0, %v3060
        %v3062 = vpop.f32.mrb[0].mxu0
        %3063 = vmatprep.mubr.f32.mxu0 0.0
        %3064 = vmatmul.mubr.f32.gmra.mrb[0].mxu0 %v2913
        %v3065 = vpop.f32.mrb[0].mxu0
        %v3066 = vadd.f32 0.0, %v3065
        %v3067 = vpop.f32.mrb[0].mxu0
        %3068 = vmatprep.mubr.f32.mxu0 0.0
        %3069 = vmatmul.mubr.f32.gmra.mrb[0].mxu0 %v2916
        %v3070 = vpop.f32.mrb[0].mxu0
        %v3071 = vadd.f32 0.0, %v3070
        %v3072 = vpop.f32.mrb[0].mxu0
        %3073 = vmatprep.mubr.f32.mxu0 0.0
        %3074 = vmatmul.mubr.f32.gmra.mrb[0].mxu0 %v2919
        %v3075 = vpop.f32.mrb[0].mxu0
        %v3076 = vadd.f32 0.0, %v3075
        %v3077 = vpop.f32.mrb[0].mxu0
        %3078 = vmatprep.mubr.f32.mxu0 0.0
        %3079 = vmatmul.mubr.f32.gmra.mrb[0].mxu0 %v2922
        %v3080 = vpop.f32.mrb[0].mxu0
        %v3081 = vadd.f32 0.0, %v3080
        %v3082 = vpop.f32.mrb[0].mxu0
        %3083 = vmatprep.mubr.f32.mxu0 0.0
        %3084 = vmatmul.mubr.f32.gmra.mrb[0].mxu0 %v2925
        %v3085 = vpop.f32.mrb[0].mxu0
        %v3086 = vadd.f32 0.0, %v3085
        %v3087 = vpop.f32.mrb[0].mxu0
        %3088 = vmatprep.mubr.f32.mxu0 0.0
        %3089 = vmatmul.mubr.f32.gmra.mrb[0].mxu0 %v2928
        %v3090 = vpop.f32.mrb[0].mxu0
        %v3091 = vadd.f32 0.0, %v3090
        %v3092 = vpop.f32.mrb[0].mxu0
        %3093 = vmatprep.mubr.f32.mxu0 0.0
        %3094 = vmatmul.mubr.f32.gmra.mrb[0].mxu0 %v2931
        %v3095 = vpop.f32.mrb[0].mxu0
        %v3096 = vadd.f32 0.0, %v3095
        %v3097 = vpop.f32.mrb[0].mxu0
        %3098 = vmatprep.mubr.f32.mxu0 0.0
        %3099 = vmatmul.mubr.f32.gmra.mrb[0].mxu0 %v2934
        %v3100 = vpop.f32.mrb[0].mxu0
        %v3101 = vadd.f32 0.0, %v3100
        %v3102 = vpop.f32.mrb[0].mxu0
        %3103 = vmatprep.mubr.f32.mxu0 0.0
        %3104 = vmatmul.mubr.f32.gmra.mrb[0].mxu0 %v2937
        %v3105 = vpop.f32.mrb[0].mxu0
        %v3106 = vadd.f32 0.0, %v3105
        %v3107 = vpop.f32.mrb[0].mxu0
        %3108 = vmatprep.mubr.f32.mxu0 0.0
        %3109 = vmatmul.mubr.f32.gmra.mrb[0].mxu0 %v2940
        %v3110 = vpop.f32.mrb[0].mxu0
        %v3111 = vadd.f32 0.0, %v3110
        %v3112 = vpop.f32.mrb[0].mxu0
        %3113 = vmatprep.mubr.f32.mxu0 0.0
        %3114 = vmatmul.mubr.f32.gmra.mrb[0].mxu0 %v2943
        %v3115 = vpop.f32.mrb[0].mxu0
        %v3116 = vadd.f32 0.0, %v3115
        %v3117 = vpop.f32.mrb[0].mxu0
        %3118 = vmatprep.mubr.f32.mxu0 0.0
        %3119 = vmatmul.mubr.f32.gmra.mrb[0].mxu0 %v2946
        %v3120 = vpop.f32.mrb[0].mxu0
        %v3121 = vadd.f32 0.0, %v3120
        %v3122 = vpop.f32.mrb[0].mxu0
        %3123 = vmatprep.mubr.f32.mxu0 0.0
        %3124 = vmatmul.mubr.f32.gmra.mrb[0].mxu0 %v2949
        %v3125 = vpop.f32.mrb[0].mxu0
        %v3126 = vadd.f32 0.0, %v3125
        %v3127 = vpop.f32.mrb[0].mxu0
        %3128 = vmatprep.mubr.f32.mxu0 0.0
        %3129 = vmatmul.mubr.f32.gmra.mrb[0].mxu0 %v2952
        %v3130 = vpop.f32.mrb[0].mxu0
        %v3131 = vadd.f32 0.0, %v3130
        %v3132 = vpop.f32.mrb[0].mxu0
        %3133 = vmatprep.mubr.f32.mxu0 0.0
        %3134 = vmatmul.mubr.f32.gmra.mrb[0].mxu0 %v2955
        %v3135 = vpop.f32.mrb[0].mxu0
        %v3136 = vadd.f32 0.0, %v3135
        %v3137 = vpop.f32.mrb[0].mxu0
        %3138 = vmatprep.mubr.f32.mxu0 0.0
        %3139 = vmatmul.mubr.f32.gmra.mrb[0].mxu0 %v2958
        %v3140 = vpop.f32.mrb[0].mxu0
        %v3141 = vadd.f32 0.0, %v3140
        %v3142 = vpop.f32.mrb[0].mxu0
        %3143 = vmatprep.mubr.f32.mxu0 0.0
        %3144 = vmatmul.mubr.f32.gmra.mrb[0].mxu0 %v2961
        %v3145 = vpop.f32.mrb[0].mxu0
        %v3146 = vadd.f32 0.0, %v3145
        %v3147 = vpop.f32.mrb[0].mxu0
        %3148 = vmatprep.mubr.f32.mxu0 0.0
        %3149 = vmatmul.mubr.f32.gmra.mrb[0].mxu0 %v2964
        %v3150 = vpop.f32.mrb[0].mxu0
        %v3151 = vadd.f32 0.0, %v3150
        %v3152 = vpop.f32.mrb[0].mxu0
        %3153 = vdwg.mxu0
        %v3154 = vadd.f32 %v2672, %v3036
        %v3155 = vadd.f32 %v2673, %v3041
        %v3156 = vadd.f32 %v2674, %v3046
        %v3157 = vadd.f32 %v2675, %v3051
        %v3158 = vadd.f32 %v2676, %v3056
        %v3159 = vadd.f32 %v2677, %v3061
        %v3160 = vadd.f32 %v2678, %v3066
        %v3161 = vadd.f32 %v2679, %v3071
        %v3162 = vadd.f32 %v2680, %v3076
        %v3163 = vadd.f32 %v2681, %v3081
        %v3164 = vadd.f32 %v2682, %v3086
        %v3165 = vadd.f32 %v2683, %v3091
        %v3166 = vadd.f32 %v2684, %v3096
        %v3167 = vadd.f32 %v2685, %v3101
        %v3168 = vadd.f32 %v2686, %v3106
        %v3169 = vadd.f32 %v2687, %v3111
        %v3170 = vadd.f32 %v2688, %v3116
        %v3171 = vadd.f32 %v2689, %v3121
        %v3172 = vadd.f32 %v2690, %v3126
        %v3173 = vadd.f32 %v2691, %v3131
        %v3174 = vadd.f32 %v2692, %v3136
        %v3175 = vadd.f32 %v2693, %v3141
        %v3176 = vadd.f32 %v2694, %v3146
        %v3177 = vadd.f32 %v2695, %v3151
        %v3178 = vld [vmem:[#allocation2 + $0x11] sm:$0xff]
        %v3179 = vld [vmem:[#allocation2 + $0x19] sm:$0xff]
        %v3180 = vld [vmem:[#allocation2 + $0x21] sm:$0xff]
        %v3181 = vld [vmem:[#allocation2 + $0x29] sm:$0xff]
        %v3182 = vld [vmem:[#allocation2 + $0x31] sm:$0xff]
        %v3183 = vld [vmem:[#allocation2 + $0x39] sm:$0xff]
        %v3184 = vld [vmem:[#allocation2 + $0x41] sm:$0xff]
        %v3185 = vld [vmem:[#allocation2 + $0x49] sm:$0xff]
        %v3186 = vld [vmem:[#allocation2 + $0x51] sm:$0xff]
        %v3187 = vld [vmem:[#allocation2 + $0x59] sm:$0xff]
        %v3188 = vld [vmem:[#allocation2 + $0x61] sm:$0xff]
        %v3189 = vld [vmem:[#allocation2 + $0x69] sm:$0xff]
        %v3190 = vld [vmem:[#allocation2 + $0x71] sm:$0xff]
        %v3191 = vld [vmem:[#allocation2 + $0x79] sm:$0xff]
        %v3192 = vld [vmem:[#allocation2 + $0x81] sm:$0xff]
        %v3193 = vld [vmem:[#allocation2 + $0x89] sm:$0xff]
        %v3194 = vld [vmem:[#allocation2 + $0x91] sm:$0xff]
        %v3195 = vld [vmem:[#allocation2 + $0x99] sm:$0xff]
        %v3196 = vld [vmem:[#allocation2 + $0xa1] sm:$0xff]
        %v3197 = vld [vmem:[#allocation2 + $0xa9] sm:$0xff]
        %v3198 = vld [vmem:[#allocation2 + $0xb1] sm:$0xff]
        %v3199 = vld [vmem:[#allocation2 + $0xb9] sm:$0xff]
        %v3200 = vld [vmem:[#allocation2 + $0xc1] sm:$0xff]
        %v3201 = vld [vmem:[#allocation2 + $0xc9] sm:$0xff]
        %s3202 = scalar_lea.vmem %s0, 960
        %v3203 = vld [vmem:[%s3202] sm:$0xff]
        %v3204 = vld [vmem:[%s3202 + $0x8] sm:$0xff]
        %v3205 = vld [vmem:[%s3202 + $0x10] sm:$0xff]
        %v3206 = vld [vmem:[%s3202 + $0x18] sm:$0xff]
        %v3207 = vld [vmem:[%s3202 + $0x20] sm:$0xff]
        %v3208 = vld [vmem:[%s3202 + $0x28] sm:$0xff]
        %v3209 = vld [vmem:[%s3202 + $0x30] sm:$0xff]
        %v3210 = vld [vmem:[%s3202 + $0x38] sm:$0xff]
        %v3211 = vld [vmem:[%s3202 + $0x40] sm:$0xff]
        %v3212 = vld [vmem:[%s3202 + $0x48] sm:$0xff]
        %v3213 = vld [vmem:[%s3202 + $0x50] sm:$0xff]
        %v3214 = vld [vmem:[%s3202 + $0x58] sm:$0xff]
        %v3215 = vld [vmem:[%s3202 + $0x60] sm:$0xff]
        %v3216 = vld [vmem:[%s3202 + $0x68] sm:$0xff]
        %v3217 = vld [vmem:[%s3202 + $0x70] sm:$0xff]
        %v3218 = vld [vmem:[%s3202 + $0x78] sm:$0xff]
        %v3219 = vld [vmem:[%s3202 + $0x80] sm:$0xff]
        %v3220 = vld [vmem:[%s3202 + $0x88] sm:$0xff]
        %v3221 = vld [vmem:[%s3202 + $0x90] sm:$0xff]
        %v3222 = vld [vmem:[%s3202 + $0x98] sm:$0xff]
        %v3223 = vld [vmem:[%s3202 + $0xa0] sm:$0xff]
        %v3224 = vld [vmem:[%s3202 + $0xa8] sm:$0xff]
        %v3225 = vld [vmem:[%s3202 + $0xb0] sm:$0xff]
        %v3226 = vld [vmem:[%s3202 + $0xb8] sm:$0xff]
        %3228 = vset.pattern.permute.xlu0 0
        %3229 = vperm.xlu0 %3228, %v3203
        %v3230 = vpop.permute.xlu0 %3229
        %3233 = vset.pattern.permute.xlu0 0
        %3234 = vperm.xlu0 %3233, %v3204
        %v3235 = vpop.permute.xlu0 %3234
        %3238 = vset.pattern.permute.xlu0 0
        %3239 = vperm.xlu0 %3238, %v3205
        %v3240 = vpop.permute.xlu0 %3239
        %3243 = vset.pattern.permute.xlu0 0
        %3244 = vperm.xlu0 %3243, %v3206
        %v3245 = vpop.permute.xlu0 %3244
        %3248 = vset.pattern.permute.xlu0 0
        %3249 = vperm.xlu0 %3248, %v3207
        %v3250 = vpop.permute.xlu0 %3249
        %3253 = vset.pattern.permute.xlu0 0
        %3254 = vperm.xlu0 %3253, %v3208
        %v3255 = vpop.permute.xlu0 %3254
        %3258 = vset.pattern.permute.xlu0 0
        %3259 = vperm.xlu0 %3258, %v3209
        %v3260 = vpop.permute.xlu0 %3259
        %3263 = vset.pattern.permute.xlu0 0
        %3264 = vperm.xlu0 %3263, %v3210
        %v3265 = vpop.permute.xlu0 %3264
        %3268 = vset.pattern.permute.xlu0 0
        %3269 = vperm.xlu0 %3268, %v3211
        %v3270 = vpop.permute.xlu0 %3269
        %3273 = vset.pattern.permute.xlu0 0
        %3274 = vperm.xlu0 %3273, %v3212
        %v3275 = vpop.permute.xlu0 %3274
        %3278 = vset.pattern.permute.xlu0 0
        %3279 = vperm.xlu0 %3278, %v3213
        %v3280 = vpop.permute.xlu0 %3279
        %3283 = vset.pattern.permute.xlu0 0
        %3284 = vperm.xlu0 %3283, %v3214
        %v3285 = vpop.permute.xlu0 %3284
        %3288 = vset.pattern.permute.xlu0 0
        %3289 = vperm.xlu0 %3288, %v3215
        %v3290 = vpop.permute.xlu0 %3289
        %3293 = vset.pattern.permute.xlu0 0
        %3294 = vperm.xlu0 %3293, %v3216
        %v3295 = vpop.permute.xlu0 %3294
        %3298 = vset.pattern.permute.xlu0 0
        %3299 = vperm.xlu0 %3298, %v3217
        %v3300 = vpop.permute.xlu0 %3299
        %3303 = vset.pattern.permute.xlu0 0
        %3304 = vperm.xlu0 %3303, %v3218
        %v3305 = vpop.permute.xlu0 %3304
        %3308 = vset.pattern.permute.xlu0 0
        %3309 = vperm.xlu0 %3308, %v3219
        %v3310 = vpop.permute.xlu0 %3309
        %3313 = vset.pattern.permute.xlu0 0
        %3314 = vperm.xlu0 %3313, %v3220
        %v3315 = vpop.permute.xlu0 %3314
        %3318 = vset.pattern.permute.xlu0 0
        %3319 = vperm.xlu0 %3318, %v3221
        %v3320 = vpop.permute.xlu0 %3319
        %3323 = vset.pattern.permute.xlu0 0
        %3324 = vperm.xlu0 %3323, %v3222
        %v3325 = vpop.permute.xlu0 %3324
        %3328 = vset.pattern.permute.xlu0 0
        %3329 = vperm.xlu0 %3328, %v3223
        %v3330 = vpop.permute.xlu0 %3329
        %3333 = vset.pattern.permute.xlu0 0
        %3334 = vperm.xlu0 %3333, %v3224
        %v3335 = vpop.permute.xlu0 %3334
        %3338 = vset.pattern.permute.xlu0 0
        %3339 = vperm.xlu0 %3338, %v3225
        %v3340 = vpop.permute.xlu0 %3339
        %3343 = vset.pattern.permute.xlu0 0
        %3344 = vperm.xlu0 %3343, %v3226
        %v3345 = vpop.permute.xlu0 %3344
        %v3347 = vmul.f32 %v3178, %v3230
        %v3348 = vmul.f32 %v3179, %v3235
        %v3349 = vmul.f32 %v3180, %v3240
        %v3350 = vmul.f32 %v3181, %v3245
        %v3351 = vmul.f32 %v3182, %v3250
        %v3352 = vmul.f32 %v3183, %v3255
        %v3353 = vmul.f32 %v3184, %v3260
        %v3354 = vmul.f32 %v3185, %v3265
        %v3355 = vmul.f32 %v3186, %v3270
        %v3356 = vmul.f32 %v3187, %v3275
        %v3357 = vmul.f32 %v3188, %v3280
        %v3358 = vmul.f32 %v3189, %v3285
        %v3359 = vmul.f32 %v3190, %v3290
        %v3360 = vmul.f32 %v3191, %v3295
        %v3361 = vmul.f32 %v3192, %v3300
        %v3362 = vmul.f32 %v3193, %v3305
        %v3363 = vmul.f32 %v3194, %v3310
        %v3364 = vmul.f32 %v3195, %v3315
        %v3365 = vmul.f32 %v3196, %v3320
        %v3366 = vmul.f32 %v3197, %v3325
        %v3367 = vmul.f32 %v3198, %v3330
        %v3368 = vmul.f32 %v3199, %v3335
        %v3369 = vmul.f32 %v3200, %v3340
        %v3370 = vmul.f32 %v3201, %v3345
        %s3371 = scalar_lea.vmem %s434, 160
        %v3372 = vld [vmem:[%s3371] sm:$0xff]
        %v3373 = vld [vmem:[%s3371 + $0x8] sm:$0xff]
        %v3374 = vld [vmem:[%s3371 + $0x10] sm:$0xff]
        %v3375 = vld [vmem:[%s3371 + $0x18] sm:$0x1]
        %v3377 = vsel %vm445, %v3347, 0
        %v3380 = vsel %vm445, %v3348, 0
        %v3383 = vsel %vm445, %v3349, 0
        %v3386 = vsel %vm445, %v3350, 0
        %v3389 = vsel %vm445, %v3351, 0
        %v3392 = vsel %vm445, %v3352, 0
        %v3395 = vsel %vm445, %v3353, 0
        %v3398 = vsel %vm445, %v3354, 0
        %v3401 = vsel %vm445, %v3355, 0
        %v3404 = vsel %vm445, %v3356, 0
        %v3407 = vsel %vm445, %v3357, 0
        %v3410 = vsel %vm445, %v3358, 0
        %v3413 = vsel %vm445, %v3359, 0
        %v3416 = vsel %vm445, %v3360, 0
        %v3419 = vsel %vm445, %v3361, 0
        %v3422 = vsel %vm445, %v3362, 0
        %v3425 = vsel %vm445, %v3363, 0
        %v3428 = vsel %vm445, %v3364, 0
        %v3431 = vsel %vm445, %v3365, 0
        %v3434 = vsel %vm445, %v3366, 0
        %v3437 = vsel %vm445, %v3367, 0
        %v3440 = vsel %vm445, %v3368, 0
        %v3443 = vsel %vm445, %v3369, 0
        %v3446 = vsel %vm445, %v3370, 0
        %v3449 = vsel %vm581, %v3375, 0
        %3451 = vmatprep.subr.mxu0 0.0
        %3452 = vmatpush1.msra.mxu0 %v3372
        %3453 = vmatprep.subr.mxu0 0.0
        %3454 = vmatpush1.msra.mxu0 %v3373
        %3455 = vmatprep.subr.mxu0 0.0
        %3456 = vmatpush1.msra.mxu0 %v3374
        %3457 = vmatprep.subr.mxu0 0.0
        %3458 = vmatpush1.msra.mxu0 %v3449
        %3459 = vmatprep.subr.mxu0 0.0
        %3460 = vmatpush1.msra.mxu0 0.0
        %3461 = vmatprep.subr.mxu0 0.0
        %3462 = vmatpush1.msra.mxu0 0.0
        %3463 = vmatprep.subr.mxu0 0.0
        %3464 = vmatpush1.msra.mxu0 0.0
        %3465 = vmatprep.subr.mxu0 0.0
        %3466 = vmatpush1.msra.mxu0 0.0
        %3467 = vmatprep.subr.mxu0 0.0
        %3468 = vmatpush1.msra.mxu0 0.0
        %3469 = vmatprep.subr.mxu0 0.0
        %3470 = vmatpush1.msra.mxu0 0.0
        %3471 = vmatprep.subr.mxu0 0.0
        %3472 = vmatpush1.msra.mxu0 0.0
        %3473 = vmatprep.subr.mxu0 0.0
        %3474 = vmatpush1.msra.mxu0 0.0
        %3475 = vmatprep.subr.mxu0 0.0
        %3476 = vmatpush1.msra.mxu0 0.0
        %3477 = vmatprep.subr.mxu0 0.0
        %3478 = vmatpush1.msra.mxu0 0.0
        %3479 = vmatprep.subr.mxu0 0.0
        %3480 = vmatpush1.msra.mxu0 0.0
        %3481 = vmatprep.subr.mxu0 0.0
        %3482 = vmatpush1.msra.mxu0 0.0
        %3483 = vmatprep.subr.mxu0 0.0
        %3484 = vmatpush1.msra.mxu0 0.0
        %3485 = vmatprep.subr.mxu0 0.0
        %3486 = vmatpush1.msra.mxu0 0.0
        %3487 = vmatprep.subr.mxu0 0.0
        %3488 = vmatpush1.msra.mxu0 0.0
        %3489 = vmatprep.subr.mxu0 0.0
        %3490 = vmatpush1.msra.mxu0 0.0
        %3491 = vmatprep.subr.mxu0 0.0
        %3492 = vmatpush1.msra.mxu0 0.0
        %3493 = vmatprep.subr.mxu0 0.0
        %3494 = vmatpush1.msra.mxu0 0.0
        %3495 = vmatprep.subr.mxu0 0.0
        %3496 = vmatpush1.msra.mxu0 0.0
        %3497 = vmatprep.subr.mxu0 0.0
        %3498 = vmatpush1.msra.mxu0 0.0
        %3499 = vmatprep.subr.mxu0 0.0
        %3500 = vmatpush1.msra.mxu0 0.0
        %3501 = vmatprep.subr.mxu0 0.0
        %3502 = vmatpush1.msra.mxu0 0.0
        %3503 = vmatprep.subr.mxu0 0.0
        %3504 = vmatpush1.msra.mxu0 0.0
        %3505 = vmatprep.subr.mxu0 0.0
        %3506 = vmatpush1.msra.mxu0 0.0
        %3507 = vmatprep.subr.mxu0 0.0
        %3508 = vmatpush1.msra.mxu0 0.0
        %3509 = vmatprep.subr.mxu0 0.0
        %3510 = vmatpush1.msra.mxu0 0.0
        %3511 = vmatprep.subr.mxu0 0.0
        %3512 = vmatpush1.msra.mxu0 0.0
        %3513 = vmatprep.subr.mxu0 0.0
        %3514 = vmatpush1.msra.mxu0 0.0
        %3515 = vmatprep.mubr.f32.mxu0 0.0
        %3516 = vmatmul.mubr.f32.gmra.mrb[0].mxu0 %v3377
        %v3517 = vpop.f32.mrb[0].mxu0
        %v3518 = vadd.f32 0.0, %v3517
        %v3519 = vpop.f32.mrb[0].mxu0
        %3520 = vmatprep.mubr.f32.mxu0 0.0
        %3521 = vmatmul.mubr.f32.gmra.mrb[0].mxu0 %v3380
        %v3522 = vpop.f32.mrb[0].mxu0
        %v3523 = vadd.f32 0.0, %v3522
        %v3524 = vpop.f32.mrb[0].mxu0
        %3525 = vmatprep.mubr.f32.mxu0 0.0
        %3526 = vmatmul.mubr.f32.gmra.mrb[0].mxu0 %v3383
        %v3527 = vpop.f32.mrb[0].mxu0
        %v3528 = vadd.f32 0.0, %v3527
        %v3529 = vpop.f32.mrb[0].mxu0
        %3530 = vmatprep.mubr.f32.mxu0 0.0
        %3531 = vmatmul.mubr.f32.gmra.mrb[0].mxu0 %v3386
        %v3532 = vpop.f32.mrb[0].mxu0
        %v3533 = vadd.f32 0.0, %v3532
        %v3534 = vpop.f32.mrb[0].mxu0
        %3535 = vmatprep.mubr.f32.mxu0 0.0
        %3536 = vmatmul.mubr.f32.gmra.mrb[0].mxu0 %v3389
        %v3537 = vpop.f32.mrb[0].mxu0
        %v3538 = vadd.f32 0.0, %v3537
        %v3539 = vpop.f32.mrb[0].mxu0
        %3540 = vmatprep.mubr.f32.mxu0 0.0
        %3541 = vmatmul.mubr.f32.gmra.mrb[0].mxu0 %v3392
        %v3542 = vpop.f32.mrb[0].mxu0
        %v3543 = vadd.f32 0.0, %v3542
        %v3544 = vpop.f32.mrb[0].mxu0
        %3545 = vmatprep.mubr.f32.mxu0 0.0
        %3546 = vmatmul.mubr.f32.gmra.mrb[0].mxu0 %v3395
        %v3547 = vpop.f32.mrb[0].mxu0
        %v3548 = vadd.f32 0.0, %v3547
        %v3549 = vpop.f32.mrb[0].mxu0
        %3550 = vmatprep.mubr.f32.mxu0 0.0
        %3551 = vmatmul.mubr.f32.gmra.mrb[0].mxu0 %v3398
        %v3552 = vpop.f32.mrb[0].mxu0
        %v3553 = vadd.f32 0.0, %v3552
        %v3554 = vpop.f32.mrb[0].mxu0
        %3555 = vmatprep.mubr.f32.mxu0 0.0
        %3556 = vmatmul.mubr.f32.gmra.mrb[0].mxu0 %v3401
        %v3557 = vpop.f32.mrb[0].mxu0
        %v3558 = vadd.f32 0.0, %v3557
        %v3559 = vpop.f32.mrb[0].mxu0
        %3560 = vmatprep.mubr.f32.mxu0 0.0
        %3561 = vmatmul.mubr.f32.gmra.mrb[0].mxu0 %v3404
        %v3562 = vpop.f32.mrb[0].mxu0
        %v3563 = vadd.f32 0.0, %v3562
        %v3564 = vpop.f32.mrb[0].mxu0
        %3565 = vmatprep.mubr.f32.mxu0 0.0
        %3566 = vmatmul.mubr.f32.gmra.mrb[0].mxu0 %v3407
        %v3567 = vpop.f32.mrb[0].mxu0
        %v3568 = vadd.f32 0.0, %v3567
        %v3569 = vpop.f32.mrb[0].mxu0
        %3570 = vmatprep.mubr.f32.mxu0 0.0
        %3571 = vmatmul.mubr.f32.gmra.mrb[0].mxu0 %v3410
        %v3572 = vpop.f32.mrb[0].mxu0
        %v3573 = vadd.f32 0.0, %v3572
        %v3574 = vpop.f32.mrb[0].mxu0
        %3575 = vmatprep.mubr.f32.mxu0 0.0
        %3576 = vmatmul.mubr.f32.gmra.mrb[0].mxu0 %v3413
        %v3577 = vpop.f32.mrb[0].mxu0
        %v3578 = vadd.f32 0.0, %v3577
        %v3579 = vpop.f32.mrb[0].mxu0
        %3580 = vmatprep.mubr.f32.mxu0 0.0
        %3581 = vmatmul.mubr.f32.gmra.mrb[0].mxu0 %v3416
        %v3582 = vpop.f32.mrb[0].mxu0
        %v3583 = vadd.f32 0.0, %v3582
        %v3584 = vpop.f32.mrb[0].mxu0
        %3585 = vmatprep.mubr.f32.mxu0 0.0
        %3586 = vmatmul.mubr.f32.gmra.mrb[0].mxu0 %v3419
        %v3587 = vpop.f32.mrb[0].mxu0
        %v3588 = vadd.f32 0.0, %v3587
        %v3589 = vpop.f32.mrb[0].mxu0
        %3590 = vmatprep.mubr.f32.mxu0 0.0
        %3591 = vmatmul.mubr.f32.gmra.mrb[0].mxu0 %v3422
        %v3592 = vpop.f32.mrb[0].mxu0
        %v3593 = vadd.f32 0.0, %v3592
        %v3594 = vpop.f32.mrb[0].mxu0
        %3595 = vmatprep.mubr.f32.mxu0 0.0
        %3596 = vmatmul.mubr.f32.gmra.mrb[0].mxu0 %v3425
        %v3597 = vpop.f32.mrb[0].mxu0
        %v3598 = vadd.f32 0.0, %v3597
        %v3599 = vpop.f32.mrb[0].mxu0
        %3600 = vmatprep.mubr.f32.mxu0 0.0
        %3601 = vmatmul.mubr.f32.gmra.mrb[0].mxu0 %v3428
        %v3602 = vpop.f32.mrb[0].mxu0
        %v3603 = vadd.f32 0.0, %v3602
        %v3604 = vpop.f32.mrb[0].mxu0
        %3605 = vmatprep.mubr.f32.mxu0 0.0
        %3606 = vmatmul.mubr.f32.gmra.mrb[0].mxu0 %v3431
        %v3607 = vpop.f32.mrb[0].mxu0
        %v3608 = vadd.f32 0.0, %v3607
        %v3609 = vpop.f32.mrb[0].mxu0
        %3610 = vmatprep.mubr.f32.mxu0 0.0
        %3611 = vmatmul.mubr.f32.gmra.mrb[0].mxu0 %v3434
        %v3612 = vpop.f32.mrb[0].mxu0
        %v3613 = vadd.f32 0.0, %v3612
        %v3614 = vpop.f32.mrb[0].mxu0
        %3615 = vmatprep.mubr.f32.mxu0 0.0
        %3616 = vmatmul.mubr.f32.gmra.mrb[0].mxu0 %v3437
        %v3617 = vpop.f32.mrb[0].mxu0
        %v3618 = vadd.f32 0.0, %v3617
        %v3619 = vpop.f32.mrb[0].mxu0
        %3620 = vmatprep.mubr.f32.mxu0 0.0
        %3621 = vmatmul.mubr.f32.gmra.mrb[0].mxu0 %v3440
        %v3622 = vpop.f32.mrb[0].mxu0
        %v3623 = vadd.f32 0.0, %v3622
        %v3624 = vpop.f32.mrb[0].mxu0
        %3625 = vmatprep.mubr.f32.mxu0 0.0
        %3626 = vmatmul.mubr.f32.gmra.mrb[0].mxu0 %v3443
        %v3627 = vpop.f32.mrb[0].mxu0
        %v3628 = vadd.f32 0.0, %v3627
        %v3629 = vpop.f32.mrb[0].mxu0
        %3630 = vmatprep.mubr.f32.mxu0 0.0
        %3631 = vmatmul.mubr.f32.gmra.mrb[0].mxu0 %v3446
        %v3632 = vpop.f32.mrb[0].mxu0
        %v3633 = vadd.f32 0.0, %v3632
        %v3634 = vpop.f32.mrb[0].mxu0
        %3635 = vdwg.mxu0
        %v3636 = vadd.f32 %v3154, %v3518
        %v3637 = vadd.f32 %v3155, %v3523
        %v3638 = vadd.f32 %v3156, %v3528
        %v3639 = vadd.f32 %v3157, %v3533
        %v3640 = vadd.f32 %v3158, %v3538
        %v3641 = vadd.f32 %v3159, %v3543
        %v3642 = vadd.f32 %v3160, %v3548
        %v3643 = vadd.f32 %v3161, %v3553
        %v3644 = vadd.f32 %v3162, %v3558
        %v3645 = vadd.f32 %v3163, %v3563
        %v3646 = vadd.f32 %v3164, %v3568
        %v3647 = vadd.f32 %v3165, %v3573
        %v3648 = vadd.f32 %v3166, %v3578
        %v3649 = vadd.f32 %v3167, %v3583
        %v3650 = vadd.f32 %v3168, %v3588
        %v3651 = vadd.f32 %v3169, %v3593
        %v3652 = vadd.f32 %v3170, %v3598
        %v3653 = vadd.f32 %v3171, %v3603
        %v3654 = vadd.f32 %v3172, %v3608
        %v3655 = vadd.f32 %v3173, %v3613
        %v3656 = vadd.f32 %v3174, %v3618
        %v3657 = vadd.f32 %v3175, %v3623
        %v3658 = vadd.f32 %v3176, %v3628
        %v3659 = vadd.f32 %v3177, %v3633
        %v3660 = vld [vmem:[#allocation2 + $0x17] sm:$0xff]
        %v3661 = vld [vmem:[#allocation2 + $0x1f] sm:$0xff]
        %v3662 = vld [vmem:[#allocation2 + $0x27] sm:$0xff]
        %v3663 = vld [vmem:[#allocation2 + $0x2f] sm:$0xff]
        %v3664 = vld [vmem:[#allocation2 + $0x37] sm:$0xff]
        %v3665 = vld [vmem:[#allocation2 + $0x3f] sm:$0xff]
        %v3666 = vld [vmem:[#allocation2 + $0x47] sm:$0xff]
        %v3667 = vld [vmem:[#allocation2 + $0x4f] sm:$0xff]
        %v3668 = vld [vmem:[#allocation2 + $0x57] sm:$0xff]
        %v3669 = vld [vmem:[#allocation2 + $0x5f] sm:$0xff]
        %v3670 = vld [vmem:[#allocation2 + $0x67] sm:$0xff]
        %v3671 = vld [vmem:[#allocation2 + $0x6f] sm:$0xff]
        %v3672 = vld [vmem:[#allocation2 + $0x77] sm:$0xff]
        %v3673 = vld [vmem:[#allocation2 + $0x7f] sm:$0xff]
        %v3674 = vld [vmem:[#allocation2 + $0x87] sm:$0xff]
        %v3675 = vld [vmem:[#allocation2 + $0x8f] sm:$0xff]
        %v3676 = vld [vmem:[#allocation2 + $0x97] sm:$0xff]
        %v3677 = vld [vmem:[#allocation2 + $0x9f] sm:$0xff]
        %v3678 = vld [vmem:[#allocation2 + $0xa7] sm:$0xff]
        %v3679 = vld [vmem:[#allocation2 + $0xaf] sm:$0xff]
        %v3680 = vld [vmem:[#allocation2 + $0xb7] sm:$0xff]
        %v3681 = vld [vmem:[#allocation2 + $0xbf] sm:$0xff]
        %v3682 = vld [vmem:[#allocation2 + $0xc7] sm:$0xff]
        %v3683 = vld [vmem:[#allocation2 + $0xcf] sm:$0xff]
        %s3684 = scalar_lea.vmem %s0, 1152
        %v3685 = vld [vmem:[%s3684] sm:$0xff]
        %v3686 = vld [vmem:[%s3684 + $0x8] sm:$0xff]
        %v3687 = vld [vmem:[%s3684 + $0x10] sm:$0xff]
        %v3688 = vld [vmem:[%s3684 + $0x18] sm:$0xff]
        %v3689 = vld [vmem:[%s3684 + $0x20] sm:$0xff]
        %v3690 = vld [vmem:[%s3684 + $0x28] sm:$0xff]
        %v3691 = vld [vmem:[%s3684 + $0x30] sm:$0xff]
        %v3692 = vld [vmem:[%s3684 + $0x38] sm:$0xff]
        %v3693 = vld [vmem:[%s3684 + $0x40] sm:$0xff]
        %v3694 = vld [vmem:[%s3684 + $0x48] sm:$0xff]
        %v3695 = vld [vmem:[%s3684 + $0x50] sm:$0xff]
        %v3696 = vld [vmem:[%s3684 + $0x58] sm:$0xff]
        %v3697 = vld [vmem:[%s3684 + $0x60] sm:$0xff]
        %v3698 = vld [vmem:[%s3684 + $0x68] sm:$0xff]
        %v3699 = vld [vmem:[%s3684 + $0x70] sm:$0xff]
        %v3700 = vld [vmem:[%s3684 + $0x78] sm:$0xff]
        %v3701 = vld [vmem:[%s3684 + $0x80] sm:$0xff]
        %v3702 = vld [vmem:[%s3684 + $0x88] sm:$0xff]
        %v3703 = vld [vmem:[%s3684 + $0x90] sm:$0xff]
        %v3704 = vld [vmem:[%s3684 + $0x98] sm:$0xff]
        %v3705 = vld [vmem:[%s3684 + $0xa0] sm:$0xff]
        %v3706 = vld [vmem:[%s3684 + $0xa8] sm:$0xff]
        %v3707 = vld [vmem:[%s3684 + $0xb0] sm:$0xff]
        %v3708 = vld [vmem:[%s3684 + $0xb8] sm:$0xff]
        %3710 = vset.pattern.permute.xlu0 0
        %3711 = vperm.xlu0 %3710, %v3685
        %v3712 = vpop.permute.xlu0 %3711
        %3715 = vset.pattern.permute.xlu0 0
        %3716 = vperm.xlu0 %3715, %v3686
        %v3717 = vpop.permute.xlu0 %3716
        %3720 = vset.pattern.permute.xlu0 0
        %3721 = vperm.xlu0 %3720, %v3687
        %v3722 = vpop.permute.xlu0 %3721
        %3725 = vset.pattern.permute.xlu0 0
        %3726 = vperm.xlu0 %3725, %v3688
        %v3727 = vpop.permute.xlu0 %3726
        %3730 = vset.pattern.permute.xlu0 0
        %3731 = vperm.xlu0 %3730, %v3689
        %v3732 = vpop.permute.xlu0 %3731
        %3735 = vset.pattern.permute.xlu0 0
        %3736 = vperm.xlu0 %3735, %v3690
        %v3737 = vpop.permute.xlu0 %3736
        %3740 = vset.pattern.permute.xlu0 0
        %3741 = vperm.xlu0 %3740, %v3691
        %v3742 = vpop.permute.xlu0 %3741
        %3745 = vset.pattern.permute.xlu0 0
        %3746 = vperm.xlu0 %3745, %v3692
        %v3747 = vpop.permute.xlu0 %3746
        %3750 = vset.pattern.permute.xlu0 0
        %3751 = vperm.xlu0 %3750, %v3693
        %v3752 = vpop.permute.xlu0 %3751
        %3755 = vset.pattern.permute.xlu0 0
        %3756 = vperm.xlu0 %3755, %v3694
        %v3757 = vpop.permute.xlu0 %3756
        %3760 = vset.pattern.permute.xlu0 0
        %3761 = vperm.xlu0 %3760, %v3695
        %v3762 = vpop.permute.xlu0 %3761
        %3765 = vset.pattern.permute.xlu0 0
        %3766 = vperm.xlu0 %3765, %v3696
        %v3767 = vpop.permute.xlu0 %3766
        %3770 = vset.pattern.permute.xlu0 0
        %3771 = vperm.xlu0 %3770, %v3697
        %v3772 = vpop.permute.xlu0 %3771
        %3775 = vset.pattern.permute.xlu0 0
        %3776 = vperm.xlu0 %3775, %v3698
        %v3777 = vpop.permute.xlu0 %3776
        %3780 = vset.pattern.permute.xlu0 0
        %3781 = vperm.xlu0 %3780, %v3699
        %v3782 = vpop.permute.xlu0 %3781
        %3785 = vset.pattern.permute.xlu0 0
        %3786 = vperm.xlu0 %3785, %v3700
        %v3787 = vpop.permute.xlu0 %3786
        %3790 = vset.pattern.permute.xlu0 0
        %3791 = vperm.xlu0 %3790, %v3701
        %v3792 = vpop.permute.xlu0 %3791
        %3795 = vset.pattern.permute.xlu0 0
        %3796 = vperm.xlu0 %3795, %v3702
        %v3797 = vpop.permute.xlu0 %3796
        %3800 = vset.pattern.permute.xlu0 0
        %3801 = vperm.xlu0 %3800, %v3703
        %v3802 = vpop.permute.xlu0 %3801
        %3805 = vset.pattern.permute.xlu0 0
        %3806 = vperm.xlu0 %3805, %v3704
        %v3807 = vpop.permute.xlu0 %3806
        %3810 = vset.pattern.permute.xlu0 0
        %3811 = vperm.xlu0 %3810, %v3705
        %v3812 = vpop.permute.xlu0 %3811
        %3815 = vset.pattern.permute.xlu0 0
        %3816 = vperm.xlu0 %3815, %v3706
        %v3817 = vpop.permute.xlu0 %3816
        %3820 = vset.pattern.permute.xlu0 0
        %3821 = vperm.xlu0 %3820, %v3707
        %v3822 = vpop.permute.xlu0 %3821
        %3825 = vset.pattern.permute.xlu0 0
        %3826 = vperm.xlu0 %3825, %v3708
        %v3827 = vpop.permute.xlu0 %3826
        %v3829 = vmul.f32 %v3660, %v3712
        %v3830 = vmul.f32 %v3661, %v3717
        %v3831 = vmul.f32 %v3662, %v3722
        %v3832 = vmul.f32 %v3663, %v3727
        %v3833 = vmul.f32 %v3664, %v3732
        %v3834 = vmul.f32 %v3665, %v3737
        %v3835 = vmul.f32 %v3666, %v3742
        %v3836 = vmul.f32 %v3667, %v3747
        %v3837 = vmul.f32 %v3668, %v3752
        %v3838 = vmul.f32 %v3669, %v3757
        %v3839 = vmul.f32 %v3670, %v3762
        %v3840 = vmul.f32 %v3671, %v3767
        %v3841 = vmul.f32 %v3672, %v3772
        %v3842 = vmul.f32 %v3673, %v3777
        %v3843 = vmul.f32 %v3674, %v3782
        %v3844 = vmul.f32 %v3675, %v3787
        %v3845 = vmul.f32 %v3676, %v3792
        %v3846 = vmul.f32 %v3677, %v3797
        %v3847 = vmul.f32 %v3678, %v3802
        %v3848 = vmul.f32 %v3679, %v3807
        %v3849 = vmul.f32 %v3680, %v3812
        %v3850 = vmul.f32 %v3681, %v3817
        %v3851 = vmul.f32 %v3682, %v3822
        %v3852 = vmul.f32 %v3683, %v3827
        %s3853 = scalar_lea.vmem %s434, 192
        %v3854 = vld [vmem:[%s3853] sm:$0xff]
        %v3855 = vld [vmem:[%s3853 + $0x8] sm:$0xff]
        %v3856 = vld [vmem:[%s3853 + $0x10] sm:$0xff]
        %v3857 = vld [vmem:[%s3853 + $0x18] sm:$0x1]
        %v3859 = vsel %vm445, %v3829, 0
        %v3862 = vsel %vm445, %v3830, 0
        %v3865 = vsel %vm445, %v3831, 0
        %v3868 = vsel %vm445, %v3832, 0
        %v3871 = vsel %vm445, %v3833, 0
        %v3874 = vsel %vm445, %v3834, 0
        %v3877 = vsel %vm445, %v3835, 0
        %v3880 = vsel %vm445, %v3836, 0
        %v3883 = vsel %vm445, %v3837, 0
        %v3886 = vsel %vm445, %v3838, 0
        %v3889 = vsel %vm445, %v3839, 0
        %v3892 = vsel %vm445, %v3840, 0
        %v3895 = vsel %vm445, %v3841, 0
        %v3898 = vsel %vm445, %v3842, 0
        %v3901 = vsel %vm445, %v3843, 0
        %v3904 = vsel %vm445, %v3844, 0
        %v3907 = vsel %vm445, %v3845, 0
        %v3910 = vsel %vm445, %v3846, 0
        %v3913 = vsel %vm445, %v3847, 0
        %v3916 = vsel %vm445, %v3848, 0
        %v3919 = vsel %vm445, %v3849, 0
        %v3922 = vsel %vm445, %v3850, 0
        %v3925 = vsel %vm445, %v3851, 0
        %v3928 = vsel %vm445, %v3852, 0
        %v3931 = vsel %vm581, %v3857, 0
        %3933 = vmatprep.subr.mxu0 0.0
        %3934 = vmatpush1.msra.mxu0 %v3854
        %3935 = vmatprep.subr.mxu0 0.0
        %3936 = vmatpush1.msra.mxu0 %v3855
        %3937 = vmatprep.subr.mxu0 0.0
        %3938 = vmatpush1.msra.mxu0 %v3856
        %3939 = vmatprep.subr.mxu0 0.0
        %3940 = vmatpush1.msra.mxu0 %v3931
        %3941 = vmatprep.subr.mxu0 0.0
        %3942 = vmatpush1.msra.mxu0 0.0
        %3943 = vmatprep.subr.mxu0 0.0
        %3944 = vmatpush1.msra.mxu0 0.0
        %3945 = vmatprep.subr.mxu0 0.0
        %3946 = vmatpush1.msra.mxu0 0.0
        %3947 = vmatprep.subr.mxu0 0.0
        %3948 = vmatpush1.msra.mxu0 0.0
        %3949 = vmatprep.subr.mxu0 0.0
        %3950 = vmatpush1.msra.mxu0 0.0
        %3951 = vmatprep.subr.mxu0 0.0
        %3952 = vmatpush1.msra.mxu0 0.0
        %3953 = vmatprep.subr.mxu0 0.0
        %3954 = vmatpush1.msra.mxu0 0.0
        %3955 = vmatprep.subr.mxu0 0.0
        %3956 = vmatpush1.msra.mxu0 0.0
        %3957 = vmatprep.subr.mxu0 0.0
        %3958 = vmatpush1.msra.mxu0 0.0
        %3959 = vmatprep.subr.mxu0 0.0
        %3960 = vmatpush1.msra.mxu0 0.0
        %3961 = vmatprep.subr.mxu0 0.0
        %3962 = vmatpush1.msra.mxu0 0.0
        %3963 = vmatprep.subr.mxu0 0.0
        %3964 = vmatpush1.msra.mxu0 0.0
        %3965 = vmatprep.subr.mxu0 0.0
        %3966 = vmatpush1.msra.mxu0 0.0
        %3967 = vmatprep.subr.mxu0 0.0
        %3968 = vmatpush1.msra.mxu0 0.0
        %3969 = vmatprep.subr.mxu0 0.0
        %3970 = vmatpush1.msra.mxu0 0.0
        %3971 = vmatprep.subr.mxu0 0.0
        %3972 = vmatpush1.msra.mxu0 0.0
        %3973 = vmatprep.subr.mxu0 0.0
        %3974 = vmatpush1.msra.mxu0 0.0
        %3975 = vmatprep.subr.mxu0 0.0
        %3976 = vmatpush1.msra.mxu0 0.0
        %3977 = vmatprep.subr.mxu0 0.0
        %3978 = vmatpush1.msra.mxu0 0.0
        %3979 = vmatprep.subr.mxu0 0.0
        %3980 = vmatpush1.msra.mxu0 0.0
        %3981 = vmatprep.subr.mxu0 0.0
        %3982 = vmatpush1.msra.mxu0 0.0
        %3983 = vmatprep.subr.mxu0 0.0
        %3984 = vmatpush1.msra.mxu0 0.0
        %3985 = vmatprep.subr.mxu0 0.0
        %3986 = vmatpush1.msra.mxu0 0.0
        %3987 = vmatprep.subr.mxu0 0.0
        %3988 = vmatpush1.msra.mxu0 0.0
        %3989 = vmatprep.subr.mxu0 0.0
        %3990 = vmatpush1.msra.mxu0 0.0
        %3991 = vmatprep.subr.mxu0 0.0
        %3992 = vmatpush1.msra.mxu0 0.0
        %3993 = vmatprep.subr.mxu0 0.0
        %3994 = vmatpush1.msra.mxu0 0.0
        %3995 = vmatprep.subr.mxu0 0.0
        %3996 = vmatpush1.msra.mxu0 0.0
        %3997 = vmatprep.mubr.f32.mxu0 0.0
        %3998 = vmatmul.mubr.f32.gmra.mrb[0].mxu0 %v3859
        %v3999 = vpop.f32.mrb[0].mxu0
        %v4000 = vadd.f32 0.0, %v3999
        %v4001 = vpop.f32.mrb[0].mxu0
        %4002 = vmatprep.mubr.f32.mxu0 0.0
        %4003 = vmatmul.mubr.f32.gmra.mrb[0].mxu0 %v3862
        %v4004 = vpop.f32.mrb[0].mxu0
        %v4005 = vadd.f32 0.0, %v4004
        %v4006 = vpop.f32.mrb[0].mxu0
        %4007 = vmatprep.mubr.f32.mxu0 0.0
        %4008 = vmatmul.mubr.f32.gmra.mrb[0].mxu0 %v3865
        %v4009 = vpop.f32.mrb[0].mxu0
        %v4010 = vadd.f32 0.0, %v4009
        %v4011 = vpop.f32.mrb[0].mxu0
        %4012 = vmatprep.mubr.f32.mxu0 0.0
        %4013 = vmatmul.mubr.f32.gmra.mrb[0].mxu0 %v3868
        %v4014 = vpop.f32.mrb[0].mxu0
        %v4015 = vadd.f32 0.0, %v4014
        %v4016 = vpop.f32.mrb[0].mxu0
        %4017 = vmatprep.mubr.f32.mxu0 0.0
        %4018 = vmatmul.mubr.f32.gmra.mrb[0].mxu0 %v3871
        %v4019 = vpop.f32.mrb[0].mxu0
        %v4020 = vadd.f32 0.0, %v4019
        %v4021 = vpop.f32.mrb[0].mxu0
        %4022 = vmatprep.mubr.f32.mxu0 0.0
        %4023 = vmatmul.mubr.f32.gmra.mrb[0].mxu0 %v3874
        %v4024 = vpop.f32.mrb[0].mxu0
        %v4025 = vadd.f32 0.0, %v4024
        %v4026 = vpop.f32.mrb[0].mxu0
        %4027 = vmatprep.mubr.f32.mxu0 0.0
        %4028 = vmatmul.mubr.f32.gmra.mrb[0].mxu0 %v3877
        %v4029 = vpop.f32.mrb[0].mxu0
        %v4030 = vadd.f32 0.0, %v4029
        %v4031 = vpop.f32.mrb[0].mxu0
        %4032 = vmatprep.mubr.f32.mxu0 0.0
        %4033 = vmatmul.mubr.f32.gmra.mrb[0].mxu0 %v3880
        %v4034 = vpop.f32.mrb[0].mxu0
        %v4035 = vadd.f32 0.0, %v4034
        %v4036 = vpop.f32.mrb[0].mxu0
        %4037 = vmatprep.mubr.f32.mxu0 0.0
        %4038 = vmatmul.mubr.f32.gmra.mrb[0].mxu0 %v3883
        %v4039 = vpop.f32.mrb[0].mxu0
        %v4040 = vadd.f32 0.0, %v4039
        %v4041 = vpop.f32.mrb[0].mxu0
        %4042 = vmatprep.mubr.f32.mxu0 0.0
        %4043 = vmatmul.mubr.f32.gmra.mrb[0].mxu0 %v3886
        %v4044 = vpop.f32.mrb[0].mxu0
        %v4045 = vadd.f32 0.0, %v4044
        %v4046 = vpop.f32.mrb[0].mxu0
        %4047 = vmatprep.mubr.f32.mxu0 0.0
        %4048 = vmatmul.mubr.f32.gmra.mrb[0].mxu0 %v3889
        %v4049 = vpop.f32.mrb[0].mxu0
        %v4050 = vadd.f32 0.0, %v4049
        %v4051 = vpop.f32.mrb[0].mxu0
        %4052 = vmatprep.mubr.f32.mxu0 0.0
        %4053 = vmatmul.mubr.f32.gmra.mrb[0].mxu0 %v3892
        %v4054 = vpop.f32.mrb[0].mxu0
        %v4055 = vadd.f32 0.0, %v4054
        %v4056 = vpop.f32.mrb[0].mxu0
        %4057 = vmatprep.mubr.f32.mxu0 0.0
        %4058 = vmatmul.mubr.f32.gmra.mrb[0].mxu0 %v3895
        %v4059 = vpop.f32.mrb[0].mxu0
        %v4060 = vadd.f32 0.0, %v4059
        %v4061 = vpop.f32.mrb[0].mxu0
        %4062 = vmatprep.mubr.f32.mxu0 0.0
        %4063 = vmatmul.mubr.f32.gmra.mrb[0].mxu0 %v3898
        %v4064 = vpop.f32.mrb[0].mxu0
        %v4065 = vadd.f32 0.0, %v4064
        %v4066 = vpop.f32.mrb[0].mxu0
        %4067 = vmatprep.mubr.f32.mxu0 0.0
        %4068 = vmatmul.mubr.f32.gmra.mrb[0].mxu0 %v3901
        %v4069 = vpop.f32.mrb[0].mxu0
        %v4070 = vadd.f32 0.0, %v4069
        %v4071 = vpop.f32.mrb[0].mxu0
        %4072 = vmatprep.mubr.f32.mxu0 0.0
        %4073 = vmatmul.mubr.f32.gmra.mrb[0].mxu0 %v3904
        %v4074 = vpop.f32.mrb[0].mxu0
        %v4075 = vadd.f32 0.0, %v4074
        %v4076 = vpop.f32.mrb[0].mxu0
        %4077 = vmatprep.mubr.f32.mxu0 0.0
        %4078 = vmatmul.mubr.f32.gmra.mrb[0].mxu0 %v3907
        %v4079 = vpop.f32.mrb[0].mxu0
        %v4080 = vadd.f32 0.0, %v4079
        %v4081 = vpop.f32.mrb[0].mxu0
        %4082 = vmatprep.mubr.f32.mxu0 0.0
        %4083 = vmatmul.mubr.f32.gmra.mrb[0].mxu0 %v3910
        %v4084 = vpop.f32.mrb[0].mxu0
        %v4085 = vadd.f32 0.0, %v4084
        %v4086 = vpop.f32.mrb[0].mxu0
        %4087 = vmatprep.mubr.f32.mxu0 0.0
        %4088 = vmatmul.mubr.f32.gmra.mrb[0].mxu0 %v3913
        %v4089 = vpop.f32.mrb[0].mxu0
        %v4090 = vadd.f32 0.0, %v4089
        %v4091 = vpop.f32.mrb[0].mxu0
        %4092 = vmatprep.mubr.f32.mxu0 0.0
        %4093 = vmatmul.mubr.f32.gmra.mrb[0].mxu0 %v3916
        %v4094 = vpop.f32.mrb[0].mxu0
        %v4095 = vadd.f32 0.0, %v4094
        %v4096 = vpop.f32.mrb[0].mxu0
        %4097 = vmatprep.mubr.f32.mxu0 0.0
        %4098 = vmatmul.mubr.f32.gmra.mrb[0].mxu0 %v3919
        %v4099 = vpop.f32.mrb[0].mxu0
        %v4100 = vadd.f32 0.0, %v4099
        %v4101 = vpop.f32.mrb[0].mxu0
        %4102 = vmatprep.mubr.f32.mxu0 0.0
        %4103 = vmatmul.mubr.f32.gmra.mrb[0].mxu0 %v3922
        %v4104 = vpop.f32.mrb[0].mxu0
        %v4105 = vadd.f32 0.0, %v4104
        %v4106 = vpop.f32.mrb[0].mxu0
        %4107 = vmatprep.mubr.f32.mxu0 0.0
        %4108 = vmatmul.mubr.f32.gmra.mrb[0].mxu0 %v3925
        %v4109 = vpop.f32.mrb[0].mxu0
        %v4110 = vadd.f32 0.0, %v4109
        %v4111 = vpop.f32.mrb[0].mxu0
        %4112 = vmatprep.mubr.f32.mxu0 0.0
        %4113 = vmatmul.mubr.f32.gmra.mrb[0].mxu0 %v3928
        %v4114 = vpop.f32.mrb[0].mxu0
        %v4115 = vadd.f32 0.0, %v4114
        %v4116 = vpop.f32.mrb[0].mxu0
        %4117 = vdwg.mxu0
        %v4118 = vadd.f32 %v3636, %v4000
        %v4119 = vadd.f32 %v3637, %v4005
        %v4120 = vadd.f32 %v3638, %v4010
        %v4121 = vadd.f32 %v3639, %v4015
        %v4122 = vadd.f32 %v3640, %v4020
        %v4123 = vadd.f32 %v3641, %v4025
        %v4124 = vadd.f32 %v3642, %v4030
        %v4125 = vadd.f32 %v3643, %v4035
        %v4126 = vadd.f32 %v3644, %v4040
        %v4127 = vadd.f32 %v3645, %v4045
        %v4128 = vadd.f32 %v3646, %v4050
        %v4129 = vadd.f32 %v3647, %v4055
        %v4130 = vadd.f32 %v3648, %v4060
        %v4131 = vadd.f32 %v3649, %v4065
        %v4132 = vadd.f32 %v3650, %v4070
        %v4133 = vadd.f32 %v3651, %v4075
        %v4134 = vadd.f32 %v3652, %v4080
        %v4135 = vadd.f32 %v3653, %v4085
        %v4136 = vadd.f32 %v3654, %v4090
        %v4137 = vadd.f32 %v3655, %v4095
        %v4138 = vadd.f32 %v3656, %v4100
        %v4139 = vadd.f32 %v3657, %v4105
        %v4140 = vadd.f32 %v3658, %v4110
        %v4141 = vadd.f32 %v3659, %v4115
        %v4142 = vld [vmem:[#allocation2 + $0x18] sm:$0xff]
        %v4143 = vld [vmem:[#allocation2 + $0x20] sm:$0xff]
        %v4144 = vld [vmem:[#allocation2 + $0x28] sm:$0xff]
        %v4145 = vld [vmem:[#allocation2 + $0x30] sm:$0xff]
        %v4146 = vld [vmem:[#allocation2 + $0x38] sm:$0xff]
        %v4147 = vld [vmem:[#allocation2 + $0x40] sm:$0xff]
        %v4148 = vld [vmem:[#allocation2 + $0x48] sm:$0xff]
        %v4149 = vld [vmem:[#allocation2 + $0x50] sm:$0xff]
        %v4150 = vld [vmem:[#allocation2 + $0x58] sm:$0xff]
        %v4151 = vld [vmem:[#allocation2 + $0x60] sm:$0xff]
        %v4152 = vld [vmem:[#allocation2 + $0x68] sm:$0xff]
        %v4153 = vld [vmem:[#allocation2 + $0x70] sm:$0xff]
        %v4154 = vld [vmem:[#allocation2 + $0x78] sm:$0xff]
        %v4155 = vld [vmem:[#allocation2 + $0x80] sm:$0xff]
        %v4156 = vld [vmem:[#allocation2 + $0x88] sm:$0xff]
        %v4157 = vld [vmem:[#allocation2 + $0x90] sm:$0xff]
        %v4158 = vld [vmem:[#allocation2 + $0x98] sm:$0xff]
        %v4159 = vld [vmem:[#allocation2 + $0xa0] sm:$0xff]
        %v4160 = vld [vmem:[#allocation2 + $0xa8] sm:$0xff]
        %v4161 = vld [vmem:[#allocation2 + $0xb0] sm:$0xff]
        %v4162 = vld [vmem:[#allocation2 + $0xb8] sm:$0xff]
        %v4163 = vld [vmem:[#allocation2 + $0xc0] sm:$0xff]
        %v4164 = vld [vmem:[#allocation2 + $0xc8] sm:$0xff]
        %v4165 = vld [vmem:[#allocation2 + $0xd0] sm:$0xff]
        %s4166 = scalar_lea.vmem %s0, 1344
        %v4167 = vld [vmem:[%s4166] sm:$0xff]
        %v4168 = vld [vmem:[%s4166 + $0x8] sm:$0xff]
        %v4169 = vld [vmem:[%s4166 + $0x10] sm:$0xff]
        %v4170 = vld [vmem:[%s4166 + $0x18] sm:$0xff]
        %v4171 = vld [vmem:[%s4166 + $0x20] sm:$0xff]
        %v4172 = vld [vmem:[%s4166 + $0x28] sm:$0xff]
        %v4173 = vld [vmem:[%s4166 + $0x30] sm:$0xff]
        %v4174 = vld [vmem:[%s4166 + $0x38] sm:$0xff]
        %v4175 = vld [vmem:[%s4166 + $0x40] sm:$0xff]
        %v4176 = vld [vmem:[%s4166 + $0x48] sm:$0xff]
        %v4177 = vld [vmem:[%s4166 + $0x50] sm:$0xff]
        %v4178 = vld [vmem:[%s4166 + $0x58] sm:$0xff]
        %v4179 = vld [vmem:[%s4166 + $0x60] sm:$0xff]
        %v4180 = vld [vmem:[%s4166 + $0x68] sm:$0xff]
        %v4181 = vld [vmem:[%s4166 + $0x70] sm:$0xff]
        %v4182 = vld [vmem:[%s4166 + $0x78] sm:$0xff]
        %v4183 = vld [vmem:[%s4166 + $0x80] sm:$0xff]
        %v4184 = vld [vmem:[%s4166 + $0x88] sm:$0xff]
        %v4185 = vld [vmem:[%s4166 + $0x90] sm:$0xff]
        %v4186 = vld [vmem:[%s4166 + $0x98] sm:$0xff]
        %v4187 = vld [vmem:[%s4166 + $0xa0] sm:$0xff]
        %v4188 = vld [vmem:[%s4166 + $0xa8] sm:$0xff]
        %v4189 = vld [vmem:[%s4166 + $0xb0] sm:$0xff]
        %v4190 = vld [vmem:[%s4166 + $0xb8] sm:$0xff]
        %4192 = vset.pattern.permute.xlu0 0
        %4193 = vperm.xlu0 %4192, %v4167
        %v4194 = vpop.permute.xlu0 %4193
        %4197 = vset.pattern.permute.xlu0 0
        %4198 = vperm.xlu0 %4197, %v4168
        %v4199 = vpop.permute.xlu0 %4198
        %4202 = vset.pattern.permute.xlu0 0
        %4203 = vperm.xlu0 %4202, %v4169
        %v4204 = vpop.permute.xlu0 %4203
        %4207 = vset.pattern.permute.xlu0 0
        %4208 = vperm.xlu0 %4207, %v4170
        %v4209 = vpop.permute.xlu0 %4208
        %4212 = vset.pattern.permute.xlu0 0
        %4213 = vperm.xlu0 %4212, %v4171
        %v4214 = vpop.permute.xlu0 %4213
        %4217 = vset.pattern.permute.xlu0 0
        %4218 = vperm.xlu0 %4217, %v4172
        %v4219 = vpop.permute.xlu0 %4218
        %4222 = vset.pattern.permute.xlu0 0
        %4223 = vperm.xlu0 %4222, %v4173
        %v4224 = vpop.permute.xlu0 %4223
        %4227 = vset.pattern.permute.xlu0 0
        %4228 = vperm.xlu0 %4227, %v4174
        %v4229 = vpop.permute.xlu0 %4228
        %4232 = vset.pattern.permute.xlu0 0
        %4233 = vperm.xlu0 %4232, %v4175
        %v4234 = vpop.permute.xlu0 %4233
        %4237 = vset.pattern.permute.xlu0 0
        %4238 = vperm.xlu0 %4237, %v4176
        %v4239 = vpop.permute.xlu0 %4238
        %4242 = vset.pattern.permute.xlu0 0
        %4243 = vperm.xlu0 %4242, %v4177
        %v4244 = vpop.permute.xlu0 %4243
        %4247 = vset.pattern.permute.xlu0 0
        %4248 = vperm.xlu0 %4247, %v4178
        %v4249 = vpop.permute.xlu0 %4248
        %4252 = vset.pattern.permute.xlu0 0
        %4253 = vperm.xlu0 %4252, %v4179
        %v4254 = vpop.permute.xlu0 %4253
        %4257 = vset.pattern.permute.xlu0 0
        %4258 = vperm.xlu0 %4257, %v4180
        %v4259 = vpop.permute.xlu0 %4258
        %4262 = vset.pattern.permute.xlu0 0
        %4263 = vperm.xlu0 %4262, %v4181
        %v4264 = vpop.permute.xlu0 %4263
        %4267 = vset.pattern.permute.xlu0 0
        %4268 = vperm.xlu0 %4267, %v4182
        %v4269 = vpop.permute.xlu0 %4268
        %4272 = vset.pattern.permute.xlu0 0
        %4273 = vperm.xlu0 %4272, %v4183
        %v4274 = vpop.permute.xlu0 %4273
        %4277 = vset.pattern.permute.xlu0 0
        %4278 = vperm.xlu0 %4277, %v4184
        %v4279 = vpop.permute.xlu0 %4278
        %4282 = vset.pattern.permute.xlu0 0
        %4283 = vperm.xlu0 %4282, %v4185
        %v4284 = vpop.permute.xlu0 %4283
        %4287 = vset.pattern.permute.xlu0 0
        %4288 = vperm.xlu0 %4287, %v4186
        %v4289 = vpop.permute.xlu0 %4288
        %4292 = vset.pattern.permute.xlu0 0
        %4293 = vperm.xlu0 %4292, %v4187
        %v4294 = vpop.permute.xlu0 %4293
        %4297 = vset.pattern.permute.xlu0 0
        %4298 = vperm.xlu0 %4297, %v4188
        %v4299 = vpop.permute.xlu0 %4298
        %4302 = vset.pattern.permute.xlu0 0
        %4303 = vperm.xlu0 %4302, %v4189
        %v4304 = vpop.permute.xlu0 %4303
        %4307 = vset.pattern.permute.xlu0 0
        %4308 = vperm.xlu0 %4307, %v4190
        %v4309 = vpop.permute.xlu0 %4308
        %v4311 = vmul.f32 %v4142, %v4194
        %v4312 = vmul.f32 %v4143, %v4199
        %v4313 = vmul.f32 %v4144, %v4204
        %v4314 = vmul.f32 %v4145, %v4209
        %v4315 = vmul.f32 %v4146, %v4214
        %v4316 = vmul.f32 %v4147, %v4219
        %v4317 = vmul.f32 %v4148, %v4224
        %v4318 = vmul.f32 %v4149, %v4229
        %v4319 = vmul.f32 %v4150, %v4234
        %v4320 = vmul.f32 %v4151, %v4239
        %v4321 = vmul.f32 %v4152, %v4244
        %v4322 = vmul.f32 %v4153, %v4249
        %v4323 = vmul.f32 %v4154, %v4254
        %v4324 = vmul.f32 %v4155, %v4259
        %v4325 = vmul.f32 %v4156, %v4264
        %v4326 = vmul.f32 %v4157, %v4269
        %v4327 = vmul.f32 %v4158, %v4274
        %v4328 = vmul.f32 %v4159, %v4279
        %v4329 = vmul.f32 %v4160, %v4284
        %v4330 = vmul.f32 %v4161, %v4289
        %v4331 = vmul.f32 %v4162, %v4294
        %v4332 = vmul.f32 %v4163, %v4299
        %v4333 = vmul.f32 %v4164, %v4304
        %v4334 = vmul.f32 %v4165, %v4309
        %s4335 = scalar_lea.vmem %s434, 224
        %v4336 = vld [vmem:[%s4335] sm:$0xff]
        %v4337 = vld [vmem:[%s4335 + $0x8] sm:$0xff]
        %v4338 = vld [vmem:[%s4335 + $0x10] sm:$0xff]
        %v4339 = vld [vmem:[%s4335 + $0x18] sm:$0x1]
        %v4341 = vsel %vm445, %v4311, 0
        %v4344 = vsel %vm445, %v4312, 0
        %v4347 = vsel %vm445, %v4313, 0
        %v4350 = vsel %vm445, %v4314, 0
        %v4353 = vsel %vm445, %v4315, 0
        %v4356 = vsel %vm445, %v4316, 0
        %v4359 = vsel %vm445, %v4317, 0
        %v4362 = vsel %vm445, %v4318, 0
        %v4365 = vsel %vm445, %v4319, 0
        %v4368 = vsel %vm445, %v4320, 0
        %v4371 = vsel %vm445, %v4321, 0
        %v4374 = vsel %vm445, %v4322, 0
        %v4377 = vsel %vm445, %v4323, 0
        %v4380 = vsel %vm445, %v4324, 0
        %v4383 = vsel %vm445, %v4325, 0
        %v4386 = vsel %vm445, %v4326, 0
        %v4389 = vsel %vm445, %v4327, 0
        %v4392 = vsel %vm445, %v4328, 0
        %v4395 = vsel %vm445, %v4329, 0
        %v4398 = vsel %vm445, %v4330, 0
        %v4401 = vsel %vm445, %v4331, 0
        %v4404 = vsel %vm445, %v4332, 0
        %v4407 = vsel %vm445, %v4333, 0
        %v4410 = vsel %vm445, %v4334, 0
        %v4413 = vsel %vm581, %v4339, 0
        %4415 = vmatprep.subr.mxu0 0.0
        %4416 = vmatpush1.msra.mxu0 %v4336
        %4417 = vmatprep.subr.mxu0 0.0
        %4418 = vmatpush1.msra.mxu0 %v4337
        %4419 = vmatprep.subr.mxu0 0.0
        %4420 = vmatpush1.msra.mxu0 %v4338
        %4421 = vmatprep.subr.mxu0 0.0
        %4422 = vmatpush1.msra.mxu0 %v4413
        %4423 = vmatprep.subr.mxu0 0.0
        %4424 = vmatpush1.msra.mxu0 0.0
        %4425 = vmatprep.subr.mxu0 0.0
        %4426 = vmatpush1.msra.mxu0 0.0
        %4427 = vmatprep.subr.mxu0 0.0
        %4428 = vmatpush1.msra.mxu0 0.0
        %4429 = vmatprep.subr.mxu0 0.0
        %4430 = vmatpush1.msra.mxu0 0.0
        %4431 = vmatprep.subr.mxu0 0.0
        %4432 = vmatpush1.msra.mxu0 0.0
        %4433 = vmatprep.subr.mxu0 0.0
        %4434 = vmatpush1.msra.mxu0 0.0
        %4435 = vmatprep.subr.mxu0 0.0
        %4436 = vmatpush1.msra.mxu0 0.0
        %4437 = vmatprep.subr.mxu0 0.0
        %4438 = vmatpush1.msra.mxu0 0.0
        %4439 = vmatprep.subr.mxu0 0.0
        %4440 = vmatpush1.msra.mxu0 0.0
        %4441 = vmatprep.subr.mxu0 0.0
        %4442 = vmatpush1.msra.mxu0 0.0
        %4443 = vmatprep.subr.mxu0 0.0
        %4444 = vmatpush1.msra.mxu0 0.0
        %4445 = vmatprep.subr.mxu0 0.0
        %4446 = vmatpush1.msra.mxu0 0.0
        %4447 = vmatprep.subr.mxu0 0.0
        %4448 = vmatpush1.msra.mxu0 0.0
        %4449 = vmatprep.subr.mxu0 0.0
        %4450 = vmatpush1.msra.mxu0 0.0
        %4451 = vmatprep.subr.mxu0 0.0
        %4452 = vmatpush1.msra.mxu0 0.0
        %4453 = vmatprep.subr.mxu0 0.0
        %4454 = vmatpush1.msra.mxu0 0.0
        %4455 = vmatprep.subr.mxu0 0.0
        %4456 = vmatpush1.msra.mxu0 0.0
        %4457 = vmatprep.subr.mxu0 0.0
        %4458 = vmatpush1.msra.mxu0 0.0
        %4459 = vmatprep.subr.mxu0 0.0
        %4460 = vmatpush1.msra.mxu0 0.0
        %4461 = vmatprep.subr.mxu0 0.0
        %4462 = vmatpush1.msra.mxu0 0.0
        %4463 = vmatprep.subr.mxu0 0.0
        %4464 = vmatpush1.msra.mxu0 0.0
        %4465 = vmatprep.subr.mxu0 0.0
        %4466 = vmatpush1.msra.mxu0 0.0
        %4467 = vmatprep.subr.mxu0 0.0
        %4468 = vmatpush1.msra.mxu0 0.0
        %4469 = vmatprep.subr.mxu0 0.0
        %4470 = vmatpush1.msra.mxu0 0.0
        %4471 = vmatprep.subr.mxu0 0.0
        %4472 = vmatpush1.msra.mxu0 0.0
        %4473 = vmatprep.subr.mxu0 0.0
        %4474 = vmatpush1.msra.mxu0 0.0
        %4475 = vmatprep.subr.mxu0 0.0
        %4476 = vmatpush1.msra.mxu0 0.0
        %4477 = vmatprep.subr.mxu0 0.0
        %4478 = vmatpush1.msra.mxu0 0.0
        %4479 = vmatprep.mubr.f32.mxu0 0.0
        %4480 = vmatmul.mubr.f32.gmra.mrb[0].mxu0 %v4341
        %v4481 = vpop.f32.mrb[0].mxu0
        %v4482 = vadd.f32 0.0, %v4481
        %v4483 = vpop.f32.mrb[0].mxu0
        %4484 = vmatprep.mubr.f32.mxu0 0.0
        %4485 = vmatmul.mubr.f32.gmra.mrb[0].mxu0 %v4344
        %v4486 = vpop.f32.mrb[0].mxu0
        %v4487 = vadd.f32 0.0, %v4486
        %v4488 = vpop.f32.mrb[0].mxu0
        %4489 = vmatprep.mubr.f32.mxu0 0.0
        %4490 = vmatmul.mubr.f32.gmra.mrb[0].mxu0 %v4347
        %v4491 = vpop.f32.mrb[0].mxu0
        %v4492 = vadd.f32 0.0, %v4491
        %v4493 = vpop.f32.mrb[0].mxu0
        %4494 = vmatprep.mubr.f32.mxu0 0.0
        %4495 = vmatmul.mubr.f32.gmra.mrb[0].mxu0 %v4350
        %v4496 = vpop.f32.mrb[0].mxu0
        %v4497 = vadd.f32 0.0, %v4496
        %v4498 = vpop.f32.mrb[0].mxu0
        %4499 = vmatprep.mubr.f32.mxu0 0.0
        %4500 = vmatmul.mubr.f32.gmra.mrb[0].mxu0 %v4353
        %v4501 = vpop.f32.mrb[0].mxu0
        %v4502 = vadd.f32 0.0, %v4501
        %v4503 = vpop.f32.mrb[0].mxu0
        %4504 = vmatprep.mubr.f32.mxu0 0.0
        %4505 = vmatmul.mubr.f32.gmra.mrb[0].mxu0 %v4356
        %v4506 = vpop.f32.mrb[0].mxu0
        %v4507 = vadd.f32 0.0, %v4506
        %v4508 = vpop.f32.mrb[0].mxu0
        %4509 = vmatprep.mubr.f32.mxu0 0.0
        %4510 = vmatmul.mubr.f32.gmra.mrb[0].mxu0 %v4359
        %v4511 = vpop.f32.mrb[0].mxu0
        %v4512 = vadd.f32 0.0, %v4511
        %v4513 = vpop.f32.mrb[0].mxu0
        %4514 = vmatprep.mubr.f32.mxu0 0.0
        %4515 = vmatmul.mubr.f32.gmra.mrb[0].mxu0 %v4362
        %v4516 = vpop.f32.mrb[0].mxu0
        %v4517 = vadd.f32 0.0, %v4516
        %v4518 = vpop.f32.mrb[0].mxu0
        %4519 = vmatprep.mubr.f32.mxu0 0.0
        %4520 = vmatmul.mubr.f32.gmra.mrb[0].mxu0 %v4365
        %v4521 = vpop.f32.mrb[0].mxu0
        %v4522 = vadd.f32 0.0, %v4521
        %v4523 = vpop.f32.mrb[0].mxu0
        %4524 = vmatprep.mubr.f32.mxu0 0.0
        %4525 = vmatmul.mubr.f32.gmra.mrb[0].mxu0 %v4368
        %v4526 = vpop.f32.mrb[0].mxu0
        %v4527 = vadd.f32 0.0, %v4526
        %v4528 = vpop.f32.mrb[0].mxu0
        %4529 = vmatprep.mubr.f32.mxu0 0.0
        %4530 = vmatmul.mubr.f32.gmra.mrb[0].mxu0 %v4371
        %v4531 = vpop.f32.mrb[0].mxu0
        %v4532 = vadd.f32 0.0, %v4531
        %v4533 = vpop.f32.mrb[0].mxu0
        %4534 = vmatprep.mubr.f32.mxu0 0.0
        %4535 = vmatmul.mubr.f32.gmra.mrb[0].mxu0 %v4374
        %v4536 = vpop.f32.mrb[0].mxu0
        %v4537 = vadd.f32 0.0, %v4536
        %v4538 = vpop.f32.mrb[0].mxu0
        %4539 = vmatprep.mubr.f32.mxu0 0.0
        %4540 = vmatmul.mubr.f32.gmra.mrb[0].mxu0 %v4377
        %v4541 = vpop.f32.mrb[0].mxu0
        %v4542 = vadd.f32 0.0, %v4541
        %v4543 = vpop.f32.mrb[0].mxu0
        %4544 = vmatprep.mubr.f32.mxu0 0.0
        %4545 = vmatmul.mubr.f32.gmra.mrb[0].mxu0 %v4380
        %v4546 = vpop.f32.mrb[0].mxu0
        %v4547 = vadd.f32 0.0, %v4546
        %v4548 = vpop.f32.mrb[0].mxu0
        %4549 = vmatprep.mubr.f32.mxu0 0.0
        %4550 = vmatmul.mubr.f32.gmra.mrb[0].mxu0 %v4383
        %v4551 = vpop.f32.mrb[0].mxu0
        %v4552 = vadd.f32 0.0, %v4551
        %v4553 = vpop.f32.mrb[0].mxu0
        %4554 = vmatprep.mubr.f32.mxu0 0.0
        %4555 = vmatmul.mubr.f32.gmra.mrb[0].mxu0 %v4386
        %v4556 = vpop.f32.mrb[0].mxu0
        %v4557 = vadd.f32 0.0, %v4556
        %v4558 = vpop.f32.mrb[0].mxu0
        %4559 = vmatprep.mubr.f32.mxu0 0.0
        %4560 = vmatmul.mubr.f32.gmra.mrb[0].mxu0 %v4389
        %v4561 = vpop.f32.mrb[0].mxu0
        %v4562 = vadd.f32 0.0, %v4561
        %v4563 = vpop.f32.mrb[0].mxu0
        %4564 = vmatprep.mubr.f32.mxu0 0.0
        %4565 = vmatmul.mubr.f32.gmra.mrb[0].mxu0 %v4392
        %v4566 = vpop.f32.mrb[0].mxu0
        %v4567 = vadd.f32 0.0, %v4566
        %v4568 = vpop.f32.mrb[0].mxu0
        %4569 = vmatprep.mubr.f32.mxu0 0.0
        %4570 = vmatmul.mubr.f32.gmra.mrb[0].mxu0 %v4395
        %v4571 = vpop.f32.mrb[0].mxu0
        %v4572 = vadd.f32 0.0, %v4571
        %v4573 = vpop.f32.mrb[0].mxu0
        %4574 = vmatprep.mubr.f32.mxu0 0.0
        %4575 = vmatmul.mubr.f32.gmra.mrb[0].mxu0 %v4398
        %v4576 = vpop.f32.mrb[0].mxu0
        %v4577 = vadd.f32 0.0, %v4576
        %v4578 = vpop.f32.mrb[0].mxu0
        %4579 = vmatprep.mubr.f32.mxu0 0.0
        %4580 = vmatmul.mubr.f32.gmra.mrb[0].mxu0 %v4401
        %v4581 = vpop.f32.mrb[0].mxu0
        %v4582 = vadd.f32 0.0, %v4581
        %v4583 = vpop.f32.mrb[0].mxu0
        %4584 = vmatprep.mubr.f32.mxu0 0.0
        %4585 = vmatmul.mubr.f32.gmra.mrb[0].mxu0 %v4404
        %v4586 = vpop.f32.mrb[0].mxu0
        %v4587 = vadd.f32 0.0, %v4586
        %v4588 = vpop.f32.mrb[0].mxu0
        %4589 = vmatprep.mubr.f32.mxu0 0.0
        %4590 = vmatmul.mubr.f32.gmra.mrb[0].mxu0 %v4407
        %v4591 = vpop.f32.mrb[0].mxu0
        %v4592 = vadd.f32 0.0, %v4591
        %v4593 = vpop.f32.mrb[0].mxu0
        %4594 = vmatprep.mubr.f32.mxu0 0.0
        %4595 = vmatmul.mubr.f32.gmra.mrb[0].mxu0 %v4410
        %v4596 = vpop.f32.mrb[0].mxu0
        %v4597 = vadd.f32 0.0, %v4596
        %v4598 = vpop.f32.mrb[0].mxu0
        %4599 = vdwg.mxu0
        %v4600 = vadd.f32 %v4118, %v4482
        %v4601 = vadd.f32 %v4119, %v4487
        %v4602 = vadd.f32 %v4120, %v4492
        %v4603 = vadd.f32 %v4121, %v4497
        %v4604 = vadd.f32 %v4122, %v4502
        %v4605 = vadd.f32 %v4123, %v4507
        %v4606 = vadd.f32 %v4124, %v4512
        %v4607 = vadd.f32 %v4125, %v4517
        %v4608 = vadd.f32 %v4126, %v4522
        %v4609 = vadd.f32 %v4127, %v4527
        %v4610 = vadd.f32 %v4128, %v4532
        %v4611 = vadd.f32 %v4129, %v4537
        %v4612 = vadd.f32 %v4130, %v4542
        %v4613 = vadd.f32 %v4131, %v4547
        %v4614 = vadd.f32 %v4132, %v4552
        %v4615 = vadd.f32 %v4133, %v4557
        %v4616 = vadd.f32 %v4134, %v4562
        %v4617 = vadd.f32 %v4135, %v4567
        %v4618 = vadd.f32 %v4136, %v4572
        %v4619 = vadd.f32 %v4137, %v4577
        %v4620 = vadd.f32 %v4138, %v4582
        %v4621 = vadd.f32 %v4139, %v4587
        %v4622 = vadd.f32 %v4140, %v4592
        %v4623 = vadd.f32 %v4141, %v4597
        %v4624 = vld [vmem:[#allocation2 + $0x19] sm:$0xff]
        %v4625 = vld [vmem:[#allocation2 + $0x21] sm:$0xff]
        %v4626 = vld [vmem:[#allocation2 + $0x29] sm:$0xff]
        %v4627 = vld [vmem:[#allocation2 + $0x31] sm:$0xff]
        %v4628 = vld [vmem:[#allocation2 + $0x39] sm:$0xff]
        %v4629 = vld [vmem:[#allocation2 + $0x41] sm:$0xff]
        %v4630 = vld [vmem:[#allocation2 + $0x49] sm:$0xff]
        %v4631 = vld [vmem:[#allocation2 + $0x51] sm:$0xff]
        %v4632 = vld [vmem:[#allocation2 + $0x59] sm:$0xff]
        %v4633 = vld [vmem:[#allocation2 + $0x61] sm:$0xff]
        %v4634 = vld [vmem:[#allocation2 + $0x69] sm:$0xff]
        %v4635 = vld [vmem:[#allocation2 + $0x71] sm:$0xff]
        %v4636 = vld [vmem:[#allocation2 + $0x79] sm:$0xff]
        %v4637 = vld [vmem:[#allocation2 + $0x81] sm:$0xff]
        %v4638 = vld [vmem:[#allocation2 + $0x89] sm:$0xff]
        %v4639 = vld [vmem:[#allocation2 + $0x91] sm:$0xff]
        %v4640 = vld [vmem:[#allocation2 + $0x99] sm:$0xff]
        %v4641 = vld [vmem:[#allocation2 + $0xa1] sm:$0xff]
        %v4642 = vld [vmem:[#allocation2 + $0xa9] sm:$0xff]
        %v4643 = vld [vmem:[#allocation2 + $0xb1] sm:$0xff]
        %v4644 = vld [vmem:[#allocation2 + $0xb9] sm:$0xff]
        %v4645 = vld [vmem:[#allocation2 + $0xc1] sm:$0xff]
        %v4646 = vld [vmem:[#allocation2 + $0xc9] sm:$0xff]
        %v4647 = vld [vmem:[#allocation2 + $0xd1] sm:$0xff]
        %s4648 = scalar_lea.vmem %s0, 1536
        %v4649 = vld [vmem:[%s4648] sm:$0xff]
        %v4650 = vld [vmem:[%s4648 + $0x8] sm:$0xff]
        %v4651 = vld [vmem:[%s4648 + $0x10] sm:$0xff]
        %v4652 = vld [vmem:[%s4648 + $0x18] sm:$0xff]
        %v4653 = vld [vmem:[%s4648 + $0x20] sm:$0xff]
        %v4654 = vld [vmem:[%s4648 + $0x28] sm:$0xff]
        %v4655 = vld [vmem:[%s4648 + $0x30] sm:$0xff]
        %v4656 = vld [vmem:[%s4648 + $0x38] sm:$0xff]
        %v4657 = vld [vmem:[%s4648 + $0x40] sm:$0xff]
        %v4658 = vld [vmem:[%s4648 + $0x48] sm:$0xff]
        %v4659 = vld [vmem:[%s4648 + $0x50] sm:$0xff]
        %v4660 = vld [vmem:[%s4648 + $0x58] sm:$0xff]
        %v4661 = vld [vmem:[%s4648 + $0x60] sm:$0xff]
        %v4662 = vld [vmem:[%s4648 + $0x68] sm:$0xff]
        %v4663 = vld [vmem:[%s4648 + $0x70] sm:$0xff]
        %v4664 = vld [vmem:[%s4648 + $0x78] sm:$0xff]
        %v4665 = vld [vmem:[%s4648 + $0x80] sm:$0xff]
        %v4666 = vld [vmem:[%s4648 + $0x88] sm:$0xff]
        %v4667 = vld [vmem:[%s4648 + $0x90] sm:$0xff]
        %v4668 = vld [vmem:[%s4648 + $0x98] sm:$0xff]
        %v4669 = vld [vmem:[%s4648 + $0xa0] sm:$0xff]
        %v4670 = vld [vmem:[%s4648 + $0xa8] sm:$0xff]
        %v4671 = vld [vmem:[%s4648 + $0xb0] sm:$0xff]
        %v4672 = vld [vmem:[%s4648 + $0xb8] sm:$0xff]
        %4674 = vset.pattern.permute.xlu0 0
        %4675 = vperm.xlu0 %4674, %v4649
        %v4676 = vpop.permute.xlu0 %4675
        %4679 = vset.pattern.permute.xlu0 0
        %4680 = vperm.xlu0 %4679, %v4650
        %v4681 = vpop.permute.xlu0 %4680
        %4684 = vset.pattern.permute.xlu0 0
        %4685 = vperm.xlu0 %4684, %v4651
        %v4686 = vpop.permute.xlu0 %4685
        %4689 = vset.pattern.permute.xlu0 0
        %4690 = vperm.xlu0 %4689, %v4652
        %v4691 = vpop.permute.xlu0 %4690
        %4694 = vset.pattern.permute.xlu0 0
        %4695 = vperm.xlu0 %4694, %v4653
        %v4696 = vpop.permute.xlu0 %4695
        %4699 = vset.pattern.permute.xlu0 0
        %4700 = vperm.xlu0 %4699, %v4654
        %v4701 = vpop.permute.xlu0 %4700
        %4704 = vset.pattern.permute.xlu0 0
        %4705 = vperm.xlu0 %4704, %v4655
        %v4706 = vpop.permute.xlu0 %4705
        %4709 = vset.pattern.permute.xlu0 0
        %4710 = vperm.xlu0 %4709, %v4656
        %v4711 = vpop.permute.xlu0 %4710
        %4714 = vset.pattern.permute.xlu0 0
        %4715 = vperm.xlu0 %4714, %v4657
        %v4716 = vpop.permute.xlu0 %4715
        %4719 = vset.pattern.permute.xlu0 0
        %4720 = vperm.xlu0 %4719, %v4658
        %v4721 = vpop.permute.xlu0 %4720
        %4724 = vset.pattern.permute.xlu0 0
        %4725 = vperm.xlu0 %4724, %v4659
        %v4726 = vpop.permute.xlu0 %4725
        %4729 = vset.pattern.permute.xlu0 0
        %4730 = vperm.xlu0 %4729, %v4660
        %v4731 = vpop.permute.xlu0 %4730
        %4734 = vset.pattern.permute.xlu0 0
        %4735 = vperm.xlu0 %4734, %v4661
        %v4736 = vpop.permute.xlu0 %4735
        %4739 = vset.pattern.permute.xlu0 0
        %4740 = vperm.xlu0 %4739, %v4662
        %v4741 = vpop.permute.xlu0 %4740
        %4744 = vset.pattern.permute.xlu0 0
        %4745 = vperm.xlu0 %4744, %v4663
        %v4746 = vpop.permute.xlu0 %4745
        %4749 = vset.pattern.permute.xlu0 0
        %4750 = vperm.xlu0 %4749, %v4664
        %v4751 = vpop.permute.xlu0 %4750
        %4754 = vset.pattern.permute.xlu0 0
        %4755 = vperm.xlu0 %4754, %v4665
        %v4756 = vpop.permute.xlu0 %4755
        %4759 = vset.pattern.permute.xlu0 0
        %4760 = vperm.xlu0 %4759, %v4666
        %v4761 = vpop.permute.xlu0 %4760
        %4764 = vset.pattern.permute.xlu0 0
        %4765 = vperm.xlu0 %4764, %v4667
        %v4766 = vpop.permute.xlu0 %4765
        %4769 = vset.pattern.permute.xlu0 0
        %4770 = vperm.xlu0 %4769, %v4668
        %v4771 = vpop.permute.xlu0 %4770
        %4774 = vset.pattern.permute.xlu0 0
        %4775 = vperm.xlu0 %4774, %v4669
        %v4776 = vpop.permute.xlu0 %4775
        %4779 = vset.pattern.permute.xlu0 0
        %4780 = vperm.xlu0 %4779, %v4670
        %v4781 = vpop.permute.xlu0 %4780
        %4784 = vset.pattern.permute.xlu0 0
        %4785 = vperm.xlu0 %4784, %v4671
        %v4786 = vpop.permute.xlu0 %4785
        %4789 = vset.pattern.permute.xlu0 0
        %4790 = vperm.xlu0 %4789, %v4672
        %v4791 = vpop.permute.xlu0 %4790
        %v4793 = vmul.f32 %v4624, %v4676
        %v4794 = vmul.f32 %v4625, %v4681
        %v4795 = vmul.f32 %v4626, %v4686
        %v4796 = vmul.f32 %v4627, %v4691
        %v4797 = vmul.f32 %v4628, %v4696
        %v4798 = vmul.f32 %v4629, %v4701
        %v4799 = vmul.f32 %v4630, %v4706
        %v4800 = vmul.f32 %v4631, %v4711
        %v4801 = vmul.f32 %v4632, %v4716
        %v4802 = vmul.f32 %v4633, %v4721
        %v4803 = vmul.f32 %v4634, %v4726
        %v4804 = vmul.f32 %v4635, %v4731
        %v4805 = vmul.f32 %v4636, %v4736
        %v4806 = vmul.f32 %v4637, %v4741
        %v4807 = vmul.f32 %v4638, %v4746
        %v4808 = vmul.f32 %v4639, %v4751
        %v4809 = vmul.f32 %v4640, %v4756
        %v4810 = vmul.f32 %v4641, %v4761
        %v4811 = vmul.f32 %v4642, %v4766
        %v4812 = vmul.f32 %v4643, %v4771
        %v4813 = vmul.f32 %v4644, %v4776
        %v4814 = vmul.f32 %v4645, %v4781
        %v4815 = vmul.f32 %v4646, %v4786
        %v4816 = vmul.f32 %v4647, %v4791
        %s4817 = scalar_lea.vmem %s434, 256
        %v4818 = vld [vmem:[%s4817] sm:$0xff]
        %v4819 = vld [vmem:[%s4817 + $0x8] sm:$0xff]
        %v4820 = vld [vmem:[%s4817 + $0x10] sm:$0xff]
        %v4821 = vld [vmem:[%s4817 + $0x18] sm:$0x1]
        %v4823 = vsel %vm445, %v4793, 0
        %v4826 = vsel %vm445, %v4794, 0
        %v4829 = vsel %vm445, %v4795, 0
        %v4832 = vsel %vm445, %v4796, 0
        %v4835 = vsel %vm445, %v4797, 0
        %v4838 = vsel %vm445, %v4798, 0
        %v4841 = vsel %vm445, %v4799, 0
        %v4844 = vsel %vm445, %v4800, 0
        %v4847 = vsel %vm445, %v4801, 0
        %v4850 = vsel %vm445, %v4802, 0
        %v4853 = vsel %vm445, %v4803, 0
        %v4856 = vsel %vm445, %v4804, 0
        %v4859 = vsel %vm445, %v4805, 0
        %v4862 = vsel %vm445, %v4806, 0
        %v4865 = vsel %vm445, %v4807, 0
        %v4868 = vsel %vm445, %v4808, 0
        %v4871 = vsel %vm445, %v4809, 0
        %v4874 = vsel %vm445, %v4810, 0
        %v4877 = vsel %vm445, %v4811, 0
        %v4880 = vsel %vm445, %v4812, 0
        %v4883 = vsel %vm445, %v4813, 0
        %v4886 = vsel %vm445, %v4814, 0
        %v4889 = vsel %vm445, %v4815, 0
        %v4892 = vsel %vm445, %v4816, 0
        %v4895 = vsel %vm581, %v4821, 0
        %4897 = vmatprep.subr.mxu0 0.0
        %4898 = vmatpush1.msra.mxu0 %v4818
        %4899 = vmatprep.subr.mxu0 0.0
        %4900 = vmatpush1.msra.mxu0 %v4819
        %4901 = vmatprep.subr.mxu0 0.0
        %4902 = vmatpush1.msra.mxu0 %v4820
        %4903 = vmatprep.subr.mxu0 0.0
        %4904 = vmatpush1.msra.mxu0 %v4895
        %4905 = vmatprep.subr.mxu0 0.0
        %4906 = vmatpush1.msra.mxu0 0.0
        %4907 = vmatprep.subr.mxu0 0.0
        %4908 = vmatpush1.msra.mxu0 0.0
        %4909 = vmatprep.subr.mxu0 0.0
        %4910 = vmatpush1.msra.mxu0 0.0
        %4911 = vmatprep.subr.mxu0 0.0
        %4912 = vmatpush1.msra.mxu0 0.0
        %4913 = vmatprep.subr.mxu0 0.0
        %4914 = vmatpush1.msra.mxu0 0.0
        %4915 = vmatprep.subr.mxu0 0.0
        %4916 = vmatpush1.msra.mxu0 0.0
        %4917 = vmatprep.subr.mxu0 0.0
        %4918 = vmatpush1.msra.mxu0 0.0
        %4919 = vmatprep.subr.mxu0 0.0
        %4920 = vmatpush1.msra.mxu0 0.0
        %4921 = vmatprep.subr.mxu0 0.0
        %4922 = vmatpush1.msra.mxu0 0.0
        %4923 = vmatprep.subr.mxu0 0.0
        %4924 = vmatpush1.msra.mxu0 0.0
        %4925 = vmatprep.subr.mxu0 0.0
        %4926 = vmatpush1.msra.mxu0 0.0
        %4927 = vmatprep.subr.mxu0 0.0
        %4928 = vmatpush1.msra.mxu0 0.0
        %4929 = vmatprep.subr.mxu0 0.0
        %4930 = vmatpush1.msra.mxu0 0.0
        %4931 = vmatprep.subr.mxu0 0.0
        %4932 = vmatpush1.msra.mxu0 0.0
        %4933 = vmatprep.subr.mxu0 0.0
        %4934 = vmatpush1.msra.mxu0 0.0
        %4935 = vmatprep.subr.mxu0 0.0
        %4936 = vmatpush1.msra.mxu0 0.0
        %4937 = vmatprep.subr.mxu0 0.0
        %4938 = vmatpush1.msra.mxu0 0.0
        %4939 = vmatprep.subr.mxu0 0.0
        %4940 = vmatpush1.msra.mxu0 0.0
        %4941 = vmatprep.subr.mxu0 0.0
        %4942 = vmatpush1.msra.mxu0 0.0
        %4943 = vmatprep.subr.mxu0 0.0
        %4944 = vmatpush1.msra.mxu0 0.0
        %4945 = vmatprep.subr.mxu0 0.0
        %4946 = vmatpush1.msra.mxu0 0.0
        %4947 = vmatprep.subr.mxu0 0.0
        %4948 = vmatpush1.msra.mxu0 0.0
        %4949 = vmatprep.subr.mxu0 0.0
        %4950 = vmatpush1.msra.mxu0 0.0
        %4951 = vmatprep.subr.mxu0 0.0
        %4952 = vmatpush1.msra.mxu0 0.0
        %4953 = vmatprep.subr.mxu0 0.0
        %4954 = vmatpush1.msra.mxu0 0.0
        %4955 = vmatprep.subr.mxu0 0.0
        %4956 = vmatpush1.msra.mxu0 0.0
        %4957 = vmatprep.subr.mxu0 0.0
        %4958 = vmatpush1.msra.mxu0 0.0
        %4959 = vmatprep.subr.mxu0 0.0
        %4960 = vmatpush1.msra.mxu0 0.0
        %4961 = vmatprep.mubr.f32.mxu0 0.0
        %4962 = vmatmul.mubr.f32.gmra.mrb[0].mxu0 %v4823
        %v4963 = vpop.f32.mrb[0].mxu0
        %v4964 = vadd.f32 0.0, %v4963
        %v4965 = vpop.f32.mrb[0].mxu0
        %4966 = vmatprep.mubr.f32.mxu0 0.0
        %4967 = vmatmul.mubr.f32.gmra.mrb[0].mxu0 %v4826
        %v4968 = vpop.f32.mrb[0].mxu0
        %v4969 = vadd.f32 0.0, %v4968
        %v4970 = vpop.f32.mrb[0].mxu0
        %4971 = vmatprep.mubr.f32.mxu0 0.0
        %4972 = vmatmul.mubr.f32.gmra.mrb[0].mxu0 %v4829
        %v4973 = vpop.f32.mrb[0].mxu0
        %v4974 = vadd.f32 0.0, %v4973
        %v4975 = vpop.f32.mrb[0].mxu0
        %4976 = vmatprep.mubr.f32.mxu0 0.0
        %4977 = vmatmul.mubr.f32.gmra.mrb[0].mxu0 %v4832
        %v4978 = vpop.f32.mrb[0].mxu0
        %v4979 = vadd.f32 0.0, %v4978
        %v4980 = vpop.f32.mrb[0].mxu0
        %4981 = vmatprep.mubr.f32.mxu0 0.0
        %4982 = vmatmul.mubr.f32.gmra.mrb[0].mxu0 %v4835
        %v4983 = vpop.f32.mrb[0].mxu0
        %v4984 = vadd.f32 0.0, %v4983
        %v4985 = vpop.f32.mrb[0].mxu0
        %4986 = vmatprep.mubr.f32.mxu0 0.0
        %4987 = vmatmul.mubr.f32.gmra.mrb[0].mxu0 %v4838
        %v4988 = vpop.f32.mrb[0].mxu0
        %v4989 = vadd.f32 0.0, %v4988
        %v4990 = vpop.f32.mrb[0].mxu0
        %4991 = vmatprep.mubr.f32.mxu0 0.0
        %4992 = vmatmul.mubr.f32.gmra.mrb[0].mxu0 %v4841
        %v4993 = vpop.f32.mrb[0].mxu0
        %v4994 = vadd.f32 0.0, %v4993
        %v4995 = vpop.f32.mrb[0].mxu0
        %4996 = vmatprep.mubr.f32.mxu0 0.0
        %4997 = vmatmul.mubr.f32.gmra.mrb[0].mxu0 %v4844
        %v4998 = vpop.f32.mrb[0].mxu0
        %v4999 = vadd.f32 0.0, %v4998
        %v5000 = vpop.f32.mrb[0].mxu0
        %5001 = vmatprep.mubr.f32.mxu0 0.0
        %5002 = vmatmul.mubr.f32.gmra.mrb[0].mxu0 %v4847
        %v5003 = vpop.f32.mrb[0].mxu0
        %v5004 = vadd.f32 0.0, %v5003
        %v5005 = vpop.f32.mrb[0].mxu0
        %5006 = vmatprep.mubr.f32.mxu0 0.0
        %5007 = vmatmul.mubr.f32.gmra.mrb[0].mxu0 %v4850
        %v5008 = vpop.f32.mrb[0].mxu0
        %v5009 = vadd.f32 0.0, %v5008
        %v5010 = vpop.f32.mrb[0].mxu0
        %5011 = vmatprep.mubr.f32.mxu0 0.0
        %5012 = vmatmul.mubr.f32.gmra.mrb[0].mxu0 %v4853
        %v5013 = vpop.f32.mrb[0].mxu0
        %v5014 = vadd.f32 0.0, %v5013
        %v5015 = vpop.f32.mrb[0].mxu0
        %5016 = vmatprep.mubr.f32.mxu0 0.0
        %5017 = vmatmul.mubr.f32.gmra.mrb[0].mxu0 %v4856
        %v5018 = vpop.f32.mrb[0].mxu0
        %v5019 = vadd.f32 0.0, %v5018
        %v5020 = vpop.f32.mrb[0].mxu0
        %5021 = vmatprep.mubr.f32.mxu0 0.0
        %5022 = vmatmul.mubr.f32.gmra.mrb[0].mxu0 %v4859
        %v5023 = vpop.f32.mrb[0].mxu0
        %v5024 = vadd.f32 0.0, %v5023
        %v5025 = vpop.f32.mrb[0].mxu0
        %5026 = vmatprep.mubr.f32.mxu0 0.0
        %5027 = vmatmul.mubr.f32.gmra.mrb[0].mxu0 %v4862
        %v5028 = vpop.f32.mrb[0].mxu0
        %v5029 = vadd.f32 0.0, %v5028
        %v5030 = vpop.f32.mrb[0].mxu0
        %5031 = vmatprep.mubr.f32.mxu0 0.0
        %5032 = vmatmul.mubr.f32.gmra.mrb[0].mxu0 %v4865
        %v5033 = vpop.f32.mrb[0].mxu0
        %v5034 = vadd.f32 0.0, %v5033
        %v5035 = vpop.f32.mrb[0].mxu0
        %5036 = vmatprep.mubr.f32.mxu0 0.0
        %5037 = vmatmul.mubr.f32.gmra.mrb[0].mxu0 %v4868
        %v5038 = vpop.f32.mrb[0].mxu0
        %v5039 = vadd.f32 0.0, %v5038
        %v5040 = vpop.f32.mrb[0].mxu0
        %5041 = vmatprep.mubr.f32.mxu0 0.0
        %5042 = vmatmul.mubr.f32.gmra.mrb[0].mxu0 %v4871
        %v5043 = vpop.f32.mrb[0].mxu0
        %v5044 = vadd.f32 0.0, %v5043
        %v5045 = vpop.f32.mrb[0].mxu0
        %5046 = vmatprep.mubr.f32.mxu0 0.0
        %5047 = vmatmul.mubr.f32.gmra.mrb[0].mxu0 %v4874
        %v5048 = vpop.f32.mrb[0].mxu0
        %v5049 = vadd.f32 0.0, %v5048
        %v5050 = vpop.f32.mrb[0].mxu0
        %5051 = vmatprep.mubr.f32.mxu0 0.0
        %5052 = vmatmul.mubr.f32.gmra.mrb[0].mxu0 %v4877
        %v5053 = vpop.f32.mrb[0].mxu0
        %v5054 = vadd.f32 0.0, %v5053
        %v5055 = vpop.f32.mrb[0].mxu0
        %5056 = vmatprep.mubr.f32.mxu0 0.0
        %5057 = vmatmul.mubr.f32.gmra.mrb[0].mxu0 %v4880
        %v5058 = vpop.f32.mrb[0].mxu0
        %v5059 = vadd.f32 0.0, %v5058
        %v5060 = vpop.f32.mrb[0].mxu0
        %5061 = vmatprep.mubr.f32.mxu0 0.0
        %5062 = vmatmul.mubr.f32.gmra.mrb[0].mxu0 %v4883
        %v5063 = vpop.f32.mrb[0].mxu0
        %v5064 = vadd.f32 0.0, %v5063
        %v5065 = vpop.f32.mrb[0].mxu0
        %5066 = vmatprep.mubr.f32.mxu0 0.0
        %5067 = vmatmul.mubr.f32.gmra.mrb[0].mxu0 %v4886
        %v5068 = vpop.f32.mrb[0].mxu0
        %v5069 = vadd.f32 0.0, %v5068
        %v5070 = vpop.f32.mrb[0].mxu0
        %5071 = vmatprep.mubr.f32.mxu0 0.0
        %5072 = vmatmul.mubr.f32.gmra.mrb[0].mxu0 %v4889
        %v5073 = vpop.f32.mrb[0].mxu0
        %v5074 = vadd.f32 0.0, %v5073
        %v5075 = vpop.f32.mrb[0].mxu0
        %5076 = vmatprep.mubr.f32.mxu0 0.0
        %5077 = vmatmul.mubr.f32.gmra.mrb[0].mxu0 %v4892
        %v5078 = vpop.f32.mrb[0].mxu0
        %v5079 = vadd.f32 0.0, %v5078
        %v5080 = vpop.f32.mrb[0].mxu0
        %5081 = vdwg.mxu0
        %v5082 = vadd.f32 %v4600, %v4964
        %v5083 = vadd.f32 %v4601, %v4969
        %v5084 = vadd.f32 %v4602, %v4974
        %v5085 = vadd.f32 %v4603, %v4979
        %v5086 = vadd.f32 %v4604, %v4984
        %v5087 = vadd.f32 %v4605, %v4989
        %v5088 = vadd.f32 %v4606, %v4994
        %v5089 = vadd.f32 %v4607, %v4999
        %v5090 = vadd.f32 %v4608, %v5004
        %v5091 = vadd.f32 %v4609, %v5009
        %v5092 = vadd.f32 %v4610, %v5014
        %v5093 = vadd.f32 %v4611, %v5019
        %v5094 = vadd.f32 %v4612, %v5024
        %v5095 = vadd.f32 %v4613, %v5029
        %v5096 = vadd.f32 %v4614, %v5034
        %v5097 = vadd.f32 %v4615, %v5039
        %v5098 = vadd.f32 %v4616, %v5044
        %v5099 = vadd.f32 %v4617, %v5049
        %v5100 = vadd.f32 %v4618, %v5054
        %v5101 = vadd.f32 %v4619, %v5059
        %v5102 = vadd.f32 %v4620, %v5064
        %v5103 = vadd.f32 %v4621, %v5069
        %v5104 = vadd.f32 %v4622, %v5074
        %v5105 = vadd.f32 %v4623, %v5079
        %v5106 = vld [vmem:[%s362] sm:$0x1]
        %v5108 = vlaneseq
        %v5109 = vshrl.u32 %v5108, 7
        %v5110 = vsub.s32 0, %v5109
        %v5111 = vrot.slane %v5106, %v5110
        %v5113 = vadd.f32 %v5082, %v5111
        %v5114 = vadd.f32 %v5083, %v5111
        %v5115 = vadd.f32 %v5084, %v5111
        %v5116 = vadd.f32 %v5085, %v5111
        %v5117 = vadd.f32 %v5086, %v5111
        %v5118 = vadd.f32 %v5087, %v5111
        %v5119 = vadd.f32 %v5088, %v5111
        %v5120 = vadd.f32 %v5089, %v5111
        %v5121 = vadd.f32 %v5090, %v5111
        %v5122 = vadd.f32 %v5091, %v5111
        %v5123 = vadd.f32 %v5092, %v5111
        %v5124 = vadd.f32 %v5093, %v5111
        %v5125 = vadd.f32 %v5094, %v5111
        %v5126 = vadd.f32 %v5095, %v5111
        %v5127 = vadd.f32 %v5096, %v5111
        %v5128 = vadd.f32 %v5097, %v5111
        %v5129 = vadd.f32 %v5098, %v5111
        %v5130 = vadd.f32 %v5099, %v5111
        %v5131 = vadd.f32 %v5100, %v5111
        %v5132 = vadd.f32 %v5101, %v5111
        %v5133 = vadd.f32 %v5102, %v5111
        %v5134 = vadd.f32 %v5103, %v5111
        %v5135 = vadd.f32 %v5104, %v5111
        %v5136 = vadd.f32 %v5105, %v5111
        %v5137 = vtanh.pop %v5113
        %v5138 = vtanh.pop %v5114
        %v5139 = vtanh.pop %v5115
        %v5140 = vtanh.pop %v5116
        %v5141 = vtanh.pop %v5117
        %v5142 = vtanh.pop %v5118
        %v5143 = vtanh.pop %v5119
        %v5144 = vtanh.pop %v5120
        %v5145 = vtanh.pop %v5121
        %v5146 = vtanh.pop %v5122
        %v5147 = vtanh.pop %v5123
        %v5148 = vtanh.pop %v5124
        %v5149 = vtanh.pop %v5125
        %v5150 = vtanh.pop %v5126
        %v5151 = vtanh.pop %v5127
        %v5152 = vtanh.pop %v5128
        %v5153 = vtanh.pop %v5129
        %v5154 = vtanh.pop %v5130
        %v5155 = vtanh.pop %v5131
        %v5156 = vtanh.pop %v5132
        %v5157 = vtanh.pop %v5133
        %v5158 = vtanh.pop %v5134
        %v5159 = vtanh.pop %v5135
        %v5160 = vtanh.pop %v5136
        %5161 = vst.msk [vmem:[#allocation2 + $0x10] sm:$0xff] %vm445, %v5137
        %5162 = vst.msk [vmem:[#allocation2 + $0x18] sm:$0xff] %vm445, %v5138
        %5163 = vst.msk [vmem:[#allocation2 + $0x20] sm:$0xff] %vm445, %v5139
        %5164 = vst.msk [vmem:[#allocation2 + $0x28] sm:$0xff] %vm445, %v5140
        %5165 = vst.msk [vmem:[#allocation2 + $0x30] sm:$0xff] %vm445, %v5141
        %5166 = vst.msk [vmem:[#allocation2 + $0x38] sm:$0xff] %vm445, %v5142
        %5167 = vst.msk [vmem:[#allocation2 + $0x40] sm:$0xff] %vm445, %v5143
        %5168 = vst.msk [vmem:[#allocation2 + $0x48] sm:$0xff] %vm445, %v5144
        %5169 = vst.msk [vmem:[#allocation2 + $0x50] sm:$0xff] %vm445, %v5145
        %5170 = vst.msk [vmem:[#allocation2 + $0x58] sm:$0xff] %vm445, %v5146
        %5171 = vst.msk [vmem:[#allocation2 + $0x60] sm:$0xff] %vm445, %v5147
        %5172 = vst.msk [vmem:[#allocation2 + $0x68] sm:$0xff] %vm445, %v5148
        %5173 = vst.msk [vmem:[#allocation2 + $0x70] sm:$0xff] %vm445, %v5149
        %5174 = vst.msk [vmem:[#allocation2 + $0x78] sm:$0xff] %vm445, %v5150
        %5175 = vst.msk [vmem:[#allocation2 + $0x80] sm:$0xff] %vm445, %v5151
        %5176 = vst.msk [vmem:[#allocation2 + $0x88] sm:$0xff] %vm445, %v5152
        %5177 = vst.msk [vmem:[#allocation2 + $0x90] sm:$0xff] %vm445, %v5153
        %5178 = vst.msk [vmem:[#allocation2 + $0x98] sm:$0xff] %vm445, %v5154
        %5179 = vst.msk [vmem:[#allocation2 + $0xa0] sm:$0xff] %vm445, %v5155
        %5180 = vst.msk [vmem:[#allocation2 + $0xa8] sm:$0xff] %vm445, %v5156
        %5181 = vst.msk [vmem:[#allocation2 + $0xb0] sm:$0xff] %vm445, %v5157
        %5182 = vst.msk [vmem:[#allocation2 + $0xb8] sm:$0xff] %vm445, %v5158
        %5183 = vst.msk [vmem:[#allocation2 + $0xc0] sm:$0xff] %vm445, %v5159
        %5184 = vst.msk [vmem:[#allocation2 + $0xc8] sm:$0xff] %vm445, %v5160
        %v5185 = vld [vmem:[#allocation2 + $0x7] sm:$0xff]
        %v5186 = vld [vmem:[#allocation2 + $0xf] sm:$0xff]
        %v5187 = vld [vmem:[#allocation2 + $0x17] sm:$0xff]
        %v5188 = vld [vmem:[#allocation2 + $0x1f] sm:$0xff]
        %v5189 = vld [vmem:[#allocation2 + $0x27] sm:$0xff]
        %v5190 = vld [vmem:[#allocation2 + $0x2f] sm:$0xff]
        %v5191 = vld [vmem:[#allocation2 + $0x37] sm:$0xff]
        %v5192 = vld [vmem:[#allocation2 + $0x3f] sm:$0xff]
        %v5193 = vld [vmem:[#allocation2 + $0x47] sm:$0xff]
        %v5194 = vld [vmem:[#allocation2 + $0x4f] sm:$0xff]
        %v5195 = vld [vmem:[#allocation2 + $0x57] sm:$0xff]
        %v5196 = vld [vmem:[#allocation2 + $0x5f] sm:$0xff]
        %v5197 = vld [vmem:[#allocation2 + $0x67] sm:$0xff]
        %v5198 = vld [vmem:[#allocation2 + $0x6f] sm:$0xff]
        %v5199 = vld [vmem:[#allocation2 + $0x77] sm:$0xff]
        %v5200 = vld [vmem:[#allocation2 + $0x7f] sm:$0xff]
        %v5201 = vld [vmem:[#allocation2 + $0x87] sm:$0xff]
        %v5202 = vld [vmem:[#allocation2 + $0x8f] sm:$0xff]
        %v5203 = vld [vmem:[#allocation2 + $0x97] sm:$0xff]
        %v5204 = vld [vmem:[#allocation2 + $0x9f] sm:$0xff]
        %v5205 = vld [vmem:[#allocation2 + $0xa7] sm:$0xff]
        %v5206 = vld [vmem:[#allocation2 + $0xaf] sm:$0xff]
        %v5207 = vld [vmem:[#allocation2 + $0xb7] sm:$0xff]
        %v5208 = vld [vmem:[#allocation2 + $0xbf] sm:$0xff]
        %v5209 = vld [vmem:[%s0] sm:$0xff]
        %v5210 = vld [vmem:[%s0 + $0x8] sm:$0xff]
        %v5211 = vld [vmem:[%s0 + $0x10] sm:$0xff]
        %v5212 = vld [vmem:[%s0 + $0x18] sm:$0xff]
        %v5213 = vld [vmem:[%s0 + $0x20] sm:$0xff]
        %v5214 = vld [vmem:[%s0 + $0x28] sm:$0xff]
        %v5215 = vld [vmem:[%s0 + $0x30] sm:$0xff]
        %v5216 = vld [vmem:[%s0 + $0x38] sm:$0xff]
        %v5217 = vld [vmem:[%s0 + $0x40] sm:$0xff]
        %v5218 = vld [vmem:[%s0 + $0x48] sm:$0xff]
        %v5219 = vld [vmem:[%s0 + $0x50] sm:$0xff]
        %v5220 = vld [vmem:[%s0 + $0x58] sm:$0xff]
        %v5221 = vld [vmem:[%s0 + $0x60] sm:$0xff]
        %v5222 = vld [vmem:[%s0 + $0x68] sm:$0xff]
        %v5223 = vld [vmem:[%s0 + $0x70] sm:$0xff]
        %v5224 = vld [vmem:[%s0 + $0x78] sm:$0xff]
        %v5225 = vld [vmem:[%s0 + $0x80] sm:$0xff]
        %v5226 = vld [vmem:[%s0 + $0x88] sm:$0xff]
        %v5227 = vld [vmem:[%s0 + $0x90] sm:$0xff]
        %v5228 = vld [vmem:[%s0 + $0x98] sm:$0xff]
        %v5229 = vld [vmem:[%s0 + $0xa0] sm:$0xff]
        %v5230 = vld [vmem:[%s0 + $0xa8] sm:$0xff]
        %v5231 = vld [vmem:[%s0 + $0xb0] sm:$0xff]
        %v5232 = vld [vmem:[%s0 + $0xb8] sm:$0xff]
        %5234 = vset.pattern.permute.xlu0 0
        %5235 = vperm.xlu0 %5234, %v5209
        %v5236 = vpop.permute.xlu0 %5235
        %5239 = vset.pattern.permute.xlu0 0
        %5240 = vperm.xlu0 %5239, %v5210
        %v5241 = vpop.permute.xlu0 %5240
        %5244 = vset.pattern.permute.xlu0 0
        %5245 = vperm.xlu0 %5244, %v5211
        %v5246 = vpop.permute.xlu0 %5245
        %5249 = vset.pattern.permute.xlu0 0
        %5250 = vperm.xlu0 %5249, %v5212
        %v5251 = vpop.permute.xlu0 %5250
        %5254 = vset.pattern.permute.xlu0 0
        %5255 = vperm.xlu0 %5254, %v5213
        %v5256 = vpop.permute.xlu0 %5255
        %5259 = vset.pattern.permute.xlu0 0
        %5260 = vperm.xlu0 %5259, %v5214
        %v5261 = vpop.permute.xlu0 %5260
        %5264 = vset.pattern.permute.xlu0 0
        %5265 = vperm.xlu0 %5264, %v5215
        %v5266 = vpop.permute.xlu0 %5265
        %5269 = vset.pattern.permute.xlu0 0
        %5270 = vperm.xlu0 %5269, %v5216
        %v5271 = vpop.permute.xlu0 %5270
        %5274 = vset.pattern.permute.xlu0 0
        %5275 = vperm.xlu0 %5274, %v5217
        %v5276 = vpop.permute.xlu0 %5275
        %5279 = vset.pattern.permute.xlu0 0
        %5280 = vperm.xlu0 %5279, %v5218
        %v5281 = vpop.permute.xlu0 %5280
        %5284 = vset.pattern.permute.xlu0 0
        %5285 = vperm.xlu0 %5284, %v5219
        %v5286 = vpop.permute.xlu0 %5285
        %5289 = vset.pattern.permute.xlu0 0
        %5290 = vperm.xlu0 %5289, %v5220
        %v5291 = vpop.permute.xlu0 %5290
        %5294 = vset.pattern.permute.xlu0 0
        %5295 = vperm.xlu0 %5294, %v5221
        %v5296 = vpop.permute.xlu0 %5295
        %5299 = vset.pattern.permute.xlu0 0
        %5300 = vperm.xlu0 %5299, %v5222
        %v5301 = vpop.permute.xlu0 %5300
        %5304 = vset.pattern.permute.xlu0 0
        %5305 = vperm.xlu0 %5304, %v5223
        %v5306 = vpop.permute.xlu0 %5305
        %5309 = vset.pattern.permute.xlu0 0
        %5310 = vperm.xlu0 %5309, %v5224
        %v5311 = vpop.permute.xlu0 %5310
        %5314 = vset.pattern.permute.xlu0 0
        %5315 = vperm.xlu0 %5314, %v5225
        %v5316 = vpop.permute.xlu0 %5315
        %5319 = vset.pattern.permute.xlu0 0
        %5320 = vperm.xlu0 %5319, %v5226
        %v5321 = vpop.permute.xlu0 %5320
        %5324 = vset.pattern.permute.xlu0 0
        %5325 = vperm.xlu0 %5324, %v5227
        %v5326 = vpop.permute.xlu0 %5325
        %5329 = vset.pattern.permute.xlu0 0
        %5330 = vperm.xlu0 %5329, %v5228
        %v5331 = vpop.permute.xlu0 %5330
        %5334 = vset.pattern.permute.xlu0 0
        %5335 = vperm.xlu0 %5334, %v5229
        %v5336 = vpop.permute.xlu0 %5335
        %5339 = vset.pattern.permute.xlu0 0
        %5340 = vperm.xlu0 %5339, %v5230
        %v5341 = vpop.permute.xlu0 %5340
        %5344 = vset.pattern.permute.xlu0 0
        %5345 = vperm.xlu0 %5344, %v5231
        %v5346 = vpop.permute.xlu0 %5345
        %5349 = vset.pattern.permute.xlu0 0
        %5350 = vperm.xlu0 %5349, %v5232
        %v5351 = vpop.permute.xlu0 %5350
        %v5353 = vmul.f32 %v5185, %v5236
        %v5354 = vmul.f32 %v5186, %v5241
        %v5355 = vmul.f32 %v5187, %v5246
        %v5356 = vmul.f32 %v5188, %v5251
        %v5357 = vmul.f32 %v5189, %v5256
        %v5358 = vmul.f32 %v5190, %v5261
        %v5359 = vmul.f32 %v5191, %v5266
        %v5360 = vmul.f32 %v5192, %v5271
        %v5361 = vmul.f32 %v5193, %v5276
        %v5362 = vmul.f32 %v5194, %v5281
        %v5363 = vmul.f32 %v5195, %v5286
        %v5364 = vmul.f32 %v5196, %v5291
        %v5365 = vmul.f32 %v5197, %v5296
        %v5366 = vmul.f32 %v5198, %v5301
        %v5367 = vmul.f32 %v5199, %v5306
        %v5368 = vmul.f32 %v5200, %v5311
        %v5369 = vmul.f32 %v5201, %v5316
        %v5370 = vmul.f32 %v5202, %v5321
        %v5371 = vmul.f32 %v5203, %v5326
        %v5372 = vmul.f32 %v5204, %v5331
        %v5373 = vmul.f32 %v5205, %v5336
        %v5374 = vmul.f32 %v5206, %v5341
        %v5375 = vmul.f32 %v5207, %v5346
        %v5376 = vmul.f32 %v5208, %v5351
        %v5377 = vld [vmem:[%s439] sm:$0xff]
        %v5378 = vld [vmem:[%s439 + $0x8] sm:$0xff]
        %v5379 = vld [vmem:[%s439 + $0x10] sm:$0xff]
        %v5380 = vld [vmem:[%s439 + $0x18] sm:$0x1]
        %v5381 = vld [vmem:[#allocation2 + $0x8] sm:$0xff]
        %v5382 = vld [vmem:[#allocation2 + $0x10] sm:$0xff]
        %v5383 = vld [vmem:[#allocation2 + $0x18] sm:$0xff]
        %v5384 = vld [vmem:[#allocation2 + $0x20] sm:$0xff]
        %v5385 = vld [vmem:[#allocation2 + $0x28] sm:$0xff]
        %v5386 = vld [vmem:[#allocation2 + $0x30] sm:$0xff]
        %v5387 = vld [vmem:[#allocation2 + $0x38] sm:$0xff]
        %v5388 = vld [vmem:[#allocation2 + $0x40] sm:$0xff]
        %v5389 = vld [vmem:[#allocation2 + $0x48] sm:$0xff]
        %v5390 = vld [vmem:[#allocation2 + $0x50] sm:$0xff]
        %v5391 = vld [vmem:[#allocation2 + $0x58] sm:$0xff]
        %v5392 = vld [vmem:[#allocation2 + $0x60] sm:$0xff]
        %v5393 = vld [vmem:[#allocation2 + $0x68] sm:$0xff]
        %v5394 = vld [vmem:[#allocation2 + $0x70] sm:$0xff]
        %v5395 = vld [vmem:[#allocation2 + $0x78] sm:$0xff]
        %v5396 = vld [vmem:[#allocation2 + $0x80] sm:$0xff]
        %v5397 = vld [vmem:[#allocation2 + $0x88] sm:$0xff]
        %v5398 = vld [vmem:[#allocation2 + $0x90] sm:$0xff]
        %v5399 = vld [vmem:[#allocation2 + $0x98] sm:$0xff]
        %v5400 = vld [vmem:[#allocation2 + $0xa0] sm:$0xff]
        %v5401 = vld [vmem:[#allocation2 + $0xa8] sm:$0xff]
        %v5402 = vld [vmem:[#allocation2 + $0xb0] sm:$0xff]
        %v5403 = vld [vmem:[#allocation2 + $0xb8] sm:$0xff]
        %v5404 = vld [vmem:[#allocation2 + $0xc0] sm:$0xff]
        %v5405 = vld [vmem:[%s1038] sm:$0xff]
        %v5406 = vld [vmem:[%s1038 + $0x8] sm:$0xff]
        %v5407 = vld [vmem:[%s1038 + $0x10] sm:$0xff]
        %v5408 = vld [vmem:[%s1038 + $0x18] sm:$0xff]
        %v5409 = vld [vmem:[%s1038 + $0x20] sm:$0xff]
        %v5410 = vld [vmem:[%s1038 + $0x28] sm:$0xff]
        %v5411 = vld [vmem:[%s1038 + $0x30] sm:$0xff]
        %v5412 = vld [vmem:[%s1038 + $0x38] sm:$0xff]
        %v5413 = vld [vmem:[%s1038 + $0x40] sm:$0xff]
        %v5414 = vld [vmem:[%s1038 + $0x48] sm:$0xff]
        %v5415 = vld [vmem:[%s1038 + $0x50] sm:$0xff]
        %v5416 = vld [vmem:[%s1038 + $0x58] sm:$0xff]
        %v5417 = vld [vmem:[%s1038 + $0x60] sm:$0xff]
        %v5418 = vld [vmem:[%s1038 + $0x68] sm:$0xff]
        %v5419 = vld [vmem:[%s1038 + $0x70] sm:$0xff]
        %v5420 = vld [vmem:[%s1038 + $0x78] sm:$0xff]
        %v5421 = vld [vmem:[%s1038 + $0x80] sm:$0xff]
        %v5422 = vld [vmem:[%s1038 + $0x88] sm:$0xff]
        %v5423 = vld [vmem:[%s1038 + $0x90] sm:$0xff]
        %v5424 = vld [vmem:[%s1038 + $0x98] sm:$0xff]
        %v5425 = vld [vmem:[%s1038 + $0xa0] sm:$0xff]
        %v5426 = vld [vmem:[%s1038 + $0xa8] sm:$0xff]
        %v5427 = vld [vmem:[%s1038 + $0xb0] sm:$0xff]
        %v5428 = vld [vmem:[%s1038 + $0xb8] sm:$0xff]
        %5430 = vset.pattern.permute.xlu0 0
        %5431 = vperm.xlu0 %5430, %v5405
        %v5432 = vpop.permute.xlu0 %5431
        %5435 = vset.pattern.permute.xlu0 0
        %5436 = vperm.xlu0 %5435, %v5406
        %v5437 = vpop.permute.xlu0 %5436
        %5440 = vset.pattern.permute.xlu0 0
        %5441 = vperm.xlu0 %5440, %v5407
        %v5442 = vpop.permute.xlu0 %5441
        %5445 = vset.pattern.permute.xlu0 0
        %5446 = vperm.xlu0 %5445, %v5408
        %v5447 = vpop.permute.xlu0 %5446
        %5450 = vset.pattern.permute.xlu0 0
        %5451 = vperm.xlu0 %5450, %v5409
        %v5452 = vpop.permute.xlu0 %5451
        %5455 = vset.pattern.permute.xlu0 0
        %5456 = vperm.xlu0 %5455, %v5410
        %v5457 = vpop.permute.xlu0 %5456
        %5460 = vset.pattern.permute.xlu0 0
        %5461 = vperm.xlu0 %5460, %v5411
        %v5462 = vpop.permute.xlu0 %5461
        %5465 = vset.pattern.permute.xlu0 0
        %5466 = vperm.xlu0 %5465, %v5412
        %v5467 = vpop.permute.xlu0 %5466
        %5470 = vset.pattern.permute.xlu0 0
        %5471 = vperm.xlu0 %5470, %v5413
        %v5472 = vpop.permute.xlu0 %5471
        %5475 = vset.pattern.permute.xlu0 0
        %5476 = vperm.xlu0 %5475, %v5414
        %v5477 = vpop.permute.xlu0 %5476
        %5480 = vset.pattern.permute.xlu0 0
        %5481 = vperm.xlu0 %5480, %v5415
        %v5482 = vpop.permute.xlu0 %5481
        %5485 = vset.pattern.permute.xlu0 0
        %5486 = vperm.xlu0 %5485, %v5416
        %v5487 = vpop.permute.xlu0 %5486
        %5490 = vset.pattern.permute.xlu0 0
        %5491 = vperm.xlu0 %5490, %v5417
        %v5492 = vpop.permute.xlu0 %5491
        %5495 = vset.pattern.permute.xlu0 0
        %5496 = vperm.xlu0 %5495, %v5418
        %v5497 = vpop.permute.xlu0 %5496
        %5500 = vset.pattern.permute.xlu0 0
        %5501 = vperm.xlu0 %5500, %v5419
        %v5502 = vpop.permute.xlu0 %5501
        %5505 = vset.pattern.permute.xlu0 0
        %5506 = vperm.xlu0 %5505, %v5420
        %v5507 = vpop.permute.xlu0 %5506
        %5510 = vset.pattern.permute.xlu0 0
        %5511 = vperm.xlu0 %5510, %v5421
        %v5512 = vpop.permute.xlu0 %5511
        %5515 = vset.pattern.permute.xlu0 0
        %5516 = vperm.xlu0 %5515, %v5422
        %v5517 = vpop.permute.xlu0 %5516
        %5520 = vset.pattern.permute.xlu0 0
        %5521 = vperm.xlu0 %5520, %v5423
        %v5522 = vpop.permute.xlu0 %5521
        %5525 = vset.pattern.permute.xlu0 0
        %5526 = vperm.xlu0 %5525, %v5424
        %v5527 = vpop.permute.xlu0 %5526
        %5530 = vset.pattern.permute.xlu0 0
        %5531 = vperm.xlu0 %5530, %v5425
        %v5532 = vpop.permute.xlu0 %5531
        %5535 = vset.pattern.permute.xlu0 0
        %5536 = vperm.xlu0 %5535, %v5426
        %v5537 = vpop.permute.xlu0 %5536
        %5540 = vset.pattern.permute.xlu0 0
        %5541 = vperm.xlu0 %5540, %v5427
        %v5542 = vpop.permute.xlu0 %5541
        %5545 = vset.pattern.permute.xlu0 0
        %5546 = vperm.xlu0 %5545, %v5428
        %v5547 = vpop.permute.xlu0 %5546
        %v5549 = vmul.f32 %v5381, %v5432
        %v5550 = vmul.f32 %v5382, %v5437
        %v5551 = vmul.f32 %v5383, %v5442
        %v5552 = vmul.f32 %v5384, %v5447
        %v5553 = vmul.f32 %v5385, %v5452
        %v5554 = vmul.f32 %v5386, %v5457
        %v5555 = vmul.f32 %v5387, %v5462
        %v5556 = vmul.f32 %v5388, %v5467
        %v5557 = vmul.f32 %v5389, %v5472
        %v5558 = vmul.f32 %v5390, %v5477
        %v5559 = vmul.f32 %v5391, %v5482
        %v5560 = vmul.f32 %v5392, %v5487
        %v5561 = vmul.f32 %v5393, %v5492
        %v5562 = vmul.f32 %v5394, %v5497
        %v5563 = vmul.f32 %v5395, %v5502
        %v5564 = vmul.f32 %v5396, %v5507
        %v5565 = vmul.f32 %v5397, %v5512
        %v5566 = vmul.f32 %v5398, %v5517
        %v5567 = vmul.f32 %v5399, %v5522
        %v5568 = vmul.f32 %v5400, %v5527
        %v5569 = vmul.f32 %v5401, %v5532
        %v5570 = vmul.f32 %v5402, %v5537
        %v5571 = vmul.f32 %v5403, %v5542
        %v5572 = vmul.f32 %v5404, %v5547
        %s5573 = scalar_lea.vmem %s439, 32
        %v5574 = vld [vmem:[%s5573] sm:$0xff]
        %v5575 = vld [vmem:[%s5573 + $0x8] sm:$0xff]
        %v5576 = vld [vmem:[%s5573 + $0x10] sm:$0xff]
        %v5577 = vld [vmem:[%s5573 + $0x18] sm:$0x1]
        %v5579 = vsel %vm445, %v5549, 0
        %v5582 = vsel %vm445, %v5550, 0
        %v5585 = vsel %vm445, %v5551, 0
        %v5588 = vsel %vm445, %v5552, 0
        %v5591 = vsel %vm445, %v5553, 0
        %v5594 = vsel %vm445, %v5554, 0
        %v5597 = vsel %vm445, %v5555, 0
        %v5600 = vsel %vm445, %v5556, 0
        %v5603 = vsel %vm445, %v5557, 0
        %v5606 = vsel %vm445, %v5558, 0
        %v5609 = vsel %vm445, %v5559, 0
        %v5612 = vsel %vm445, %v5560, 0
        %v5615 = vsel %vm445, %v5561, 0
        %v5618 = vsel %vm445, %v5562, 0
        %v5621 = vsel %vm445, %v5563, 0
        %v5624 = vsel %vm445, %v5564, 0
        %v5627 = vsel %vm445, %v5565, 0
        %v5630 = vsel %vm445, %v5566, 0
        %v5633 = vsel %vm445, %v5567, 0
        %v5636 = vsel %vm445, %v5568, 0
        %v5639 = vsel %vm445, %v5569, 0
        %v5642 = vsel %vm445, %v5570, 0
        %v5645 = vsel %vm445, %v5571, 0
        %v5648 = vsel %vm445, %v5572, 0
        %v5651 = vsel %vm581, %v5577, 0
        %5653 = vmatprep.subr.mxu0 0.0
        %5654 = vmatpush1.msra.mxu0 %v5574
        %5655 = vmatprep.subr.mxu0 0.0
        %5656 = vmatpush1.msra.mxu0 %v5575
        %5657 = vmatprep.subr.mxu0 0.0
        %5658 = vmatpush1.msra.mxu0 %v5576
        %5659 = vmatprep.subr.mxu0 0.0
        %5660 = vmatpush1.msra.mxu0 %v5651
        %5661 = vmatprep.subr.mxu0 0.0
        %5662 = vmatpush1.msra.mxu0 0.0
        %5663 = vmatprep.subr.mxu0 0.0
        %5664 = vmatpush1.msra.mxu0 0.0
        %5665 = vmatprep.subr.mxu0 0.0
        %5666 = vmatpush1.msra.mxu0 0.0
        %5667 = vmatprep.subr.mxu0 0.0
        %5668 = vmatpush1.msra.mxu0 0.0
        %5669 = vmatprep.subr.mxu0 0.0
        %5670 = vmatpush1.msra.mxu0 0.0
        %5671 = vmatprep.subr.mxu0 0.0
        %5672 = vmatpush1.msra.mxu0 0.0
        %5673 = vmatprep.subr.mxu0 0.0
        %5674 = vmatpush1.msra.mxu0 0.0
        %5675 = vmatprep.subr.mxu0 0.0
        %5676 = vmatpush1.msra.mxu0 0.0
        %5677 = vmatprep.subr.mxu0 0.0
        %5678 = vmatpush1.msra.mxu0 0.0
        %5679 = vmatprep.subr.mxu0 0.0
        %5680 = vmatpush1.msra.mxu0 0.0
        %5681 = vmatprep.subr.mxu0 0.0
        %5682 = vmatpush1.msra.mxu0 0.0
        %5683 = vmatprep.subr.mxu0 0.0
        %5684 = vmatpush1.msra.mxu0 0.0
        %5685 = vmatprep.subr.mxu0 0.0
        %5686 = vmatpush1.msra.mxu0 0.0
        %5687 = vmatprep.subr.mxu0 0.0
        %5688 = vmatpush1.msra.mxu0 0.0
        %5689 = vmatprep.subr.mxu0 0.0
        %5690 = vmatpush1.msra.mxu0 0.0
        %5691 = vmatprep.subr.mxu0 0.0
        %5692 = vmatpush1.msra.mxu0 0.0
        %5693 = vmatprep.subr.mxu0 0.0
        %5694 = vmatpush1.msra.mxu0 0.0
        %5695 = vmatprep.subr.mxu0 0.0
        %5696 = vmatpush1.msra.mxu0 0.0
        %5697 = vmatprep.subr.mxu0 0.0
        %5698 = vmatpush1.msra.mxu0 0.0
        %5699 = vmatprep.subr.mxu0 0.0
        %5700 = vmatpush1.msra.mxu0 0.0
        %5701 = vmatprep.subr.mxu0 0.0
        %5702 = vmatpush1.msra.mxu0 0.0
        %5703 = vmatprep.subr.mxu0 0.0
        %5704 = vmatpush1.msra.mxu0 0.0
        %5705 = vmatprep.subr.mxu0 0.0
        %5706 = vmatpush1.msra.mxu0 0.0
        %5707 = vmatprep.subr.mxu0 0.0
        %5708 = vmatpush1.msra.mxu0 0.0
        %5709 = vmatprep.subr.mxu0 0.0
        %5710 = vmatpush1.msra.mxu0 0.0
        %5711 = vmatprep.subr.mxu0 0.0
        %5712 = vmatpush1.msra.mxu0 0.0
        %5713 = vmatprep.subr.mxu0 0.0
        %5714 = vmatpush1.msra.mxu0 0.0
        %5715 = vmatprep.subr.mxu0 0.0
        %5716 = vmatpush1.msra.mxu0 0.0
        %5717 = vmatprep.mubr.f32.mxu0 0.0
        %5718 = vmatmul.mubr.f32.gmra.mrb[0].mxu0 %v5579
        %v5719 = vpop.f32.mrb[0].mxu0
        %v5720 = vadd.f32 0.0, %v5719
        %v5721 = vpop.f32.mrb[0].mxu0
        %5722 = vmatprep.mubr.f32.mxu0 0.0
        %5723 = vmatmul.mubr.f32.gmra.mrb[0].mxu0 %v5582
        %v5724 = vpop.f32.mrb[0].mxu0
        %v5725 = vadd.f32 0.0, %v5724
        %v5726 = vpop.f32.mrb[0].mxu0
        %5727 = vmatprep.mubr.f32.mxu0 0.0
        %5728 = vmatmul.mubr.f32.gmra.mrb[0].mxu0 %v5585
        %v5729 = vpop.f32.mrb[0].mxu0
        %v5730 = vadd.f32 0.0, %v5729
        %v5731 = vpop.f32.mrb[0].mxu0
        %5732 = vmatprep.mubr.f32.mxu0 0.0
        %5733 = vmatmul.mubr.f32.gmra.mrb[0].mxu0 %v5588
        %v5734 = vpop.f32.mrb[0].mxu0
        %v5735 = vadd.f32 0.0, %v5734
        %v5736 = vpop.f32.mrb[0].mxu0
        %5737 = vmatprep.mubr.f32.mxu0 0.0
        %5738 = vmatmul.mubr.f32.gmra.mrb[0].mxu0 %v5591
        %v5739 = vpop.f32.mrb[0].mxu0
        %v5740 = vadd.f32 0.0, %v5739
        %v5741 = vpop.f32.mrb[0].mxu0
        %5742 = vmatprep.mubr.f32.mxu0 0.0
        %5743 = vmatmul.mubr.f32.gmra.mrb[0].mxu0 %v5594
        %v5744 = vpop.f32.mrb[0].mxu0
        %v5745 = vadd.f32 0.0, %v5744
        %v5746 = vpop.f32.mrb[0].mxu0
        %5747 = vmatprep.mubr.f32.mxu0 0.0
        %5748 = vmatmul.mubr.f32.gmra.mrb[0].mxu0 %v5597
        %v5749 = vpop.f32.mrb[0].mxu0
        %v5750 = vadd.f32 0.0, %v5749
        %v5751 = vpop.f32.mrb[0].mxu0
        %5752 = vmatprep.mubr.f32.mxu0 0.0
        %5753 = vmatmul.mubr.f32.gmra.mrb[0].mxu0 %v5600
        %v5754 = vpop.f32.mrb[0].mxu0
        %v5755 = vadd.f32 0.0, %v5754
        %v5756 = vpop.f32.mrb[0].mxu0
        %5757 = vmatprep.mubr.f32.mxu0 0.0
        %5758 = vmatmul.mubr.f32.gmra.mrb[0].mxu0 %v5603
        %v5759 = vpop.f32.mrb[0].mxu0
        %v5760 = vadd.f32 0.0, %v5759
        %v5761 = vpop.f32.mrb[0].mxu0
        %5762 = vmatprep.mubr.f32.mxu0 0.0
        %5763 = vmatmul.mubr.f32.gmra.mrb[0].mxu0 %v5606
        %v5764 = vpop.f32.mrb[0].mxu0
        %v5765 = vadd.f32 0.0, %v5764
        %v5766 = vpop.f32.mrb[0].mxu0
        %5767 = vmatprep.mubr.f32.mxu0 0.0
        %5768 = vmatmul.mubr.f32.gmra.mrb[0].mxu0 %v5609
        %v5769 = vpop.f32.mrb[0].mxu0
        %v5770 = vadd.f32 0.0, %v5769
        %v5771 = vpop.f32.mrb[0].mxu0
        %5772 = vmatprep.mubr.f32.mxu0 0.0
        %5773 = vmatmul.mubr.f32.gmra.mrb[0].mxu0 %v5612
        %v5774 = vpop.f32.mrb[0].mxu0
        %v5775 = vadd.f32 0.0, %v5774
        %v5776 = vpop.f32.mrb[0].mxu0
        %5777 = vmatprep.mubr.f32.mxu0 0.0
        %5778 = vmatmul.mubr.f32.gmra.mrb[0].mxu0 %v5615
        %v5779 = vpop.f32.mrb[0].mxu0
        %v5780 = vadd.f32 0.0, %v5779
        %v5781 = vpop.f32.mrb[0].mxu0
        %5782 = vmatprep.mubr.f32.mxu0 0.0
        %5783 = vmatmul.mubr.f32.gmra.mrb[0].mxu0 %v5618
        %v5784 = vpop.f32.mrb[0].mxu0
        %v5785 = vadd.f32 0.0, %v5784
        %v5786 = vpop.f32.mrb[0].mxu0
        %5787 = vmatprep.mubr.f32.mxu0 0.0
        %5788 = vmatmul.mubr.f32.gmra.mrb[0].mxu0 %v5621
        %v5789 = vpop.f32.mrb[0].mxu0
        %v5790 = vadd.f32 0.0, %v5789
        %v5791 = vpop.f32.mrb[0].mxu0
        %5792 = vmatprep.mubr.f32.mxu0 0.0
        %5793 = vmatmul.mubr.f32.gmra.mrb[0].mxu0 %v5624
        %v5794 = vpop.f32.mrb[0].mxu0
        %v5795 = vadd.f32 0.0, %v5794
        %v5796 = vpop.f32.mrb[0].mxu0
        %5797 = vmatprep.mubr.f32.mxu0 0.0
        %5798 = vmatmul.mubr.f32.gmra.mrb[0].mxu0 %v5627
        %v5799 = vpop.f32.mrb[0].mxu0
        %v5800 = vadd.f32 0.0, %v5799
        %v5801 = vpop.f32.mrb[0].mxu0
        %5802 = vmatprep.mubr.f32.mxu0 0.0
        %5803 = vmatmul.mubr.f32.gmra.mrb[0].mxu0 %v5630
        %v5804 = vpop.f32.mrb[0].mxu0
        %v5805 = vadd.f32 0.0, %v5804
        %v5806 = vpop.f32.mrb[0].mxu0
        %5807 = vmatprep.mubr.f32.mxu0 0.0
        %5808 = vmatmul.mubr.f32.gmra.mrb[0].mxu0 %v5633
        %v5809 = vpop.f32.mrb[0].mxu0
        %v5810 = vadd.f32 0.0, %v5809
        %v5811 = vpop.f32.mrb[0].mxu0
        %5812 = vmatprep.mubr.f32.mxu0 0.0
        %5813 = vmatmul.mubr.f32.gmra.mrb[0].mxu0 %v5636
        %v5814 = vpop.f32.mrb[0].mxu0
        %v5815 = vadd.f32 0.0, %v5814
        %v5816 = vpop.f32.mrb[0].mxu0
        %5817 = vmatprep.mubr.f32.mxu0 0.0
        %5818 = vmatmul.mubr.f32.gmra.mrb[0].mxu0 %v5639
        %v5819 = vpop.f32.mrb[0].mxu0
        %v5820 = vadd.f32 0.0, %v5819
        %v5821 = vpop.f32.mrb[0].mxu0
        %5822 = vmatprep.mubr.f32.mxu0 0.0
        %5823 = vmatmul.mubr.f32.gmra.mrb[0].mxu0 %v5642
        %v5824 = vpop.f32.mrb[0].mxu0
        %v5825 = vadd.f32 0.0, %v5824
        %v5826 = vpop.f32.mrb[0].mxu0
        %5827 = vmatprep.mubr.f32.mxu0 0.0
        %5828 = vmatmul.mubr.f32.gmra.mrb[0].mxu0 %v5645
        %v5829 = vpop.f32.mrb[0].mxu0
        %v5830 = vadd.f32 0.0, %v5829
        %v5831 = vpop.f32.mrb[0].mxu0
        %5832 = vmatprep.mubr.f32.mxu0 0.0
        %5833 = vmatmul.mubr.f32.gmra.mrb[0].mxu0 %v5648
        %v5834 = vpop.f32.mrb[0].mxu0
        %v5835 = vadd.f32 0.0, %v5834
        %v5836 = vpop.f32.mrb[0].mxu0
        %5837 = vdwg.mxu0
        %v5839 = vsel %vm445, %v5353, 0
        %v5842 = vsel %vm445, %v5354, 0
        %v5845 = vsel %vm445, %v5355, 0
        %v5848 = vsel %vm445, %v5356, 0
        %v5851 = vsel %vm445, %v5357, 0
        %v5854 = vsel %vm445, %v5358, 0
        %v5857 = vsel %vm445, %v5359, 0
        %v5860 = vsel %vm445, %v5360, 0
        %v5863 = vsel %vm445, %v5361, 0
        %v5866 = vsel %vm445, %v5362, 0
        %v5869 = vsel %vm445, %v5363, 0
        %v5872 = vsel %vm445, %v5364, 0
        %v5875 = vsel %vm445, %v5365, 0
        %v5878 = vsel %vm445, %v5366, 0
        %v5881 = vsel %vm445, %v5367, 0
        %v5884 = vsel %vm445, %v5368, 0
        %v5887 = vsel %vm445, %v5369, 0
        %v5890 = vsel %vm445, %v5370, 0
        %v5893 = vsel %vm445, %v5371, 0
        %v5896 = vsel %vm445, %v5372, 0
        %v5899 = vsel %vm445, %v5373, 0
        %v5902 = vsel %vm445, %v5374, 0
        %v5905 = vsel %vm445, %v5375, 0
        %v5908 = vsel %vm445, %v5376, 0
        %v5911 = vsel %vm581, %v5380, 0
        %5913 = vmatprep.subr.mxu0 0.0
        %5914 = vmatpush1.msra.mxu0 %v5377
        %5915 = vmatprep.subr.mxu0 0.0
        %5916 = vmatpush1.msra.mxu0 %v5378
        %5917 = vmatprep.subr.mxu0 0.0
        %5918 = vmatpush1.msra.mxu0 %v5379
        %5919 = vmatprep.subr.mxu0 0.0
        %5920 = vmatpush1.msra.mxu0 %v5911
        %5921 = vmatprep.subr.mxu0 0.0
        %5922 = vmatpush1.msra.mxu0 0.0
        %5923 = vmatprep.subr.mxu0 0.0
        %5924 = vmatpush1.msra.mxu0 0.0
        %5925 = vmatprep.subr.mxu0 0.0
        %5926 = vmatpush1.msra.mxu0 0.0
        %5927 = vmatprep.subr.mxu0 0.0
        %5928 = vmatpush1.msra.mxu0 0.0
        %5929 = vmatprep.subr.mxu0 0.0
        %5930 = vmatpush1.msra.mxu0 0.0
        %5931 = vmatprep.subr.mxu0 0.0
        %5932 = vmatpush1.msra.mxu0 0.0
        %5933 = vmatprep.subr.mxu0 0.0
        %5934 = vmatpush1.msra.mxu0 0.0
        %5935 = vmatprep.subr.mxu0 0.0
        %5936 = vmatpush1.msra.mxu0 0.0
        %5937 = vmatprep.subr.mxu0 0.0
        %5938 = vmatpush1.msra.mxu0 0.0
        %5939 = vmatprep.subr.mxu0 0.0
        %5940 = vmatpush1.msra.mxu0 0.0
        %5941 = vmatprep.subr.mxu0 0.0
        %5942 = vmatpush1.msra.mxu0 0.0
        %5943 = vmatprep.subr.mxu0 0.0
        %5944 = vmatpush1.msra.mxu0 0.0
        %5945 = vmatprep.subr.mxu0 0.0
        %5946 = vmatpush1.msra.mxu0 0.0
        %5947 = vmatprep.subr.mxu0 0.0
        %5948 = vmatpush1.msra.mxu0 0.0
        %5949 = vmatprep.subr.mxu0 0.0
        %5950 = vmatpush1.msra.mxu0 0.0
        %5951 = vmatprep.subr.mxu0 0.0
        %5952 = vmatpush1.msra.mxu0 0.0
        %5953 = vmatprep.subr.mxu0 0.0
        %5954 = vmatpush1.msra.mxu0 0.0
        %5955 = vmatprep.subr.mxu0 0.0
        %5956 = vmatpush1.msra.mxu0 0.0
        %5957 = vmatprep.subr.mxu0 0.0
        %5958 = vmatpush1.msra.mxu0 0.0
        %5959 = vmatprep.subr.mxu0 0.0
        %5960 = vmatpush1.msra.mxu0 0.0
        %5961 = vmatprep.subr.mxu0 0.0
        %5962 = vmatpush1.msra.mxu0 0.0
        %5963 = vmatprep.subr.mxu0 0.0
        %5964 = vmatpush1.msra.mxu0 0.0
        %5965 = vmatprep.subr.mxu0 0.0
        %5966 = vmatpush1.msra.mxu0 0.0
        %5967 = vmatprep.subr.mxu0 0.0
        %5968 = vmatpush1.msra.mxu0 0.0
        %5969 = vmatprep.subr.mxu0 0.0
        %5970 = vmatpush1.msra.mxu0 0.0
        %5971 = vmatprep.subr.mxu0 0.0
        %5972 = vmatpush1.msra.mxu0 0.0
        %5973 = vmatprep.subr.mxu0 0.0
        %5974 = vmatpush1.msra.mxu0 0.0
        %5975 = vmatprep.subr.mxu0 0.0
        %5976 = vmatpush1.msra.mxu0 0.0
        %5977 = vmatprep.mubr.f32.mxu0 0.0
        %5978 = vmatmul.mubr.f32.gmra.mrb[0].mxu0 %v5839
        %v5979 = vpop.f32.mrb[0].mxu0
        %v5980 = vadd.f32 %v5720, %v5979
        %v5981 = vpop.f32.mrb[0].mxu0
        %5982 = vmatprep.mubr.f32.mxu0 0.0
        %5983 = vmatmul.mubr.f32.gmra.mrb[0].mxu0 %v5842
        %v5984 = vpop.f32.mrb[0].mxu0
        %v5985 = vadd.f32 %v5725, %v5984
        %v5986 = vpop.f32.mrb[0].mxu0
        %5987 = vmatprep.mubr.f32.mxu0 0.0
        %5988 = vmatmul.mubr.f32.gmra.mrb[0].mxu0 %v5845
        %v5989 = vpop.f32.mrb[0].mxu0
        %v5990 = vadd.f32 %v5730, %v5989
        %v5991 = vpop.f32.mrb[0].mxu0
        %5992 = vmatprep.mubr.f32.mxu0 0.0
        %5993 = vmatmul.mubr.f32.gmra.mrb[0].mxu0 %v5848
        %v5994 = vpop.f32.mrb[0].mxu0
        %v5995 = vadd.f32 %v5735, %v5994
        %v5996 = vpop.f32.mrb[0].mxu0
        %5997 = vmatprep.mubr.f32.mxu0 0.0
        %5998 = vmatmul.mubr.f32.gmra.mrb[0].mxu0 %v5851
        %v5999 = vpop.f32.mrb[0].mxu0
        %v6000 = vadd.f32 %v5740, %v5999
        %v6001 = vpop.f32.mrb[0].mxu0
        %6002 = vmatprep.mubr.f32.mxu0 0.0
        %6003 = vmatmul.mubr.f32.gmra.mrb[0].mxu0 %v5854
        %v6004 = vpop.f32.mrb[0].mxu0
        %v6005 = vadd.f32 %v5745, %v6004
        %v6006 = vpop.f32.mrb[0].mxu0
        %6007 = vmatprep.mubr.f32.mxu0 0.0
        %6008 = vmatmul.mubr.f32.gmra.mrb[0].mxu0 %v5857
        %v6009 = vpop.f32.mrb[0].mxu0
        %v6010 = vadd.f32 %v5750, %v6009
        %v6011 = vpop.f32.mrb[0].mxu0
        %6012 = vmatprep.mubr.f32.mxu0 0.0
        %6013 = vmatmul.mubr.f32.gmra.mrb[0].mxu0 %v5860
        %v6014 = vpop.f32.mrb[0].mxu0
        %v6015 = vadd.f32 %v5755, %v6014
        %v6016 = vpop.f32.mrb[0].mxu0
        %6017 = vmatprep.mubr.f32.mxu0 0.0
        %6018 = vmatmul.mubr.f32.gmra.mrb[0].mxu0 %v5863
        %v6019 = vpop.f32.mrb[0].mxu0
        %v6020 = vadd.f32 %v5760, %v6019
        %v6021 = vpop.f32.mrb[0].mxu0
        %6022 = vmatprep.mubr.f32.mxu0 0.0
        %6023 = vmatmul.mubr.f32.gmra.mrb[0].mxu0 %v5866
        %v6024 = vpop.f32.mrb[0].mxu0
        %v6025 = vadd.f32 %v5765, %v6024
        %v6026 = vpop.f32.mrb[0].mxu0
        %6027 = vmatprep.mubr.f32.mxu0 0.0
        %6028 = vmatmul.mubr.f32.gmra.mrb[0].mxu0 %v5869
        %v6029 = vpop.f32.mrb[0].mxu0
        %v6030 = vadd.f32 %v5770, %v6029
        %v6031 = vpop.f32.mrb[0].mxu0
        %6032 = vmatprep.mubr.f32.mxu0 0.0
        %6033 = vmatmul.mubr.f32.gmra.mrb[0].mxu0 %v5872
        %v6034 = vpop.f32.mrb[0].mxu0
        %v6035 = vadd.f32 %v5775, %v6034
        %v6036 = vpop.f32.mrb[0].mxu0
        %6037 = vmatprep.mubr.f32.mxu0 0.0
        %6038 = vmatmul.mubr.f32.gmra.mrb[0].mxu0 %v5875
        %v6039 = vpop.f32.mrb[0].mxu0
        %v6040 = vadd.f32 %v5780, %v6039
        %v6041 = vpop.f32.mrb[0].mxu0
        %6042 = vmatprep.mubr.f32.mxu0 0.0
        %6043 = vmatmul.mubr.f32.gmra.mrb[0].mxu0 %v5878
        %v6044 = vpop.f32.mrb[0].mxu0
        %v6045 = vadd.f32 %v5785, %v6044
        %v6046 = vpop.f32.mrb[0].mxu0
        %6047 = vmatprep.mubr.f32.mxu0 0.0
        %6048 = vmatmul.mubr.f32.gmra.mrb[0].mxu0 %v5881
        %v6049 = vpop.f32.mrb[0].mxu0
        %v6050 = vadd.f32 %v5790, %v6049
        %v6051 = vpop.f32.mrb[0].mxu0
        %6052 = vmatprep.mubr.f32.mxu0 0.0
        %6053 = vmatmul.mubr.f32.gmra.mrb[0].mxu0 %v5884
        %v6054 = vpop.f32.mrb[0].mxu0
        %v6055 = vadd.f32 %v5795, %v6054
        %v6056 = vpop.f32.mrb[0].mxu0
        %6057 = vmatprep.mubr.f32.mxu0 0.0
        %6058 = vmatmul.mubr.f32.gmra.mrb[0].mxu0 %v5887
        %v6059 = vpop.f32.mrb[0].mxu0
        %v6060 = vadd.f32 %v5800, %v6059
        %v6061 = vpop.f32.mrb[0].mxu0
        %6062 = vmatprep.mubr.f32.mxu0 0.0
        %6063 = vmatmul.mubr.f32.gmra.mrb[0].mxu0 %v5890
        %v6064 = vpop.f32.mrb[0].mxu0
        %v6065 = vadd.f32 %v5805, %v6064
        %v6066 = vpop.f32.mrb[0].mxu0
        %6067 = vmatprep.mubr.f32.mxu0 0.0
        %6068 = vmatmul.mubr.f32.gmra.mrb[0].mxu0 %v5893
        %v6069 = vpop.f32.mrb[0].mxu0
        %v6070 = vadd.f32 %v5810, %v6069
        %v6071 = vpop.f32.mrb[0].mxu0
        %6072 = vmatprep.mubr.f32.mxu0 0.0
        %6073 = vmatmul.mubr.f32.gmra.mrb[0].mxu0 %v5896
        %v6074 = vpop.f32.mrb[0].mxu0
        %v6075 = vadd.f32 %v5815, %v6074
        %v6076 = vpop.f32.mrb[0].mxu0
        %6077 = vmatprep.mubr.f32.mxu0 0.0
        %6078 = vmatmul.mubr.f32.gmra.mrb[0].mxu0 %v5899
        %v6079 = vpop.f32.mrb[0].mxu0
        %v6080 = vadd.f32 %v5820, %v6079
        %v6081 = vpop.f32.mrb[0].mxu0
        %6082 = vmatprep.mubr.f32.mxu0 0.0
        %6083 = vmatmul.mubr.f32.gmra.mrb[0].mxu0 %v5902
        %v6084 = vpop.f32.mrb[0].mxu0
        %v6085 = vadd.f32 %v5825, %v6084
        %v6086 = vpop.f32.mrb[0].mxu0
        %6087 = vmatprep.mubr.f32.mxu0 0.0
        %6088 = vmatmul.mubr.f32.gmra.mrb[0].mxu0 %v5905
        %v6089 = vpop.f32.mrb[0].mxu0
        %v6090 = vadd.f32 %v5830, %v6089
        %v6091 = vpop.f32.mrb[0].mxu0
        %6092 = vmatprep.mubr.f32.mxu0 0.0
        %6093 = vmatmul.mubr.f32.gmra.mrb[0].mxu0 %v5908
        %v6094 = vpop.f32.mrb[0].mxu0
        %v6095 = vadd.f32 %v5835, %v6094
        %v6096 = vpop.f32.mrb[0].mxu0
        %6097 = vdwg.mxu0
        %v6098 = vld [vmem:[#allocation2 + $0x9] sm:$0xff]
        %v6099 = vld [vmem:[#allocation2 + $0x11] sm:$0xff]
        %v6100 = vld [vmem:[#allocation2 + $0x19] sm:$0xff]
        %v6101 = vld [vmem:[#allocation2 + $0x21] sm:$0xff]
        %v6102 = vld [vmem:[#allocation2 + $0x29] sm:$0xff]
        %v6103 = vld [vmem:[#allocation2 + $0x31] sm:$0xff]
        %v6104 = vld [vmem:[#allocation2 + $0x39] sm:$0xff]
        %v6105 = vld [vmem:[#allocation2 + $0x41] sm:$0xff]
        %v6106 = vld [vmem:[#allocation2 + $0x49] sm:$0xff]
        %v6107 = vld [vmem:[#allocation2 + $0x51] sm:$0xff]
        %v6108 = vld [vmem:[#allocation2 + $0x59] sm:$0xff]
        %v6109 = vld [vmem:[#allocation2 + $0x61] sm:$0xff]
        %v6110 = vld [vmem:[#allocation2 + $0x69] sm:$0xff]
        %v6111 = vld [vmem:[#allocation2 + $0x71] sm:$0xff]
        %v6112 = vld [vmem:[#allocation2 + $0x79] sm:$0xff]
        %v6113 = vld [vmem:[#allocation2 + $0x81] sm:$0xff]
        %v6114 = vld [vmem:[#allocation2 + $0x89] sm:$0xff]
        %v6115 = vld [vmem:[#allocation2 + $0x91] sm:$0xff]
        %v6116 = vld [vmem:[#allocation2 + $0x99] sm:$0xff]
        %v6117 = vld [vmem:[#allocation2 + $0xa1] sm:$0xff]
        %v6118 = vld [vmem:[#allocation2 + $0xa9] sm:$0xff]
        %v6119 = vld [vmem:[#allocation2 + $0xb1] sm:$0xff]
        %v6120 = vld [vmem:[#allocation2 + $0xb9] sm:$0xff]
        %v6121 = vld [vmem:[#allocation2 + $0xc1] sm:$0xff]
        %v6122 = vld [vmem:[%s1756] sm:$0xff]
        %v6123 = vld [vmem:[%s1756 + $0x8] sm:$0xff]
        %v6124 = vld [vmem:[%s1756 + $0x10] sm:$0xff]
        %v6125 = vld [vmem:[%s1756 + $0x18] sm:$0xff]
        %v6126 = vld [vmem:[%s1756 + $0x20] sm:$0xff]
        %v6127 = vld [vmem:[%s1756 + $0x28] sm:$0xff]
        %v6128 = vld [vmem:[%s1756 + $0x30] sm:$0xff]
        %v6129 = vld [vmem:[%s1756 + $0x38] sm:$0xff]
        %v6130 = vld [vmem:[%s1756 + $0x40] sm:$0xff]
        %v6131 = vld [vmem:[%s1756 + $0x48] sm:$0xff]
        %v6132 = vld [vmem:[%s1756 + $0x50] sm:$0xff]
        %v6133 = vld [vmem:[%s1756 + $0x58] sm:$0xff]
        %v6134 = vld [vmem:[%s1756 + $0x60] sm:$0xff]
        %v6135 = vld [vmem:[%s1756 + $0x68] sm:$0xff]
        %v6136 = vld [vmem:[%s1756 + $0x70] sm:$0xff]
        %v6137 = vld [vmem:[%s1756 + $0x78] sm:$0xff]
        %v6138 = vld [vmem:[%s1756 + $0x80] sm:$0xff]
        %v6139 = vld [vmem:[%s1756 + $0x88] sm:$0xff]
        %v6140 = vld [vmem:[%s1756 + $0x90] sm:$0xff]
        %v6141 = vld [vmem:[%s1756 + $0x98] sm:$0xff]
        %v6142 = vld [vmem:[%s1756 + $0xa0] sm:$0xff]
        %v6143 = vld [vmem:[%s1756 + $0xa8] sm:$0xff]
        %v6144 = vld [vmem:[%s1756 + $0xb0] sm:$0xff]
        %v6145 = vld [vmem:[%s1756 + $0xb8] sm:$0xff]
        %6147 = vset.pattern.permute.xlu0 0
        %6148 = vperm.xlu0 %6147, %v6122
        %v6149 = vpop.permute.xlu0 %6148
        %6152 = vset.pattern.permute.xlu0 0
        %6153 = vperm.xlu0 %6152, %v6123
        %v6154 = vpop.permute.xlu0 %6153
        %6157 = vset.pattern.permute.xlu0 0
        %6158 = vperm.xlu0 %6157, %v6124
        %v6159 = vpop.permute.xlu0 %6158
        %6162 = vset.pattern.permute.xlu0 0
        %6163 = vperm.xlu0 %6162, %v6125
        %v6164 = vpop.permute.xlu0 %6163
        %6167 = vset.pattern.permute.xlu0 0
        %6168 = vperm.xlu0 %6167, %v6126
        %v6169 = vpop.permute.xlu0 %6168
        %6172 = vset.pattern.permute.xlu0 0
        %6173 = vperm.xlu0 %6172, %v6127
        %v6174 = vpop.permute.xlu0 %6173
        %6177 = vset.pattern.permute.xlu0 0
        %6178 = vperm.xlu0 %6177, %v6128
        %v6179 = vpop.permute.xlu0 %6178
        %6182 = vset.pattern.permute.xlu0 0
        %6183 = vperm.xlu0 %6182, %v6129
        %v6184 = vpop.permute.xlu0 %6183
        %6187 = vset.pattern.permute.xlu0 0
        %6188 = vperm.xlu0 %6187, %v6130
        %v6189 = vpop.permute.xlu0 %6188
        %6192 = vset.pattern.permute.xlu0 0
        %6193 = vperm.xlu0 %6192, %v6131
        %v6194 = vpop.permute.xlu0 %6193
        %6197 = vset.pattern.permute.xlu0 0
        %6198 = vperm.xlu0 %6197, %v6132
        %v6199 = vpop.permute.xlu0 %6198
        %6202 = vset.pattern.permute.xlu0 0
        %6203 = vperm.xlu0 %6202, %v6133
        %v6204 = vpop.permute.xlu0 %6203
        %6207 = vset.pattern.permute.xlu0 0
        %6208 = vperm.xlu0 %6207, %v6134
        %v6209 = vpop.permute.xlu0 %6208
        %6212 = vset.pattern.permute.xlu0 0
        %6213 = vperm.xlu0 %6212, %v6135
        %v6214 = vpop.permute.xlu0 %6213
        %6217 = vset.pattern.permute.xlu0 0
        %6218 = vperm.xlu0 %6217, %v6136
        %v6219 = vpop.permute.xlu0 %6218
        %6222 = vset.pattern.permute.xlu0 0
        %6223 = vperm.xlu0 %6222, %v6137
        %v6224 = vpop.permute.xlu0 %6223
        %6227 = vset.pattern.permute.xlu0 0
        %6228 = vperm.xlu0 %6227, %v6138
        %v6229 = vpop.permute.xlu0 %6228
        %6232 = vset.pattern.permute.xlu0 0
        %6233 = vperm.xlu0 %6232, %v6139
        %v6234 = vpop.permute.xlu0 %6233
        %6237 = vset.pattern.permute.xlu0 0
        %6238 = vperm.xlu0 %6237, %v6140
        %v6239 = vpop.permute.xlu0 %6238
        %6242 = vset.pattern.permute.xlu0 0
        %6243 = vperm.xlu0 %6242, %v6141
        %v6244 = vpop.permute.xlu0 %6243
        %6247 = vset.pattern.permute.xlu0 0
        %6248 = vperm.xlu0 %6247, %v6142
        %v6249 = vpop.permute.xlu0 %6248
        %6252 = vset.pattern.permute.xlu0 0
        %6253 = vperm.xlu0 %6252, %v6143
        %v6254 = vpop.permute.xlu0 %6253
        %6257 = vset.pattern.permute.xlu0 0
        %6258 = vperm.xlu0 %6257, %v6144
        %v6259 = vpop.permute.xlu0 %6258
        %6262 = vset.pattern.permute.xlu0 0
        %6263 = vperm.xlu0 %6262, %v6145
        %v6264 = vpop.permute.xlu0 %6263
        %v6266 = vmul.f32 %v6098, %v6149
        %v6267 = vmul.f32 %v6099, %v6154
        %v6268 = vmul.f32 %v6100, %v6159
        %v6269 = vmul.f32 %v6101, %v6164
        %v6270 = vmul.f32 %v6102, %v6169
        %v6271 = vmul.f32 %v6103, %v6174
        %v6272 = vmul.f32 %v6104, %v6179
        %v6273 = vmul.f32 %v6105, %v6184
        %v6274 = vmul.f32 %v6106, %v6189
        %v6275 = vmul.f32 %v6107, %v6194
        %v6276 = vmul.f32 %v6108, %v6199
        %v6277 = vmul.f32 %v6109, %v6204
        %v6278 = vmul.f32 %v6110, %v6209
        %v6279 = vmul.f32 %v6111, %v6214
        %v6280 = vmul.f32 %v6112, %v6219
        %v6281 = vmul.f32 %v6113, %v6224
        %v6282 = vmul.f32 %v6114, %v6229
        %v6283 = vmul.f32 %v6115, %v6234
        %v6284 = vmul.f32 %v6116, %v6239
        %v6285 = vmul.f32 %v6117, %v6244
        %v6286 = vmul.f32 %v6118, %v6249
        %v6287 = vmul.f32 %v6119, %v6254
        %v6288 = vmul.f32 %v6120, %v6259
        %v6289 = vmul.f32 %v6121, %v6264
        %s6290 = scalar_lea.vmem %s439, 64
        %v6291 = vld [vmem:[%s6290] sm:$0xff]
        %v6292 = vld [vmem:[%s6290 + $0x8] sm:$0xff]
        %v6293 = vld [vmem:[%s6290 + $0x10] sm:$0xff]
        %v6294 = vld [vmem:[%s6290 + $0x18] sm:$0x1]
        %v6296 = vsel %vm445, %v6266, 0
        %v6299 = vsel %vm445, %v6267, 0
        %v6302 = vsel %vm445, %v6268, 0
        %v6305 = vsel %vm445, %v6269, 0
        %v6308 = vsel %vm445, %v6270, 0
        %v6311 = vsel %vm445, %v6271, 0
        %v6314 = vsel %vm445, %v6272, 0
        %v6317 = vsel %vm445, %v6273, 0
        %v6320 = vsel %vm445, %v6274, 0
        %v6323 = vsel %vm445, %v6275, 0
        %v6326 = vsel %vm445, %v6276, 0
        %v6329 = vsel %vm445, %v6277, 0
        %v6332 = vsel %vm445, %v6278, 0
        %v6335 = vsel %vm445, %v6279, 0
        %v6338 = vsel %vm445, %v6280, 0
        %v6341 = vsel %vm445, %v6281, 0
        %v6344 = vsel %vm445, %v6282, 0
        %v6347 = vsel %vm445, %v6283, 0
        %v6350 = vsel %vm445, %v6284, 0
        %v6353 = vsel %vm445, %v6285, 0
        %v6356 = vsel %vm445, %v6286, 0
        %v6359 = vsel %vm445, %v6287, 0
        %v6362 = vsel %vm445, %v6288, 0
        %v6365 = vsel %vm445, %v6289, 0
        %v6368 = vsel %vm581, %v6294, 0
        %6370 = vmatprep.subr.mxu0 0.0
        %6371 = vmatpush1.msra.mxu0 %v6291
        %6372 = vmatprep.subr.mxu0 0.0
        %6373 = vmatpush1.msra.mxu0 %v6292
        %6374 = vmatprep.subr.mxu0 0.0
        %6375 = vmatpush1.msra.mxu0 %v6293
        %6376 = vmatprep.subr.mxu0 0.0
        %6377 = vmatpush1.msra.mxu0 %v6368
        %6378 = vmatprep.subr.mxu0 0.0
        %6379 = vmatpush1.msra.mxu0 0.0
        %6380 = vmatprep.subr.mxu0 0.0
        %6381 = vmatpush1.msra.mxu0 0.0
        %6382 = vmatprep.subr.mxu0 0.0
        %6383 = vmatpush1.msra.mxu0 0.0
        %6384 = vmatprep.subr.mxu0 0.0
        %6385 = vmatpush1.msra.mxu0 0.0
        %6386 = vmatprep.subr.mxu0 0.0
        %6387 = vmatpush1.msra.mxu0 0.0
        %6388 = vmatprep.subr.mxu0 0.0
        %6389 = vmatpush1.msra.mxu0 0.0
        %6390 = vmatprep.subr.mxu0 0.0
        %6391 = vmatpush1.msra.mxu0 0.0
        %6392 = vmatprep.subr.mxu0 0.0
        %6393 = vmatpush1.msra.mxu0 0.0
        %6394 = vmatprep.subr.mxu0 0.0
        %6395 = vmatpush1.msra.mxu0 0.0
        %6396 = vmatprep.subr.mxu0 0.0
        %6397 = vmatpush1.msra.mxu0 0.0
        %6398 = vmatprep.subr.mxu0 0.0
        %6399 = vmatpush1.msra.mxu0 0.0
        %6400 = vmatprep.subr.mxu0 0.0
        %6401 = vmatpush1.msra.mxu0 0.0
        %6402 = vmatprep.subr.mxu0 0.0
        %6403 = vmatpush1.msra.mxu0 0.0
        %6404 = vmatprep.subr.mxu0 0.0
        %6405 = vmatpush1.msra.mxu0 0.0
        %6406 = vmatprep.subr.mxu0 0.0
        %6407 = vmatpush1.msra.mxu0 0.0
        %6408 = vmatprep.subr.mxu0 0.0
        %6409 = vmatpush1.msra.mxu0 0.0
        %6410 = vmatprep.subr.mxu0 0.0
        %6411 = vmatpush1.msra.mxu0 0.0
        %6412 = vmatprep.subr.mxu0 0.0
        %6413 = vmatpush1.msra.mxu0 0.0
        %6414 = vmatprep.subr.mxu0 0.0
        %6415 = vmatpush1.msra.mxu0 0.0
        %6416 = vmatprep.subr.mxu0 0.0
        %6417 = vmatpush1.msra.mxu0 0.0
        %6418 = vmatprep.subr.mxu0 0.0
        %6419 = vmatpush1.msra.mxu0 0.0
        %6420 = vmatprep.subr.mxu0 0.0
        %6421 = vmatpush1.msra.mxu0 0.0
        %6422 = vmatprep.subr.mxu0 0.0
        %6423 = vmatpush1.msra.mxu0 0.0
        %6424 = vmatprep.subr.mxu0 0.0
        %6425 = vmatpush1.msra.mxu0 0.0
        %6426 = vmatprep.subr.mxu0 0.0
        %6427 = vmatpush1.msra.mxu0 0.0
        %6428 = vmatprep.subr.mxu0 0.0
        %6429 = vmatpush1.msra.mxu0 0.0
        %6430 = vmatprep.subr.mxu0 0.0
        %6431 = vmatpush1.msra.mxu0 0.0
        %6432 = vmatprep.subr.mxu0 0.0
        %6433 = vmatpush1.msra.mxu0 0.0
        %6434 = vmatprep.mubr.f32.mxu0 0.0
        %6435 = vmatmul.mubr.f32.gmra.mrb[0].mxu0 %v6296
        %v6436 = vpop.f32.mrb[0].mxu0
        %v6437 = vadd.f32 0.0, %v6436
        %v6438 = vpop.f32.mrb[0].mxu0
        %6439 = vmatprep.mubr.f32.mxu0 0.0
        %6440 = vmatmul.mubr.f32.gmra.mrb[0].mxu0 %v6299
        %v6441 = vpop.f32.mrb[0].mxu0
        %v6442 = vadd.f32 0.0, %v6441
        %v6443 = vpop.f32.mrb[0].mxu0
        %6444 = vmatprep.mubr.f32.mxu0 0.0
        %6445 = vmatmul.mubr.f32.gmra.mrb[0].mxu0 %v6302
        %v6446 = vpop.f32.mrb[0].mxu0
        %v6447 = vadd.f32 0.0, %v6446
        %v6448 = vpop.f32.mrb[0].mxu0
        %6449 = vmatprep.mubr.f32.mxu0 0.0
        %6450 = vmatmul.mubr.f32.gmra.mrb[0].mxu0 %v6305
        %v6451 = vpop.f32.mrb[0].mxu0
        %v6452 = vadd.f32 0.0, %v6451
        %v6453 = vpop.f32.mrb[0].mxu0
        %6454 = vmatprep.mubr.f32.mxu0 0.0
        %6455 = vmatmul.mubr.f32.gmra.mrb[0].mxu0 %v6308
        %v6456 = vpop.f32.mrb[0].mxu0
        %v6457 = vadd.f32 0.0, %v6456
        %v6458 = vpop.f32.mrb[0].mxu0
        %6459 = vmatprep.mubr.f32.mxu0 0.0
        %6460 = vmatmul.mubr.f32.gmra.mrb[0].mxu0 %v6311
        %v6461 = vpop.f32.mrb[0].mxu0
        %v6462 = vadd.f32 0.0, %v6461
        %v6463 = vpop.f32.mrb[0].mxu0
        %6464 = vmatprep.mubr.f32.mxu0 0.0
        %6465 = vmatmul.mubr.f32.gmra.mrb[0].mxu0 %v6314
        %v6466 = vpop.f32.mrb[0].mxu0
        %v6467 = vadd.f32 0.0, %v6466
        %v6468 = vpop.f32.mrb[0].mxu0
        %6469 = vmatprep.mubr.f32.mxu0 0.0
        %6470 = vmatmul.mubr.f32.gmra.mrb[0].mxu0 %v6317
        %v6471 = vpop.f32.mrb[0].mxu0
        %v6472 = vadd.f32 0.0, %v6471
        %v6473 = vpop.f32.mrb[0].mxu0
        %6474 = vmatprep.mubr.f32.mxu0 0.0
        %6475 = vmatmul.mubr.f32.gmra.mrb[0].mxu0 %v6320
        %v6476 = vpop.f32.mrb[0].mxu0
        %v6477 = vadd.f32 0.0, %v6476
        %v6478 = vpop.f32.mrb[0].mxu0
        %6479 = vmatprep.mubr.f32.mxu0 0.0
        %6480 = vmatmul.mubr.f32.gmra.mrb[0].mxu0 %v6323
        %v6481 = vpop.f32.mrb[0].mxu0
        %v6482 = vadd.f32 0.0, %v6481
        %v6483 = vpop.f32.mrb[0].mxu0
        %6484 = vmatprep.mubr.f32.mxu0 0.0
        %6485 = vmatmul.mubr.f32.gmra.mrb[0].mxu0 %v6326
        %v6486 = vpop.f32.mrb[0].mxu0
        %v6487 = vadd.f32 0.0, %v6486
        %v6488 = vpop.f32.mrb[0].mxu0
        %6489 = vmatprep.mubr.f32.mxu0 0.0
        %6490 = vmatmul.mubr.f32.gmra.mrb[0].mxu0 %v6329
        %v6491 = vpop.f32.mrb[0].mxu0
        %v6492 = vadd.f32 0.0, %v6491
        %v6493 = vpop.f32.mrb[0].mxu0
        %6494 = vmatprep.mubr.f32.mxu0 0.0
        %6495 = vmatmul.mubr.f32.gmra.mrb[0].mxu0 %v6332
        %v6496 = vpop.f32.mrb[0].mxu0
        %v6497 = vadd.f32 0.0, %v6496
        %v6498 = vpop.f32.mrb[0].mxu0
        %6499 = vmatprep.mubr.f32.mxu0 0.0
        %6500 = vmatmul.mubr.f32.gmra.mrb[0].mxu0 %v6335
        %v6501 = vpop.f32.mrb[0].mxu0
        %v6502 = vadd.f32 0.0, %v6501
        %v6503 = vpop.f32.mrb[0].mxu0
        %6504 = vmatprep.mubr.f32.mxu0 0.0
        %6505 = vmatmul.mubr.f32.gmra.mrb[0].mxu0 %v6338
        %v6506 = vpop.f32.mrb[0].mxu0
        %v6507 = vadd.f32 0.0, %v6506
        %v6508 = vpop.f32.mrb[0].mxu0
        %6509 = vmatprep.mubr.f32.mxu0 0.0
        %6510 = vmatmul.mubr.f32.gmra.mrb[0].mxu0 %v6341
        %v6511 = vpop.f32.mrb[0].mxu0
        %v6512 = vadd.f32 0.0, %v6511
        %v6513 = vpop.f32.mrb[0].mxu0
        %6514 = vmatprep.mubr.f32.mxu0 0.0
        %6515 = vmatmul.mubr.f32.gmra.mrb[0].mxu0 %v6344
        %v6516 = vpop.f32.mrb[0].mxu0
        %v6517 = vadd.f32 0.0, %v6516
        %v6518 = vpop.f32.mrb[0].mxu0
        %6519 = vmatprep.mubr.f32.mxu0 0.0
        %6520 = vmatmul.mubr.f32.gmra.mrb[0].mxu0 %v6347
        %v6521 = vpop.f32.mrb[0].mxu0
        %v6522 = vadd.f32 0.0, %v6521
        %v6523 = vpop.f32.mrb[0].mxu0
        %6524 = vmatprep.mubr.f32.mxu0 0.0
        %6525 = vmatmul.mubr.f32.gmra.mrb[0].mxu0 %v6350
        %v6526 = vpop.f32.mrb[0].mxu0
        %v6527 = vadd.f32 0.0, %v6526
        %v6528 = vpop.f32.mrb[0].mxu0
        %6529 = vmatprep.mubr.f32.mxu0 0.0
        %6530 = vmatmul.mubr.f32.gmra.mrb[0].mxu0 %v6353
        %v6531 = vpop.f32.mrb[0].mxu0
        %v6532 = vadd.f32 0.0, %v6531
        %v6533 = vpop.f32.mrb[0].mxu0
        %6534 = vmatprep.mubr.f32.mxu0 0.0
        %6535 = vmatmul.mubr.f32.gmra.mrb[0].mxu0 %v6356
        %v6536 = vpop.f32.mrb[0].mxu0
        %v6537 = vadd.f32 0.0, %v6536
        %v6538 = vpop.f32.mrb[0].mxu0
        %6539 = vmatprep.mubr.f32.mxu0 0.0
        %6540 = vmatmul.mubr.f32.gmra.mrb[0].mxu0 %v6359
        %v6541 = vpop.f32.mrb[0].mxu0
        %v6542 = vadd.f32 0.0, %v6541
        %v6543 = vpop.f32.mrb[0].mxu0
        %6544 = vmatprep.mubr.f32.mxu0 0.0
        %6545 = vmatmul.mubr.f32.gmra.mrb[0].mxu0 %v6362
        %v6546 = vpop.f32.mrb[0].mxu0
        %v6547 = vadd.f32 0.0, %v6546
        %v6548 = vpop.f32.mrb[0].mxu0
        %6549 = vmatprep.mubr.f32.mxu0 0.0
        %6550 = vmatmul.mubr.f32.gmra.mrb[0].mxu0 %v6365
        %v6551 = vpop.f32.mrb[0].mxu0
        %v6552 = vadd.f32 0.0, %v6551
        %v6553 = vpop.f32.mrb[0].mxu0
        %6554 = vdwg.mxu0
        %v6555 = vadd.f32 %v5980, %v6437
        %v6556 = vadd.f32 %v5985, %v6442
        %v6557 = vadd.f32 %v5990, %v6447
        %v6558 = vadd.f32 %v5995, %v6452
        %v6559 = vadd.f32 %v6000, %v6457
        %v6560 = vadd.f32 %v6005, %v6462
        %v6561 = vadd.f32 %v6010, %v6467
        %v6562 = vadd.f32 %v6015, %v6472
        %v6563 = vadd.f32 %v6020, %v6477
        %v6564 = vadd.f32 %v6025, %v6482
        %v6565 = vadd.f32 %v6030, %v6487
        %v6566 = vadd.f32 %v6035, %v6492
        %v6567 = vadd.f32 %v6040, %v6497
        %v6568 = vadd.f32 %v6045, %v6502
        %v6569 = vadd.f32 %v6050, %v6507
        %v6570 = vadd.f32 %v6055, %v6512
        %v6571 = vadd.f32 %v6060, %v6517
        %v6572 = vadd.f32 %v6065, %v6522
        %v6573 = vadd.f32 %v6070, %v6527
        %v6574 = vadd.f32 %v6075, %v6532
        %v6575 = vadd.f32 %v6080, %v6537
        %v6576 = vadd.f32 %v6085, %v6542
        %v6577 = vadd.f32 %v6090, %v6547
        %v6578 = vadd.f32 %v6095, %v6552
        %v6579 = vld [vmem:[#allocation2 + $0xf] sm:$0xff]
        %v6580 = vld [vmem:[#allocation2 + $0x17] sm:$0xff]
        %v6581 = vld [vmem:[#allocation2 + $0x1f] sm:$0xff]
        %v6582 = vld [vmem:[#allocation2 + $0x27] sm:$0xff]
        %v6583 = vld [vmem:[#allocation2 + $0x2f] sm:$0xff]
        %v6584 = vld [vmem:[#allocation2 + $0x37] sm:$0xff]
        %v6585 = vld [vmem:[#allocation2 + $0x3f] sm:$0xff]
        %v6586 = vld [vmem:[#allocation2 + $0x47] sm:$0xff]
        %v6587 = vld [vmem:[#allocation2 + $0x4f] sm:$0xff]
        %v6588 = vld [vmem:[#allocation2 + $0x57] sm:$0xff]
        %v6589 = vld [vmem:[#allocation2 + $0x5f] sm:$0xff]
        %v6590 = vld [vmem:[#allocation2 + $0x67] sm:$0xff]
        %v6591 = vld [vmem:[#allocation2 + $0x6f] sm:$0xff]
        %v6592 = vld [vmem:[#allocation2 + $0x77] sm:$0xff]
        %v6593 = vld [vmem:[#allocation2 + $0x7f] sm:$0xff]
        %v6594 = vld [vmem:[#allocation2 + $0x87] sm:$0xff]
        %v6595 = vld [vmem:[#allocation2 + $0x8f] sm:$0xff]
        %v6596 = vld [vmem:[#allocation2 + $0x97] sm:$0xff]
        %v6597 = vld [vmem:[#allocation2 + $0x9f] sm:$0xff]
        %v6598 = vld [vmem:[#allocation2 + $0xa7] sm:$0xff]
        %v6599 = vld [vmem:[#allocation2 + $0xaf] sm:$0xff]
        %v6600 = vld [vmem:[#allocation2 + $0xb7] sm:$0xff]
        %v6601 = vld [vmem:[#allocation2 + $0xbf] sm:$0xff]
        %v6602 = vld [vmem:[#allocation2 + $0xc7] sm:$0xff]
        %v6603 = vld [vmem:[%s2238] sm:$0xff]
        %v6604 = vld [vmem:[%s2238 + $0x8] sm:$0xff]
        %v6605 = vld [vmem:[%s2238 + $0x10] sm:$0xff]
        %v6606 = vld [vmem:[%s2238 + $0x18] sm:$0xff]
        %v6607 = vld [vmem:[%s2238 + $0x20] sm:$0xff]
        %v6608 = vld [vmem:[%s2238 + $0x28] sm:$0xff]
        %v6609 = vld [vmem:[%s2238 + $0x30] sm:$0xff]
        %v6610 = vld [vmem:[%s2238 + $0x38] sm:$0xff]
        %v6611 = vld [vmem:[%s2238 + $0x40] sm:$0xff]
        %v6612 = vld [vmem:[%s2238 + $0x48] sm:$0xff]
        %v6613 = vld [vmem:[%s2238 + $0x50] sm:$0xff]
        %v6614 = vld [vmem:[%s2238 + $0x58] sm:$0xff]
        %v6615 = vld [vmem:[%s2238 + $0x60] sm:$0xff]
        %v6616 = vld [vmem:[%s2238 + $0x68] sm:$0xff]
        %v6617 = vld [vmem:[%s2238 + $0x70] sm:$0xff]
        %v6618 = vld [vmem:[%s2238 + $0x78] sm:$0xff]
        %v6619 = vld [vmem:[%s2238 + $0x80] sm:$0xff]
        %v6620 = vld [vmem:[%s2238 + $0x88] sm:$0xff]
        %v6621 = vld [vmem:[%s2238 + $0x90] sm:$0xff]
        %v6622 = vld [vmem:[%s2238 + $0x98] sm:$0xff]
        %v6623 = vld [vmem:[%s2238 + $0xa0] sm:$0xff]
        %v6624 = vld [vmem:[%s2238 + $0xa8] sm:$0xff]
        %v6625 = vld [vmem:[%s2238 + $0xb0] sm:$0xff]
        %v6626 = vld [vmem:[%s2238 + $0xb8] sm:$0xff]
        %6628 = vset.pattern.permute.xlu0 0
        %6629 = vperm.xlu0 %6628, %v6603
        %v6630 = vpop.permute.xlu0 %6629
        %6633 = vset.pattern.permute.xlu0 0
        %6634 = vperm.xlu0 %6633, %v6604
        %v6635 = vpop.permute.xlu0 %6634
        %6638 = vset.pattern.permute.xlu0 0
        %6639 = vperm.xlu0 %6638, %v6605
        %v6640 = vpop.permute.xlu0 %6639
        %6643 = vset.pattern.permute.xlu0 0
        %6644 = vperm.xlu0 %6643, %v6606
        %v6645 = vpop.permute.xlu0 %6644
        %6648 = vset.pattern.permute.xlu0 0
        %6649 = vperm.xlu0 %6648, %v6607
        %v6650 = vpop.permute.xlu0 %6649
        %6653 = vset.pattern.permute.xlu0 0
        %6654 = vperm.xlu0 %6653, %v6608
        %v6655 = vpop.permute.xlu0 %6654
        %6658 = vset.pattern.permute.xlu0 0
        %6659 = vperm.xlu0 %6658, %v6609
        %v6660 = vpop.permute.xlu0 %6659
        %6663 = vset.pattern.permute.xlu0 0
        %6664 = vperm.xlu0 %6663, %v6610
        %v6665 = vpop.permute.xlu0 %6664
        %6668 = vset.pattern.permute.xlu0 0
        %6669 = vperm.xlu0 %6668, %v6611
        %v6670 = vpop.permute.xlu0 %6669
        %6673 = vset.pattern.permute.xlu0 0
        %6674 = vperm.xlu0 %6673, %v6612
        %v6675 = vpop.permute.xlu0 %6674
        %6678 = vset.pattern.permute.xlu0 0
        %6679 = vperm.xlu0 %6678, %v6613
        %v6680 = vpop.permute.xlu0 %6679
        %6683 = vset.pattern.permute.xlu0 0
        %6684 = vperm.xlu0 %6683, %v6614
        %v6685 = vpop.permute.xlu0 %6684
        %6688 = vset.pattern.permute.xlu0 0
        %6689 = vperm.xlu0 %6688, %v6615
        %v6690 = vpop.permute.xlu0 %6689
        %6693 = vset.pattern.permute.xlu0 0
        %6694 = vperm.xlu0 %6693, %v6616
        %v6695 = vpop.permute.xlu0 %6694
        %6698 = vset.pattern.permute.xlu0 0
        %6699 = vperm.xlu0 %6698, %v6617
        %v6700 = vpop.permute.xlu0 %6699
        %6703 = vset.pattern.permute.xlu0 0
        %6704 = vperm.xlu0 %6703, %v6618
        %v6705 = vpop.permute.xlu0 %6704
        %6708 = vset.pattern.permute.xlu0 0
        %6709 = vperm.xlu0 %6708, %v6619
        %v6710 = vpop.permute.xlu0 %6709
        %6713 = vset.pattern.permute.xlu0 0
        %6714 = vperm.xlu0 %6713, %v6620
        %v6715 = vpop.permute.xlu0 %6714
        %6718 = vset.pattern.permute.xlu0 0
        %6719 = vperm.xlu0 %6718, %v6621
        %v6720 = vpop.permute.xlu0 %6719
        %6723 = vset.pattern.permute.xlu0 0
        %6724 = vperm.xlu0 %6723, %v6622
        %v6725 = vpop.permute.xlu0 %6724
        %6728 = vset.pattern.permute.xlu0 0
        %6729 = vperm.xlu0 %6728, %v6623
        %v6730 = vpop.permute.xlu0 %6729
        %6733 = vset.pattern.permute.xlu0 0
        %6734 = vperm.xlu0 %6733, %v6624
        %v6735 = vpop.permute.xlu0 %6734
        %6738 = vset.pattern.permute.xlu0 0
        %6739 = vperm.xlu0 %6738, %v6625
        %v6740 = vpop.permute.xlu0 %6739
        %6743 = vset.pattern.permute.xlu0 0
        %6744 = vperm.xlu0 %6743, %v6626
        %v6745 = vpop.permute.xlu0 %6744
        %v6747 = vmul.f32 %v6579, %v6630
        %v6748 = vmul.f32 %v6580, %v6635
        %v6749 = vmul.f32 %v6581, %v6640
        %v6750 = vmul.f32 %v6582, %v6645
        %v6751 = vmul.f32 %v6583, %v6650
        %v6752 = vmul.f32 %v6584, %v6655
        %v6753 = vmul.f32 %v6585, %v6660
        %v6754 = vmul.f32 %v6586, %v6665
        %v6755 = vmul.f32 %v6587, %v6670
        %v6756 = vmul.f32 %v6588, %v6675
        %v6757 = vmul.f32 %v6589, %v6680
        %v6758 = vmul.f32 %v6590, %v6685
        %v6759 = vmul.f32 %v6591, %v6690
        %v6760 = vmul.f32 %v6592, %v6695
        %v6761 = vmul.f32 %v6593, %v6700
        %v6762 = vmul.f32 %v6594, %v6705
        %v6763 = vmul.f32 %v6595, %v6710
        %v6764 = vmul.f32 %v6596, %v6715
        %v6765 = vmul.f32 %v6597, %v6720
        %v6766 = vmul.f32 %v6598, %v6725
        %v6767 = vmul.f32 %v6599, %v6730
        %v6768 = vmul.f32 %v6600, %v6735
        %v6769 = vmul.f32 %v6601, %v6740
        %v6770 = vmul.f32 %v6602, %v6745
        %s6771 = scalar_lea.vmem %s439, 96
        %v6772 = vld [vmem:[%s6771] sm:$0xff]
        %v6773 = vld [vmem:[%s6771 + $0x8] sm:$0xff]
        %v6774 = vld [vmem:[%s6771 + $0x10] sm:$0xff]
        %v6775 = vld [vmem:[%s6771 + $0x18] sm:$0x1]
        %v6777 = vsel %vm445, %v6747, 0
        %v6780 = vsel %vm445, %v6748, 0
        %v6783 = vsel %vm445, %v6749, 0
        %v6786 = vsel %vm445, %v6750, 0
        %v6789 = vsel %vm445, %v6751, 0
        %v6792 = vsel %vm445, %v6752, 0
        %v6795 = vsel %vm445, %v6753, 0
        %v6798 = vsel %vm445, %v6754, 0
        %v6801 = vsel %vm445, %v6755, 0
        %v6804 = vsel %vm445, %v6756, 0
        %v6807 = vsel %vm445, %v6757, 0
        %v6810 = vsel %vm445, %v6758, 0
        %v6813 = vsel %vm445, %v6759, 0
        %v6816 = vsel %vm445, %v6760, 0
        %v6819 = vsel %vm445, %v6761, 0
        %v6822 = vsel %vm445, %v6762, 0
        %v6825 = vsel %vm445, %v6763, 0
        %v6828 = vsel %vm445, %v6764, 0
        %v6831 = vsel %vm445, %v6765, 0
        %v6834 = vsel %vm445, %v6766, 0
        %v6837 = vsel %vm445, %v6767, 0
        %v6840 = vsel %vm445, %v6768, 0
        %v6843 = vsel %vm445, %v6769, 0
        %v6846 = vsel %vm445, %v6770, 0
        %v6849 = vsel %vm581, %v6775, 0
        %6851 = vmatprep.subr.mxu0 0.0
        %6852 = vmatpush1.msra.mxu0 %v6772
        %6853 = vmatprep.subr.mxu0 0.0
        %6854 = vmatpush1.msra.mxu0 %v6773
        %6855 = vmatprep.subr.mxu0 0.0
        %6856 = vmatpush1.msra.mxu0 %v6774
        %6857 = vmatprep.subr.mxu0 0.0
        %6858 = vmatpush1.msra.mxu0 %v6849
        %6859 = vmatprep.subr.mxu0 0.0
        %6860 = vmatpush1.msra.mxu0 0.0
        %6861 = vmatprep.subr.mxu0 0.0
        %6862 = vmatpush1.msra.mxu0 0.0
        %6863 = vmatprep.subr.mxu0 0.0
        %6864 = vmatpush1.msra.mxu0 0.0
        %6865 = vmatprep.subr.mxu0 0.0
        %6866 = vmatpush1.msra.mxu0 0.0
        %6867 = vmatprep.subr.mxu0 0.0
        %6868 = vmatpush1.msra.mxu0 0.0
        %6869 = vmatprep.subr.mxu0 0.0
        %6870 = vmatpush1.msra.mxu0 0.0
        %6871 = vmatprep.subr.mxu0 0.0
        %6872 = vmatpush1.msra.mxu0 0.0
        %6873 = vmatprep.subr.mxu0 0.0
        %6874 = vmatpush1.msra.mxu0 0.0
        %6875 = vmatprep.subr.mxu0 0.0
        %6876 = vmatpush1.msra.mxu0 0.0
        %6877 = vmatprep.subr.mxu0 0.0
        %6878 = vmatpush1.msra.mxu0 0.0
        %6879 = vmatprep.subr.mxu0 0.0
        %6880 = vmatpush1.msra.mxu0 0.0
        %6881 = vmatprep.subr.mxu0 0.0
        %6882 = vmatpush1.msra.mxu0 0.0
        %6883 = vmatprep.subr.mxu0 0.0
        %6884 = vmatpush1.msra.mxu0 0.0
        %6885 = vmatprep.subr.mxu0 0.0
        %6886 = vmatpush1.msra.mxu0 0.0
        %6887 = vmatprep.subr.mxu0 0.0
        %6888 = vmatpush1.msra.mxu0 0.0
        %6889 = vmatprep.subr.mxu0 0.0
        %6890 = vmatpush1.msra.mxu0 0.0
        %6891 = vmatprep.subr.mxu0 0.0
        %6892 = vmatpush1.msra.mxu0 0.0
        %6893 = vmatprep.subr.mxu0 0.0
        %6894 = vmatpush1.msra.mxu0 0.0
        %6895 = vmatprep.subr.mxu0 0.0
        %6896 = vmatpush1.msra.mxu0 0.0
        %6897 = vmatprep.subr.mxu0 0.0
        %6898 = vmatpush1.msra.mxu0 0.0
        %6899 = vmatprep.subr.mxu0 0.0
        %6900 = vmatpush1.msra.mxu0 0.0
        %6901 = vmatprep.subr.mxu0 0.0
        %6902 = vmatpush1.msra.mxu0 0.0
        %6903 = vmatprep.subr.mxu0 0.0
        %6904 = vmatpush1.msra.mxu0 0.0
        %6905 = vmatprep.subr.mxu0 0.0
        %6906 = vmatpush1.msra.mxu0 0.0
        %6907 = vmatprep.subr.mxu0 0.0
        %6908 = vmatpush1.msra.mxu0 0.0
        %6909 = vmatprep.subr.mxu0 0.0
        %6910 = vmatpush1.msra.mxu0 0.0
        %6911 = vmatprep.subr.mxu0 0.0
        %6912 = vmatpush1.msra.mxu0 0.0
        %6913 = vmatprep.subr.mxu0 0.0
        %6914 = vmatpush1.msra.mxu0 0.0
        %6915 = vmatprep.mubr.f32.mxu0 0.0
        %6916 = vmatmul.mubr.f32.gmra.mrb[0].mxu0 %v6777
        %v6917 = vpop.f32.mrb[0].mxu0
        %v6918 = vadd.f32 0.0, %v6917
        %v6919 = vpop.f32.mrb[0].mxu0
        %6920 = vmatprep.mubr.f32.mxu0 0.0
        %6921 = vmatmul.mubr.f32.gmra.mrb[0].mxu0 %v6780
        %v6922 = vpop.f32.mrb[0].mxu0
        %v6923 = vadd.f32 0.0, %v6922
        %v6924 = vpop.f32.mrb[0].mxu0
        %6925 = vmatprep.mubr.f32.mxu0 0.0
        %6926 = vmatmul.mubr.f32.gmra.mrb[0].mxu0 %v6783
        %v6927 = vpop.f32.mrb[0].mxu0
        %v6928 = vadd.f32 0.0, %v6927
        %v6929 = vpop.f32.mrb[0].mxu0
        %6930 = vmatprep.mubr.f32.mxu0 0.0
        %6931 = vmatmul.mubr.f32.gmra.mrb[0].mxu0 %v6786
        %v6932 = vpop.f32.mrb[0].mxu0
        %v6933 = vadd.f32 0.0, %v6932
        %v6934 = vpop.f32.mrb[0].mxu0
        %6935 = vmatprep.mubr.f32.mxu0 0.0
        %6936 = vmatmul.mubr.f32.gmra.mrb[0].mxu0 %v6789
        %v6937 = vpop.f32.mrb[0].mxu0
        %v6938 = vadd.f32 0.0, %v6937
        %v6939 = vpop.f32.mrb[0].mxu0
        %6940 = vmatprep.mubr.f32.mxu0 0.0
        %6941 = vmatmul.mubr.f32.gmra.mrb[0].mxu0 %v6792
        %v6942 = vpop.f32.mrb[0].mxu0
        %v6943 = vadd.f32 0.0, %v6942
        %v6944 = vpop.f32.mrb[0].mxu0
        %6945 = vmatprep.mubr.f32.mxu0 0.0
        %6946 = vmatmul.mubr.f32.gmra.mrb[0].mxu0 %v6795
        %v6947 = vpop.f32.mrb[0].mxu0
        %v6948 = vadd.f32 0.0, %v6947
        %v6949 = vpop.f32.mrb[0].mxu0
        %6950 = vmatprep.mubr.f32.mxu0 0.0
        %6951 = vmatmul.mubr.f32.gmra.mrb[0].mxu0 %v6798
        %v6952 = vpop.f32.mrb[0].mxu0
        %v6953 = vadd.f32 0.0, %v6952
        %v6954 = vpop.f32.mrb[0].mxu0
        %6955 = vmatprep.mubr.f32.mxu0 0.0
        %6956 = vmatmul.mubr.f32.gmra.mrb[0].mxu0 %v6801
        %v6957 = vpop.f32.mrb[0].mxu0
        %v6958 = vadd.f32 0.0, %v6957
        %v6959 = vpop.f32.mrb[0].mxu0
        %6960 = vmatprep.mubr.f32.mxu0 0.0
        %6961 = vmatmul.mubr.f32.gmra.mrb[0].mxu0 %v6804
        %v6962 = vpop.f32.mrb[0].mxu0
        %v6963 = vadd.f32 0.0, %v6962
        %v6964 = vpop.f32.mrb[0].mxu0
        %6965 = vmatprep.mubr.f32.mxu0 0.0
        %6966 = vmatmul.mubr.f32.gmra.mrb[0].mxu0 %v6807
        %v6967 = vpop.f32.mrb[0].mxu0
        %v6968 = vadd.f32 0.0, %v6967
        %v6969 = vpop.f32.mrb[0].mxu0
        %6970 = vmatprep.mubr.f32.mxu0 0.0
        %6971 = vmatmul.mubr.f32.gmra.mrb[0].mxu0 %v6810
        %v6972 = vpop.f32.mrb[0].mxu0
        %v6973 = vadd.f32 0.0, %v6972
        %v6974 = vpop.f32.mrb[0].mxu0
        %6975 = vmatprep.mubr.f32.mxu0 0.0
        %6976 = vmatmul.mubr.f32.gmra.mrb[0].mxu0 %v6813
        %v6977 = vpop.f32.mrb[0].mxu0
        %v6978 = vadd.f32 0.0, %v6977
        %v6979 = vpop.f32.mrb[0].mxu0
        %6980 = vmatprep.mubr.f32.mxu0 0.0
        %6981 = vmatmul.mubr.f32.gmra.mrb[0].mxu0 %v6816
        %v6982 = vpop.f32.mrb[0].mxu0
        %v6983 = vadd.f32 0.0, %v6982
        %v6984 = vpop.f32.mrb[0].mxu0
        %6985 = vmatprep.mubr.f32.mxu0 0.0
        %6986 = vmatmul.mubr.f32.gmra.mrb[0].mxu0 %v6819
        %v6987 = vpop.f32.mrb[0].mxu0
        %v6988 = vadd.f32 0.0, %v6987
        %v6989 = vpop.f32.mrb[0].mxu0
        %6990 = vmatprep.mubr.f32.mxu0 0.0
        %6991 = vmatmul.mubr.f32.gmra.mrb[0].mxu0 %v6822
        %v6992 = vpop.f32.mrb[0].mxu0
        %v6993 = vadd.f32 0.0, %v6992
        %v6994 = vpop.f32.mrb[0].mxu0
        %6995 = vmatprep.mubr.f32.mxu0 0.0
        %6996 = vmatmul.mubr.f32.gmra.mrb[0].mxu0 %v6825
        %v6997 = vpop.f32.mrb[0].mxu0
        %v6998 = vadd.f32 0.0, %v6997
        %v6999 = vpop.f32.mrb[0].mxu0
        %7000 = vmatprep.mubr.f32.mxu0 0.0
        %7001 = vmatmul.mubr.f32.gmra.mrb[0].mxu0 %v6828
        %v7002 = vpop.f32.mrb[0].mxu0
        %v7003 = vadd.f32 0.0, %v7002
        %v7004 = vpop.f32.mrb[0].mxu0
        %7005 = vmatprep.mubr.f32.mxu0 0.0
        %7006 = vmatmul.mubr.f32.gmra.mrb[0].mxu0 %v6831
        %v7007 = vpop.f32.mrb[0].mxu0
        %v7008 = vadd.f32 0.0, %v7007
        %v7009 = vpop.f32.mrb[0].mxu0
        %7010 = vmatprep.mubr.f32.mxu0 0.0
        %7011 = vmatmul.mubr.f32.gmra.mrb[0].mxu0 %v6834
        %v7012 = vpop.f32.mrb[0].mxu0
        %v7013 = vadd.f32 0.0, %v7012
        %v7014 = vpop.f32.mrb[0].mxu0
        %7015 = vmatprep.mubr.f32.mxu0 0.0
        %7016 = vmatmul.mubr.f32.gmra.mrb[0].mxu0 %v6837
        %v7017 = vpop.f32.mrb[0].mxu0
        %v7018 = vadd.f32 0.0, %v7017
        %v7019 = vpop.f32.mrb[0].mxu0
        %7020 = vmatprep.mubr.f32.mxu0 0.0
        %7021 = vmatmul.mubr.f32.gmra.mrb[0].mxu0 %v6840
        %v7022 = vpop.f32.mrb[0].mxu0
        %v7023 = vadd.f32 0.0, %v7022
        %v7024 = vpop.f32.mrb[0].mxu0
        %7025 = vmatprep.mubr.f32.mxu0 0.0
        %7026 = vmatmul.mubr.f32.gmra.mrb[0].mxu0 %v6843
        %v7027 = vpop.f32.mrb[0].mxu0
        %v7028 = vadd.f32 0.0, %v7027
        %v7029 = vpop.f32.mrb[0].mxu0
        %7030 = vmatprep.mubr.f32.mxu0 0.0
        %7031 = vmatmul.mubr.f32.gmra.mrb[0].mxu0 %v6846
        %v7032 = vpop.f32.mrb[0].mxu0
        %v7033 = vadd.f32 0.0, %v7032
        %v7034 = vpop.f32.mrb[0].mxu0
        %7035 = vdwg.mxu0
        %v7036 = vadd.f32 %v6555, %v6918
        %v7037 = vadd.f32 %v6556, %v6923
        %v7038 = vadd.f32 %v6557, %v6928
        %v7039 = vadd.f32 %v6558, %v6933
        %v7040 = vadd.f32 %v6559, %v6938
        %v7041 = vadd.f32 %v6560, %v6943
        %v7042 = vadd.f32 %v6561, %v6948
        %v7043 = vadd.f32 %v6562, %v6953
        %v7044 = vadd.f32 %v6563, %v6958
        %v7045 = vadd.f32 %v6564, %v6963
        %v7046 = vadd.f32 %v6565, %v6968
        %v7047 = vadd.f32 %v6566, %v6973
        %v7048 = vadd.f32 %v6567, %v6978
        %v7049 = vadd.f32 %v6568, %v6983
        %v7050 = vadd.f32 %v6569, %v6988
        %v7051 = vadd.f32 %v6570, %v6993
        %v7052 = vadd.f32 %v6571, %v6998
        %v7053 = vadd.f32 %v6572, %v7003
        %v7054 = vadd.f32 %v6573, %v7008
        %v7055 = vadd.f32 %v6574, %v7013
        %v7056 = vadd.f32 %v6575, %v7018
        %v7057 = vadd.f32 %v6576, %v7023
        %v7058 = vadd.f32 %v6577, %v7028
        %v7059 = vadd.f32 %v6578, %v7033
        %v7060 = vld [vmem:[#allocation2 + $0x10] sm:$0xff]
        %v7061 = vld [vmem:[#allocation2 + $0x18] sm:$0xff]
        %v7062 = vld [vmem:[#allocation2 + $0x20] sm:$0xff]
        %v7063 = vld [vmem:[#allocation2 + $0x28] sm:$0xff]
        %v7064 = vld [vmem:[#allocation2 + $0x30] sm:$0xff]
        %v7065 = vld [vmem:[#allocation2 + $0x38] sm:$0xff]
        %v7066 = vld [vmem:[#allocation2 + $0x40] sm:$0xff]
        %v7067 = vld [vmem:[#allocation2 + $0x48] sm:$0xff]
        %v7068 = vld [vmem:[#allocation2 + $0x50] sm:$0xff]
        %v7069 = vld [vmem:[#allocation2 + $0x58] sm:$0xff]
        %v7070 = vld [vmem:[#allocation2 + $0x60] sm:$0xff]
        %v7071 = vld [vmem:[#allocation2 + $0x68] sm:$0xff]
        %v7072 = vld [vmem:[#allocation2 + $0x70] sm:$0xff]
        %v7073 = vld [vmem:[#allocation2 + $0x78] sm:$0xff]
        %v7074 = vld [vmem:[#allocation2 + $0x80] sm:$0xff]
        %v7075 = vld [vmem:[#allocation2 + $0x88] sm:$0xff]
        %v7076 = vld [vmem:[#allocation2 + $0x90] sm:$0xff]
        %v7077 = vld [vmem:[#allocation2 + $0x98] sm:$0xff]
        %v7078 = vld [vmem:[#allocation2 + $0xa0] sm:$0xff]
        %v7079 = vld [vmem:[#allocation2 + $0xa8] sm:$0xff]
        %v7080 = vld [vmem:[#allocation2 + $0xb0] sm:$0xff]
        %v7081 = vld [vmem:[#allocation2 + $0xb8] sm:$0xff]
        %v7082 = vld [vmem:[#allocation2 + $0xc0] sm:$0xff]
        %v7083 = vld [vmem:[#allocation2 + $0xc8] sm:$0xff]
        %v7084 = vld [vmem:[%s2720] sm:$0xff]
        %v7085 = vld [vmem:[%s2720 + $0x8] sm:$0xff]
        %v7086 = vld [vmem:[%s2720 + $0x10] sm:$0xff]
        %v7087 = vld [vmem:[%s2720 + $0x18] sm:$0xff]
        %v7088 = vld [vmem:[%s2720 + $0x20] sm:$0xff]
        %v7089 = vld [vmem:[%s2720 + $0x28] sm:$0xff]
        %v7090 = vld [vmem:[%s2720 + $0x30] sm:$0xff]
        %v7091 = vld [vmem:[%s2720 + $0x38] sm:$0xff]
        %v7092 = vld [vmem:[%s2720 + $0x40] sm:$0xff]
        %v7093 = vld [vmem:[%s2720 + $0x48] sm:$0xff]
        %v7094 = vld [vmem:[%s2720 + $0x50] sm:$0xff]
        %v7095 = vld [vmem:[%s2720 + $0x58] sm:$0xff]
        %v7096 = vld [vmem:[%s2720 + $0x60] sm:$0xff]
        %v7097 = vld [vmem:[%s2720 + $0x68] sm:$0xff]
        %v7098 = vld [vmem:[%s2720 + $0x70] sm:$0xff]
        %v7099 = vld [vmem:[%s2720 + $0x78] sm:$0xff]
        %v7100 = vld [vmem:[%s2720 + $0x80] sm:$0xff]
        %v7101 = vld [vmem:[%s2720 + $0x88] sm:$0xff]
        %v7102 = vld [vmem:[%s2720 + $0x90] sm:$0xff]
        %v7103 = vld [vmem:[%s2720 + $0x98] sm:$0xff]
        %v7104 = vld [vmem:[%s2720 + $0xa0] sm:$0xff]
        %v7105 = vld [vmem:[%s2720 + $0xa8] sm:$0xff]
        %v7106 = vld [vmem:[%s2720 + $0xb0] sm:$0xff]
        %v7107 = vld [vmem:[%s2720 + $0xb8] sm:$0xff]
        %7109 = vset.pattern.permute.xlu0 0
        %7110 = vperm.xlu0 %7109, %v7084
        %v7111 = vpop.permute.xlu0 %7110
        %7114 = vset.pattern.permute.xlu0 0
        %7115 = vperm.xlu0 %7114, %v7085
        %v7116 = vpop.permute.xlu0 %7115
        %7119 = vset.pattern.permute.xlu0 0
        %7120 = vperm.xlu0 %7119, %v7086
        %v7121 = vpop.permute.xlu0 %7120
        %7124 = vset.pattern.permute.xlu0 0
        %7125 = vperm.xlu0 %7124, %v7087
        %v7126 = vpop.permute.xlu0 %7125
        %7129 = vset.pattern.permute.xlu0 0
        %7130 = vperm.xlu0 %7129, %v7088
        %v7131 = vpop.permute.xlu0 %7130
        %7134 = vset.pattern.permute.xlu0 0
        %7135 = vperm.xlu0 %7134, %v7089
        %v7136 = vpop.permute.xlu0 %7135
        %7139 = vset.pattern.permute.xlu0 0
        %7140 = vperm.xlu0 %7139, %v7090
        %v7141 = vpop.permute.xlu0 %7140
        %7144 = vset.pattern.permute.xlu0 0
        %7145 = vperm.xlu0 %7144, %v7091
        %v7146 = vpop.permute.xlu0 %7145
        %7149 = vset.pattern.permute.xlu0 0
        %7150 = vperm.xlu0 %7149, %v7092
        %v7151 = vpop.permute.xlu0 %7150
        %7154 = vset.pattern.permute.xlu0 0
        %7155 = vperm.xlu0 %7154, %v7093
        %v7156 = vpop.permute.xlu0 %7155
        %7159 = vset.pattern.permute.xlu0 0
        %7160 = vperm.xlu0 %7159, %v7094
        %v7161 = vpop.permute.xlu0 %7160
        %7164 = vset.pattern.permute.xlu0 0
        %7165 = vperm.xlu0 %7164, %v7095
        %v7166 = vpop.permute.xlu0 %7165
        %7169 = vset.pattern.permute.xlu0 0
        %7170 = vperm.xlu0 %7169, %v7096
        %v7171 = vpop.permute.xlu0 %7170
        %7174 = vset.pattern.permute.xlu0 0
        %7175 = vperm.xlu0 %7174, %v7097
        %v7176 = vpop.permute.xlu0 %7175
        %7179 = vset.pattern.permute.xlu0 0
        %7180 = vperm.xlu0 %7179, %v7098
        %v7181 = vpop.permute.xlu0 %7180
        %7184 = vset.pattern.permute.xlu0 0
        %7185 = vperm.xlu0 %7184, %v7099
        %v7186 = vpop.permute.xlu0 %7185
        %7189 = vset.pattern.permute.xlu0 0
        %7190 = vperm.xlu0 %7189, %v7100
        %v7191 = vpop.permute.xlu0 %7190
        %7194 = vset.pattern.permute.xlu0 0
        %7195 = vperm.xlu0 %7194, %v7101
        %v7196 = vpop.permute.xlu0 %7195
        %7199 = vset.pattern.permute.xlu0 0
        %7200 = vperm.xlu0 %7199, %v7102
        %v7201 = vpop.permute.xlu0 %7200
        %7204 = vset.pattern.permute.xlu0 0
        %7205 = vperm.xlu0 %7204, %v7103
        %v7206 = vpop.permute.xlu0 %7205
        %7209 = vset.pattern.permute.xlu0 0
        %7210 = vperm.xlu0 %7209, %v7104
        %v7211 = vpop.permute.xlu0 %7210
        %7214 = vset.pattern.permute.xlu0 0
        %7215 = vperm.xlu0 %7214, %v7105
        %v7216 = vpop.permute.xlu0 %7215
        %7219 = vset.pattern.permute.xlu0 0
        %7220 = vperm.xlu0 %7219, %v7106
        %v7221 = vpop.permute.xlu0 %7220
        %7224 = vset.pattern.permute.xlu0 0
        %7225 = vperm.xlu0 %7224, %v7107
        %v7226 = vpop.permute.xlu0 %7225
        %v7228 = vmul.f32 %v7060, %v7111
        %v7229 = vmul.f32 %v7061, %v7116
        %v7230 = vmul.f32 %v7062, %v7121
        %v7231 = vmul.f32 %v7063, %v7126
        %v7232 = vmul.f32 %v7064, %v7131
        %v7233 = vmul.f32 %v7065, %v7136
        %v7234 = vmul.f32 %v7066, %v7141
        %v7235 = vmul.f32 %v7067, %v7146
        %v7236 = vmul.f32 %v7068, %v7151
        %v7237 = vmul.f32 %v7069, %v7156
        %v7238 = vmul.f32 %v7070, %v7161
        %v7239 = vmul.f32 %v7071, %v7166
        %v7240 = vmul.f32 %v7072, %v7171
        %v7241 = vmul.f32 %v7073, %v7176
        %v7242 = vmul.f32 %v7074, %v7181
        %v7243 = vmul.f32 %v7075, %v7186
        %v7244 = vmul.f32 %v7076, %v7191
        %v7245 = vmul.f32 %v7077, %v7196
        %v7246 = vmul.f32 %v7078, %v7201
        %v7247 = vmul.f32 %v7079, %v7206
        %v7248 = vmul.f32 %v7080, %v7211
        %v7249 = vmul.f32 %v7081, %v7216
        %v7250 = vmul.f32 %v7082, %v7221
        %v7251 = vmul.f32 %v7083, %v7226
        %s7252 = scalar_lea.vmem %s439, 128
        %v7253 = vld [vmem:[%s7252] sm:$0xff]
        %v7254 = vld [vmem:[%s7252 + $0x8] sm:$0xff]
        %v7255 = vld [vmem:[%s7252 + $0x10] sm:$0xff]
        %v7256 = vld [vmem:[%s7252 + $0x18] sm:$0x1]
        %v7258 = vsel %vm445, %v7228, 0
        %v7261 = vsel %vm445, %v7229, 0
        %v7264 = vsel %vm445, %v7230, 0
        %v7267 = vsel %vm445, %v7231, 0
        %v7270 = vsel %vm445, %v7232, 0
        %v7273 = vsel %vm445, %v7233, 0
        %v7276 = vsel %vm445, %v7234, 0
        %v7279 = vsel %vm445, %v7235, 0
        %v7282 = vsel %vm445, %v7236, 0
        %v7285 = vsel %vm445, %v7237, 0
        %v7288 = vsel %vm445, %v7238, 0
        %v7291 = vsel %vm445, %v7239, 0
        %v7294 = vsel %vm445, %v7240, 0
        %v7297 = vsel %vm445, %v7241, 0
        %v7300 = vsel %vm445, %v7242, 0
        %v7303 = vsel %vm445, %v7243, 0
        %v7306 = vsel %vm445, %v7244, 0
        %v7309 = vsel %vm445, %v7245, 0
        %v7312 = vsel %vm445, %v7246, 0
        %v7315 = vsel %vm445, %v7247, 0
        %v7318 = vsel %vm445, %v7248, 0
        %v7321 = vsel %vm445, %v7249, 0
        %v7324 = vsel %vm445, %v7250, 0
        %v7327 = vsel %vm445, %v7251, 0
        %v7330 = vsel %vm581, %v7256, 0
        %7332 = vmatprep.subr.mxu0 0.0
        %7333 = vmatpush1.msra.mxu0 %v7253
        %7334 = vmatprep.subr.mxu0 0.0
        %7335 = vmatpush1.msra.mxu0 %v7254
        %7336 = vmatprep.subr.mxu0 0.0
        %7337 = vmatpush1.msra.mxu0 %v7255
        %7338 = vmatprep.subr.mxu0 0.0
        %7339 = vmatpush1.msra.mxu0 %v7330
        %7340 = vmatprep.subr.mxu0 0.0
        %7341 = vmatpush1.msra.mxu0 0.0
        %7342 = vmatprep.subr.mxu0 0.0
        %7343 = vmatpush1.msra.mxu0 0.0
        %7344 = vmatprep.subr.mxu0 0.0
        %7345 = vmatpush1.msra.mxu0 0.0
        %7346 = vmatprep.subr.mxu0 0.0
        %7347 = vmatpush1.msra.mxu0 0.0
        %7348 = vmatprep.subr.mxu0 0.0
        %7349 = vmatpush1.msra.mxu0 0.0
        %7350 = vmatprep.subr.mxu0 0.0
        %7351 = vmatpush1.msra.mxu0 0.0
        %7352 = vmatprep.subr.mxu0 0.0
        %7353 = vmatpush1.msra.mxu0 0.0
        %7354 = vmatprep.subr.mxu0 0.0
        %7355 = vmatpush1.msra.mxu0 0.0
        %7356 = vmatprep.subr.mxu0 0.0
        %7357 = vmatpush1.msra.mxu0 0.0
        %7358 = vmatprep.subr.mxu0 0.0
        %7359 = vmatpush1.msra.mxu0 0.0
        %7360 = vmatprep.subr.mxu0 0.0
        %7361 = vmatpush1.msra.mxu0 0.0
        %7362 = vmatprep.subr.mxu0 0.0
        %7363 = vmatpush1.msra.mxu0 0.0
        %7364 = vmatprep.subr.mxu0 0.0
        %7365 = vmatpush1.msra.mxu0 0.0
        %7366 = vmatprep.subr.mxu0 0.0
        %7367 = vmatpush1.msra.mxu0 0.0
        %7368 = vmatprep.subr.mxu0 0.0
        %7369 = vmatpush1.msra.mxu0 0.0
        %7370 = vmatprep.subr.mxu0 0.0
        %7371 = vmatpush1.msra.mxu0 0.0
        %7372 = vmatprep.subr.mxu0 0.0
        %7373 = vmatpush1.msra.mxu0 0.0
        %7374 = vmatprep.subr.mxu0 0.0
        %7375 = vmatpush1.msra.mxu0 0.0
        %7376 = vmatprep.subr.mxu0 0.0
        %7377 = vmatpush1.msra.mxu0 0.0
        %7378 = vmatprep.subr.mxu0 0.0
        %7379 = vmatpush1.msra.mxu0 0.0
        %7380 = vmatprep.subr.mxu0 0.0
        %7381 = vmatpush1.msra.mxu0 0.0
        %7382 = vmatprep.subr.mxu0 0.0
        %7383 = vmatpush1.msra.mxu0 0.0
        %7384 = vmatprep.subr.mxu0 0.0
        %7385 = vmatpush1.msra.mxu0 0.0
        %7386 = vmatprep.subr.mxu0 0.0
        %7387 = vmatpush1.msra.mxu0 0.0
        %7388 = vmatprep.subr.mxu0 0.0
        %7389 = vmatpush1.msra.mxu0 0.0
        %7390 = vmatprep.subr.mxu0 0.0
        %7391 = vmatpush1.msra.mxu0 0.0
        %7392 = vmatprep.subr.mxu0 0.0
        %7393 = vmatpush1.msra.mxu0 0.0
        %7394 = vmatprep.subr.mxu0 0.0
        %7395 = vmatpush1.msra.mxu0 0.0
        %7396 = vmatprep.mubr.f32.mxu0 0.0
        %7397 = vmatmul.mubr.f32.gmra.mrb[0].mxu0 %v7258
        %v7398 = vpop.f32.mrb[0].mxu0
        %v7399 = vadd.f32 0.0, %v7398
        %v7400 = vpop.f32.mrb[0].mxu0
        %7401 = vmatprep.mubr.f32.mxu0 0.0
        %7402 = vmatmul.mubr.f32.gmra.mrb[0].mxu0 %v7261
        %v7403 = vpop.f32.mrb[0].mxu0
        %v7404 = vadd.f32 0.0, %v7403
        %v7405 = vpop.f32.mrb[0].mxu0
        %7406 = vmatprep.mubr.f32.mxu0 0.0
        %7407 = vmatmul.mubr.f32.gmra.mrb[0].mxu0 %v7264
        %v7408 = vpop.f32.mrb[0].mxu0
        %v7409 = vadd.f32 0.0, %v7408
        %v7410 = vpop.f32.mrb[0].mxu0
        %7411 = vmatprep.mubr.f32.mxu0 0.0
        %7412 = vmatmul.mubr.f32.gmra.mrb[0].mxu0 %v7267
        %v7413 = vpop.f32.mrb[0].mxu0
        %v7414 = vadd.f32 0.0, %v7413
        %v7415 = vpop.f32.mrb[0].mxu0
        %7416 = vmatprep.mubr.f32.mxu0 0.0
        %7417 = vmatmul.mubr.f32.gmra.mrb[0].mxu0 %v7270
        %v7418 = vpop.f32.mrb[0].mxu0
        %v7419 = vadd.f32 0.0, %v7418
        %v7420 = vpop.f32.mrb[0].mxu0
        %7421 = vmatprep.mubr.f32.mxu0 0.0
        %7422 = vmatmul.mubr.f32.gmra.mrb[0].mxu0 %v7273
        %v7423 = vpop.f32.mrb[0].mxu0
        %v7424 = vadd.f32 0.0, %v7423
        %v7425 = vpop.f32.mrb[0].mxu0
        %7426 = vmatprep.mubr.f32.mxu0 0.0
        %7427 = vmatmul.mubr.f32.gmra.mrb[0].mxu0 %v7276
        %v7428 = vpop.f32.mrb[0].mxu0
        %v7429 = vadd.f32 0.0, %v7428
        %v7430 = vpop.f32.mrb[0].mxu0
        %7431 = vmatprep.mubr.f32.mxu0 0.0
        %7432 = vmatmul.mubr.f32.gmra.mrb[0].mxu0 %v7279
        %v7433 = vpop.f32.mrb[0].mxu0
        %v7434 = vadd.f32 0.0, %v7433
        %v7435 = vpop.f32.mrb[0].mxu0
        %7436 = vmatprep.mubr.f32.mxu0 0.0
        %7437 = vmatmul.mubr.f32.gmra.mrb[0].mxu0 %v7282
        %v7438 = vpop.f32.mrb[0].mxu0
        %v7439 = vadd.f32 0.0, %v7438
        %v7440 = vpop.f32.mrb[0].mxu0
        %7441 = vmatprep.mubr.f32.mxu0 0.0
        %7442 = vmatmul.mubr.f32.gmra.mrb[0].mxu0 %v7285
        %v7443 = vpop.f32.mrb[0].mxu0
        %v7444 = vadd.f32 0.0, %v7443
        %v7445 = vpop.f32.mrb[0].mxu0
        %7446 = vmatprep.mubr.f32.mxu0 0.0
        %7447 = vmatmul.mubr.f32.gmra.mrb[0].mxu0 %v7288
        %v7448 = vpop.f32.mrb[0].mxu0
        %v7449 = vadd.f32 0.0, %v7448
        %v7450 = vpop.f32.mrb[0].mxu0
        %7451 = vmatprep.mubr.f32.mxu0 0.0
        %7452 = vmatmul.mubr.f32.gmra.mrb[0].mxu0 %v7291
        %v7453 = vpop.f32.mrb[0].mxu0
        %v7454 = vadd.f32 0.0, %v7453
        %v7455 = vpop.f32.mrb[0].mxu0
        %7456 = vmatprep.mubr.f32.mxu0 0.0
        %7457 = vmatmul.mubr.f32.gmra.mrb[0].mxu0 %v7294
        %v7458 = vpop.f32.mrb[0].mxu0
        %v7459 = vadd.f32 0.0, %v7458
        %v7460 = vpop.f32.mrb[0].mxu0
        %7461 = vmatprep.mubr.f32.mxu0 0.0
        %7462 = vmatmul.mubr.f32.gmra.mrb[0].mxu0 %v7297
        %v7463 = vpop.f32.mrb[0].mxu0
        %v7464 = vadd.f32 0.0, %v7463
        %v7465 = vpop.f32.mrb[0].mxu0
        %7466 = vmatprep.mubr.f32.mxu0 0.0
        %7467 = vmatmul.mubr.f32.gmra.mrb[0].mxu0 %v7300
        %v7468 = vpop.f32.mrb[0].mxu0
        %v7469 = vadd.f32 0.0, %v7468
        %v7470 = vpop.f32.mrb[0].mxu0
        %7471 = vmatprep.mubr.f32.mxu0 0.0
        %7472 = vmatmul.mubr.f32.gmra.mrb[0].mxu0 %v7303
        %v7473 = vpop.f32.mrb[0].mxu0
        %v7474 = vadd.f32 0.0, %v7473
        %v7475 = vpop.f32.mrb[0].mxu0
        %7476 = vmatprep.mubr.f32.mxu0 0.0
        %7477 = vmatmul.mubr.f32.gmra.mrb[0].mxu0 %v7306
        %v7478 = vpop.f32.mrb[0].mxu0
        %v7479 = vadd.f32 0.0, %v7478
        %v7480 = vpop.f32.mrb[0].mxu0
        %7481 = vmatprep.mubr.f32.mxu0 0.0
        %7482 = vmatmul.mubr.f32.gmra.mrb[0].mxu0 %v7309
        %v7483 = vpop.f32.mrb[0].mxu0
        %v7484 = vadd.f32 0.0, %v7483
        %v7485 = vpop.f32.mrb[0].mxu0
        %7486 = vmatprep.mubr.f32.mxu0 0.0
        %7487 = vmatmul.mubr.f32.gmra.mrb[0].mxu0 %v7312
        %v7488 = vpop.f32.mrb[0].mxu0
        %v7489 = vadd.f32 0.0, %v7488
        %v7490 = vpop.f32.mrb[0].mxu0
        %7491 = vmatprep.mubr.f32.mxu0 0.0
        %7492 = vmatmul.mubr.f32.gmra.mrb[0].mxu0 %v7315
        %v7493 = vpop.f32.mrb[0].mxu0
        %v7494 = vadd.f32 0.0, %v7493
        %v7495 = vpop.f32.mrb[0].mxu0
        %7496 = vmatprep.mubr.f32.mxu0 0.0
        %7497 = vmatmul.mubr.f32.gmra.mrb[0].mxu0 %v7318
        %v7498 = vpop.f32.mrb[0].mxu0
        %v7499 = vadd.f32 0.0, %v7498
        %v7500 = vpop.f32.mrb[0].mxu0
        %7501 = vmatprep.mubr.f32.mxu0 0.0
        %7502 = vmatmul.mubr.f32.gmra.mrb[0].mxu0 %v7321
        %v7503 = vpop.f32.mrb[0].mxu0
        %v7504 = vadd.f32 0.0, %v7503
        %v7505 = vpop.f32.mrb[0].mxu0
        %7506 = vmatprep.mubr.f32.mxu0 0.0
        %7507 = vmatmul.mubr.f32.gmra.mrb[0].mxu0 %v7324
        %v7508 = vpop.f32.mrb[0].mxu0
        %v7509 = vadd.f32 0.0, %v7508
        %v7510 = vpop.f32.mrb[0].mxu0
        %7511 = vmatprep.mubr.f32.mxu0 0.0
        %7512 = vmatmul.mubr.f32.gmra.mrb[0].mxu0 %v7327
        %v7513 = vpop.f32.mrb[0].mxu0
        %v7514 = vadd.f32 0.0, %v7513
        %v7515 = vpop.f32.mrb[0].mxu0
        %7516 = vdwg.mxu0
        %v7517 = vadd.f32 %v7036, %v7399
        %v7518 = vadd.f32 %v7037, %v7404
        %v7519 = vadd.f32 %v7038, %v7409
        %v7520 = vadd.f32 %v7039, %v7414
        %v7521 = vadd.f32 %v7040, %v7419
        %v7522 = vadd.f32 %v7041, %v7424
        %v7523 = vadd.f32 %v7042, %v7429
        %v7524 = vadd.f32 %v7043, %v7434
        %v7525 = vadd.f32 %v7044, %v7439
        %v7526 = vadd.f32 %v7045, %v7444
        %v7527 = vadd.f32 %v7046, %v7449
        %v7528 = vadd.f32 %v7047, %v7454
        %v7529 = vadd.f32 %v7048, %v7459
        %v7530 = vadd.f32 %v7049, %v7464
        %v7531 = vadd.f32 %v7050, %v7469
        %v7532 = vadd.f32 %v7051, %v7474
        %v7533 = vadd.f32 %v7052, %v7479
        %v7534 = vadd.f32 %v7053, %v7484
        %v7535 = vadd.f32 %v7054, %v7489
        %v7536 = vadd.f32 %v7055, %v7494
        %v7537 = vadd.f32 %v7056, %v7499
        %v7538 = vadd.f32 %v7057, %v7504
        %v7539 = vadd.f32 %v7058, %v7509
        %v7540 = vadd.f32 %v7059, %v7514
        %v7541 = vld [vmem:[#allocation2 + $0x11] sm:$0xff]
        %v7542 = vld [vmem:[#allocation2 + $0x19] sm:$0xff]
        %v7543 = vld [vmem:[#allocation2 + $0x21] sm:$0xff]
        %v7544 = vld [vmem:[#allocation2 + $0x29] sm:$0xff]
        %v7545 = vld [vmem:[#allocation2 + $0x31] sm:$0xff]
        %v7546 = vld [vmem:[#allocation2 + $0x39] sm:$0xff]
        %v7547 = vld [vmem:[#allocation2 + $0x41] sm:$0xff]
        %v7548 = vld [vmem:[#allocation2 + $0x49] sm:$0xff]
        %v7549 = vld [vmem:[#allocation2 + $0x51] sm:$0xff]
        %v7550 = vld [vmem:[#allocation2 + $0x59] sm:$0xff]
        %v7551 = vld [vmem:[#allocation2 + $0x61] sm:$0xff]
        %v7552 = vld [vmem:[#allocation2 + $0x69] sm:$0xff]
        %v7553 = vld [vmem:[#allocation2 + $0x71] sm:$0xff]
        %v7554 = vld [vmem:[#allocation2 + $0x79] sm:$0xff]
        %v7555 = vld [vmem:[#allocation2 + $0x81] sm:$0xff]
        %v7556 = vld [vmem:[#allocation2 + $0x89] sm:$0xff]
        %v7557 = vld [vmem:[#allocation2 + $0x91] sm:$0xff]
        %v7558 = vld [vmem:[#allocation2 + $0x99] sm:$0xff]
        %v7559 = vld [vmem:[#allocation2 + $0xa1] sm:$0xff]
        %v7560 = vld [vmem:[#allocation2 + $0xa9] sm:$0xff]
        %v7561 = vld [vmem:[#allocation2 + $0xb1] sm:$0xff]
        %v7562 = vld [vmem:[#allocation2 + $0xb9] sm:$0xff]
        %v7563 = vld [vmem:[#allocation2 + $0xc1] sm:$0xff]
        %v7564 = vld [vmem:[#allocation2 + $0xc9] sm:$0xff]
        %v7565 = vld [vmem:[%s3202] sm:$0xff]
        %v7566 = vld [vmem:[%s3202 + $0x8] sm:$0xff]
        %v7567 = vld [vmem:[%s3202 + $0x10] sm:$0xff]
        %v7568 = vld [vmem:[%s3202 + $0x18] sm:$0xff]
        %v7569 = vld [vmem:[%s3202 + $0x20] sm:$0xff]
        %v7570 = vld [vmem:[%s3202 + $0x28] sm:$0xff]
        %v7571 = vld [vmem:[%s3202 + $0x30] sm:$0xff]
        %v7572 = vld [vmem:[%s3202 + $0x38] sm:$0xff]
        %v7573 = vld [vmem:[%s3202 + $0x40] sm:$0xff]
        %v7574 = vld [vmem:[%s3202 + $0x48] sm:$0xff]
        %v7575 = vld [vmem:[%s3202 + $0x50] sm:$0xff]
        %v7576 = vld [vmem:[%s3202 + $0x58] sm:$0xff]
        %v7577 = vld [vmem:[%s3202 + $0x60] sm:$0xff]
        %v7578 = vld [vmem:[%s3202 + $0x68] sm:$0xff]
        %v7579 = vld [vmem:[%s3202 + $0x70] sm:$0xff]
        %v7580 = vld [vmem:[%s3202 + $0x78] sm:$0xff]
        %v7581 = vld [vmem:[%s3202 + $0x80] sm:$0xff]
        %v7582 = vld [vmem:[%s3202 + $0x88] sm:$0xff]
        %v7583 = vld [vmem:[%s3202 + $0x90] sm:$0xff]
        %v7584 = vld [vmem:[%s3202 + $0x98] sm:$0xff]
        %v7585 = vld [vmem:[%s3202 + $0xa0] sm:$0xff]
        %v7586 = vld [vmem:[%s3202 + $0xa8] sm:$0xff]
        %v7587 = vld [vmem:[%s3202 + $0xb0] sm:$0xff]
        %v7588 = vld [vmem:[%s3202 + $0xb8] sm:$0xff]
        %7590 = vset.pattern.permute.xlu0 0
        %7591 = vperm.xlu0 %7590, %v7565
        %v7592 = vpop.permute.xlu0 %7591
        %7595 = vset.pattern.permute.xlu0 0
        %7596 = vperm.xlu0 %7595, %v7566
        %v7597 = vpop.permute.xlu0 %7596
        %7600 = vset.pattern.permute.xlu0 0
        %7601 = vperm.xlu0 %7600, %v7567
        %v7602 = vpop.permute.xlu0 %7601
        %7605 = vset.pattern.permute.xlu0 0
        %7606 = vperm.xlu0 %7605, %v7568
        %v7607 = vpop.permute.xlu0 %7606
        %7610 = vset.pattern.permute.xlu0 0
        %7611 = vperm.xlu0 %7610, %v7569
        %v7612 = vpop.permute.xlu0 %7611
        %7615 = vset.pattern.permute.xlu0 0
        %7616 = vperm.xlu0 %7615, %v7570
        %v7617 = vpop.permute.xlu0 %7616
        %7620 = vset.pattern.permute.xlu0 0
        %7621 = vperm.xlu0 %7620, %v7571
        %v7622 = vpop.permute.xlu0 %7621
        %7625 = vset.pattern.permute.xlu0 0
        %7626 = vperm.xlu0 %7625, %v7572
        %v7627 = vpop.permute.xlu0 %7626
        %7630 = vset.pattern.permute.xlu0 0
        %7631 = vperm.xlu0 %7630, %v7573
        %v7632 = vpop.permute.xlu0 %7631
        %7635 = vset.pattern.permute.xlu0 0
        %7636 = vperm.xlu0 %7635, %v7574
        %v7637 = vpop.permute.xlu0 %7636
        %7640 = vset.pattern.permute.xlu0 0
        %7641 = vperm.xlu0 %7640, %v7575
        %v7642 = vpop.permute.xlu0 %7641
        %7645 = vset.pattern.permute.xlu0 0
        %7646 = vperm.xlu0 %7645, %v7576
        %v7647 = vpop.permute.xlu0 %7646
        %7650 = vset.pattern.permute.xlu0 0
        %7651 = vperm.xlu0 %7650, %v7577
        %v7652 = vpop.permute.xlu0 %7651
        %7655 = vset.pattern.permute.xlu0 0
        %7656 = vperm.xlu0 %7655, %v7578
        %v7657 = vpop.permute.xlu0 %7656
        %7660 = vset.pattern.permute.xlu0 0
        %7661 = vperm.xlu0 %7660, %v7579
        %v7662 = vpop.permute.xlu0 %7661
        %7665 = vset.pattern.permute.xlu0 0
        %7666 = vperm.xlu0 %7665, %v7580
        %v7667 = vpop.permute.xlu0 %7666
        %7670 = vset.pattern.permute.xlu0 0
        %7671 = vperm.xlu0 %7670, %v7581
        %v7672 = vpop.permute.xlu0 %7671
        %7675 = vset.pattern.permute.xlu0 0
        %7676 = vperm.xlu0 %7675, %v7582
        %v7677 = vpop.permute.xlu0 %7676
        %7680 = vset.pattern.permute.xlu0 0
        %7681 = vperm.xlu0 %7680, %v7583
        %v7682 = vpop.permute.xlu0 %7681
        %7685 = vset.pattern.permute.xlu0 0
        %7686 = vperm.xlu0 %7685, %v7584
        %v7687 = vpop.permute.xlu0 %7686
        %7690 = vset.pattern.permute.xlu0 0
        %7691 = vperm.xlu0 %7690, %v7585
        %v7692 = vpop.permute.xlu0 %7691
        %7695 = vset.pattern.permute.xlu0 0
        %7696 = vperm.xlu0 %7695, %v7586
        %v7697 = vpop.permute.xlu0 %7696
        %7700 = vset.pattern.permute.xlu0 0
        %7701 = vperm.xlu0 %7700, %v7587
        %v7702 = vpop.permute.xlu0 %7701
        %7705 = vset.pattern.permute.xlu0 0
        %7706 = vperm.xlu0 %7705, %v7588
        %v7707 = vpop.permute.xlu0 %7706
        %v7709 = vmul.f32 %v7541, %v7592
        %v7710 = vmul.f32 %v7542, %v7597
        %v7711 = vmul.f32 %v7543, %v7602
        %v7712 = vmul.f32 %v7544, %v7607
        %v7713 = vmul.f32 %v7545, %v7612
        %v7714 = vmul.f32 %v7546, %v7617
        %v7715 = vmul.f32 %v7547, %v7622
        %v7716 = vmul.f32 %v7548, %v7627
        %v7717 = vmul.f32 %v7549, %v7632
        %v7718 = vmul.f32 %v7550, %v7637
        %v7719 = vmul.f32 %v7551, %v7642
        %v7720 = vmul.f32 %v7552, %v7647
        %v7721 = vmul.f32 %v7553, %v7652
        %v7722 = vmul.f32 %v7554, %v7657
        %v7723 = vmul.f32 %v7555, %v7662
        %v7724 = vmul.f32 %v7556, %v7667
        %v7725 = vmul.f32 %v7557, %v7672
        %v7726 = vmul.f32 %v7558, %v7677
        %v7727 = vmul.f32 %v7559, %v7682
        %v7728 = vmul.f32 %v7560, %v7687
        %v7729 = vmul.f32 %v7561, %v7692
        %v7730 = vmul.f32 %v7562, %v7697
        %v7731 = vmul.f32 %v7563, %v7702
        %v7732 = vmul.f32 %v7564, %v7707
        %s7733 = scalar_lea.vmem %s439, 160
        %v7734 = vld [vmem:[%s7733] sm:$0xff]
        %v7735 = vld [vmem:[%s7733 + $0x8] sm:$0xff]
        %v7736 = vld [vmem:[%s7733 + $0x10] sm:$0xff]
        %v7737 = vld [vmem:[%s7733 + $0x18] sm:$0x1]
        %v7739 = vsel %vm445, %v7709, 0
        %v7742 = vsel %vm445, %v7710, 0
        %v7745 = vsel %vm445, %v7711, 0
        %v7748 = vsel %vm445, %v7712, 0
        %v7751 = vsel %vm445, %v7713, 0
        %v7754 = vsel %vm445, %v7714, 0
        %v7757 = vsel %vm445, %v7715, 0
        %v7760 = vsel %vm445, %v7716, 0
        %v7763 = vsel %vm445, %v7717, 0
        %v7766 = vsel %vm445, %v7718, 0
        %v7769 = vsel %vm445, %v7719, 0
        %v7772 = vsel %vm445, %v7720, 0
        %v7775 = vsel %vm445, %v7721, 0
        %v7778 = vsel %vm445, %v7722, 0
        %v7781 = vsel %vm445, %v7723, 0
        %v7784 = vsel %vm445, %v7724, 0
        %v7787 = vsel %vm445, %v7725, 0
        %v7790 = vsel %vm445, %v7726, 0
        %v7793 = vsel %vm445, %v7727, 0
        %v7796 = vsel %vm445, %v7728, 0
        %v7799 = vsel %vm445, %v7729, 0
        %v7802 = vsel %vm445, %v7730, 0
        %v7805 = vsel %vm445, %v7731, 0
        %v7808 = vsel %vm445, %v7732, 0
        %v7811 = vsel %vm581, %v7737, 0
        %7813 = vmatprep.subr.mxu0 0.0
        %7814 = vmatpush1.msra.mxu0 %v7734
        %7815 = vmatprep.subr.mxu0 0.0
        %7816 = vmatpush1.msra.mxu0 %v7735
        %7817 = vmatprep.subr.mxu0 0.0
        %7818 = vmatpush1.msra.mxu0 %v7736
        %7819 = vmatprep.subr.mxu0 0.0
        %7820 = vmatpush1.msra.mxu0 %v7811
        %7821 = vmatprep.subr.mxu0 0.0
        %7822 = vmatpush1.msra.mxu0 0.0
        %7823 = vmatprep.subr.mxu0 0.0
        %7824 = vmatpush1.msra.mxu0 0.0
        %7825 = vmatprep.subr.mxu0 0.0
        %7826 = vmatpush1.msra.mxu0 0.0
        %7827 = vmatprep.subr.mxu0 0.0
        %7828 = vmatpush1.msra.mxu0 0.0
        %7829 = vmatprep.subr.mxu0 0.0
        %7830 = vmatpush1.msra.mxu0 0.0
        %7831 = vmatprep.subr.mxu0 0.0
        %7832 = vmatpush1.msra.mxu0 0.0
        %7833 = vmatprep.subr.mxu0 0.0
        %7834 = vmatpush1.msra.mxu0 0.0
        %7835 = vmatprep.subr.mxu0 0.0
        %7836 = vmatpush1.msra.mxu0 0.0
        %7837 = vmatprep.subr.mxu0 0.0
        %7838 = vmatpush1.msra.mxu0 0.0
        %7839 = vmatprep.subr.mxu0 0.0
        %7840 = vmatpush1.msra.mxu0 0.0
        %7841 = vmatprep.subr.mxu0 0.0
        %7842 = vmatpush1.msra.mxu0 0.0
        %7843 = vmatprep.subr.mxu0 0.0
        %7844 = vmatpush1.msra.mxu0 0.0
        %7845 = vmatprep.subr.mxu0 0.0
        %7846 = vmatpush1.msra.mxu0 0.0
        %7847 = vmatprep.subr.mxu0 0.0
        %7848 = vmatpush1.msra.mxu0 0.0
        %7849 = vmatprep.subr.mxu0 0.0
        %7850 = vmatpush1.msra.mxu0 0.0
        %7851 = vmatprep.subr.mxu0 0.0
        %7852 = vmatpush1.msra.mxu0 0.0
        %7853 = vmatprep.subr.mxu0 0.0
        %7854 = vmatpush1.msra.mxu0 0.0
        %7855 = vmatprep.subr.mxu0 0.0
        %7856 = vmatpush1.msra.mxu0 0.0
        %7857 = vmatprep.subr.mxu0 0.0
        %7858 = vmatpush1.msra.mxu0 0.0
        %7859 = vmatprep.subr.mxu0 0.0
        %7860 = vmatpush1.msra.mxu0 0.0
        %7861 = vmatprep.subr.mxu0 0.0
        %7862 = vmatpush1.msra.mxu0 0.0
        %7863 = vmatprep.subr.mxu0 0.0
        %7864 = vmatpush1.msra.mxu0 0.0
        %7865 = vmatprep.subr.mxu0 0.0
        %7866 = vmatpush1.msra.mxu0 0.0
        %7867 = vmatprep.subr.mxu0 0.0
        %7868 = vmatpush1.msra.mxu0 0.0
        %7869 = vmatprep.subr.mxu0 0.0
        %7870 = vmatpush1.msra.mxu0 0.0
        %7871 = vmatprep.subr.mxu0 0.0
        %7872 = vmatpush1.msra.mxu0 0.0
        %7873 = vmatprep.subr.mxu0 0.0
        %7874 = vmatpush1.msra.mxu0 0.0
        %7875 = vmatprep.subr.mxu0 0.0
        %7876 = vmatpush1.msra.mxu0 0.0
        %7877 = vmatprep.mubr.f32.mxu0 0.0
        %7878 = vmatmul.mubr.f32.gmra.mrb[0].mxu0 %v7739
        %v7879 = vpop.f32.mrb[0].mxu0
        %v7880 = vadd.f32 0.0, %v7879
        %v7881 = vpop.f32.mrb[0].mxu0
        %7882 = vmatprep.mubr.f32.mxu0 0.0
        %7883 = vmatmul.mubr.f32.gmra.mrb[0].mxu0 %v7742
        %v7884 = vpop.f32.mrb[0].mxu0
        %v7885 = vadd.f32 0.0, %v7884
        %v7886 = vpop.f32.mrb[0].mxu0
        %7887 = vmatprep.mubr.f32.mxu0 0.0
        %7888 = vmatmul.mubr.f32.gmra.mrb[0].mxu0 %v7745
        %v7889 = vpop.f32.mrb[0].mxu0
        %v7890 = vadd.f32 0.0, %v7889
        %v7891 = vpop.f32.mrb[0].mxu0
        %7892 = vmatprep.mubr.f32.mxu0 0.0
        %7893 = vmatmul.mubr.f32.gmra.mrb[0].mxu0 %v7748
        %v7894 = vpop.f32.mrb[0].mxu0
        %v7895 = vadd.f32 0.0, %v7894
        %v7896 = vpop.f32.mrb[0].mxu0
        %7897 = vmatprep.mubr.f32.mxu0 0.0
        %7898 = vmatmul.mubr.f32.gmra.mrb[0].mxu0 %v7751
        %v7899 = vpop.f32.mrb[0].mxu0
        %v7900 = vadd.f32 0.0, %v7899
        %v7901 = vpop.f32.mrb[0].mxu0
        %7902 = vmatprep.mubr.f32.mxu0 0.0
        %7903 = vmatmul.mubr.f32.gmra.mrb[0].mxu0 %v7754
        %v7904 = vpop.f32.mrb[0].mxu0
        %v7905 = vadd.f32 0.0, %v7904
        %v7906 = vpop.f32.mrb[0].mxu0
        %7907 = vmatprep.mubr.f32.mxu0 0.0
        %7908 = vmatmul.mubr.f32.gmra.mrb[0].mxu0 %v7757
        %v7909 = vpop.f32.mrb[0].mxu0
        %v7910 = vadd.f32 0.0, %v7909
        %v7911 = vpop.f32.mrb[0].mxu0
        %7912 = vmatprep.mubr.f32.mxu0 0.0
        %7913 = vmatmul.mubr.f32.gmra.mrb[0].mxu0 %v7760
        %v7914 = vpop.f32.mrb[0].mxu0
        %v7915 = vadd.f32 0.0, %v7914
        %v7916 = vpop.f32.mrb[0].mxu0
        %7917 = vmatprep.mubr.f32.mxu0 0.0
        %7918 = vmatmul.mubr.f32.gmra.mrb[0].mxu0 %v7763
        %v7919 = vpop.f32.mrb[0].mxu0
        %v7920 = vadd.f32 0.0, %v7919
        %v7921 = vpop.f32.mrb[0].mxu0
        %7922 = vmatprep.mubr.f32.mxu0 0.0
        %7923 = vmatmul.mubr.f32.gmra.mrb[0].mxu0 %v7766
        %v7924 = vpop.f32.mrb[0].mxu0
        %v7925 = vadd.f32 0.0, %v7924
        %v7926 = vpop.f32.mrb[0].mxu0
        %7927 = vmatprep.mubr.f32.mxu0 0.0
        %7928 = vmatmul.mubr.f32.gmra.mrb[0].mxu0 %v7769
        %v7929 = vpop.f32.mrb[0].mxu0
        %v7930 = vadd.f32 0.0, %v7929
        %v7931 = vpop.f32.mrb[0].mxu0
        %7932 = vmatprep.mubr.f32.mxu0 0.0
        %7933 = vmatmul.mubr.f32.gmra.mrb[0].mxu0 %v7772
        %v7934 = vpop.f32.mrb[0].mxu0
        %v7935 = vadd.f32 0.0, %v7934
        %v7936 = vpop.f32.mrb[0].mxu0
        %7937 = vmatprep.mubr.f32.mxu0 0.0
        %7938 = vmatmul.mubr.f32.gmra.mrb[0].mxu0 %v7775
        %v7939 = vpop.f32.mrb[0].mxu0
        %v7940 = vadd.f32 0.0, %v7939
        %v7941 = vpop.f32.mrb[0].mxu0
        %7942 = vmatprep.mubr.f32.mxu0 0.0
        %7943 = vmatmul.mubr.f32.gmra.mrb[0].mxu0 %v7778
        %v7944 = vpop.f32.mrb[0].mxu0
        %v7945 = vadd.f32 0.0, %v7944
        %v7946 = vpop.f32.mrb[0].mxu0
        %7947 = vmatprep.mubr.f32.mxu0 0.0
        %7948 = vmatmul.mubr.f32.gmra.mrb[0].mxu0 %v7781
        %v7949 = vpop.f32.mrb[0].mxu0
        %v7950 = vadd.f32 0.0, %v7949
        %v7951 = vpop.f32.mrb[0].mxu0
        %7952 = vmatprep.mubr.f32.mxu0 0.0
        %7953 = vmatmul.mubr.f32.gmra.mrb[0].mxu0 %v7784
        %v7954 = vpop.f32.mrb[0].mxu0
        %v7955 = vadd.f32 0.0, %v7954
        %v7956 = vpop.f32.mrb[0].mxu0
        %7957 = vmatprep.mubr.f32.mxu0 0.0
        %7958 = vmatmul.mubr.f32.gmra.mrb[0].mxu0 %v7787
        %v7959 = vpop.f32.mrb[0].mxu0
        %v7960 = vadd.f32 0.0, %v7959
        %v7961 = vpop.f32.mrb[0].mxu0
        %7962 = vmatprep.mubr.f32.mxu0 0.0
        %7963 = vmatmul.mubr.f32.gmra.mrb[0].mxu0 %v7790
        %v7964 = vpop.f32.mrb[0].mxu0
        %v7965 = vadd.f32 0.0, %v7964
        %v7966 = vpop.f32.mrb[0].mxu0
        %7967 = vmatprep.mubr.f32.mxu0 0.0
        %7968 = vmatmul.mubr.f32.gmra.mrb[0].mxu0 %v7793
        %v7969 = vpop.f32.mrb[0].mxu0
        %v7970 = vadd.f32 0.0, %v7969
        %v7971 = vpop.f32.mrb[0].mxu0
        %7972 = vmatprep.mubr.f32.mxu0 0.0
        %7973 = vmatmul.mubr.f32.gmra.mrb[0].mxu0 %v7796
        %v7974 = vpop.f32.mrb[0].mxu0
        %v7975 = vadd.f32 0.0, %v7974
        %v7976 = vpop.f32.mrb[0].mxu0
        %7977 = vmatprep.mubr.f32.mxu0 0.0
        %7978 = vmatmul.mubr.f32.gmra.mrb[0].mxu0 %v7799
        %v7979 = vpop.f32.mrb[0].mxu0
        %v7980 = vadd.f32 0.0, %v7979
        %v7981 = vpop.f32.mrb[0].mxu0
        %7982 = vmatprep.mubr.f32.mxu0 0.0
        %7983 = vmatmul.mubr.f32.gmra.mrb[0].mxu0 %v7802
        %v7984 = vpop.f32.mrb[0].mxu0
        %v7985 = vadd.f32 0.0, %v7984
        %v7986 = vpop.f32.mrb[0].mxu0
        %7987 = vmatprep.mubr.f32.mxu0 0.0
        %7988 = vmatmul.mubr.f32.gmra.mrb[0].mxu0 %v7805
        %v7989 = vpop.f32.mrb[0].mxu0
        %v7990 = vadd.f32 0.0, %v7989
        %v7991 = vpop.f32.mrb[0].mxu0
        %7992 = vmatprep.mubr.f32.mxu0 0.0
        %7993 = vmatmul.mubr.f32.gmra.mrb[0].mxu0 %v7808
        %v7994 = vpop.f32.mrb[0].mxu0
        %v7995 = vadd.f32 0.0, %v7994
        %v7996 = vpop.f32.mrb[0].mxu0
        %7997 = vdwg.mxu0
        %v7998 = vadd.f32 %v7517, %v7880
        %v7999 = vadd.f32 %v7518, %v7885
        %v8000 = vadd.f32 %v7519, %v7890
        %v8001 = vadd.f32 %v7520, %v7895
        %v8002 = vadd.f32 %v7521, %v7900
        %v8003 = vadd.f32 %v7522, %v7905
        %v8004 = vadd.f32 %v7523, %v7910
        %v8005 = vadd.f32 %v7524, %v7915
        %v8006 = vadd.f32 %v7525, %v7920
        %v8007 = vadd.f32 %v7526, %v7925
        %v8008 = vadd.f32 %v7527, %v7930
        %v8009 = vadd.f32 %v7528, %v7935
        %v8010 = vadd.f32 %v7529, %v7940
        %v8011 = vadd.f32 %v7530, %v7945
        %v8012 = vadd.f32 %v7531, %v7950
        %v8013 = vadd.f32 %v7532, %v7955
        %v8014 = vadd.f32 %v7533, %v7960
        %v8015 = vadd.f32 %v7534, %v7965
        %v8016 = vadd.f32 %v7535, %v7970
        %v8017 = vadd.f32 %v7536, %v7975
        %v8018 = vadd.f32 %v7537, %v7980
        %v8019 = vadd.f32 %v7538, %v7985
        %v8020 = vadd.f32 %v7539, %v7990
        %v8021 = vadd.f32 %v7540, %v7995
        %v8022 = vld [vmem:[#allocation2 + $0x17] sm:$0xff]
        %v8023 = vld [vmem:[#allocation2 + $0x1f] sm:$0xff]
        %v8024 = vld [vmem:[#allocation2 + $0x27] sm:$0xff]
        %v8025 = vld [vmem:[#allocation2 + $0x2f] sm:$0xff]
        %v8026 = vld [vmem:[#allocation2 + $0x37] sm:$0xff]
        %v8027 = vld [vmem:[#allocation2 + $0x3f] sm:$0xff]
        %v8028 = vld [vmem:[#allocation2 + $0x47] sm:$0xff]
        %v8029 = vld [vmem:[#allocation2 + $0x4f] sm:$0xff]
        %v8030 = vld [vmem:[#allocation2 + $0x57] sm:$0xff]
        %v8031 = vld [vmem:[#allocation2 + $0x5f] sm:$0xff]
        %v8032 = vld [vmem:[#allocation2 + $0x67] sm:$0xff]
        %v8033 = vld [vmem:[#allocation2 + $0x6f] sm:$0xff]
        %v8034 = vld [vmem:[#allocation2 + $0x77] sm:$0xff]
        %v8035 = vld [vmem:[#allocation2 + $0x7f] sm:$0xff]
        %v8036 = vld [vmem:[#allocation2 + $0x87] sm:$0xff]
        %v8037 = vld [vmem:[#allocation2 + $0x8f] sm:$0xff]
        %v8038 = vld [vmem:[#allocation2 + $0x97] sm:$0xff]
        %v8039 = vld [vmem:[#allocation2 + $0x9f] sm:$0xff]
        %v8040 = vld [vmem:[#allocation2 + $0xa7] sm:$0xff]
        %v8041 = vld [vmem:[#allocation2 + $0xaf] sm:$0xff]
        %v8042 = vld [vmem:[#allocation2 + $0xb7] sm:$0xff]
        %v8043 = vld [vmem:[#allocation2 + $0xbf] sm:$0xff]
        %v8044 = vld [vmem:[#allocation2 + $0xc7] sm:$0xff]
        %v8045 = vld [vmem:[#allocation2 + $0xcf] sm:$0xff]
        %v8046 = vld [vmem:[%s3684] sm:$0xff]
        %v8047 = vld [vmem:[%s3684 + $0x8] sm:$0xff]
        %v8048 = vld [vmem:[%s3684 + $0x10] sm:$0xff]
        %v8049 = vld [vmem:[%s3684 + $0x18] sm:$0xff]
        %v8050 = vld [vmem:[%s3684 + $0x20] sm:$0xff]
        %v8051 = vld [vmem:[%s3684 + $0x28] sm:$0xff]
        %v8052 = vld [vmem:[%s3684 + $0x30] sm:$0xff]
        %v8053 = vld [vmem:[%s3684 + $0x38] sm:$0xff]
        %v8054 = vld [vmem:[%s3684 + $0x40] sm:$0xff]
        %v8055 = vld [vmem:[%s3684 + $0x48] sm:$0xff]
        %v8056 = vld [vmem:[%s3684 + $0x50] sm:$0xff]
        %v8057 = vld [vmem:[%s3684 + $0x58] sm:$0xff]
        %v8058 = vld [vmem:[%s3684 + $0x60] sm:$0xff]
        %v8059 = vld [vmem:[%s3684 + $0x68] sm:$0xff]
        %v8060 = vld [vmem:[%s3684 + $0x70] sm:$0xff]
        %v8061 = vld [vmem:[%s3684 + $0x78] sm:$0xff]
        %v8062 = vld [vmem:[%s3684 + $0x80] sm:$0xff]
        %v8063 = vld [vmem:[%s3684 + $0x88] sm:$0xff]
        %v8064 = vld [vmem:[%s3684 + $0x90] sm:$0xff]
        %v8065 = vld [vmem:[%s3684 + $0x98] sm:$0xff]
        %v8066 = vld [vmem:[%s3684 + $0xa0] sm:$0xff]
        %v8067 = vld [vmem:[%s3684 + $0xa8] sm:$0xff]
        %v8068 = vld [vmem:[%s3684 + $0xb0] sm:$0xff]
        %v8069 = vld [vmem:[%s3684 + $0xb8] sm:$0xff]
        %8071 = vset.pattern.permute.xlu0 0
        %8072 = vperm.xlu0 %8071, %v8046
        %v8073 = vpop.permute.xlu0 %8072
        %8076 = vset.pattern.permute.xlu0 0
        %8077 = vperm.xlu0 %8076, %v8047
        %v8078 = vpop.permute.xlu0 %8077
        %8081 = vset.pattern.permute.xlu0 0
        %8082 = vperm.xlu0 %8081, %v8048
        %v8083 = vpop.permute.xlu0 %8082
        %8086 = vset.pattern.permute.xlu0 0
        %8087 = vperm.xlu0 %8086, %v8049
        %v8088 = vpop.permute.xlu0 %8087
        %8091 = vset.pattern.permute.xlu0 0
        %8092 = vperm.xlu0 %8091, %v8050
        %v8093 = vpop.permute.xlu0 %8092
        %8096 = vset.pattern.permute.xlu0 0
        %8097 = vperm.xlu0 %8096, %v8051
        %v8098 = vpop.permute.xlu0 %8097
        %8101 = vset.pattern.permute.xlu0 0
        %8102 = vperm.xlu0 %8101, %v8052
        %v8103 = vpop.permute.xlu0 %8102
        %8106 = vset.pattern.permute.xlu0 0
        %8107 = vperm.xlu0 %8106, %v8053
        %v8108 = vpop.permute.xlu0 %8107
        %8111 = vset.pattern.permute.xlu0 0
        %8112 = vperm.xlu0 %8111, %v8054
        %v8113 = vpop.permute.xlu0 %8112
        %8116 = vset.pattern.permute.xlu0 0
        %8117 = vperm.xlu0 %8116, %v8055
        %v8118 = vpop.permute.xlu0 %8117
        %8121 = vset.pattern.permute.xlu0 0
        %8122 = vperm.xlu0 %8121, %v8056
        %v8123 = vpop.permute.xlu0 %8122
        %8126 = vset.pattern.permute.xlu0 0
        %8127 = vperm.xlu0 %8126, %v8057
        %v8128 = vpop.permute.xlu0 %8127
        %8131 = vset.pattern.permute.xlu0 0
        %8132 = vperm.xlu0 %8131, %v8058
        %v8133 = vpop.permute.xlu0 %8132
        %8136 = vset.pattern.permute.xlu0 0
        %8137 = vperm.xlu0 %8136, %v8059
        %v8138 = vpop.permute.xlu0 %8137
        %8141 = vset.pattern.permute.xlu0 0
        %8142 = vperm.xlu0 %8141, %v8060
        %v8143 = vpop.permute.xlu0 %8142
        %8146 = vset.pattern.permute.xlu0 0
        %8147 = vperm.xlu0 %8146, %v8061
        %v8148 = vpop.permute.xlu0 %8147
        %8151 = vset.pattern.permute.xlu0 0
        %8152 = vperm.xlu0 %8151, %v8062
        %v8153 = vpop.permute.xlu0 %8152
        %8156 = vset.pattern.permute.xlu0 0
        %8157 = vperm.xlu0 %8156, %v8063
        %v8158 = vpop.permute.xlu0 %8157
        %8161 = vset.pattern.permute.xlu0 0
        %8162 = vperm.xlu0 %8161, %v8064
        %v8163 = vpop.permute.xlu0 %8162
        %8166 = vset.pattern.permute.xlu0 0
        %8167 = vperm.xlu0 %8166, %v8065
        %v8168 = vpop.permute.xlu0 %8167
        %8171 = vset.pattern.permute.xlu0 0
        %8172 = vperm.xlu0 %8171, %v8066
        %v8173 = vpop.permute.xlu0 %8172
        %8176 = vset.pattern.permute.xlu0 0
        %8177 = vperm.xlu0 %8176, %v8067
        %v8178 = vpop.permute.xlu0 %8177
        %8181 = vset.pattern.permute.xlu0 0
        %8182 = vperm.xlu0 %8181, %v8068
        %v8183 = vpop.permute.xlu0 %8182
        %8186 = vset.pattern.permute.xlu0 0
        %8187 = vperm.xlu0 %8186, %v8069
        %v8188 = vpop.permute.xlu0 %8187
        %v8190 = vmul.f32 %v8022, %v8073
        %v8191 = vmul.f32 %v8023, %v8078
        %v8192 = vmul.f32 %v8024, %v8083
        %v8193 = vmul.f32 %v8025, %v8088
        %v8194 = vmul.f32 %v8026, %v8093
        %v8195 = vmul.f32 %v8027, %v8098
        %v8196 = vmul.f32 %v8028, %v8103
        %v8197 = vmul.f32 %v8029, %v8108
        %v8198 = vmul.f32 %v8030, %v8113
        %v8199 = vmul.f32 %v8031, %v8118
        %v8200 = vmul.f32 %v8032, %v8123
        %v8201 = vmul.f32 %v8033, %v8128
        %v8202 = vmul.f32 %v8034, %v8133
        %v8203 = vmul.f32 %v8035, %v8138
        %v8204 = vmul.f32 %v8036, %v8143
        %v8205 = vmul.f32 %v8037, %v8148
        %v8206 = vmul.f32 %v8038, %v8153
        %v8207 = vmul.f32 %v8039, %v8158
        %v8208 = vmul.f32 %v8040, %v8163
        %v8209 = vmul.f32 %v8041, %v8168
        %v8210 = vmul.f32 %v8042, %v8173
        %v8211 = vmul.f32 %v8043, %v8178
        %v8212 = vmul.f32 %v8044, %v8183
        %v8213 = vmul.f32 %v8045, %v8188
        %s8214 = scalar_lea.vmem %s439, 192
        %v8215 = vld [vmem:[%s8214] sm:$0xff]
        %v8216 = vld [vmem:[%s8214 + $0x8] sm:$0xff]
        %v8217 = vld [vmem:[%s8214 + $0x10] sm:$0xff]
        %v8218 = vld [vmem:[%s8214 + $0x18] sm:$0x1]
        %v8220 = vsel %vm445, %v8190, 0
        %v8223 = vsel %vm445, %v8191, 0
        %v8226 = vsel %vm445, %v8192, 0
        %v8229 = vsel %vm445, %v8193, 0
        %v8232 = vsel %vm445, %v8194, 0
        %v8235 = vsel %vm445, %v8195, 0
        %v8238 = vsel %vm445, %v8196, 0
        %v8241 = vsel %vm445, %v8197, 0
        %v8244 = vsel %vm445, %v8198, 0
        %v8247 = vsel %vm445, %v8199, 0
        %v8250 = vsel %vm445, %v8200, 0
        %v8253 = vsel %vm445, %v8201, 0
        %v8256 = vsel %vm445, %v8202, 0
        %v8259 = vsel %vm445, %v8203, 0
        %v8262 = vsel %vm445, %v8204, 0
        %v8265 = vsel %vm445, %v8205, 0
        %v8268 = vsel %vm445, %v8206, 0
        %v8271 = vsel %vm445, %v8207, 0
        %v8274 = vsel %vm445, %v8208, 0
        %v8277 = vsel %vm445, %v8209, 0
        %v8280 = vsel %vm445, %v8210, 0
        %v8283 = vsel %vm445, %v8211, 0
        %v8286 = vsel %vm445, %v8212, 0
        %v8289 = vsel %vm445, %v8213, 0
        %v8292 = vsel %vm581, %v8218, 0
        %8294 = vmatprep.subr.mxu0 0.0
        %8295 = vmatpush1.msra.mxu0 %v8215
        %8296 = vmatprep.subr.mxu0 0.0
        %8297 = vmatpush1.msra.mxu0 %v8216
        %8298 = vmatprep.subr.mxu0 0.0
        %8299 = vmatpush1.msra.mxu0 %v8217
        %8300 = vmatprep.subr.mxu0 0.0
        %8301 = vmatpush1.msra.mxu0 %v8292
        %8302 = vmatprep.subr.mxu0 0.0
        %8303 = vmatpush1.msra.mxu0 0.0
        %8304 = vmatprep.subr.mxu0 0.0
        %8305 = vmatpush1.msra.mxu0 0.0
        %8306 = vmatprep.subr.mxu0 0.0
        %8307 = vmatpush1.msra.mxu0 0.0
        %8308 = vmatprep.subr.mxu0 0.0
        %8309 = vmatpush1.msra.mxu0 0.0
        %8310 = vmatprep.subr.mxu0 0.0
        %8311 = vmatpush1.msra.mxu0 0.0
        %8312 = vmatprep.subr.mxu0 0.0
        %8313 = vmatpush1.msra.mxu0 0.0
        %8314 = vmatprep.subr.mxu0 0.0
        %8315 = vmatpush1.msra.mxu0 0.0
        %8316 = vmatprep.subr.mxu0 0.0
        %8317 = vmatpush1.msra.mxu0 0.0
        %8318 = vmatprep.subr.mxu0 0.0
        %8319 = vmatpush1.msra.mxu0 0.0
        %8320 = vmatprep.subr.mxu0 0.0
        %8321 = vmatpush1.msra.mxu0 0.0
        %8322 = vmatprep.subr.mxu0 0.0
        %8323 = vmatpush1.msra.mxu0 0.0
        %8324 = vmatprep.subr.mxu0 0.0
        %8325 = vmatpush1.msra.mxu0 0.0
        %8326 = vmatprep.subr.mxu0 0.0
        %8327 = vmatpush1.msra.mxu0 0.0
        %8328 = vmatprep.subr.mxu0 0.0
        %8329 = vmatpush1.msra.mxu0 0.0
        %8330 = vmatprep.subr.mxu0 0.0
        %8331 = vmatpush1.msra.mxu0 0.0
        %8332 = vmatprep.subr.mxu0 0.0
        %8333 = vmatpush1.msra.mxu0 0.0
        %8334 = vmatprep.subr.mxu0 0.0
        %8335 = vmatpush1.msra.mxu0 0.0
        %8336 = vmatprep.subr.mxu0 0.0
        %8337 = vmatpush1.msra.mxu0 0.0
        %8338 = vmatprep.subr.mxu0 0.0
        %8339 = vmatpush1.msra.mxu0 0.0
        %8340 = vmatprep.subr.mxu0 0.0
        %8341 = vmatpush1.msra.mxu0 0.0
        %8342 = vmatprep.subr.mxu0 0.0
        %8343 = vmatpush1.msra.mxu0 0.0
        %8344 = vmatprep.subr.mxu0 0.0
        %8345 = vmatpush1.msra.mxu0 0.0
        %8346 = vmatprep.subr.mxu0 0.0
        %8347 = vmatpush1.msra.mxu0 0.0
        %8348 = vmatprep.subr.mxu0 0.0
        %8349 = vmatpush1.msra.mxu0 0.0
        %8350 = vmatprep.subr.mxu0 0.0
        %8351 = vmatpush1.msra.mxu0 0.0
        %8352 = vmatprep.subr.mxu0 0.0
        %8353 = vmatpush1.msra.mxu0 0.0
        %8354 = vmatprep.subr.mxu0 0.0
        %8355 = vmatpush1.msra.mxu0 0.0
        %8356 = vmatprep.subr.mxu0 0.0
        %8357 = vmatpush1.msra.mxu0 0.0
        %8358 = vmatprep.mubr.f32.mxu0 0.0
        %8359 = vmatmul.mubr.f32.gmra.mrb[0].mxu0 %v8220
        %v8360 = vpop.f32.mrb[0].mxu0
        %v8361 = vadd.f32 0.0, %v8360
        %v8362 = vpop.f32.mrb[0].mxu0
        %8363 = vmatprep.mubr.f32.mxu0 0.0
        %8364 = vmatmul.mubr.f32.gmra.mrb[0].mxu0 %v8223
        %v8365 = vpop.f32.mrb[0].mxu0
        %v8366 = vadd.f32 0.0, %v8365
        %v8367 = vpop.f32.mrb[0].mxu0
        %8368 = vmatprep.mubr.f32.mxu0 0.0
        %8369 = vmatmul.mubr.f32.gmra.mrb[0].mxu0 %v8226
        %v8370 = vpop.f32.mrb[0].mxu0
        %v8371 = vadd.f32 0.0, %v8370
        %v8372 = vpop.f32.mrb[0].mxu0
        %8373 = vmatprep.mubr.f32.mxu0 0.0
        %8374 = vmatmul.mubr.f32.gmra.mrb[0].mxu0 %v8229
        %v8375 = vpop.f32.mrb[0].mxu0
        %v8376 = vadd.f32 0.0, %v8375
        %v8377 = vpop.f32.mrb[0].mxu0
        %8378 = vmatprep.mubr.f32.mxu0 0.0
        %8379 = vmatmul.mubr.f32.gmra.mrb[0].mxu0 %v8232
        %v8380 = vpop.f32.mrb[0].mxu0
        %v8381 = vadd.f32 0.0, %v8380
        %v8382 = vpop.f32.mrb[0].mxu0
        %8383 = vmatprep.mubr.f32.mxu0 0.0
        %8384 = vmatmul.mubr.f32.gmra.mrb[0].mxu0 %v8235
        %v8385 = vpop.f32.mrb[0].mxu0
        %v8386 = vadd.f32 0.0, %v8385
        %v8387 = vpop.f32.mrb[0].mxu0
        %8388 = vmatprep.mubr.f32.mxu0 0.0
        %8389 = vmatmul.mubr.f32.gmra.mrb[0].mxu0 %v8238
        %v8390 = vpop.f32.mrb[0].mxu0
        %v8391 = vadd.f32 0.0, %v8390
        %v8392 = vpop.f32.mrb[0].mxu0
        %8393 = vmatprep.mubr.f32.mxu0 0.0
        %8394 = vmatmul.mubr.f32.gmra.mrb[0].mxu0 %v8241
        %v8395 = vpop.f32.mrb[0].mxu0
        %v8396 = vadd.f32 0.0, %v8395
        %v8397 = vpop.f32.mrb[0].mxu0
        %8398 = vmatprep.mubr.f32.mxu0 0.0
        %8399 = vmatmul.mubr.f32.gmra.mrb[0].mxu0 %v8244
        %v8400 = vpop.f32.mrb[0].mxu0
        %v8401 = vadd.f32 0.0, %v8400
        %v8402 = vpop.f32.mrb[0].mxu0
        %8403 = vmatprep.mubr.f32.mxu0 0.0
        %8404 = vmatmul.mubr.f32.gmra.mrb[0].mxu0 %v8247
        %v8405 = vpop.f32.mrb[0].mxu0
        %v8406 = vadd.f32 0.0, %v8405
        %v8407 = vpop.f32.mrb[0].mxu0
        %8408 = vmatprep.mubr.f32.mxu0 0.0
        %8409 = vmatmul.mubr.f32.gmra.mrb[0].mxu0 %v8250
        %v8410 = vpop.f32.mrb[0].mxu0
        %v8411 = vadd.f32 0.0, %v8410
        %v8412 = vpop.f32.mrb[0].mxu0
        %8413 = vmatprep.mubr.f32.mxu0 0.0
        %8414 = vmatmul.mubr.f32.gmra.mrb[0].mxu0 %v8253
        %v8415 = vpop.f32.mrb[0].mxu0
        %v8416 = vadd.f32 0.0, %v8415
        %v8417 = vpop.f32.mrb[0].mxu0
        %8418 = vmatprep.mubr.f32.mxu0 0.0
        %8419 = vmatmul.mubr.f32.gmra.mrb[0].mxu0 %v8256
        %v8420 = vpop.f32.mrb[0].mxu0
        %v8421 = vadd.f32 0.0, %v8420
        %v8422 = vpop.f32.mrb[0].mxu0
        %8423 = vmatprep.mubr.f32.mxu0 0.0
        %8424 = vmatmul.mubr.f32.gmra.mrb[0].mxu0 %v8259
        %v8425 = vpop.f32.mrb[0].mxu0
        %v8426 = vadd.f32 0.0, %v8425
        %v8427 = vpop.f32.mrb[0].mxu0
        %8428 = vmatprep.mubr.f32.mxu0 0.0
        %8429 = vmatmul.mubr.f32.gmra.mrb[0].mxu0 %v8262
        %v8430 = vpop.f32.mrb[0].mxu0
        %v8431 = vadd.f32 0.0, %v8430
        %v8432 = vpop.f32.mrb[0].mxu0
        %8433 = vmatprep.mubr.f32.mxu0 0.0
        %8434 = vmatmul.mubr.f32.gmra.mrb[0].mxu0 %v8265
        %v8435 = vpop.f32.mrb[0].mxu0
        %v8436 = vadd.f32 0.0, %v8435
        %v8437 = vpop.f32.mrb[0].mxu0
        %8438 = vmatprep.mubr.f32.mxu0 0.0
        %8439 = vmatmul.mubr.f32.gmra.mrb[0].mxu0 %v8268
        %v8440 = vpop.f32.mrb[0].mxu0
        %v8441 = vadd.f32 0.0, %v8440
        %v8442 = vpop.f32.mrb[0].mxu0
        %8443 = vmatprep.mubr.f32.mxu0 0.0
        %8444 = vmatmul.mubr.f32.gmra.mrb[0].mxu0 %v8271
        %v8445 = vpop.f32.mrb[0].mxu0
        %v8446 = vadd.f32 0.0, %v8445
        %v8447 = vpop.f32.mrb[0].mxu0
        %8448 = vmatprep.mubr.f32.mxu0 0.0
        %8449 = vmatmul.mubr.f32.gmra.mrb[0].mxu0 %v8274
        %v8450 = vpop.f32.mrb[0].mxu0
        %v8451 = vadd.f32 0.0, %v8450
        %v8452 = vpop.f32.mrb[0].mxu0
        %8453 = vmatprep.mubr.f32.mxu0 0.0
        %8454 = vmatmul.mubr.f32.gmra.mrb[0].mxu0 %v8277
        %v8455 = vpop.f32.mrb[0].mxu0
        %v8456 = vadd.f32 0.0, %v8455
        %v8457 = vpop.f32.mrb[0].mxu0
        %8458 = vmatprep.mubr.f32.mxu0 0.0
        %8459 = vmatmul.mubr.f32.gmra.mrb[0].mxu0 %v8280
        %v8460 = vpop.f32.mrb[0].mxu0
        %v8461 = vadd.f32 0.0, %v8460
        %v8462 = vpop.f32.mrb[0].mxu0
        %8463 = vmatprep.mubr.f32.mxu0 0.0
        %8464 = vmatmul.mubr.f32.gmra.mrb[0].mxu0 %v8283
        %v8465 = vpop.f32.mrb[0].mxu0
        %v8466 = vadd.f32 0.0, %v8465
        %v8467 = vpop.f32.mrb[0].mxu0
        %8468 = vmatprep.mubr.f32.mxu0 0.0
        %8469 = vmatmul.mubr.f32.gmra.mrb[0].mxu0 %v8286
        %v8470 = vpop.f32.mrb[0].mxu0
        %v8471 = vadd.f32 0.0, %v8470
        %v8472 = vpop.f32.mrb[0].mxu0
        %8473 = vmatprep.mubr.f32.mxu0 0.0
        %8474 = vmatmul.mubr.f32.gmra.mrb[0].mxu0 %v8289
        %v8475 = vpop.f32.mrb[0].mxu0
        %v8476 = vadd.f32 0.0, %v8475
        %v8477 = vpop.f32.mrb[0].mxu0
        %8478 = vdwg.mxu0
        %v8479 = vadd.f32 %v7998, %v8361
        %v8480 = vadd.f32 %v7999, %v8366
        %v8481 = vadd.f32 %v8000, %v8371
        %v8482 = vadd.f32 %v8001, %v8376
        %v8483 = vadd.f32 %v8002, %v8381
        %v8484 = vadd.f32 %v8003, %v8386
        %v8485 = vadd.f32 %v8004, %v8391
        %v8486 = vadd.f32 %v8005, %v8396
        %v8487 = vadd.f32 %v8006, %v8401
        %v8488 = vadd.f32 %v8007, %v8406
        %v8489 = vadd.f32 %v8008, %v8411
        %v8490 = vadd.f32 %v8009, %v8416
        %v8491 = vadd.f32 %v8010, %v8421
        %v8492 = vadd.f32 %v8011, %v8426
        %v8493 = vadd.f32 %v8012, %v8431
        %v8494 = vadd.f32 %v8013, %v8436
        %v8495 = vadd.f32 %v8014, %v8441
        %v8496 = vadd.f32 %v8015, %v8446
        %v8497 = vadd.f32 %v8016, %v8451
        %v8498 = vadd.f32 %v8017, %v8456
        %v8499 = vadd.f32 %v8018, %v8461
        %v8500 = vadd.f32 %v8019, %v8466
        %v8501 = vadd.f32 %v8020, %v8471
        %v8502 = vadd.f32 %v8021, %v8476
        %v8503 = vld [vmem:[#allocation2 + $0x18] sm:$0xff]
        %v8504 = vld [vmem:[#allocation2 + $0x20] sm:$0xff]
        %v8505 = vld [vmem:[#allocation2 + $0x28] sm:$0xff]
        %v8506 = vld [vmem:[#allocation2 + $0x30] sm:$0xff]
        %v8507 = vld [vmem:[#allocation2 + $0x38] sm:$0xff]
        %v8508 = vld [vmem:[#allocation2 + $0x40] sm:$0xff]
        %v8509 = vld [vmem:[#allocation2 + $0x48] sm:$0xff]
        %v8510 = vld [vmem:[#allocation2 + $0x50] sm:$0xff]
        %v8511 = vld [vmem:[#allocation2 + $0x58] sm:$0xff]
        %v8512 = vld [vmem:[#allocation2 + $0x60] sm:$0xff]
        %v8513 = vld [vmem:[#allocation2 + $0x68] sm:$0xff]
        %v8514 = vld [vmem:[#allocation2 + $0x70] sm:$0xff]
        %v8515 = vld [vmem:[#allocation2 + $0x78] sm:$0xff]
        %v8516 = vld [vmem:[#allocation2 + $0x80] sm:$0xff]
        %v8517 = vld [vmem:[#allocation2 + $0x88] sm:$0xff]
        %v8518 = vld [vmem:[#allocation2 + $0x90] sm:$0xff]
        %v8519 = vld [vmem:[#allocation2 + $0x98] sm:$0xff]
        %v8520 = vld [vmem:[#allocation2 + $0xa0] sm:$0xff]
        %v8521 = vld [vmem:[#allocation2 + $0xa8] sm:$0xff]
        %v8522 = vld [vmem:[#allocation2 + $0xb0] sm:$0xff]
        %v8523 = vld [vmem:[#allocation2 + $0xb8] sm:$0xff]
        %v8524 = vld [vmem:[#allocation2 + $0xc0] sm:$0xff]
        %v8525 = vld [vmem:[#allocation2 + $0xc8] sm:$0xff]
        %v8526 = vld [vmem:[#allocation2 + $0xd0] sm:$0xff]
        %v8527 = vld [vmem:[%s4166] sm:$0xff]
        %v8528 = vld [vmem:[%s4166 + $0x8] sm:$0xff]
        %v8529 = vld [vmem:[%s4166 + $0x10] sm:$0xff]
        %v8530 = vld [vmem:[%s4166 + $0x18] sm:$0xff]
        %v8531 = vld [vmem:[%s4166 + $0x20] sm:$0xff]
        %v8532 = vld [vmem:[%s4166 + $0x28] sm:$0xff]
        %v8533 = vld [vmem:[%s4166 + $0x30] sm:$0xff]
        %v8534 = vld [vmem:[%s4166 + $0x38] sm:$0xff]
        %v8535 = vld [vmem:[%s4166 + $0x40] sm:$0xff]
        %v8536 = vld [vmem:[%s4166 + $0x48] sm:$0xff]
        %v8537 = vld [vmem:[%s4166 + $0x50] sm:$0xff]
        %v8538 = vld [vmem:[%s4166 + $0x58] sm:$0xff]
        %v8539 = vld [vmem:[%s4166 + $0x60] sm:$0xff]
        %v8540 = vld [vmem:[%s4166 + $0x68] sm:$0xff]
        %v8541 = vld [vmem:[%s4166 + $0x70] sm:$0xff]
        %v8542 = vld [vmem:[%s4166 + $0x78] sm:$0xff]
        %v8543 = vld [vmem:[%s4166 + $0x80] sm:$0xff]
        %v8544 = vld [vmem:[%s4166 + $0x88] sm:$0xff]
        %v8545 = vld [vmem:[%s4166 + $0x90] sm:$0xff]
        %v8546 = vld [vmem:[%s4166 + $0x98] sm:$0xff]
        %v8547 = vld [vmem:[%s4166 + $0xa0] sm:$0xff]
        %v8548 = vld [vmem:[%s4166 + $0xa8] sm:$0xff]
        %v8549 = vld [vmem:[%s4166 + $0xb0] sm:$0xff]
        %v8550 = vld [vmem:[%s4166 + $0xb8] sm:$0xff]
        %8552 = vset.pattern.permute.xlu0 0
        %8553 = vperm.xlu0 %8552, %v8527
        %v8554 = vpop.permute.xlu0 %8553
        %8557 = vset.pattern.permute.xlu0 0
        %8558 = vperm.xlu0 %8557, %v8528
        %v8559 = vpop.permute.xlu0 %8558
        %8562 = vset.pattern.permute.xlu0 0
        %8563 = vperm.xlu0 %8562, %v8529
        %v8564 = vpop.permute.xlu0 %8563
        %8567 = vset.pattern.permute.xlu0 0
        %8568 = vperm.xlu0 %8567, %v8530
        %v8569 = vpop.permute.xlu0 %8568
        %8572 = vset.pattern.permute.xlu0 0
        %8573 = vperm.xlu0 %8572, %v8531
        %v8574 = vpop.permute.xlu0 %8573
        %8577 = vset.pattern.permute.xlu0 0
        %8578 = vperm.xlu0 %8577, %v8532
        %v8579 = vpop.permute.xlu0 %8578
        %8582 = vset.pattern.permute.xlu0 0
        %8583 = vperm.xlu0 %8582, %v8533
        %v8584 = vpop.permute.xlu0 %8583
        %8587 = vset.pattern.permute.xlu0 0
        %8588 = vperm.xlu0 %8587, %v8534
        %v8589 = vpop.permute.xlu0 %8588
        %8592 = vset.pattern.permute.xlu0 0
        %8593 = vperm.xlu0 %8592, %v8535
        %v8594 = vpop.permute.xlu0 %8593
        %8597 = vset.pattern.permute.xlu0 0
        %8598 = vperm.xlu0 %8597, %v8536
        %v8599 = vpop.permute.xlu0 %8598
        %8602 = vset.pattern.permute.xlu0 0
        %8603 = vperm.xlu0 %8602, %v8537
        %v8604 = vpop.permute.xlu0 %8603
        %8607 = vset.pattern.permute.xlu0 0
        %8608 = vperm.xlu0 %8607, %v8538
        %v8609 = vpop.permute.xlu0 %8608
        %8612 = vset.pattern.permute.xlu0 0
        %8613 = vperm.xlu0 %8612, %v8539
        %v8614 = vpop.permute.xlu0 %8613
        %8617 = vset.pattern.permute.xlu0 0
        %8618 = vperm.xlu0 %8617, %v8540
        %v8619 = vpop.permute.xlu0 %8618
        %8622 = vset.pattern.permute.xlu0 0
        %8623 = vperm.xlu0 %8622, %v8541
        %v8624 = vpop.permute.xlu0 %8623
        %8627 = vset.pattern.permute.xlu0 0
        %8628 = vperm.xlu0 %8627, %v8542
        %v8629 = vpop.permute.xlu0 %8628
        %8632 = vset.pattern.permute.xlu0 0
        %8633 = vperm.xlu0 %8632, %v8543
        %v8634 = vpop.permute.xlu0 %8633
        %8637 = vset.pattern.permute.xlu0 0
        %8638 = vperm.xlu0 %8637, %v8544
        %v8639 = vpop.permute.xlu0 %8638
        %8642 = vset.pattern.permute.xlu0 0
        %8643 = vperm.xlu0 %8642, %v8545
        %v8644 = vpop.permute.xlu0 %8643
        %8647 = vset.pattern.permute.xlu0 0
        %8648 = vperm.xlu0 %8647, %v8546
        %v8649 = vpop.permute.xlu0 %8648
        %8652 = vset.pattern.permute.xlu0 0
        %8653 = vperm.xlu0 %8652, %v8547
        %v8654 = vpop.permute.xlu0 %8653
        %8657 = vset.pattern.permute.xlu0 0
        %8658 = vperm.xlu0 %8657, %v8548
        %v8659 = vpop.permute.xlu0 %8658
        %8662 = vset.pattern.permute.xlu0 0
        %8663 = vperm.xlu0 %8662, %v8549
        %v8664 = vpop.permute.xlu0 %8663
        %8667 = vset.pattern.permute.xlu0 0
        %8668 = vperm.xlu0 %8667, %v8550
        %v8669 = vpop.permute.xlu0 %8668
        %v8671 = vmul.f32 %v8503, %v8554
        %v8672 = vmul.f32 %v8504, %v8559
        %v8673 = vmul.f32 %v8505, %v8564
        %v8674 = vmul.f32 %v8506, %v8569
        %v8675 = vmul.f32 %v8507, %v8574
        %v8676 = vmul.f32 %v8508, %v8579
        %v8677 = vmul.f32 %v8509, %v8584
        %v8678 = vmul.f32 %v8510, %v8589
        %v8679 = vmul.f32 %v8511, %v8594
        %v8680 = vmul.f32 %v8512, %v8599
        %v8681 = vmul.f32 %v8513, %v8604
        %v8682 = vmul.f32 %v8514, %v8609
        %v8683 = vmul.f32 %v8515, %v8614
        %v8684 = vmul.f32 %v8516, %v8619
        %v8685 = vmul.f32 %v8517, %v8624
        %v8686 = vmul.f32 %v8518, %v8629
        %v8687 = vmul.f32 %v8519, %v8634
        %v8688 = vmul.f32 %v8520, %v8639
        %v8689 = vmul.f32 %v8521, %v8644
        %v8690 = vmul.f32 %v8522, %v8649
        %v8691 = vmul.f32 %v8523, %v8654
        %v8692 = vmul.f32 %v8524, %v8659
        %v8693 = vmul.f32 %v8525, %v8664
        %v8694 = vmul.f32 %v8526, %v8669
        %s8695 = scalar_lea.vmem %s439, 224
        %v8696 = vld [vmem:[%s8695] sm:$0xff]
        %v8697 = vld [vmem:[%s8695 + $0x8] sm:$0xff]
        %v8698 = vld [vmem:[%s8695 + $0x10] sm:$0xff]
        %v8699 = vld [vmem:[%s8695 + $0x18] sm:$0x1]
        %v8701 = vsel %vm445, %v8671, 0
        %v8704 = vsel %vm445, %v8672, 0
        %v8707 = vsel %vm445, %v8673, 0
        %v8710 = vsel %vm445, %v8674, 0
        %v8713 = vsel %vm445, %v8675, 0
        %v8716 = vsel %vm445, %v8676, 0
        %v8719 = vsel %vm445, %v8677, 0
        %v8722 = vsel %vm445, %v8678, 0
        %v8725 = vsel %vm445, %v8679, 0
        %v8728 = vsel %vm445, %v8680, 0
        %v8731 = vsel %vm445, %v8681, 0
        %v8734 = vsel %vm445, %v8682, 0
        %v8737 = vsel %vm445, %v8683, 0
        %v8740 = vsel %vm445, %v8684, 0
        %v8743 = vsel %vm445, %v8685, 0
        %v8746 = vsel %vm445, %v8686, 0
        %v8749 = vsel %vm445, %v8687, 0
        %v8752 = vsel %vm445, %v8688, 0
        %v8755 = vsel %vm445, %v8689, 0
        %v8758 = vsel %vm445, %v8690, 0
        %v8761 = vsel %vm445, %v8691, 0
        %v8764 = vsel %vm445, %v8692, 0
        %v8767 = vsel %vm445, %v8693, 0
        %v8770 = vsel %vm445, %v8694, 0
        %v8773 = vsel %vm581, %v8699, 0
        %8775 = vmatprep.subr.mxu0 0.0
        %8776 = vmatpush1.msra.mxu0 %v8696
        %8777 = vmatprep.subr.mxu0 0.0
        %8778 = vmatpush1.msra.mxu0 %v8697
        %8779 = vmatprep.subr.mxu0 0.0
        %8780 = vmatpush1.msra.mxu0 %v8698
        %8781 = vmatprep.subr.mxu0 0.0
        %8782 = vmatpush1.msra.mxu0 %v8773
        %8783 = vmatprep.subr.mxu0 0.0
        %8784 = vmatpush1.msra.mxu0 0.0
        %8785 = vmatprep.subr.mxu0 0.0
        %8786 = vmatpush1.msra.mxu0 0.0
        %8787 = vmatprep.subr.mxu0 0.0
        %8788 = vmatpush1.msra.mxu0 0.0
        %8789 = vmatprep.subr.mxu0 0.0
        %8790 = vmatpush1.msra.mxu0 0.0
        %8791 = vmatprep.subr.mxu0 0.0
        %8792 = vmatpush1.msra.mxu0 0.0
        %8793 = vmatprep.subr.mxu0 0.0
        %8794 = vmatpush1.msra.mxu0 0.0
        %8795 = vmatprep.subr.mxu0 0.0
        %8796 = vmatpush1.msra.mxu0 0.0
        %8797 = vmatprep.subr.mxu0 0.0
        %8798 = vmatpush1.msra.mxu0 0.0
        %8799 = vmatprep.subr.mxu0 0.0
        %8800 = vmatpush1.msra.mxu0 0.0
        %8801 = vmatprep.subr.mxu0 0.0
        %8802 = vmatpush1.msra.mxu0 0.0
        %8803 = vmatprep.subr.mxu0 0.0
        %8804 = vmatpush1.msra.mxu0 0.0
        %8805 = vmatprep.subr.mxu0 0.0
        %8806 = vmatpush1.msra.mxu0 0.0
        %8807 = vmatprep.subr.mxu0 0.0
        %8808 = vmatpush1.msra.mxu0 0.0
        %8809 = vmatprep.subr.mxu0 0.0
        %8810 = vmatpush1.msra.mxu0 0.0
        %8811 = vmatprep.subr.mxu0 0.0
        %8812 = vmatpush1.msra.mxu0 0.0
        %8813 = vmatprep.subr.mxu0 0.0
        %8814 = vmatpush1.msra.mxu0 0.0
        %8815 = vmatprep.subr.mxu0 0.0
        %8816 = vmatpush1.msra.mxu0 0.0
        %8817 = vmatprep.subr.mxu0 0.0
        %8818 = vmatpush1.msra.mxu0 0.0
        %8819 = vmatprep.subr.mxu0 0.0
        %8820 = vmatpush1.msra.mxu0 0.0
        %8821 = vmatprep.subr.mxu0 0.0
        %8822 = vmatpush1.msra.mxu0 0.0
        %8823 = vmatprep.subr.mxu0 0.0
        %8824 = vmatpush1.msra.mxu0 0.0
        %8825 = vmatprep.subr.mxu0 0.0
        %8826 = vmatpush1.msra.mxu0 0.0
        %8827 = vmatprep.subr.mxu0 0.0
        %8828 = vmatpush1.msra.mxu0 0.0
        %8829 = vmatprep.subr.mxu0 0.0
        %8830 = vmatpush1.msra.mxu0 0.0
        %8831 = vmatprep.subr.mxu0 0.0
        %8832 = vmatpush1.msra.mxu0 0.0
        %8833 = vmatprep.subr.mxu0 0.0
        %8834 = vmatpush1.msra.mxu0 0.0
        %8835 = vmatprep.subr.mxu0 0.0
        %8836 = vmatpush1.msra.mxu0 0.0
        %8837 = vmatprep.subr.mxu0 0.0
        %8838 = vmatpush1.msra.mxu0 0.0
        %8839 = vmatprep.mubr.f32.mxu0 0.0
        %8840 = vmatmul.mubr.f32.gmra.mrb[0].mxu0 %v8701
        %v8841 = vpop.f32.mrb[0].mxu0
        %v8842 = vadd.f32 0.0, %v8841
        %v8843 = vpop.f32.mrb[0].mxu0
        %8844 = vmatprep.mubr.f32.mxu0 0.0
        %8845 = vmatmul.mubr.f32.gmra.mrb[0].mxu0 %v8704
        %v8846 = vpop.f32.mrb[0].mxu0
        %v8847 = vadd.f32 0.0, %v8846
        %v8848 = vpop.f32.mrb[0].mxu0
        %8849 = vmatprep.mubr.f32.mxu0 0.0
        %8850 = vmatmul.mubr.f32.gmra.mrb[0].mxu0 %v8707
        %v8851 = vpop.f32.mrb[0].mxu0
        %v8852 = vadd.f32 0.0, %v8851
        %v8853 = vpop.f32.mrb[0].mxu0
        %8854 = vmatprep.mubr.f32.mxu0 0.0
        %8855 = vmatmul.mubr.f32.gmra.mrb[0].mxu0 %v8710
        %v8856 = vpop.f32.mrb[0].mxu0
        %v8857 = vadd.f32 0.0, %v8856
        %v8858 = vpop.f32.mrb[0].mxu0
        %8859 = vmatprep.mubr.f32.mxu0 0.0
        %8860 = vmatmul.mubr.f32.gmra.mrb[0].mxu0 %v8713
        %v8861 = vpop.f32.mrb[0].mxu0
        %v8862 = vadd.f32 0.0, %v8861
        %v8863 = vpop.f32.mrb[0].mxu0
        %8864 = vmatprep.mubr.f32.mxu0 0.0
        %8865 = vmatmul.mubr.f32.gmra.mrb[0].mxu0 %v8716
        %v8866 = vpop.f32.mrb[0].mxu0
        %v8867 = vadd.f32 0.0, %v8866
        %v8868 = vpop.f32.mrb[0].mxu0
        %8869 = vmatprep.mubr.f32.mxu0 0.0
        %8870 = vmatmul.mubr.f32.gmra.mrb[0].mxu0 %v8719
        %v8871 = vpop.f32.mrb[0].mxu0
        %v8872 = vadd.f32 0.0, %v8871
        %v8873 = vpop.f32.mrb[0].mxu0
        %8874 = vmatprep.mubr.f32.mxu0 0.0
        %8875 = vmatmul.mubr.f32.gmra.mrb[0].mxu0 %v8722
        %v8876 = vpop.f32.mrb[0].mxu0
        %v8877 = vadd.f32 0.0, %v8876
        %v8878 = vpop.f32.mrb[0].mxu0
        %8879 = vmatprep.mubr.f32.mxu0 0.0
        %8880 = vmatmul.mubr.f32.gmra.mrb[0].mxu0 %v8725
        %v8881 = vpop.f32.mrb[0].mxu0
        %v8882 = vadd.f32 0.0, %v8881
        %v8883 = vpop.f32.mrb[0].mxu0
        %8884 = vmatprep.mubr.f32.mxu0 0.0
        %8885 = vmatmul.mubr.f32.gmra.mrb[0].mxu0 %v8728
        %v8886 = vpop.f32.mrb[0].mxu0
        %v8887 = vadd.f32 0.0, %v8886
        %v8888 = vpop.f32.mrb[0].mxu0
        %8889 = vmatprep.mubr.f32.mxu0 0.0
        %8890 = vmatmul.mubr.f32.gmra.mrb[0].mxu0 %v8731
        %v8891 = vpop.f32.mrb[0].mxu0
        %v8892 = vadd.f32 0.0, %v8891
        %v8893 = vpop.f32.mrb[0].mxu0
        %8894 = vmatprep.mubr.f32.mxu0 0.0
        %8895 = vmatmul.mubr.f32.gmra.mrb[0].mxu0 %v8734
        %v8896 = vpop.f32.mrb[0].mxu0
        %v8897 = vadd.f32 0.0, %v8896
        %v8898 = vpop.f32.mrb[0].mxu0
        %8899 = vmatprep.mubr.f32.mxu0 0.0
        %8900 = vmatmul.mubr.f32.gmra.mrb[0].mxu0 %v8737
        %v8901 = vpop.f32.mrb[0].mxu0
        %v8902 = vadd.f32 0.0, %v8901
        %v8903 = vpop.f32.mrb[0].mxu0
        %8904 = vmatprep.mubr.f32.mxu0 0.0
        %8905 = vmatmul.mubr.f32.gmra.mrb[0].mxu0 %v8740
        %v8906 = vpop.f32.mrb[0].mxu0
        %v8907 = vadd.f32 0.0, %v8906
        %v8908 = vpop.f32.mrb[0].mxu0
        %8909 = vmatprep.mubr.f32.mxu0 0.0
        %8910 = vmatmul.mubr.f32.gmra.mrb[0].mxu0 %v8743
        %v8911 = vpop.f32.mrb[0].mxu0
        %v8912 = vadd.f32 0.0, %v8911
        %v8913 = vpop.f32.mrb[0].mxu0
        %8914 = vmatprep.mubr.f32.mxu0 0.0
        %8915 = vmatmul.mubr.f32.gmra.mrb[0].mxu0 %v8746
        %v8916 = vpop.f32.mrb[0].mxu0
        %v8917 = vadd.f32 0.0, %v8916
        %v8918 = vpop.f32.mrb[0].mxu0
        %8919 = vmatprep.mubr.f32.mxu0 0.0
        %8920 = vmatmul.mubr.f32.gmra.mrb[0].mxu0 %v8749
        %v8921 = vpop.f32.mrb[0].mxu0
        %v8922 = vadd.f32 0.0, %v8921
        %v8923 = vpop.f32.mrb[0].mxu0
        %8924 = vmatprep.mubr.f32.mxu0 0.0
        %8925 = vmatmul.mubr.f32.gmra.mrb[0].mxu0 %v8752
        %v8926 = vpop.f32.mrb[0].mxu0
        %v8927 = vadd.f32 0.0, %v8926
        %v8928 = vpop.f32.mrb[0].mxu0
        %8929 = vmatprep.mubr.f32.mxu0 0.0
        %8930 = vmatmul.mubr.f32.gmra.mrb[0].mxu0 %v8755
        %v8931 = vpop.f32.mrb[0].mxu0
        %v8932 = vadd.f32 0.0, %v8931
        %v8933 = vpop.f32.mrb[0].mxu0
        %8934 = vmatprep.mubr.f32.mxu0 0.0
        %8935 = vmatmul.mubr.f32.gmra.mrb[0].mxu0 %v8758
        %v8936 = vpop.f32.mrb[0].mxu0
        %v8937 = vadd.f32 0.0, %v8936
        %v8938 = vpop.f32.mrb[0].mxu0
        %8939 = vmatprep.mubr.f32.mxu0 0.0
        %8940 = vmatmul.mubr.f32.gmra.mrb[0].mxu0 %v8761
        %v8941 = vpop.f32.mrb[0].mxu0
        %v8942 = vadd.f32 0.0, %v8941
        %v8943 = vpop.f32.mrb[0].mxu0
        %8944 = vmatprep.mubr.f32.mxu0 0.0
        %8945 = vmatmul.mubr.f32.gmra.mrb[0].mxu0 %v8764
        %v8946 = vpop.f32.mrb[0].mxu0
        %v8947 = vadd.f32 0.0, %v8946
        %v8948 = vpop.f32.mrb[0].mxu0
        %8949 = vmatprep.mubr.f32.mxu0 0.0
        %8950 = vmatmul.mubr.f32.gmra.mrb[0].mxu0 %v8767
        %v8951 = vpop.f32.mrb[0].mxu0
        %v8952 = vadd.f32 0.0, %v8951
        %v8953 = vpop.f32.mrb[0].mxu0
        %8954 = vmatprep.mubr.f32.mxu0 0.0
        %8955 = vmatmul.mubr.f32.gmra.mrb[0].mxu0 %v8770
        %v8956 = vpop.f32.mrb[0].mxu0
        %v8957 = vadd.f32 0.0, %v8956
        %v8958 = vpop.f32.mrb[0].mxu0
        %8959 = vdwg.mxu0
        %v8960 = vadd.f32 %v8479, %v8842
        %v8961 = vadd.f32 %v8480, %v8847
        %v8962 = vadd.f32 %v8481, %v8852
        %v8963 = vadd.f32 %v8482, %v8857
        %v8964 = vadd.f32 %v8483, %v8862
        %v8965 = vadd.f32 %v8484, %v8867
        %v8966 = vadd.f32 %v8485, %v8872
        %v8967 = vadd.f32 %v8486, %v8877
        %v8968 = vadd.f32 %v8487, %v8882
        %v8969 = vadd.f32 %v8488, %v8887
        %v8970 = vadd.f32 %v8489, %v8892
        %v8971 = vadd.f32 %v8490, %v8897
        %v8972 = vadd.f32 %v8491, %v8902
        %v8973 = vadd.f32 %v8492, %v8907
        %v8974 = vadd.f32 %v8493, %v8912
        %v8975 = vadd.f32 %v8494, %v8917
        %v8976 = vadd.f32 %v8495, %v8922
        %v8977 = vadd.f32 %v8496, %v8927
        %v8978 = vadd.f32 %v8497, %v8932
        %v8979 = vadd.f32 %v8498, %v8937
        %v8980 = vadd.f32 %v8499, %v8942
        %v8981 = vadd.f32 %v8500, %v8947
        %v8982 = vadd.f32 %v8501, %v8952
        %v8983 = vadd.f32 %v8502, %v8957
        %v8984 = vld [vmem:[#allocation2 + $0x19] sm:$0xff]
        %v8985 = vld [vmem:[#allocation2 + $0x21] sm:$0xff]
        %v8986 = vld [vmem:[#allocation2 + $0x29] sm:$0xff]
        %v8987 = vld [vmem:[#allocation2 + $0x31] sm:$0xff]
        %v8988 = vld [vmem:[#allocation2 + $0x39] sm:$0xff]
        %v8989 = vld [vmem:[#allocation2 + $0x41] sm:$0xff]
        %v8990 = vld [vmem:[#allocation2 + $0x49] sm:$0xff]
        %v8991 = vld [vmem:[#allocation2 + $0x51] sm:$0xff]
        %v8992 = vld [vmem:[#allocation2 + $0x59] sm:$0xff]
        %v8993 = vld [vmem:[#allocation2 + $0x61] sm:$0xff]
        %v8994 = vld [vmem:[#allocation2 + $0x69] sm:$0xff]
        %v8995 = vld [vmem:[#allocation2 + $0x71] sm:$0xff]
        %v8996 = vld [vmem:[#allocation2 + $0x79] sm:$0xff]
        %v8997 = vld [vmem:[#allocation2 + $0x81] sm:$0xff]
        %v8998 = vld [vmem:[#allocation2 + $0x89] sm:$0xff]
        %v8999 = vld [vmem:[#allocation2 + $0x91] sm:$0xff]
        %v9000 = vld [vmem:[#allocation2 + $0x99] sm:$0xff]
        %v9001 = vld [vmem:[#allocation2 + $0xa1] sm:$0xff]
        %v9002 = vld [vmem:[#allocation2 + $0xa9] sm:$0xff]
        %v9003 = vld [vmem:[#allocation2 + $0xb1] sm:$0xff]
        %v9004 = vld [vmem:[#allocation2 + $0xb9] sm:$0xff]
        %v9005 = vld [vmem:[#allocation2 + $0xc1] sm:$0xff]
        %v9006 = vld [vmem:[#allocation2 + $0xc9] sm:$0xff]
        %v9007 = vld [vmem:[#allocation2 + $0xd1] sm:$0xff]
        %v9008 = vld [vmem:[%s4648] sm:$0xff]
        %v9009 = vld [vmem:[%s4648 + $0x8] sm:$0xff]
        %v9010 = vld [vmem:[%s4648 + $0x10] sm:$0xff]
        %v9011 = vld [vmem:[%s4648 + $0x18] sm:$0xff]
        %v9012 = vld [vmem:[%s4648 + $0x20] sm:$0xff]
        %v9013 = vld [vmem:[%s4648 + $0x28] sm:$0xff]
        %v9014 = vld [vmem:[%s4648 + $0x30] sm:$0xff]
        %v9015 = vld [vmem:[%s4648 + $0x38] sm:$0xff]
        %v9016 = vld [vmem:[%s4648 + $0x40] sm:$0xff]
        %v9017 = vld [vmem:[%s4648 + $0x48] sm:$0xff]
        %v9018 = vld [vmem:[%s4648 + $0x50] sm:$0xff]
        %v9019 = vld [vmem:[%s4648 + $0x58] sm:$0xff]
        %v9020 = vld [vmem:[%s4648 + $0x60] sm:$0xff]
        %v9021 = vld [vmem:[%s4648 + $0x68] sm:$0xff]
        %v9022 = vld [vmem:[%s4648 + $0x70] sm:$0xff]
        %v9023 = vld [vmem:[%s4648 + $0x78] sm:$0xff]
        %v9024 = vld [vmem:[%s4648 + $0x80] sm:$0xff]
        %v9025 = vld [vmem:[%s4648 + $0x88] sm:$0xff]
        %v9026 = vld [vmem:[%s4648 + $0x90] sm:$0xff]
        %v9027 = vld [vmem:[%s4648 + $0x98] sm:$0xff]
        %v9028 = vld [vmem:[%s4648 + $0xa0] sm:$0xff]
        %v9029 = vld [vmem:[%s4648 + $0xa8] sm:$0xff]
        %v9030 = vld [vmem:[%s4648 + $0xb0] sm:$0xff]
        %v9031 = vld [vmem:[%s4648 + $0xb8] sm:$0xff]
        %9033 = vset.pattern.permute.xlu0 0
        %9034 = vperm.xlu0 %9033, %v9008
        %v9035 = vpop.permute.xlu0 %9034
        %9038 = vset.pattern.permute.xlu0 0
        %9039 = vperm.xlu0 %9038, %v9009
        %v9040 = vpop.permute.xlu0 %9039
        %9043 = vset.pattern.permute.xlu0 0
        %9044 = vperm.xlu0 %9043, %v9010
        %v9045 = vpop.permute.xlu0 %9044
        %9048 = vset.pattern.permute.xlu0 0
        %9049 = vperm.xlu0 %9048, %v9011
        %v9050 = vpop.permute.xlu0 %9049
        %9053 = vset.pattern.permute.xlu0 0
        %9054 = vperm.xlu0 %9053, %v9012
        %v9055 = vpop.permute.xlu0 %9054
        %9058 = vset.pattern.permute.xlu0 0
        %9059 = vperm.xlu0 %9058, %v9013
        %v9060 = vpop.permute.xlu0 %9059
        %9063 = vset.pattern.permute.xlu0 0
        %9064 = vperm.xlu0 %9063, %v9014
        %v9065 = vpop.permute.xlu0 %9064
        %9068 = vset.pattern.permute.xlu0 0
        %9069 = vperm.xlu0 %9068, %v9015
        %v9070 = vpop.permute.xlu0 %9069
        %9073 = vset.pattern.permute.xlu0 0
        %9074 = vperm.xlu0 %9073, %v9016
        %v9075 = vpop.permute.xlu0 %9074
        %9078 = vset.pattern.permute.xlu0 0
        %9079 = vperm.xlu0 %9078, %v9017
        %v9080 = vpop.permute.xlu0 %9079
        %9083 = vset.pattern.permute.xlu0 0
        %9084 = vperm.xlu0 %9083, %v9018
        %v9085 = vpop.permute.xlu0 %9084
        %9088 = vset.pattern.permute.xlu0 0
        %9089 = vperm.xlu0 %9088, %v9019
        %v9090 = vpop.permute.xlu0 %9089
        %9093 = vset.pattern.permute.xlu0 0
        %9094 = vperm.xlu0 %9093, %v9020
        %v9095 = vpop.permute.xlu0 %9094
        %9098 = vset.pattern.permute.xlu0 0
        %9099 = vperm.xlu0 %9098, %v9021
        %v9100 = vpop.permute.xlu0 %9099
        %9103 = vset.pattern.permute.xlu0 0
        %9104 = vperm.xlu0 %9103, %v9022
        %v9105 = vpop.permute.xlu0 %9104
        %9108 = vset.pattern.permute.xlu0 0
        %9109 = vperm.xlu0 %9108, %v9023
        %v9110 = vpop.permute.xlu0 %9109
        %9113 = vset.pattern.permute.xlu0 0
        %9114 = vperm.xlu0 %9113, %v9024
        %v9115 = vpop.permute.xlu0 %9114
        %9118 = vset.pattern.permute.xlu0 0
        %9119 = vperm.xlu0 %9118, %v9025
        %v9120 = vpop.permute.xlu0 %9119
        %9123 = vset.pattern.permute.xlu0 0
        %9124 = vperm.xlu0 %9123, %v9026
        %v9125 = vpop.permute.xlu0 %9124
        %9128 = vset.pattern.permute.xlu0 0
        %9129 = vperm.xlu0 %9128, %v9027
        %v9130 = vpop.permute.xlu0 %9129
        %9133 = vset.pattern.permute.xlu0 0
        %9134 = vperm.xlu0 %9133, %v9028
        %v9135 = vpop.permute.xlu0 %9134
        %9138 = vset.pattern.permute.xlu0 0
        %9139 = vperm.xlu0 %9138, %v9029
        %v9140 = vpop.permute.xlu0 %9139
        %9143 = vset.pattern.permute.xlu0 0
        %9144 = vperm.xlu0 %9143, %v9030
        %v9145 = vpop.permute.xlu0 %9144
        %9148 = vset.pattern.permute.xlu0 0
        %9149 = vperm.xlu0 %9148, %v9031
        %v9150 = vpop.permute.xlu0 %9149
        %v9152 = vmul.f32 %v8984, %v9035
        %v9153 = vmul.f32 %v8985, %v9040
        %v9154 = vmul.f32 %v8986, %v9045
        %v9155 = vmul.f32 %v8987, %v9050
        %v9156 = vmul.f32 %v8988, %v9055
        %v9157 = vmul.f32 %v8989, %v9060
        %v9158 = vmul.f32 %v8990, %v9065
        %v9159 = vmul.f32 %v8991, %v9070
        %v9160 = vmul.f32 %v8992, %v9075
        %v9161 = vmul.f32 %v8993, %v9080
        %v9162 = vmul.f32 %v8994, %v9085
        %v9163 = vmul.f32 %v8995, %v9090
        %v9164 = vmul.f32 %v8996, %v9095
        %v9165 = vmul.f32 %v8997, %v9100
        %v9166 = vmul.f32 %v8998, %v9105
        %v9167 = vmul.f32 %v8999, %v9110
        %v9168 = vmul.f32 %v9000, %v9115
        %v9169 = vmul.f32 %v9001, %v9120
        %v9170 = vmul.f32 %v9002, %v9125
        %v9171 = vmul.f32 %v9003, %v9130
        %v9172 = vmul.f32 %v9004, %v9135
        %v9173 = vmul.f32 %v9005, %v9140
        %v9174 = vmul.f32 %v9006, %v9145
        %v9175 = vmul.f32 %v9007, %v9150
        %s9176 = scalar_lea.vmem %s439, 256
        %v9177 = vld [vmem:[%s9176] sm:$0xff]
        %v9178 = vld [vmem:[%s9176 + $0x8] sm:$0xff]
        %v9179 = vld [vmem:[%s9176 + $0x10] sm:$0xff]
        %v9180 = vld [vmem:[%s9176 + $0x18] sm:$0x1]
        %v9182 = vsel %vm445, %v9152, 0
        %v9185 = vsel %vm445, %v9153, 0
        %v9188 = vsel %vm445, %v9154, 0
        %v9191 = vsel %vm445, %v9155, 0
        %v9194 = vsel %vm445, %v9156, 0
        %v9197 = vsel %vm445, %v9157, 0
        %v9200 = vsel %vm445, %v9158, 0
        %v9203 = vsel %vm445, %v9159, 0
        %v9206 = vsel %vm445, %v9160, 0
        %v9209 = vsel %vm445, %v9161, 0
        %v9212 = vsel %vm445, %v9162, 0
        %v9215 = vsel %vm445, %v9163, 0
        %v9218 = vsel %vm445, %v9164, 0
        %v9221 = vsel %vm445, %v9165, 0
        %v9224 = vsel %vm445, %v9166, 0
        %v9227 = vsel %vm445, %v9167, 0
        %v9230 = vsel %vm445, %v9168, 0
        %v9233 = vsel %vm445, %v9169, 0
        %v9236 = vsel %vm445, %v9170, 0
        %v9239 = vsel %vm445, %v9171, 0
        %v9242 = vsel %vm445, %v9172, 0
        %v9245 = vsel %vm445, %v9173, 0
        %v9248 = vsel %vm445, %v9174, 0
        %v9251 = vsel %vm445, %v9175, 0
        %v9254 = vsel %vm581, %v9180, 0
        %9256 = vmatprep.subr.mxu0 0.0
        %9257 = vmatpush1.msra.mxu0 %v9177
        %9258 = vmatprep.subr.mxu0 0.0
        %9259 = vmatpush1.msra.mxu0 %v9178
        %9260 = vmatprep.subr.mxu0 0.0
        %9261 = vmatpush1.msra.mxu0 %v9179
        %9262 = vmatprep.subr.mxu0 0.0
        %9263 = vmatpush1.msra.mxu0 %v9254
        %9264 = vmatprep.subr.mxu0 0.0
        %9265 = vmatpush1.msra.mxu0 0.0
        %9266 = vmatprep.subr.mxu0 0.0
        %9267 = vmatpush1.msra.mxu0 0.0
        %9268 = vmatprep.subr.mxu0 0.0
        %9269 = vmatpush1.msra.mxu0 0.0
        %9270 = vmatprep.subr.mxu0 0.0
        %9271 = vmatpush1.msra.mxu0 0.0
        %9272 = vmatprep.subr.mxu0 0.0
        %9273 = vmatpush1.msra.mxu0 0.0
        %9274 = vmatprep.subr.mxu0 0.0
        %9275 = vmatpush1.msra.mxu0 0.0
        %9276 = vmatprep.subr.mxu0 0.0
        %9277 = vmatpush1.msra.mxu0 0.0
        %9278 = vmatprep.subr.mxu0 0.0
        %9279 = vmatpush1.msra.mxu0 0.0
        %9280 = vmatprep.subr.mxu0 0.0
        %9281 = vmatpush1.msra.mxu0 0.0
        %9282 = vmatprep.subr.mxu0 0.0
        %9283 = vmatpush1.msra.mxu0 0.0
        %9284 = vmatprep.subr.mxu0 0.0
        %9285 = vmatpush1.msra.mxu0 0.0
        %9286 = vmatprep.subr.mxu0 0.0
        %9287 = vmatpush1.msra.mxu0 0.0
        %9288 = vmatprep.subr.mxu0 0.0
        %9289 = vmatpush1.msra.mxu0 0.0
        %9290 = vmatprep.subr.mxu0 0.0
        %9291 = vmatpush1.msra.mxu0 0.0
        %9292 = vmatprep.subr.mxu0 0.0
        %9293 = vmatpush1.msra.mxu0 0.0
        %9294 = vmatprep.subr.mxu0 0.0
        %9295 = vmatpush1.msra.mxu0 0.0
        %9296 = vmatprep.subr.mxu0 0.0
        %9297 = vmatpush1.msra.mxu0 0.0
        %9298 = vmatprep.subr.mxu0 0.0
        %9299 = vmatpush1.msra.mxu0 0.0
        %9300 = vmatprep.subr.mxu0 0.0
        %9301 = vmatpush1.msra.mxu0 0.0
        %9302 = vmatprep.subr.mxu0 0.0
        %9303 = vmatpush1.msra.mxu0 0.0
        %9304 = vmatprep.subr.mxu0 0.0
        %9305 = vmatpush1.msra.mxu0 0.0
        %9306 = vmatprep.subr.mxu0 0.0
        %9307 = vmatpush1.msra.mxu0 0.0
        %9308 = vmatprep.subr.mxu0 0.0
        %9309 = vmatpush1.msra.mxu0 0.0
        %9310 = vmatprep.subr.mxu0 0.0
        %9311 = vmatpush1.msra.mxu0 0.0
        %9312 = vmatprep.subr.mxu0 0.0
        %9313 = vmatpush1.msra.mxu0 0.0
        %9314 = vmatprep.subr.mxu0 0.0
        %9315 = vmatpush1.msra.mxu0 0.0
        %9316 = vmatprep.subr.mxu0 0.0
        %9317 = vmatpush1.msra.mxu0 0.0
        %9318 = vmatprep.subr.mxu0 0.0
        %9319 = vmatpush1.msra.mxu0 0.0
        %9320 = vmatprep.mubr.f32.mxu0 0.0
        %9321 = vmatmul.mubr.f32.gmra.mrb[0].mxu0 %v9182
        %v9322 = vpop.f32.mrb[0].mxu0
        %v9323 = vadd.f32 0.0, %v9322
        %v9324 = vpop.f32.mrb[0].mxu0
        %9325 = vmatprep.mubr.f32.mxu0 0.0
        %9326 = vmatmul.mubr.f32.gmra.mrb[0].mxu0 %v9185
        %v9327 = vpop.f32.mrb[0].mxu0
        %v9328 = vadd.f32 0.0, %v9327
        %v9329 = vpop.f32.mrb[0].mxu0
        %9330 = vmatprep.mubr.f32.mxu0 0.0
        %9331 = vmatmul.mubr.f32.gmra.mrb[0].mxu0 %v9188
        %v9332 = vpop.f32.mrb[0].mxu0
        %v9333 = vadd.f32 0.0, %v9332
        %v9334 = vpop.f32.mrb[0].mxu0
        %9335 = vmatprep.mubr.f32.mxu0 0.0
        %9336 = vmatmul.mubr.f32.gmra.mrb[0].mxu0 %v9191
        %v9337 = vpop.f32.mrb[0].mxu0
        %v9338 = vadd.f32 0.0, %v9337
        %v9339 = vpop.f32.mrb[0].mxu0
        %9340 = vmatprep.mubr.f32.mxu0 0.0
        %9341 = vmatmul.mubr.f32.gmra.mrb[0].mxu0 %v9194
        %v9342 = vpop.f32.mrb[0].mxu0
        %v9343 = vadd.f32 0.0, %v9342
        %v9344 = vpop.f32.mrb[0].mxu0
        %9345 = vmatprep.mubr.f32.mxu0 0.0
        %9346 = vmatmul.mubr.f32.gmra.mrb[0].mxu0 %v9197
        %v9347 = vpop.f32.mrb[0].mxu0
        %v9348 = vadd.f32 0.0, %v9347
        %v9349 = vpop.f32.mrb[0].mxu0
        %9350 = vmatprep.mubr.f32.mxu0 0.0
        %9351 = vmatmul.mubr.f32.gmra.mrb[0].mxu0 %v9200
        %v9352 = vpop.f32.mrb[0].mxu0
        %v9353 = vadd.f32 0.0, %v9352
        %v9354 = vpop.f32.mrb[0].mxu0
        %9355 = vmatprep.mubr.f32.mxu0 0.0
        %9356 = vmatmul.mubr.f32.gmra.mrb[0].mxu0 %v9203
        %v9357 = vpop.f32.mrb[0].mxu0
        %v9358 = vadd.f32 0.0, %v9357
        %v9359 = vpop.f32.mrb[0].mxu0
        %9360 = vmatprep.mubr.f32.mxu0 0.0
        %9361 = vmatmul.mubr.f32.gmra.mrb[0].mxu0 %v9206
        %v9362 = vpop.f32.mrb[0].mxu0
        %v9363 = vadd.f32 0.0, %v9362
        %v9364 = vpop.f32.mrb[0].mxu0
        %9365 = vmatprep.mubr.f32.mxu0 0.0
        %9366 = vmatmul.mubr.f32.gmra.mrb[0].mxu0 %v9209
        %v9367 = vpop.f32.mrb[0].mxu0
        %v9368 = vadd.f32 0.0, %v9367
        %v9369 = vpop.f32.mrb[0].mxu0
        %9370 = vmatprep.mubr.f32.mxu0 0.0
        %9371 = vmatmul.mubr.f32.gmra.mrb[0].mxu0 %v9212
        %v9372 = vpop.f32.mrb[0].mxu0
        %v9373 = vadd.f32 0.0, %v9372
        %v9374 = vpop.f32.mrb[0].mxu0
        %9375 = vmatprep.mubr.f32.mxu0 0.0
        %9376 = vmatmul.mubr.f32.gmra.mrb[0].mxu0 %v9215
        %v9377 = vpop.f32.mrb[0].mxu0
        %v9378 = vadd.f32 0.0, %v9377
        %v9379 = vpop.f32.mrb[0].mxu0
        %9380 = vmatprep.mubr.f32.mxu0 0.0
        %9381 = vmatmul.mubr.f32.gmra.mrb[0].mxu0 %v9218
        %v9382 = vpop.f32.mrb[0].mxu0
        %v9383 = vadd.f32 0.0, %v9382
        %v9384 = vpop.f32.mrb[0].mxu0
        %9385 = vmatprep.mubr.f32.mxu0 0.0
        %9386 = vmatmul.mubr.f32.gmra.mrb[0].mxu0 %v9221
        %v9387 = vpop.f32.mrb[0].mxu0
        %v9388 = vadd.f32 0.0, %v9387
        %v9389 = vpop.f32.mrb[0].mxu0
        %9390 = vmatprep.mubr.f32.mxu0 0.0
        %9391 = vmatmul.mubr.f32.gmra.mrb[0].mxu0 %v9224
        %v9392 = vpop.f32.mrb[0].mxu0
        %v9393 = vadd.f32 0.0, %v9392
        %v9394 = vpop.f32.mrb[0].mxu0
        %9395 = vmatprep.mubr.f32.mxu0 0.0
        %9396 = vmatmul.mubr.f32.gmra.mrb[0].mxu0 %v9227
        %v9397 = vpop.f32.mrb[0].mxu0
        %v9398 = vadd.f32 0.0, %v9397
        %v9399 = vpop.f32.mrb[0].mxu0
        %9400 = vmatprep.mubr.f32.mxu0 0.0
        %9401 = vmatmul.mubr.f32.gmra.mrb[0].mxu0 %v9230
        %v9402 = vpop.f32.mrb[0].mxu0
        %v9403 = vadd.f32 0.0, %v9402
        %v9404 = vpop.f32.mrb[0].mxu0
        %9405 = vmatprep.mubr.f32.mxu0 0.0
        %9406 = vmatmul.mubr.f32.gmra.mrb[0].mxu0 %v9233
        %v9407 = vpop.f32.mrb[0].mxu0
        %v9408 = vadd.f32 0.0, %v9407
        %v9409 = vpop.f32.mrb[0].mxu0
        %9410 = vmatprep.mubr.f32.mxu0 0.0
        %9411 = vmatmul.mubr.f32.gmra.mrb[0].mxu0 %v9236
        %v9412 = vpop.f32.mrb[0].mxu0
        %v9413 = vadd.f32 0.0, %v9412
        %v9414 = vpop.f32.mrb[0].mxu0
        %9415 = vmatprep.mubr.f32.mxu0 0.0
        %9416 = vmatmul.mubr.f32.gmra.mrb[0].mxu0 %v9239
        %v9417 = vpop.f32.mrb[0].mxu0
        %v9418 = vadd.f32 0.0, %v9417
        %v9419 = vpop.f32.mrb[0].mxu0
        %9420 = vmatprep.mubr.f32.mxu0 0.0
        %9421 = vmatmul.mubr.f32.gmra.mrb[0].mxu0 %v9242
        %v9422 = vpop.f32.mrb[0].mxu0
        %v9423 = vadd.f32 0.0, %v9422
        %v9424 = vpop.f32.mrb[0].mxu0
        %9425 = vmatprep.mubr.f32.mxu0 0.0
        %9426 = vmatmul.mubr.f32.gmra.mrb[0].mxu0 %v9245
        %v9427 = vpop.f32.mrb[0].mxu0
        %v9428 = vadd.f32 0.0, %v9427
        %v9429 = vpop.f32.mrb[0].mxu0
        %9430 = vmatprep.mubr.f32.mxu0 0.0
        %9431 = vmatmul.mubr.f32.gmra.mrb[0].mxu0 %v9248
        %v9432 = vpop.f32.mrb[0].mxu0
        %v9433 = vadd.f32 0.0, %v9432
        %v9434 = vpop.f32.mrb[0].mxu0
        %9435 = vmatprep.mubr.f32.mxu0 0.0
        %9436 = vmatmul.mubr.f32.gmra.mrb[0].mxu0 %v9251
        %v9437 = vpop.f32.mrb[0].mxu0
        %v9438 = vadd.f32 0.0, %v9437
        %v9439 = vpop.f32.mrb[0].mxu0
        %9440 = vdwg.mxu0
        %v9441 = vadd.f32 %v8960, %v9323
        %v9442 = vadd.f32 %v8961, %v9328
        %v9443 = vadd.f32 %v8962, %v9333
        %v9444 = vadd.f32 %v8963, %v9338
        %v9445 = vadd.f32 %v8964, %v9343
        %v9446 = vadd.f32 %v8965, %v9348
        %v9447 = vadd.f32 %v8966, %v9353
        %v9448 = vadd.f32 %v8967, %v9358
        %v9449 = vadd.f32 %v8968, %v9363
        %v9450 = vadd.f32 %v8969, %v9368
        %v9451 = vadd.f32 %v8970, %v9373
        %v9452 = vadd.f32 %v8971, %v9378
        %v9453 = vadd.f32 %v8972, %v9383
        %v9454 = vadd.f32 %v8973, %v9388
        %v9455 = vadd.f32 %v8974, %v9393
        %v9456 = vadd.f32 %v8975, %v9398
        %v9457 = vadd.f32 %v8976, %v9403
        %v9458 = vadd.f32 %v8977, %v9408
        %v9459 = vadd.f32 %v8978, %v9413
        %v9460 = vadd.f32 %v8979, %v9418
        %v9461 = vadd.f32 %v8980, %v9423
        %v9462 = vadd.f32 %v8981, %v9428
        %v9463 = vadd.f32 %v8982, %v9433
        %v9464 = vadd.f32 %v8983, %v9438
        %v9465 = vld [vmem:[%s370] sm:$0x1]
        %v9467 = vlaneseq
        %v9468 = vshrl.u32 %v9467, 7
        %v9469 = vsub.s32 0, %v9468
        %v9470 = vrot.slane %v9465, %v9469
        %v9472 = vadd.f32 %v9441, %v9470
        %v9473 = vadd.f32 %v9442, %v9470
        %v9474 = vadd.f32 %v9443, %v9470
        %v9475 = vadd.f32 %v9444, %v9470
        %v9476 = vadd.f32 %v9445, %v9470
        %v9477 = vadd.f32 %v9446, %v9470
        %v9478 = vadd.f32 %v9447, %v9470
        %v9479 = vadd.f32 %v9448, %v9470
        %v9480 = vadd.f32 %v9449, %v9470
        %v9481 = vadd.f32 %v9450, %v9470
        %v9482 = vadd.f32 %v9451, %v9470
        %v9483 = vadd.f32 %v9452, %v9470
        %v9484 = vadd.f32 %v9453, %v9470
        %v9485 = vadd.f32 %v9454, %v9470
        %v9486 = vadd.f32 %v9455, %v9470
        %v9487 = vadd.f32 %v9456, %v9470
        %v9488 = vadd.f32 %v9457, %v9470
        %v9489 = vadd.f32 %v9458, %v9470
        %v9490 = vadd.f32 %v9459, %v9470
        %v9491 = vadd.f32 %v9460, %v9470
        %v9492 = vadd.f32 %v9461, %v9470
        %v9493 = vadd.f32 %v9462, %v9470
        %v9494 = vadd.f32 %v9463, %v9470
        %v9495 = vadd.f32 %v9464, %v9470
        %v9496 = vtanh.pop %v9472
        %v9497 = vtanh.pop %v9473
        %v9498 = vtanh.pop %v9474
        %v9499 = vtanh.pop %v9475
        %v9500 = vtanh.pop %v9476
        %v9501 = vtanh.pop %v9477
        %v9502 = vtanh.pop %v9478
        %v9503 = vtanh.pop %v9479
        %v9504 = vtanh.pop %v9480
        %v9505 = vtanh.pop %v9481
        %v9506 = vtanh.pop %v9482
        %v9507 = vtanh.pop %v9483
        %v9508 = vtanh.pop %v9484
        %v9509 = vtanh.pop %v9485
        %v9510 = vtanh.pop %v9486
        %v9511 = vtanh.pop %v9487
        %v9512 = vtanh.pop %v9488
        %v9513 = vtanh.pop %v9489
        %v9514 = vtanh.pop %v9490
        %v9515 = vtanh.pop %v9491
        %v9516 = vtanh.pop %v9492
        %v9517 = vtanh.pop %v9493
        %v9518 = vtanh.pop %v9494
        %v9519 = vtanh.pop %v9495
        %9520 = vst.msk [vmem:[%s444] sm:$0xff] %vm445, %v9496
        %9521 = vst.msk [vmem:[%s444 + $0x8] sm:$0xff] %vm445, %v9497
        %9522 = vst.msk [vmem:[%s444 + $0x10] sm:$0xff] %vm445, %v9498
        %9523 = vst.msk [vmem:[%s444 + $0x18] sm:$0xff] %vm445, %v9499
        %9524 = vst.msk [vmem:[%s444 + $0x20] sm:$0xff] %vm445, %v9500
        %9525 = vst.msk [vmem:[%s444 + $0x28] sm:$0xff] %vm445, %v9501
        %9526 = vst.msk [vmem:[%s444 + $0x30] sm:$0xff] %vm445, %v9502
        %9527 = vst.msk [vmem:[%s444 + $0x38] sm:$0xff] %vm445, %v9503
        %9528 = vst.msk [vmem:[%s444 + $0x40] sm:$0xff] %vm445, %v9504
        %9529 = vst.msk [vmem:[%s444 + $0x48] sm:$0xff] %vm445, %v9505
        %9530 = vst.msk [vmem:[%s444 + $0x50] sm:$0xff] %vm445, %v9506
        %9531 = vst.msk [vmem:[%s444 + $0x58] sm:$0xff] %vm445, %v9507
        %9532 = vst.msk [vmem:[%s444 + $0x60] sm:$0xff] %vm445, %v9508
        %9533 = vst.msk [vmem:[%s444 + $0x68] sm:$0xff] %vm445, %v9509
        %9534 = vst.msk [vmem:[%s444 + $0x70] sm:$0xff] %vm445, %v9510
        %9535 = vst.msk [vmem:[%s444 + $0x78] sm:$0xff] %vm445, %v9511
        %9536 = vst.msk [vmem:[%s444 + $0x80] sm:$0xff] %vm445, %v9512
        %9537 = vst.msk [vmem:[%s444 + $0x88] sm:$0xff] %vm445, %v9513
        %9538 = vst.msk [vmem:[%s444 + $0x90] sm:$0xff] %vm445, %v9514
        %9539 = vst.msk [vmem:[%s444 + $0x98] sm:$0xff] %vm445, %v9515
        %9540 = vst.msk [vmem:[%s444 + $0xa0] sm:$0xff] %vm445, %v9516
        %9541 = vst.msk [vmem:[%s444 + $0xa8] sm:$0xff] %vm445, %v9517
        %9542 = vst.msk [vmem:[%s444 + $0xb0] sm:$0xff] %vm445, %v9518
        %9543 = vst.msk [vmem:[%s444 + $0xb8] sm:$0xff] %vm445, %v9519
        %p9544 = scmp.lt.s32.totalorder %s25, 1
        %s9545 = scalar_select %p9544, %s25, 1
        %s9546 = smul.addr %s9545, 24
        %s9547 = smul.addr %s9546, 8
        %s9548 = scalar_lea.vmem %s8, %s9547
        // Predicated region
        $region65: #{actor_critic_forward.2} parent=51 // pred_check
          %p9549 = pneg %p241
        $region66: #{actor_critic_forward.2} parent=51 // pred_check_branch
          %9551 = sbr.rel (%p9549) target = $region68
        $region67: #{actor_critic_forward.2} parent=51 // pred_region
          _
        $region68: #{actor_critic_forward.2} parent=51 // pred_fallthru
          _
      $region52: #{actor_critic_forward.2} parent=5 // pred_fallthru
        _
      %p9552 = scmp.le.s32.totalorder 2, %s20
      // Predicated region
      $region69: #{actor_critic_forward.2} parent=5 // pred_check
        %p9553 = pneg %p9552
      $region70: #{actor_critic_forward.2} parent=5 // pred_check_branch
        %9555 = sbr.rel (%p9553) target = $region72
      $region71: #{actor_critic_forward.2} parent=5 // pred_region
        %s9556 = ssub.s32 %s20, 2
        // Predicated region
        $region73: #{actor_critic_forward.2} parent=71 // pred_check
          %p9557 = pneg %p247
        $region74: #{actor_critic_forward.2} parent=71 // pred_check_branch
          %9559 = sbr.rel (%p9557) target = $region76
        $region75: #{actor_critic_forward.2} parent=71 // pred_region
          %p9560 = scmp.lt.s32.totalorder %s26, 1
          %s9561 = scalar_select %p9560, %s26, 1
          %s9562 = smul.addr %s9561, 24
          %s9563 = smul.addr %s9562, 8
          %s9564 = scalar_lea.vmem %s8, %s9563
        $region76: #{actor_critic_forward.2} parent=71 // pred_fallthru
          _
      $region72: #{actor_critic_forward.2} parent=5 // pred_fallthru
        _
    $region6: #{actor_critic_forward.2} parent=1 // loop_footer
      %s24 = sadd.s32 1, %s20
    $region7: #{actor_critic_forward.2} parent=1 // loop_footer_branch
      %19 = sbr.rel target = $region3
    $region8: #{actor_critic_forward.2} parent=1 // loop_exit
      _
    %9565 = vsyncpa [#allocation4], 1
    %s9566 = scalar_lea.sflag [#allocation4], 1
    %9567 = vsyncpa %s9566, 1
    %9568 = vsyncpa [#allocation6], 1
    %s9569 = scalar_lea.sflag [#allocation6], 1
    %9570 = vsyncpa %s9569, 1

</llo_original>
